<compile_context>
chip_gen: v6e
topology: v6e:2x2x1
jax: 0.10.0
libtpu: 0.0.40
codegen_flags: <defaults>
</compile_context>

<pallas_src>
import functools

import jax
import jax.numpy as jnp
from jax import lax
from jax.experimental import pallas as pl
from jax.experimental.pallas import tpu as pltpu


# =============================================================================
# Kernel A: fused 4-layer conv_offset head (3x3 / stride 1 / pad 1 convs,
# LeakyReLU(0.1) after the first three layers).  Output is written already
# transposed: (27*dg, H*W) per batch element (lane-dense store).
# =============================================================================
def _conv_head_kernel(xp_ref, w1_ref, b1_ref, w2_ref, b2_ref, w3_ref, b3_ref,
                      w4_ref, b4_ref, o_ref, act_ref, *, H, W, cin0, c1, cout):
    HW = H * W
    Hp, Wp = H + 2, W + 2
    NT = (((1,), (1,)), ((), ()))   # contract lhs dim 1 with rhs dim 1

    def slab_kh(get_patch, kh, cin):
        # (HW, 3*cin) im2col band for one kernel row (kw = 0, 1, 2).
        cols = [get_patch(kh, kw).reshape(HW, cin) for kw in range(3)]
        return jnp.concatenate(cols, axis=1).astype(jnp.bfloat16)

    def conv3x3(get_patch, w_ref, b_ref, cin, co, leaky):
        # Per-kh accumulation: 3 matmuls with K = 3*cin (no full 9*cin slab).
        acc = jnp.zeros((HW, co), jnp.float32)
        for kh in range(3):
            acc = acc + jnp.dot(slab_kh(get_patch, kh, cin), w_ref[kh],
                                preferred_element_type=jnp.float32)
        y = acc + b_ref[...]
        if leaky:
            y = jnp.where(y >= 0.0, y, 0.1 * y)
        return y                                      # (HW, co) f32

    # Zero only the 1-pixel border ring of the activation scratch: the interior
    # is fully overwritten every layer and the ring is never written again.
    act_ref[0:1, :, :] = jnp.zeros((1, Wp, c1), jnp.float32)
    act_ref[Hp - 1:Hp, :, :] = jnp.zeros((1, Wp, c1), jnp.float32)
    act_ref[:, 0:1, :] = jnp.zeros((Hp, 1, c1), jnp.float32)
    act_ref[:, Wp - 1:Wp, :] = jnp.zeros((Hp, 1, c1), jnp.float32)

    patch_x = lambda kh, kw: xp_ref[0, kh:kh + H, kw:kw + W, :]
    patch_a = lambda kh, kw: act_ref[kh:kh + H, kw:kw + W, :]

    h = conv3x3(patch_x, w1_ref, b1_ref, cin0, c1, True)
    act_ref[1:H + 1, 1:W + 1, :] = h.reshape(H, W, c1)
    h = conv3x3(patch_a, w2_ref, b2_ref, c1, c1, True)
    act_ref[1:H + 1, 1:W + 1, :] = h.reshape(H, W, c1)
    h = conv3x3(patch_a, w3_ref, b3_ref, c1, c1, True)
    act_ref[1:H + 1, 1:W + 1, :] = h.reshape(H, W, c1)

    # Final layer computed directly in transposed orientation (cout, HW) via an
    # NT dot_general (lhs (cout, 3*c1) x rhs (HW, 3*c1)), so no transpose is
    # needed anywhere and the output store is lane-dense.
    accT = jnp.zeros((cout, HW), jnp.float32)
    for kh in range(3):
        slab = slab_kh(patch_a, kh, c1)               # (HW, 3*c1) bf16
        accT = accT + lax.dot_general(w4_ref[kh], slab, NT,
                                      preferred_element_type=jnp.float32)
    o_ref[0] = accT + b4_ref[...]                     # (cout, HW) lane-dense


def conv_offset_head(feat_nchw, p):
    """feat_nchw: (N, cin0, H, W) -> raw offsets/mask, transposed (N, 27*dg, H*W)."""
    N, cin0, H, W = feat_nchw.shape
    c1 = p["off_w1"].shape[0]
    cout = p["off_w4"].shape[0]                      # 27 * dg
    HW = H * W
    # TODO(synk): move Kernel A fully to channels-on-sublanes layout and add
    # row-band tiling (1-pixel halo) so this NHWC transpose/pad disappears and
    # VMEM stays bounded at large H*W (needed for v7x's 64 MiB VMEM).
    xp = jnp.pad(jnp.transpose(feat_nchw, (0, 2, 3, 1)),
                 ((0, 0), (1, 1), (1, 1), (0, 0)))

    def w_in(w):    # (Co, Ci, 3, 3) -> (3, 3*Ci, Co); row index = kw*Ci + ci
        return (jnp.transpose(w, (2, 3, 1, 0))
                .reshape(3, 3 * w.shape[1], w.shape[0]).astype(jnp.bfloat16))

    def w_out(w):   # (Co, Ci, 3, 3) -> (3, Co, 3*Ci); col index = kw*Ci + ci
        return (jnp.transpose(w, (2, 0, 3, 1))
                .reshape(3, w.shape[0], 3 * w.shape[1]).astype(jnp.bfloat16))

    full3 = lambda n: (0, 0, 0)
    full2 = lambda n: (0, 0)
    kern = functools.partial(_conv_head_kernel, H=H, W=W, cin0=cin0, c1=c1,
                             cout=cout)
    w_bytes = 2 * 9 * (cin0 * c1 + 2 * c1 * c1 + c1 * cout) + 4 * (3 * c1 + cout)
    cost = pl.CostEstimate(
        flops=int(2 * N * HW * 9 * (cin0 * c1 + 2 * c1 * c1 + c1 * cout)),
        transcendentals=0,
        bytes_accessed=int(xp.size * 4 + N * cout * HW * 4 + w_bytes))
    return pl.pallas_call(
        kern,
        out_shape=jax.ShapeDtypeStruct((N, cout, HW), jnp.float32),
        grid=(N,),
        in_specs=[
            pl.BlockSpec((1, H + 2, W + 2, cin0), lambda n: (n, 0, 0, 0)),
            pl.BlockSpec((3, 3 * cin0, c1), full3), pl.BlockSpec((1, c1), full2),
            pl.BlockSpec((3, 3 * c1, c1), full3), pl.BlockSpec((1, c1), full2),
            pl.BlockSpec((3, 3 * c1, c1), full3), pl.BlockSpec((1, c1), full2),
            pl.BlockSpec((3, cout, 3 * c1), full3), pl.BlockSpec((cout, 1), full2),
        ],
        out_specs=pl.BlockSpec((1, cout, HW), lambda n: (n, 0, 0)),
        scratch_shapes=[pltpu.VMEM((H + 2, W + 2, c1), jnp.float32)],
        compiler_params=pltpu.CompilerParams(
            dimension_semantics=("parallel",),
            vmem_limit_bytes=64 * 1024 * 1024),
        cost_estimate=cost,
    )(xp,
      w_in(p["off_w1"]), p["off_b1"].reshape(1, -1).astype(jnp.float32),
      w_in(p["off_w2"]), p["off_b2"].reshape(1, -1).astype(jnp.float32),
      w_in(p["off_w3"]), p["off_b3"].reshape(1, -1).astype(jnp.float32),
      w_out(p["off_w4"]), p["off_b4"].reshape(-1, 1).astype(jnp.float32))


# =============================================================================
# Kernel B: fused offset activation + modulated deformable 3x3 conv.
# Channels on sublanes, output pixels on lanes; grid = (batch, pixel-tile).
# =============================================================================
def _deform_kernel(x4_ref, raw_ref, flow_ref, coord_ref, w_ref, b_ref, o_ref, *,
                   H, W, C, OC, dg, max_res, pad, dil):
    Cg = C // dg
    Wp = W + 2
    HWp = (H + 2) * Wp
    TQ = raw_ref.shape[2]

    raw = raw_ref[0]                                  # (27*dg, TQ)
    # Hoisted full-slab transcendentals (single EUP pass each).
    off = max_res * jnp.tanh(raw[:18 * dg, :])        # (18*dg, TQ)
    msk = jax.nn.sigmoid(raw[18 * dg:, :])            # (9*dg, TQ)

    flow = flow_ref[0]                                # (2, TQ)
    fy = flow[1:2, :]                                 # flip(1): dy += flow ch 1
    fx = flow[0:1, :]                                 # dx += flow ch 0
    h0 = coord_ref[0:1, :]                            # output row (f32)
    w0 = coord_ref[1:2, :]                            # output col (f32)

    # (HWp, 1) iota; the (HWp, TQ) broadcast fuses into the compare below.
    src_iota = jax.lax.broadcasted_iota(jnp.int32, (HWp, 1), 0)
    one_bf = jnp.ones((1, 1), jnp.bfloat16)
    zero_bf = jnp.zeros((1, 1), jnp.bfloat16)

    # TODO(synk): replace the dense K=HWp one-hot gather with a banded gather
    # (|offset| <= max_res + |flow| reaches only ~2*max_disp+3 source rows per
    # output row band) before running non-toy H*W on v7x's 64 MiB VMEM.
    taps = []
    for g in range(dg):
        xg4 = x4_ref[0, g]                            # (4*Cg, HWp) bf16
        for k in range(9):
            kh, kw = divmod(k, 3)
            j = 9 * g + k
            dy = off[2 * j:2 * j + 1, :] + fy
            dx = off[2 * j + 1:2 * j + 2, :] + fx
            m = msk[j:j + 1, :]
            # Sampling position in 1-padded source coordinates (+1 shift).
            py = h0 + float(kh * dil - pad + 1) + dy
            px = w0 + float(kw * dil - pad + 1) + dx
            valid = ((py > 0.0) & (py < float(H + 1)) &
                     (px > 0.0) & (px < float(W + 1)))             # bool (1, TQ)
            y0 = jnp.floor(py)
            x0 = jnp.floor(px)
            ly = py - y0
            lx = px - x0
            # where(valid, ...) instead of a float multiply: NaN offsets/flow
            # produce 0 (like the CUDA reference) instead of propagating.
            hy = jnp.where(valid, 1.0 - ly, 0.0)
            lyv = jnp.where(valid, ly, 0.0)
            hx = 1.0 - lx
            # ONE one-hot per tap (top-left corner in the padded image); the
            # other 3 bilinear corners come from the pre-shifted source copies
            # in x4.  Single select into bf16 (exact 0/1 values).
            idx = (y0 * float(Wp) + x0).astype(jnp.int32)          # (1, TQ)
            oh = jnp.where(src_iota == idx, one_bf, zero_bf)       # (HWp, TQ) bf16
            g4 = jnp.dot(xg4, oh, preferred_element_type=jnp.float32)  # (4Cg,TQ)
            sampled = ((hy * hx) * g4[0:Cg] +
                       (hy * lx) * g4[Cg:2 * Cg] +
                       (lyv * hx) * g4[2 * Cg:3 * Cg] +
                       (lyv * lx) * g4[3 * Cg:4 * Cg])
            taps.append(sampled * m)                  # (Cg, TQ) f32
    # Single output-weight matmul over all groups/taps:
    # (OC, dg*9*Cg) @ (dg*9*Cg, TQ).
    slab = jnp.concatenate(taps, axis=0).astype(jnp.bfloat16)
    acc = jnp.dot(w_ref[...], slab, preferred_element_type=jnp.float32)
    o_ref[0] = acc + b_ref[...]                       # lane-dense (OC, TQ) store


def deform_conv(x_nchw, rawT, flow_nchw, w, b, *, dg, max_res, pad, dil):
    N, C, H, W = x_nchw.shape
    OC = w.shape[0]
    Cg = C // dg
    HW = H * W
    Hp, Wp = H + 2, W + 2
    HWp = Hp * Wp

    # Pixel-tile size: 256 fills the MXU N dim on v6e/v7x, is two passes on
    # v5e's 128-wide MXU, and keeps the (HWp, TQ) one-hot bounded in VMEM.
    TQ = HW
    for cand in (256, 128):
        if HW % cand == 0:
            TQ = cand
            break

    # 4 pre-shifted copies of the zero-padded source (shift-major, per group):
    # corner (y0+a, x0+b) of the bilinear stencil == shift a*Wp + b of the
    # flattened padded image, so a single one-hot serves all 4 corners.
    # TODO(synk): build the 3 extra shifted views in-kernel (pltpu.roll into a
    # persistent VMEM scratch) and/or mark this spec pl.Buffered(1) to cut the
    # 4x HBM/VMEM footprint on v7x; kept precomputed here for robustness.
    xp = jnp.pad(x_nchw, ((0, 0), (0, 0), (1, 1), (1, 1)))      # (N, C, Hp, Wp)
    flat = xp.reshape(N, C, HWp)
    flat = jnp.pad(flat, ((0, 0), (0, 0), (0, Wp + 1)))
    x4 = jnp.stack([flat[:, :, s:s + HWp] for s in (0, 1, Wp, Wp + 1)], axis=1)
    x4 = (x4.reshape(N, 4, dg, Cg, HWp).transpose(0, 2, 1, 3, 4)
          .reshape(N, dg, 4 * Cg, HWp)).astype(jnp.bfloat16)

    flowT = flow_nchw.reshape(N, 2, HW).astype(jnp.float32)
    hh = (jnp.arange(HW, dtype=jnp.int32) // W).astype(jnp.float32)
    ww = (jnp.arange(HW, dtype=jnp.int32) % W).astype(jnp.float32)
    coords = jnp.stack([hh, ww], axis=0)                         # (2, HW)

    # wT[oc, (g*9 + k)*Cg + c] = w[oc, g*Cg + c, kh, kw], k = kh*3 + kw.
    wT = (w.reshape(OC, dg, Cg, 9).transpose(0, 1, 3, 2)
          .reshape(OC, dg * 9 * Cg)).astype(jnp.bfloat16)
    b2 = b.reshape(OC, 1).astype(jnp.float32)

    kern = functools.partial(_deform_kernel, H=H, W=W, C=C, OC=OC, dg=dg,
                             max_res=float(max_res), pad=pad, dil=dil)
    cost = pl.CostEstimate(
        flops=int(N * (dg * 9 * 2 * (4 * Cg) * HWp * HW + 2 * OC * 9 * C * HW)),
        transcendentals=int(N * 27 * dg * HW),
        bytes_accessed=int(x4.size * 2 + rawT.size * 4 + flowT.size * 4 +
                           N * OC * HW * 4))
    out = pl.pallas_call(
        kern,
        out_shape=jax.ShapeDtypeStruct((N, OC, HW), jnp.float32),
        grid=(N, HW // TQ),
        in_specs=[
            pl.BlockSpec((1, dg, 4 * Cg, HWp), lambda n, q: (n, 0, 0, 0)),
            pl.BlockSpec((1, 27 * dg, TQ), lambda n, q: (n, 0, q)),
            pl.BlockSpec((1, 2, TQ), lambda n, q: (n, 0, q)),
            pl.BlockSpec((2, TQ), lambda n, q: (0, q)),
            pl.BlockSpec((OC, dg * 9 * Cg), lambda n, q: (0, 0)),
            pl.BlockSpec((OC, 1), lambda n, q: (0, 0)),
        ],
        out_specs=pl.BlockSpec((1, OC, TQ), lambda n, q: (n, 0, q)),
        compiler_params=pltpu.CompilerParams(
            dimension_semantics=("parallel", "parallel"),
            vmem_limit_bytes=64 * 1024 * 1024),
        cost_estimate=cost,
    )(x4, rawT, flowT, coords, wT, b2)
    return out.reshape(N, OC, H, W)                  # already NCHW, no transpose


# =============================================================================
# Module forward (pa_frames == 2 path of DCNv2PackFlowGuided).
# =============================================================================
def dcnv2_pack_flow_guided_forward(params, x, x_flow_warpeds, x_current, flows,
                                   *, max_residue_magnitude=10.0,
                                   deformable_groups=1, padding=1, dilation=1):
    # TODO(synk): only the pa_frames==2 branch is implemented (module default);
    # pa_frames in {4, 6} only change which flow is added to each offset chunk.
    feat = jnp.concatenate(list(x_flow_warpeds) + [x_current] + list(flows),
                           axis=1).astype(jnp.float32)
    rawT = conv_offset_head(feat, params)                 # (N, 27*dg, HW)
    return deform_conv(x.astype(jnp.float32), rawT,
                       flows[0].astype(jnp.float32),
                       params["dcn_w"].astype(jnp.float32),
                       params["dcn_b"].astype(jnp.float32),
                       dg=deformable_groups, max_res=max_residue_magnitude,
                       pad=padding, dil=dilation)


if __name__ == "__main__":
    N, C, H, W = 2, 4, 16, 16
    OC = 4                       # out_channels
    dg = 1                       # deformable_groups
    pa_frames = 2

    key = jax.random.PRNGKey(0)
    keys = jax.random.split(key, 16)

    def init(k, shape, scale=0.1):
        return jax.random.normal(k, shape, jnp.float32) * scale

    cin0 = (1 + pa_frames // 2) * C + pa_frames    # 2*C + 2
    # Deterministic synthetic parameters.  (The PyTorch module zero-inits the
    # last conv_offset layer; small random values are used instead so the
    # deformable sampling path is actually exercised.)
    params = {
        "off_w1": init(keys[0], (OC, cin0, 3, 3)),
        "off_b1": init(keys[1], (OC,)),
        "off_w2": init(keys[2], (OC, OC, 3, 3)),
        "off_b2": init(keys[3], (OC,)),
        "off_w3": init(keys[4], (OC, OC, 3, 3)),
        "off_b3": init(keys[5], (OC,)),
        "off_w4": init(keys[6], (27 * dg, OC, 3, 3)),
        "off_b4": init(keys[7], (27 * dg,)),
        "dcn_w": init(keys[8], (OC, C, 3, 3)),     # groups=1
        "dcn_b": init(keys[9], (OC,)),
    }

    x = jax.random.normal(keys[10], (N, C, H, W), jnp.float32)
    x_flow_warped = jax.random.normal(keys[11], (N, C, H, W), jnp.float32)
    x_current = jax.random.normal(keys[12], (N, C, H, W), jnp.float32)
    flow = jax.random.normal(keys[13], (N, 2, H, W), jnp.float32) * 2.0

    out = dcnv2_pack_flow_guided_forward(
        params, x, [x_flow_warped], x_current, [flow],
        max_residue_magnitude=10.0, deformable_groups=dg,
        padding=1, dilation=1)
    out = jax.block_until_ready(out)
    assert out.shape == (N, OC, H, W), out.shape
    assert bool(jnp.all(jnp.isfinite(out)))
    print("KERNEL_OK")
</pallas_src>

<mosaic_0001>
module attributes {stable_mosaic.version = 11 : i64} {
  func.func @_conv_head_kernel(%arg0: i32, %arg1: memref<1x18x18x10xf32, #tpu.memory_space<vmem>>, %arg2: memref<3x30x4xbf16, #tpu.memory_space<vmem>>, %arg3: memref<1x4xf32, #tpu.memory_space<vmem>>, %arg4: memref<3x12x4xbf16, #tpu.memory_space<vmem>>, %arg5: memref<1x4xf32, #tpu.memory_space<vmem>>, %arg6: memref<3x12x4xbf16, #tpu.memory_space<vmem>>, %arg7: memref<1x4xf32, #tpu.memory_space<vmem>>, %arg8: memref<3x27x12xbf16, #tpu.memory_space<vmem>>, %arg9: memref<27x1xf32, #tpu.memory_space<vmem>>, %arg10: memref<1x27x256xf32, #tpu.memory_space<vmem>>, %arg11: memref<18x18x4xf32, #tpu.memory_space<vmem>>) attributes {dimension_semantics = [#tpu.dimension_semantics<parallel>], iteration_bounds = array<i64: 2>, scalar_prefetch = 0 : i64, scratch_operands = 1 : i64, tpu.core_type = #tpu.core_type<tc>, window_params = [{transform_indices = @transform_0, window_bounds = array<i64: 1, 18, 18, 10>}, {pipeline_mode = #tpu.pipeline_mode<synchronous>, transform_indices = @transform_1, window_bounds = array<i64: 3, 30, 4>}, {pipeline_mode = #tpu.pipeline_mode<synchronous>, transform_indices = @transform_2, window_bounds = array<i64: 1, 4>}, {pipeline_mode = #tpu.pipeline_mode<synchronous>, transform_indices = @transform_3, window_bounds = array<i64: 3, 12, 4>}, {pipeline_mode = #tpu.pipeline_mode<synchronous>, transform_indices = @transform_4, window_bounds = array<i64: 1, 4>}, {pipeline_mode = #tpu.pipeline_mode<synchronous>, transform_indices = @transform_5, window_bounds = array<i64: 3, 12, 4>}, {pipeline_mode = #tpu.pipeline_mode<synchronous>, transform_indices = @transform_6, window_bounds = array<i64: 1, 4>}, {pipeline_mode = #tpu.pipeline_mode<synchronous>, transform_indices = @transform_7, window_bounds = array<i64: 3, 27, 12>}, {pipeline_mode = #tpu.pipeline_mode<synchronous>, transform_indices = @transform_8, window_bounds = array<i64: 27, 1>}, {transform_indices = @transform_9, window_bounds = array<i64: 1, 27, 256>}]} {
    %cst = arith.constant 0.000000e+00 : f32
    %0 = vector.broadcast %cst : f32 to vector<1x18x4xf32>
    %c0 = arith.constant 0 : index
    %c0_0 = arith.constant 0 : index
    %c0_1 = arith.constant 0 : index
    %1 = vector.load %arg11[%c0, %c0_0, %c0_1] : memref<18x18x4xf32, #tpu.memory_space<vmem>>, vector<1x18x4xf32>
    tpu.vector_store %arg11[%c0, %c0_0, %c0_1], %0 {strides = array<i32>} : memref<18x18x4xf32, #tpu.memory_space<vmem>>, vector<1x18x4xf32>,
    %cst_2 = arith.constant 0.000000e+00 : f32
    %2 = vector.broadcast %cst_2 : f32 to vector<1x18x4xf32>
    %c17 = arith.constant 17 : index
    %c0_3 = arith.constant 0 : index
    %c0_4 = arith.constant 0 : index
    %3 = vector.load %arg11[%c17, %c0_3, %c0_4] : memref<18x18x4xf32, #tpu.memory_space<vmem>>, vector<1x18x4xf32>
    tpu.vector_store %arg11[%c17, %c0_3, %c0_4], %2 {strides = array<i32>} : memref<18x18x4xf32, #tpu.memory_space<vmem>>, vector<1x18x4xf32>,
    %cst_5 = arith.constant 0.000000e+00 : f32
    %4 = vector.broadcast %cst_5 : f32 to vector<18x1x4xf32>
    %c0_6 = arith.constant 0 : index
    %c0_7 = arith.constant 0 : index
    %c0_8 = arith.constant 0 : index
    %5 = vector.load %arg11[%c0_6, %c0_7, %c0_8] : memref<18x18x4xf32, #tpu.memory_space<vmem>>, vector<18x1x4xf32>
    tpu.vector_store %arg11[%c0_6, %c0_7, %c0_8], %4 {strides = array<i32>} : memref<18x18x4xf32, #tpu.memory_space<vmem>>, vector<18x1x4xf32>,
    %cst_9 = arith.constant 0.000000e+00 : f32
    %6 = vector.broadcast %cst_9 : f32 to vector<18x1x4xf32>
    %c0_10 = arith.constant 0 : index
    %c17_11 = arith.constant 17 : index
    %c0_12 = arith.constant 0 : index
    %7 = vector.load %arg11[%c0_10, %c17_11, %c0_12] : memref<18x18x4xf32, #tpu.memory_space<vmem>>, vector<18x1x4xf32>
    tpu.vector_store %arg11[%c0_10, %c17_11, %c0_12], %6 {strides = array<i32>} : memref<18x18x4xf32, #tpu.memory_space<vmem>>, vector<18x1x4xf32>,
    %cst_13 = arith.constant 0.000000e+00 : f32
    %8 = vector.broadcast %cst_13 : f32 to vector<256x4xf32>
    %c0_14 = arith.constant 0 : index
    %c0_15 = arith.constant 0 : index
    %c0_16 = arith.constant 0 : index
    %c0_17 = arith.constant 0 : index
    %9 = vector.load %arg1[%c0_14, %c0_15, %c0_16, %c0_17] : memref<1x18x18x10xf32, #tpu.memory_space<vmem>>, vector<1x16x16x10xf32>
    %10 = vector.shape_cast %9 : vector<1x16x16x10xf32> to vector<16x16x10xf32>
    %11 = vector.shape_cast %10 : vector<16x16x10xf32> to vector<256x10xf32>
    %c0_18 = arith.constant 0 : index
    %c0_19 = arith.constant 0 : index
    %c1 = arith.constant 1 : index
    %c0_20 = arith.constant 0 : index
    %12 = vector.load %arg1[%c0_18, %c0_19, %c1, %c0_20] : memref<1x18x18x10xf32, #tpu.memory_space<vmem>>, vector<1x16x16x10xf32>
    %13 = vector.shape_cast %12 : vector<1x16x16x10xf32> to vector<16x16x10xf32>
    %14 = vector.shape_cast %13 : vector<16x16x10xf32> to vector<256x10xf32>
    %c0_21 = arith.constant 0 : index
    %c0_22 = arith.constant 0 : index
    %c2 = arith.constant 2 : index
    %c0_23 = arith.constant 0 : index
    %15 = vector.load %arg1[%c0_21, %c0_22, %c2, %c0_23] : memref<1x18x18x10xf32, #tpu.memory_space<vmem>>, vector<1x16x16x10xf32>
    %16 = vector.shape_cast %15 : vector<1x16x16x10xf32> to vector<16x16x10xf32>
    %17 = vector.shape_cast %16 : vector<16x16x10xf32> to vector<256x10xf32>
    %18 = tpu.concatenate %11, %14, %17 in 1 : vector<256x10xf32>, vector<256x10xf32>, vector<256x10xf32> -> vector<256x30xf32>
    %19 = arith.truncf %18 : vector<256x30xf32> to vector<256x30xbf16>
    %c0_24 = arith.constant 0 : index
    %c0_25 = arith.constant 0 : index
    %c0_26 = arith.constant 0 : index
    %20 = vector.load %arg2[%c0_24, %c0_25, %c0_26] : memref<3x30x4xbf16, #tpu.memory_space<vmem>>, vector<1x30x4xbf16>
    %21 = vector.shape_cast %20 : vector<1x30x4xbf16> to vector<30x4xbf16>
    %cst_27 = arith.constant dense<0.000000e+00> : vector<256x4xf32>
    %22 = tpu.matmul %19, %21, %cst_27 {dimension_numbers = #tpu.dot_dimension_numbers<[1], [0], [0], [1], [0, 0, 1, 1], [], []>} : vector<256x30xbf16>, vector<30x4xbf16>, vector<256x4xf32> -> vector<256x4xf32>
    %23 = arith.addf %8, %22 : vector<256x4xf32>
    %c0_28 = arith.constant 0 : index
    %c1_29 = arith.constant 1 : index
    %c0_30 = arith.constant 0 : index
    %c0_31 = arith.constant 0 : index
    %24 = vector.load %arg1[%c0_28, %c1_29, %c0_30, %c0_31] : memref<1x18x18x10xf32, #tpu.memory_space<vmem>>, vector<1x16x16x10xf32>
    %25 = vector.shape_cast %24 : vector<1x16x16x10xf32> to vector<16x16x10xf32>
    %26 = vector.shape_cast %25 : vector<16x16x10xf32> to vector<256x10xf32>
    %c0_32 = arith.constant 0 : index
    %c1_33 = arith.constant 1 : index
    %c1_34 = arith.constant 1 : index
    %c0_35 = arith.constant 0 : index
    %27 = vector.load %arg1[%c0_32, %c1_33, %c1_34, %c0_35] : memref<1x18x18x10xf32, #tpu.memory_space<vmem>>, vector<1x16x16x10xf32>
    %28 = vector.shape_cast %27 : vector<1x16x16x10xf32> to vector<16x16x10xf32>
    %29 = vector.shape_cast %28 : vector<16x16x10xf32> to vector<256x10xf32>
    %c0_36 = arith.constant 0 : index
    %c1_37 = arith.constant 1 : index
    %c2_38 = arith.constant 2 : index
    %c0_39 = arith.constant 0 : index
    %30 = vector.load %arg1[%c0_36, %c1_37, %c2_38, %c0_39] : memref<1x18x18x10xf32, #tpu.memory_space<vmem>>, vector<1x16x16x10xf32>
    %31 = vector.shape_cast %30 : vector<1x16x16x10xf32> to vector<16x16x10xf32>
    %32 = vector.shape_cast %31 : vector<16x16x10xf32> to vector<256x10xf32>
    %33 = tpu.concatenate %26, %29, %32 in 1 : vector<256x10xf32>, vector<256x10xf32>, vector<256x10xf32> -> vector<256x30xf32>
    %34 = arith.truncf %33 : vector<256x30xf32> to vector<256x30xbf16>
    %c1_40 = arith.constant 1 : index
    %c0_41 = arith.constant 0 : index
    %c0_42 = arith.constant 0 : index
    %35 = vector.load %arg2[%c1_40, %c0_41, %c0_42] : memref<3x30x4xbf16, #tpu.memory_space<vmem>>, vector<1x30x4xbf16>
    %36 = vector.shape_cast %35 : vector<1x30x4xbf16> to vector<30x4xbf16>
    %cst_43 = arith.constant dense<0.000000e+00> : vector<256x4xf32>
    %37 = tpu.matmul %34, %36, %cst_43 {dimension_numbers = #tpu.dot_dimension_numbers<[1], [0], [0], [1], [0, 0, 1, 1], [], []>} : vector<256x30xbf16>, vector<30x4xbf16>, vector<256x4xf32> -> vector<256x4xf32>
    %38 = arith.addf %23, %37 : vector<256x4xf32>
    %c0_44 = arith.constant 0 : index
    %c2_45 = arith.constant 2 : index
    %c0_46 = arith.constant 0 : index
    %c0_47 = arith.constant 0 : index
    %39 = vector.load %arg1[%c0_44, %c2_45, %c0_46, %c0_47] : memref<1x18x18x10xf32, #tpu.memory_space<vmem>>, vector<1x16x16x10xf32>
    %40 = vector.shape_cast %39 : vector<1x16x16x10xf32> to vector<16x16x10xf32>
    %41 = vector.shape_cast %40 : vector<16x16x10xf32> to vector<256x10xf32>
    %c0_48 = arith.constant 0 : index
    %c2_49 = arith.constant 2 : index
    %c1_50 = arith.constant 1 : index
    %c0_51 = arith.constant 0 : index
    %42 = vector.load %arg1[%c0_48, %c2_49, %c1_50, %c0_51] : memref<1x18x18x10xf32, #tpu.memory_space<vmem>>, vector<1x16x16x10xf32>
    %43 = vector.shape_cast %42 : vector<1x16x16x10xf32> to vector<16x16x10xf32>
    %44 = vector.shape_cast %43 : vector<16x16x10xf32> to vector<256x10xf32>
    %c0_52 = arith.constant 0 : index
    %c2_53 = arith.constant 2 : index
    %c2_54 = arith.constant 2 : index
    %c0_55 = arith.constant 0 : index
    %45 = vector.load %arg1[%c0_52, %c2_53, %c2_54, %c0_55] : memref<1x18x18x10xf32, #tpu.memory_space<vmem>>, vector<1x16x16x10xf32>
    %46 = vector.shape_cast %45 : vector<1x16x16x10xf32> to vector<16x16x10xf32>
    %47 = vector.shape_cast %46 : vector<16x16x10xf32> to vector<256x10xf32>
    %48 = tpu.concatenate %41, %44, %47 in 1 : vector<256x10xf32>, vector<256x10xf32>, vector<256x10xf32> -> vector<256x30xf32>
    %49 = arith.truncf %48 : vector<256x30xf32> to vector<256x30xbf16>
    %c2_56 = arith.constant 2 : index
    %c0_57 = arith.constant 0 : index
    %c0_58 = arith.constant 0 : index
    %50 = vector.load %arg2[%c2_56, %c0_57, %c0_58] : memref<3x30x4xbf16, #tpu.memory_space<vmem>>, vector<1x30x4xbf16>
    %51 = vector.shape_cast %50 : vector<1x30x4xbf16> to vector<30x4xbf16>
    %cst_59 = arith.constant dense<0.000000e+00> : vector<256x4xf32>
    %52 = tpu.matmul %49, %51, %cst_59 {dimension_numbers = #tpu.dot_dimension_numbers<[1], [0], [0], [1], [0, 0, 1, 1], [], []>} : vector<256x30xbf16>, vector<30x4xbf16>, vector<256x4xf32> -> vector<256x4xf32>
    %53 = arith.addf %38, %52 : vector<256x4xf32>
    %c0_60 = arith.constant 0 : index
    %c0_61 = arith.constant 0 : index
    %54 = vector.load %arg3[%c0_60, %c0_61] : memref<1x4xf32, #tpu.memory_space<vmem>>, vector<1x4xf32>
    %55 = vector.broadcast %54 : vector<1x4xf32> to vector<256x4xf32>
    %56 = arith.addf %53, %55 : vector<256x4xf32>
    %cst_62 = arith.constant 0.000000e+00 : f32
    %57 = vector.broadcast %cst_62 : f32 to vector<256x4xf32>
    %58 = arith.cmpf oge, %56, %57 : vector<256x4xf32>
    %cst_63 = arith.constant 1.000000e-01 : f32
    %59 = vector.broadcast %cst_63 : f32 to vector<256x4xf32>
    %60 = arith.mulf %59, %56 : vector<256x4xf32>
    %61 = arith.select %58, %56, %60 : vector<256x4xi1>, vector<256x4xf32>
    %62 = vector.shape_cast %61 : vector<256x4xf32> to vector<16x16x4xf32>
    %c1_64 = arith.constant 1 : index
    %c1_65 = arith.constant 1 : index
    %c0_66 = arith.constant 0 : index
    %63 = vector.load %arg11[%c1_64, %c1_65, %c0_66] : memref<18x18x4xf32, #tpu.memory_space<vmem>>, vector<16x16x4xf32>
    tpu.vector_store %arg11[%c1_64, %c1_65, %c0_66], %62 {strides = array<i32>} : memref<18x18x4xf32, #tpu.memory_space<vmem>>, vector<16x16x4xf32>,
    %cst_67 = arith.constant 0.000000e+00 : f32
    %64 = vector.broadcast %cst_67 : f32 to vector<256x4xf32>
    %c0_68 = arith.constant 0 : index
    %c0_69 = arith.constant 0 : index
    %c0_70 = arith.constant 0 : index
    %65 = vector.load %arg11[%c0_68, %c0_69, %c0_70] : memref<18x18x4xf32, #tpu.memory_space<vmem>>, vector<16x16x4xf32>
    %66 = vector.shape_cast %65 : vector<16x16x4xf32> to vector<256x4xf32>
    %c0_71 = arith.constant 0 : index
    %c1_72 = arith.constant 1 : index
    %c0_73 = arith.constant 0 : index
    %67 = vector.load %arg11[%c0_71, %c1_72, %c0_73] : memref<18x18x4xf32, #tpu.memory_space<vmem>>, vector<16x16x4xf32>
    %68 = vector.shape_cast %67 : vector<16x16x4xf32> to vector<256x4xf32>
    %c0_74 = arith.constant 0 : index
    %c2_75 = arith.constant 2 : index
    %c0_76 = arith.constant 0 : index
    %69 = vector.load %arg11[%c0_74, %c2_75, %c0_76] : memref<18x18x4xf32, #tpu.memory_space<vmem>>, vector<16x16x4xf32>
    %70 = vector.shape_cast %69 : vector<16x16x4xf32> to vector<256x4xf32>
    %71 = tpu.concatenate %66, %68, %70 in 1 : vector<256x4xf32>, vector<256x4xf32>, vector<256x4xf32> -> vector<256x12xf32>
    %72 = arith.truncf %71 : vector<256x12xf32> to vector<256x12xbf16>
    %c0_77 = arith.constant 0 : index
    %c0_78 = arith.constant 0 : index
    %c0_79 = arith.constant 0 : index
    %73 = vector.load %arg4[%c0_77, %c0_78, %c0_79] : memref<3x12x4xbf16, #tpu.memory_space<vmem>>, vector<1x12x4xbf16>
    %74 = vector.shape_cast %73 : vector<1x12x4xbf16> to vector<12x4xbf16>
    %cst_80 = arith.constant dense<0.000000e+00> : vector<256x4xf32>
    %75 = tpu.matmul %72, %74, %cst_80 {dimension_numbers = #tpu.dot_dimension_numbers<[1], [0], [0], [1], [0, 0, 1, 1], [], []>} : vector<256x12xbf16>, vector<12x4xbf16>, vector<256x4xf32> -> vector<256x4xf32>
    %76 = arith.addf %64, %75 : vector<256x4xf32>
    %c1_81 = arith.constant 1 : index
    %c0_82 = arith.constant 0 : index
    %c0_83 = arith.constant 0 : index
    %77 = vector.load %arg11[%c1_81, %c0_82, %c0_83] : memref<18x18x4xf32, #tpu.memory_space<vmem>>, vector<16x16x4xf32>
    %78 = vector.shape_cast %77 : vector<16x16x4xf32> to vector<256x4xf32>
    %c1_84 = arith.constant 1 : index
    %c1_85 = arith.constant 1 : index
    %c0_86 = arith.constant 0 : index
    %79 = vector.load %arg11[%c1_84, %c1_85, %c0_86] : memref<18x18x4xf32, #tpu.memory_space<vmem>>, vector<16x16x4xf32>
    %80 = vector.shape_cast %79 : vector<16x16x4xf32> to vector<256x4xf32>
    %c1_87 = arith.constant 1 : index
    %c2_88 = arith.constant 2 : index
    %c0_89 = arith.constant 0 : index
    %81 = vector.load %arg11[%c1_87, %c2_88, %c0_89] : memref<18x18x4xf32, #tpu.memory_space<vmem>>, vector<16x16x4xf32>
    %82 = vector.shape_cast %81 : vector<16x16x4xf32> to vector<256x4xf32>
    %83 = tpu.concatenate %78, %80, %82 in 1 : vector<256x4xf32>, vector<256x4xf32>, vector<256x4xf32> -> vector<256x12xf32>
    %84 = arith.truncf %83 : vector<256x12xf32> to vector<256x12xbf16>
    %c1_90 = arith.constant 1 : index
    %c0_91 = arith.constant 0 : index
    %c0_92 = arith.constant 0 : index
    %85 = vector.load %arg4[%c1_90, %c0_91, %c0_92] : memref<3x12x4xbf16, #tpu.memory_space<vmem>>, vector<1x12x4xbf16>
    %86 = vector.shape_cast %85 : vector<1x12x4xbf16> to vector<12x4xbf16>
    %cst_93 = arith.constant dense<0.000000e+00> : vector<256x4xf32>
    %87 = tpu.matmul %84, %86, %cst_93 {dimension_numbers = #tpu.dot_dimension_numbers<[1], [0], [0], [1], [0, 0, 1, 1], [], []>} : vector<256x12xbf16>, vector<12x4xbf16>, vector<256x4xf32> -> vector<256x4xf32>
    %88 = arith.addf %76, %87 : vector<256x4xf32>
    %c2_94 = arith.constant 2 : index
    %c0_95 = arith.constant 0 : index
    %c0_96 = arith.constant 0 : index
    %89 = vector.load %arg11[%c2_94, %c0_95, %c0_96] : memref<18x18x4xf32, #tpu.memory_space<vmem>>, vector<16x16x4xf32>
    %90 = vector.shape_cast %89 : vector<16x16x4xf32> to vector<256x4xf32>
    %c2_97 = arith.constant 2 : index
    %c1_98 = arith.constant 1 : index
    %c0_99 = arith.constant 0 : index
    %91 = vector.load %arg11[%c2_97, %c1_98, %c0_99] : memref<18x18x4xf32, #tpu.memory_space<vmem>>, vector<16x16x4xf32>
    %92 = vector.shape_cast %91 : vector<16x16x4xf32> to vector<256x4xf32>
    %c2_100 = arith.constant 2 : index
    %c2_101 = arith.constant 2 : index
    %c0_102 = arith.constant 0 : index
    %93 = vector.load %arg11[%c2_100, %c2_101, %c0_102] : memref<18x18x4xf32, #tpu.memory_space<vmem>>, vector<16x16x4xf32>
    %94 = vector.shape_cast %93 : vector<16x16x4xf32> to vector<256x4xf32>
    %95 = tpu.concatenate %90, %92, %94 in 1 : vector<256x4xf32>, vector<256x4xf32>, vector<256x4xf32> -> vector<256x12xf32>
    %96 = arith.truncf %95 : vector<256x12xf32> to vector<256x12xbf16>
    %c2_103 = arith.constant 2 : index
    %c0_104 = arith.constant 0 : index
    %c0_105 = arith.constant 0 : index
    %97 = vector.load %arg4[%c2_103, %c0_104, %c0_105] : memref<3x12x4xbf16, #tpu.memory_space<vmem>>, vector<1x12x4xbf16>
    %98 = vector.shape_cast %97 : vector<1x12x4xbf16> to vector<12x4xbf16>
    %cst_106 = arith.constant dense<0.000000e+00> : vector<256x4xf32>
    %99 = tpu.matmul %96, %98, %cst_106 {dimension_numbers = #tpu.dot_dimension_numbers<[1], [0], [0], [1], [0, 0, 1, 1], [], []>} : vector<256x12xbf16>, vector<12x4xbf16>, vector<256x4xf32> -> vector<256x4xf32>
    %100 = arith.addf %88, %99 : vector<256x4xf32>
    %c0_107 = arith.constant 0 : index
    %c0_108 = arith.constant 0 : index
    %101 = vector.load %arg5[%c0_107, %c0_108] : memref<1x4xf32, #tpu.memory_space<vmem>>, vector<1x4xf32>
    %102 = vector.broadcast %101 : vector<1x4xf32> to vector<256x4xf32>
    %103 = arith.addf %100, %102 : vector<256x4xf32>
    %cst_109 = arith.constant 0.000000e+00 : f32
    %104 = vector.broadcast %cst_109 : f32 to vector<256x4xf32>
    %105 = arith.cmpf oge, %103, %104 : vector<256x4xf32>
    %cst_110 = arith.constant 1.000000e-01 : f32
    %106 = vector.broadcast %cst_110 : f32 to vector<256x4xf32>
    %107 = arith.mulf %106, %103 : vector<256x4xf32>
    %108 = arith.select %105, %103, %107 : vector<256x4xi1>, vector<256x4xf32>
    %109 = vector.shape_cast %108 : vector<256x4xf32> to vector<16x16x4xf32>
    %c1_111 = arith.constant 1 : index
    %c1_112 = arith.constant 1 : index
    %c0_113 = arith.constant 0 : index
    %110 = vector.load %arg11[%c1_111, %c1_112, %c0_113] : memref<18x18x4xf32, #tpu.memory_space<vmem>>, vector<16x16x4xf32>
    tpu.vector_store %arg11[%c1_111, %c1_112, %c0_113], %109 {strides = array<i32>} : memref<18x18x4xf32, #tpu.memory_space<vmem>>, vector<16x16x4xf32>,
    %cst_114 = arith.constant 0.000000e+00 : f32
    %111 = vector.broadcast %cst_114 : f32 to vector<256x4xf32>
    %c0_115 = arith.constant 0 : index
    %c0_116 = arith.constant 0 : index
    %c0_117 = arith.constant 0 : index
    %112 = vector.load %arg11[%c0_115, %c0_116, %c0_117] : memref<18x18x4xf32, #tpu.memory_space<vmem>>, vector<16x16x4xf32>
    %113 = vector.shape_cast %112 : vector<16x16x4xf32> to vector<256x4xf32>
    %c0_118 = arith.constant 0 : index
    %c1_119 = arith.constant 1 : index
    %c0_120 = arith.constant 0 : index
    %114 = vector.load %arg11[%c0_118, %c1_119, %c0_120] : memref<18x18x4xf32, #tpu.memory_space<vmem>>, vector<16x16x4xf32>
    %115 = vector.shape_cast %114 : vector<16x16x4xf32> to vector<256x4xf32>
    %c0_121 = arith.constant 0 : index
    %c2_122 = arith.constant 2 : index
    %c0_123 = arith.constant 0 : index
    %116 = vector.load %arg11[%c0_121, %c2_122, %c0_123] : memref<18x18x4xf32, #tpu.memory_space<vmem>>, vector<16x16x4xf32>
    %117 = vector.shape_cast %116 : vector<16x16x4xf32> to vector<256x4xf32>
    %118 = tpu.concatenate %113, %115, %117 in 1 : vector<256x4xf32>, vector<256x4xf32>, vector<256x4xf32> -> vector<256x12xf32>
    %119 = arith.truncf %118 : vector<256x12xf32> to vector<256x12xbf16>
    %c0_124 = arith.constant 0 : index
    %c0_125 = arith.constant 0 : index
    %c0_126 = arith.constant 0 : index
    %120 = vector.load %arg6[%c0_124, %c0_125, %c0_126] : memref<3x12x4xbf16, #tpu.memory_space<vmem>>, vector<1x12x4xbf16>
    %121 = vector.shape_cast %120 : vector<1x12x4xbf16> to vector<12x4xbf16>
    %cst_127 = arith.constant dense<0.000000e+00> : vector<256x4xf32>
    %122 = tpu.matmul %119, %121, %cst_127 {dimension_numbers = #tpu.dot_dimension_numbers<[1], [0], [0], [1], [0, 0, 1, 1], [], []>} : vector<256x12xbf16>, vector<12x4xbf16>, vector<256x4xf32> -> vector<256x4xf32>
    %123 = arith.addf %111, %122 : vector<256x4xf32>
    %c1_128 = arith.constant 1 : index
    %c0_129 = arith.constant 0 : index
    %c0_130 = arith.constant 0 : index
    %124 = vector.load %arg11[%c1_128, %c0_129, %c0_130] : memref<18x18x4xf32, #tpu.memory_space<vmem>>, vector<16x16x4xf32>
    %125 = vector.shape_cast %124 : vector<16x16x4xf32> to vector<256x4xf32>
    %c1_131 = arith.constant 1 : index
    %c1_132 = arith.constant 1 : index
    %c0_133 = arith.constant 0 : index
    %126 = vector.load %arg11[%c1_131, %c1_132, %c0_133] : memref<18x18x4xf32, #tpu.memory_space<vmem>>, vector<16x16x4xf32>
    %127 = vector.shape_cast %126 : vector<16x16x4xf32> to vector<256x4xf32>
    %c1_134 = arith.constant 1 : index
    %c2_135 = arith.constant 2 : index
    %c0_136 = arith.constant 0 : index
    %128 = vector.load %arg11[%c1_134, %c2_135, %c0_136] : memref<18x18x4xf32, #tpu.memory_space<vmem>>, vector<16x16x4xf32>
    %129 = vector.shape_cast %128 : vector<16x16x4xf32> to vector<256x4xf32>
    %130 = tpu.concatenate %125, %127, %129 in 1 : vector<256x4xf32>, vector<256x4xf32>, vector<256x4xf32> -> vector<256x12xf32>
    %131 = arith.truncf %130 : vector<256x12xf32> to vector<256x12xbf16>
    %c1_137 = arith.constant 1 : index
    %c0_138 = arith.constant 0 : index
    %c0_139 = arith.constant 0 : index
    %132 = vector.load %arg6[%c1_137, %c0_138, %c0_139] : memref<3x12x4xbf16, #tpu.memory_space<vmem>>, vector<1x12x4xbf16>
    %133 = vector.shape_cast %132 : vector<1x12x4xbf16> to vector<12x4xbf16>
    %cst_140 = arith.constant dense<0.000000e+00> : vector<256x4xf32>
    %134 = tpu.matmul %131, %133, %cst_140 {dimension_numbers = #tpu.dot_dimension_numbers<[1], [0], [0], [1], [0, 0, 1, 1], [], []>} : vector<256x12xbf16>, vector<12x4xbf16>, vector<256x4xf32> -> vector<256x4xf32>
    %135 = arith.addf %123, %134 : vector<256x4xf32>
    %c2_141 = arith.constant 2 : index
    %c0_142 = arith.constant 0 : index
    %c0_143 = arith.constant 0 : index
    %136 = vector.load %arg11[%c2_141, %c0_142, %c0_143] : memref<18x18x4xf32, #tpu.memory_space<vmem>>, vector<16x16x4xf32>
    %137 = vector.shape_cast %136 : vector<16x16x4xf32> to vector<256x4xf32>
    %c2_144 = arith.constant 2 : index
    %c1_145 = arith.constant 1 : index
    %c0_146 = arith.constant 0 : index
    %138 = vector.load %arg11[%c2_144, %c1_145, %c0_146] : memref<18x18x4xf32, #tpu.memory_space<vmem>>, vector<16x16x4xf32>
    %139 = vector.shape_cast %138 : vector<16x16x4xf32> to vector<256x4xf32>
    %c2_147 = arith.constant 2 : index
    %c2_148 = arith.constant 2 : index
    %c0_149 = arith.constant 0 : index
    %140 = vector.load %arg11[%c2_147, %c2_148, %c0_149] : memref<18x18x4xf32, #tpu.memory_space<vmem>>, vector<16x16x4xf32>
    %141 = vector.shape_cast %140 : vector<16x16x4xf32> to vector<256x4xf32>
    %142 = tpu.concatenate %137, %139, %141 in 1 : vector<256x4xf32>, vector<256x4xf32>, vector<256x4xf32> -> vector<256x12xf32>
    %143 = arith.truncf %142 : vector<256x12xf32> to vector<256x12xbf16>
    %c2_150 = arith.constant 2 : index
    %c0_151 = arith.constant 0 : index
    %c0_152 = arith.constant 0 : index
    %144 = vector.load %arg6[%c2_150, %c0_151, %c0_152] : memref<3x12x4xbf16, #tpu.memory_space<vmem>>, vector<1x12x4xbf16>
    %145 = vector.shape_cast %144 : vector<1x12x4xbf16> to vector<12x4xbf16>
    %cst_153 = arith.constant dense<0.000000e+00> : vector<256x4xf32>
    %146 = tpu.matmul %143, %145, %cst_153 {dimension_numbers = #tpu.dot_dimension_numbers<[1], [0], [0], [1], [0, 0, 1, 1], [], []>} : vector<256x12xbf16>, vector<12x4xbf16>, vector<256x4xf32> -> vector<256x4xf32>
    %147 = arith.addf %135, %146 : vector<256x4xf32>
    %c0_154 = arith.constant 0 : index
    %c0_155 = arith.constant 0 : index
    %148 = vector.load %arg7[%c0_154, %c0_155] : memref<1x4xf32, #tpu.memory_space<vmem>>, vector<1x4xf32>
    %149 = vector.broadcast %148 : vector<1x4xf32> to vector<256x4xf32>
    %150 = arith.addf %147, %149 : vector<256x4xf32>
    %cst_156 = arith.constant 0.000000e+00 : f32
    %151 = vector.broadcast %cst_156 : f32 to vector<256x4xf32>
    %152 = arith.cmpf oge, %150, %151 : vector<256x4xf32>
    %cst_157 = arith.constant 1.000000e-01 : f32
    %153 = vector.broadcast %cst_157 : f32 to vector<256x4xf32>
    %154 = arith.mulf %153, %150 : vector<256x4xf32>
    %155 = arith.select %152, %150, %154 : vector<256x4xi1>, vector<256x4xf32>
    %156 = vector.shape_cast %155 : vector<256x4xf32> to vector<16x16x4xf32>
    %c1_158 = arith.constant 1 : index
    %c1_159 = arith.constant 1 : index
    %c0_160 = arith.constant 0 : index
    %157 = vector.load %arg11[%c1_158, %c1_159, %c0_160] : memref<18x18x4xf32, #tpu.memory_space<vmem>>, vector<16x16x4xf32>
    tpu.vector_store %arg11[%c1_158, %c1_159, %c0_160], %156 {strides = array<i32>} : memref<18x18x4xf32, #tpu.memory_space<vmem>>, vector<16x16x4xf32>,
    %cst_161 = arith.constant 0.000000e+00 : f32
    %158 = vector.broadcast %cst_161 : f32 to vector<27x256xf32>
    %c0_162 = arith.constant 0 : index
    %c0_163 = arith.constant 0 : index
    %c0_164 = arith.constant 0 : index
    %159 = vector.load %arg11[%c0_162, %c0_163, %c0_164] : memref<18x18x4xf32, #tpu.memory_space<vmem>>, vector<16x16x4xf32>
    %160 = vector.shape_cast %159 : vector<16x16x4xf32> to vector<256x4xf32>
    %c0_165 = arith.constant 0 : index
    %c1_166 = arith.constant 1 : index
    %c0_167 = arith.constant 0 : index
    %161 = vector.load %arg11[%c0_165, %c1_166, %c0_167] : memref<18x18x4xf32, #tpu.memory_space<vmem>>, vector<16x16x4xf32>
    %162 = vector.shape_cast %161 : vector<16x16x4xf32> to vector<256x4xf32>
    %c0_168 = arith.constant 0 : index
    %c2_169 = arith.constant 2 : index
    %c0_170 = arith.constant 0 : index
    %163 = vector.load %arg11[%c0_168, %c2_169, %c0_170] : memref<18x18x4xf32, #tpu.memory_space<vmem>>, vector<16x16x4xf32>
    %164 = vector.shape_cast %163 : vector<16x16x4xf32> to vector<256x4xf32>
    %165 = tpu.concatenate %160, %162, %164 in 1 : vector<256x4xf32>, vector<256x4xf32>, vector<256x4xf32> -> vector<256x12xf32>
    %166 = arith.truncf %165 : vector<256x12xf32> to vector<256x12xbf16>
    %c0_171 = arith.constant 0 : index
    %c0_172 = arith.constant 0 : index
    %c0_173 = arith.constant 0 : index
    %167 = vector.load %arg8[%c0_171, %c0_172, %c0_173] : memref<3x27x12xbf16, #tpu.memory_space<vmem>>, vector<1x27x12xbf16>
    %168 = vector.shape_cast %167 : vector<1x27x12xbf16> to vector<27x12xbf16>
    %cst_174 = arith.constant dense<0.000000e+00> : vector<27x256xf32>
    %169 = tpu.matmul %168, %166, %cst_174 {dimension_numbers = #tpu.dot_dimension_numbers<[1], [1], [0], [0], [0, 0, 1, 0], [], []>} : vector<27x12xbf16>, vector<256x12xbf16>, vector<27x256xf32> -> vector<27x256xf32>
    %170 = arith.addf %158, %169 : vector<27x256xf32>
    %c1_175 = arith.constant 1 : index
    %c0_176 = arith.constant 0 : index
    %c0_177 = arith.constant 0 : index
    %171 = vector.load %arg11[%c1_175, %c0_176, %c0_177] : memref<18x18x4xf32, #tpu.memory_space<vmem>>, vector<16x16x4xf32>
    %172 = vector.shape_cast %171 : vector<16x16x4xf32> to vector<256x4xf32>
    %c1_178 = arith.constant 1 : index
    %c1_179 = arith.constant 1 : index
    %c0_180 = arith.constant 0 : index
    %173 = vector.load %arg11[%c1_178, %c1_179, %c0_180] : memref<18x18x4xf32, #tpu.memory_space<vmem>>, vector<16x16x4xf32>
    %174 = vector.shape_cast %173 : vector<16x16x4xf32> to vector<256x4xf32>
    %c1_181 = arith.constant 1 : index
    %c2_182 = arith.constant 2 : index
    %c0_183 = arith.constant 0 : index
    %175 = vector.load %arg11[%c1_181, %c2_182, %c0_183] : memref<18x18x4xf32, #tpu.memory_space<vmem>>, vector<16x16x4xf32>
    %176 = vector.shape_cast %175 : vector<16x16x4xf32> to vector<256x4xf32>
    %177 = tpu.concatenate %172, %174, %176 in 1 : vector<256x4xf32>, vector<256x4xf32>, vector<256x4xf32> -> vector<256x12xf32>
    %178 = arith.truncf %177 : vector<256x12xf32> to vector<256x12xbf16>
    %c1_184 = arith.constant 1 : index
    %c0_185 = arith.constant 0 : index
    %c0_186 = arith.constant 0 : index
    %179 = vector.load %arg8[%c1_184, %c0_185, %c0_186] : memref<3x27x12xbf16, #tpu.memory_space<vmem>>, vector<1x27x12xbf16>
    %180 = vector.shape_cast %179 : vector<1x27x12xbf16> to vector<27x12xbf16>
    %cst_187 = arith.constant dense<0.000000e+00> : vector<27x256xf32>
    %181 = tpu.matmul %180, %178, %cst_187 {dimension_numbers = #tpu.dot_dimension_numbers<[1], [1], [0], [0], [0, 0, 1, 0], [], []>} : vector<27x12xbf16>, vector<256x12xbf16>, vector<27x256xf32> -> vector<27x256xf32>
    %182 = arith.addf %170, %181 : vector<27x256xf32>
    %c2_188 = arith.constant 2 : index
    %c0_189 = arith.constant 0 : index
    %c0_190 = arith.constant 0 : index
    %183 = vector.load %arg11[%c2_188, %c0_189, %c0_190] : memref<18x18x4xf32, #tpu.memory_space<vmem>>, vector<16x16x4xf32>
    %184 = vector.shape_cast %183 : vector<16x16x4xf32> to vector<256x4xf32>
    %c2_191 = arith.constant 2 : index
    %c1_192 = arith.constant 1 : index
    %c0_193 = arith.constant 0 : index
    %185 = vector.load %arg11[%c2_191, %c1_192, %c0_193] : memref<18x18x4xf32, #tpu.memory_space<vmem>>, vector<16x16x4xf32>
    %186 = vector.shape_cast %185 : vector<16x16x4xf32> to vector<256x4xf32>
    %c2_194 = arith.constant 2 : index
    %c2_195 = arith.constant 2 : index
    %c0_196 = arith.constant 0 : index
    %187 = vector.load %arg11[%c2_194, %c2_195, %c0_196] : memref<18x18x4xf32, #tpu.memory_space<vmem>>, vector<16x16x4xf32>
    %188 = vector.shape_cast %187 : vector<16x16x4xf32> to vector<256x4xf32>
    %189 = tpu.concatenate %184, %186, %188 in 1 : vector<256x4xf32>, vector<256x4xf32>, vector<256x4xf32> -> vector<256x12xf32>
    %190 = arith.truncf %189 : vector<256x12xf32> to vector<256x12xbf16>
    %c2_197 = arith.constant 2 : index
    %c0_198 = arith.constant 0 : index
    %c0_199 = arith.constant 0 : index
    %191 = vector.load %arg8[%c2_197, %c0_198, %c0_199] : memref<3x27x12xbf16, #tpu.memory_space<vmem>>, vector<1x27x12xbf16>
    %192 = vector.shape_cast %191 : vector<1x27x12xbf16> to vector<27x12xbf16>
    %cst_200 = arith.constant dense<0.000000e+00> : vector<27x256xf32>
    %193 = tpu.matmul %192, %190, %cst_200 {dimension_numbers = #tpu.dot_dimension_numbers<[1], [1], [0], [0], [0, 0, 1, 0], [], []>} : vector<27x12xbf16>, vector<256x12xbf16>, vector<27x256xf32> -> vector<27x256xf32>
    %194 = arith.addf %182, %193 : vector<27x256xf32>
    %c0_201 = arith.constant 0 : index
    %c0_202 = arith.constant 0 : index
    %195 = vector.load %arg9[%c0_201, %c0_202] : memref<27x1xf32, #tpu.memory_space<vmem>>, vector<27x1xf32>
    %196 = vector.broadcast %195 : vector<27x1xf32> to vector<27x256xf32>
    %197 = arith.addf %194, %196 : vector<27x256xf32>
    %c0_203 = arith.constant 0 : index
    %c0_204 = arith.constant 0 : index
    %c0_205 = arith.constant 0 : index
    %198 = vector.load %arg10[%c0_203, %c0_204, %c0_205] : memref<1x27x256xf32, #tpu.memory_space<vmem>>, vector<1x27x256xf32>
    %199 = vector.shape_cast %198 : vector<1x27x256xf32> to vector<27x256xf32>
    %200 = vector.shape_cast %197 : vector<27x256xf32> to vector<1x27x256xf32>
    tpu.vector_store %arg10[%c0_203, %c0_204, %c0_205], %200 {strides = array<i32>} : memref<1x27x256xf32, #tpu.memory_space<vmem>>, vector<1x27x256xf32>,
    return
  }
  func.func @transform_0(%arg0: i32) -> (i32, i32, i32, i32) {
    %c0_i32 = arith.constant 0 : i32
    %c0_i32_0 = arith.constant 0 : i32
    %c0_i32_1 = arith.constant 0 : i32
    %c0_i32_2 = arith.constant 0 : i32
    return %arg0, %c0_i32, %c0_i32_0, %c0_i32_1 : i32, i32, i32, i32
  }
  func.func @transform_1(%arg0: i32) -> (i32, i32, i32) {
    %c0_i32 = arith.constant 0 : i32
    %c0_i32_0 = arith.constant 0 : i32
    %c0_i32_1 = arith.constant 0 : i32
    %c0_i32_2 = arith.constant 0 : i32
    return %c0_i32, %c0_i32_0, %c0_i32_1 : i32, i32, i32
  }
  func.func @transform_2(%arg0: i32) -> (i32, i32) {
    %c0_i32 = arith.constant 0 : i32
    %c0_i32_0 = arith.constant 0 : i32
    %c0_i32_1 = arith.constant 0 : i32
    return %c0_i32, %c0_i32_0 : i32, i32
  }
  func.func @transform_3(%arg0: i32) -> (i32, i32, i32) {
    %c0_i32 = arith.constant 0 : i32
    %c0_i32_0 = arith.constant 0 : i32
    %c0_i32_1 = arith.constant 0 : i32
    %c0_i32_2 = arith.constant 0 : i32
    return %c0_i32, %c0_i32_0, %c0_i32_1 : i32, i32, i32
  }
  func.func @transform_4(%arg0: i32) -> (i32, i32) {
    %c0_i32 = arith.constant 0 : i32
    %c0_i32_0 = arith.constant 0 : i32
    %c0_i32_1 = arith.constant 0 : i32
    return %c0_i32, %c0_i32_0 : i32, i32
  }
  func.func @transform_5(%arg0: i32) -> (i32, i32, i32) {
    %c0_i32 = arith.constant 0 : i32
    %c0_i32_0 = arith.constant 0 : i32
    %c0_i32_1 = arith.constant 0 : i32
    %c0_i32_2 = arith.constant 0 : i32
    return %c0_i32, %c0_i32_0, %c0_i32_1 : i32, i32, i32
  }
  func.func @transform_6(%arg0: i32) -> (i32, i32) {
    %c0_i32 = arith.constant 0 : i32
    %c0_i32_0 = arith.constant 0 : i32
    %c0_i32_1 = arith.constant 0 : i32
    return %c0_i32, %c0_i32_0 : i32, i32
  }
  func.func @transform_7(%arg0: i32) -> (i32, i32, i32) {
    %c0_i32 = arith.constant 0 : i32
    %c0_i32_0 = arith.constant 0 : i32
    %c0_i32_1 = arith.constant 0 : i32
    %c0_i32_2 = arith.constant 0 : i32
    return %c0_i32, %c0_i32_0, %c0_i32_1 : i32, i32, i32
  }
  func.func @transform_8(%arg0: i32) -> (i32, i32) {
    %c0_i32 = arith.constant 0 : i32
    %c0_i32_0 = arith.constant 0 : i32
    %c0_i32_1 = arith.constant 0 : i32
    return %c0_i32, %c0_i32_0 : i32, i32
  }
  func.func @transform_9(%arg0: i32) -> (i32, i32, i32) {
    %c0_i32 = arith.constant 0 : i32
    %c0_i32_0 = arith.constant 0 : i32
    %c0_i32_1 = arith.constant 0 : i32
    return %arg0, %c0_i32, %c0_i32_0 : i32, i32, i32
  }
}

</mosaic_0001>

<llo_original>
// kernel: tpu_custom_call.1
$region0: #{tpu_custom_call.1}
  #allocation0 [shape = 'u32[]', space=smem, size = 0x4, offset = 0x4, fixed_abs, tag = 'smem constant byte address 0x4 - core index']
  #allocation1 [shape = 'u32[144,128]{1,0:T(1,128)}', space=vmem, size = 0x12000, scoped, tag = 'internal scratch']
  #allocation2 [shape = 'f32[18,18,4]{2,1,0:T(8,128)}', space=vmem, size = 0x36000, scoped, tag = 'scratch operand']
  %s0 = inlined_call_operand.vmem [shape: f32[2,18,18,10], index: 0, kind: input, shape index: {}]
  %s1 = inlined_call_operand.vmem [shape: bf16[3,30,4], index: 1, kind: input, shape index: {}]
  %s2 = inlined_call_operand.vmem [shape: f32[1,4], index: 2, kind: input, shape index: {}]
  %s3 = inlined_call_operand.vmem [shape: bf16[3,12,4], index: 3, kind: input, shape index: {}]
  %s4 = inlined_call_operand.vmem [shape: f32[1,4], index: 4, kind: input, shape index: {}]
  %s5 = inlined_call_operand.vmem [shape: bf16[3,12,4], index: 5, kind: input, shape index: {}]
  %s6 = inlined_call_operand.vmem [shape: f32[1,4], index: 6, kind: input, shape index: {}]
  %s7 = inlined_call_operand.vmem [shape: bf16[3,27,12], index: 7, kind: input, shape index: {}]
  %s8 = inlined_call_operand.vmem [shape: f32[27,1], index: 8, kind: input, shape index: {}]
  %s9 = inlined_call_operand.vmem [shape: f32[2,27,256], index: 9, kind: output, shape index: {}]
  %s10 = sld [smem:[#allocation0]]
  $region69: #{tpu_custom_call.1} parent=0
    _
  %s12 = ssub.s32 1, %s10
  %s13 = scalar_select 0, %s12, %s10
  loop: start=0, step=1, limit=4
  $region2: #{tpu_custom_call.1} parent=0 // loop_pre_header
    _
  $region3: #{tpu_custom_call.1} parent=0 // loop_header
    %s15 = sphi 0, %s19
    %p16 = scmp.ge.s32.totalorder %s15, 4
    %s25 = sphi 0, %s27
    %s28 = sphi 0, %s25
    %s29 = sphi 0, %s28
    %s45 = sphi 0, %s29
    %s49 = sphi 0, %s49
    %s51 = sphi 0, %s49
    %s52 = sphi 0, %s51
    %s66 = sphi 0, %s52
    %s70 = sphi 0, %s70
    %s72 = sphi 0, %s70
    %s73 = sphi 0, %s72
    %s87 = sphi 0, %s73
    %s91 = sphi 0, %s91
    %s93 = sphi 0, %s91
    %s94 = sphi 0, %s93
    %s108 = sphi 0, %s94
    %s112 = sphi 0, %s112
    %s114 = sphi 0, %s112
    %s115 = sphi 0, %s114
    %s129 = sphi 0, %s115
    %s133 = sphi 0, %s133
    %s135 = sphi 0, %s133
    %s136 = sphi 0, %s135
    %s150 = sphi 0, %s136
    %s154 = sphi 0, %s154
    %s156 = sphi 0, %s154
    %s157 = sphi 0, %s156
    %s171 = sphi 0, %s157
    %s175 = sphi 0, %s175
    %s177 = sphi 0, %s175
    %s178 = sphi 0, %s177
    %s192 = sphi 0, %s178
    %s196 = sphi 0, %s196
    %s198 = sphi 0, %s196
    %s199 = sphi 0, %s198
    %s213 = sphi 0, %s199
    %s219 = sphi 0, %s221
    %s222 = sphi 0, %s219
    %s223 = sphi 0, %s222
    %s239 = sphi 0, %s223
  $region4: #{tpu_custom_call.1} parent=0 // loop_header_branch
    %18 = sbr.rel (%p16) target = $region8
  $region5: #{tpu_custom_call.1} parent=0 // loop_body
    %s20 = ssub.s32 %s15, 1
    %s21 = ssub.s32 %s15, 2
    %s22 = sadd.s32 %s15, 1
    %s23 = ssub.s32 %s15, %s22
    %p24 = scmp.eq.s32.totalorder %s23, 0
    %s26 = sadd.s32 %s25, 1
    %s27 = scalar_select %p24, %s25, %s26
    %p30 = pneg %p24
    %p31 = scmp.eq.s32.totalorder %s15, 1
    %p32 = por %p30, %p31
    %p33 = scmp.ne.s32.totalorder %s25, %s28
    %p34 = scmp.eq.s32.totalorder %s15, 0
    %p35 = por %p33, %p34
    %p36 = scmp.ne.s32.totalorder %s25, %s28
    %p37 = scmp.eq.s32.totalorder %s20, 1
    %p38 = por %p36, %p37
    %p39 = scmp.ne.s32.totalorder %s28, %s29
    %p40 = scmp.eq.s32.totalorder %s20, 0
    %p41 = por %p39, %p40
    %p42 = scmp.ne.s32.totalorder %s28, %s29
    %p43 = scmp.eq.s32.totalorder %s21, 1
    %p44 = por %p42, %p43
    %p46 = scmp.ne.s32.totalorder %s29, %s45
    %p47 = scmp.eq.s32.totalorder %s21, 0
    %p48 = por %p46, %p47
    %s50 = sadd.s32 %s49, 1
    %p53 = scmp.eq.s32.totalorder %s15, 1
    %p54 = scmp.ne.s32.totalorder %s49, %s51
    %p55 = scmp.eq.s32.totalorder %s15, 0
    %p56 = por %p54, %p55
    %p57 = scmp.ne.s32.totalorder %s49, %s51
    %p58 = scmp.eq.s32.totalorder %s20, 1
    %p59 = por %p57, %p58
    %p60 = scmp.ne.s32.totalorder %s51, %s52
    %p61 = scmp.eq.s32.totalorder %s20, 0
    %p62 = por %p60, %p61
    %p63 = scmp.ne.s32.totalorder %s51, %s52
    %p64 = scmp.eq.s32.totalorder %s21, 1
    %p65 = por %p63, %p64
    %p67 = scmp.ne.s32.totalorder %s52, %s66
    %p68 = scmp.eq.s32.totalorder %s21, 0
    %p69 = por %p67, %p68
    %s71 = sadd.s32 %s70, 1
    %p74 = scmp.eq.s32.totalorder %s15, 1
    %p75 = scmp.ne.s32.totalorder %s70, %s72
    %p76 = scmp.eq.s32.totalorder %s15, 0
    %p77 = por %p75, %p76
    %p78 = scmp.ne.s32.totalorder %s70, %s72
    %p79 = scmp.eq.s32.totalorder %s20, 1
    %p80 = por %p78, %p79
    %p81 = scmp.ne.s32.totalorder %s72, %s73
    %p82 = scmp.eq.s32.totalorder %s20, 0
    %p83 = por %p81, %p82
    %p84 = scmp.ne.s32.totalorder %s72, %s73
    %p85 = scmp.eq.s32.totalorder %s21, 1
    %p86 = por %p84, %p85
    %p88 = scmp.ne.s32.totalorder %s73, %s87
    %p89 = scmp.eq.s32.totalorder %s21, 0
    %p90 = por %p88, %p89
    %s92 = sadd.s32 %s91, 1
    %p95 = scmp.eq.s32.totalorder %s15, 1
    %p96 = scmp.ne.s32.totalorder %s91, %s93
    %p97 = scmp.eq.s32.totalorder %s15, 0
    %p98 = por %p96, %p97
    %p99 = scmp.ne.s32.totalorder %s91, %s93
    %p100 = scmp.eq.s32.totalorder %s20, 1
    %p101 = por %p99, %p100
    %p102 = scmp.ne.s32.totalorder %s93, %s94
    %p103 = scmp.eq.s32.totalorder %s20, 0
    %p104 = por %p102, %p103
    %p105 = scmp.ne.s32.totalorder %s93, %s94
    %p106 = scmp.eq.s32.totalorder %s21, 1
    %p107 = por %p105, %p106
    %p109 = scmp.ne.s32.totalorder %s94, %s108
    %p110 = scmp.eq.s32.totalorder %s21, 0
    %p111 = por %p109, %p110
    %s113 = sadd.s32 %s112, 1
    %p116 = scmp.eq.s32.totalorder %s15, 1
    %p117 = scmp.ne.s32.totalorder %s112, %s114
    %p118 = scmp.eq.s32.totalorder %s15, 0
    %p119 = por %p117, %p118
    %p120 = scmp.ne.s32.totalorder %s112, %s114
    %p121 = scmp.eq.s32.totalorder %s20, 1
    %p122 = por %p120, %p121
    %p123 = scmp.ne.s32.totalorder %s114, %s115
    %p124 = scmp.eq.s32.totalorder %s20, 0
    %p125 = por %p123, %p124
    %p126 = scmp.ne.s32.totalorder %s114, %s115
    %p127 = scmp.eq.s32.totalorder %s21, 1
    %p128 = por %p126, %p127
    %p130 = scmp.ne.s32.totalorder %s115, %s129
    %p131 = scmp.eq.s32.totalorder %s21, 0
    %p132 = por %p130, %p131
    %s134 = sadd.s32 %s133, 1
    %p137 = scmp.eq.s32.totalorder %s15, 1
    %p138 = scmp.ne.s32.totalorder %s133, %s135
    %p139 = scmp.eq.s32.totalorder %s15, 0
    %p140 = por %p138, %p139
    %p141 = scmp.ne.s32.totalorder %s133, %s135
    %p142 = scmp.eq.s32.totalorder %s20, 1
    %p143 = por %p141, %p142
    %p144 = scmp.ne.s32.totalorder %s135, %s136
    %p145 = scmp.eq.s32.totalorder %s20, 0
    %p146 = por %p144, %p145
    %p147 = scmp.ne.s32.totalorder %s135, %s136
    %p148 = scmp.eq.s32.totalorder %s21, 1
    %p149 = por %p147, %p148
    %p151 = scmp.ne.s32.totalorder %s136, %s150
    %p152 = scmp.eq.s32.totalorder %s21, 0
    %p153 = por %p151, %p152
    %s155 = sadd.s32 %s154, 1
    %p158 = scmp.eq.s32.totalorder %s15, 1
    %p159 = scmp.ne.s32.totalorder %s154, %s156
    %p160 = scmp.eq.s32.totalorder %s15, 0
    %p161 = por %p159, %p160
    %p162 = scmp.ne.s32.totalorder %s154, %s156
    %p163 = scmp.eq.s32.totalorder %s20, 1
    %p164 = por %p162, %p163
    %p165 = scmp.ne.s32.totalorder %s156, %s157
    %p166 = scmp.eq.s32.totalorder %s20, 0
    %p167 = por %p165, %p166
    %p168 = scmp.ne.s32.totalorder %s156, %s157
    %p169 = scmp.eq.s32.totalorder %s21, 1
    %p170 = por %p168, %p169
    %p172 = scmp.ne.s32.totalorder %s157, %s171
    %p173 = scmp.eq.s32.totalorder %s21, 0
    %p174 = por %p172, %p173
    %s176 = sadd.s32 %s175, 1
    %p179 = scmp.eq.s32.totalorder %s15, 1
    %p180 = scmp.ne.s32.totalorder %s175, %s177
    %p181 = scmp.eq.s32.totalorder %s15, 0
    %p182 = por %p180, %p181
    %p183 = scmp.ne.s32.totalorder %s175, %s177
    %p184 = scmp.eq.s32.totalorder %s20, 1
    %p185 = por %p183, %p184
    %p186 = scmp.ne.s32.totalorder %s177, %s178
    %p187 = scmp.eq.s32.totalorder %s20, 0
    %p188 = por %p186, %p187
    %p189 = scmp.ne.s32.totalorder %s177, %s178
    %p190 = scmp.eq.s32.totalorder %s21, 1
    %p191 = por %p189, %p190
    %p193 = scmp.ne.s32.totalorder %s178, %s192
    %p194 = scmp.eq.s32.totalorder %s21, 0
    %p195 = por %p193, %p194
    %s197 = sadd.s32 %s196, 1
    %p200 = scmp.eq.s32.totalorder %s15, 1
    %p201 = scmp.ne.s32.totalorder %s196, %s198
    %p202 = scmp.eq.s32.totalorder %s15, 0
    %p203 = por %p201, %p202
    %p204 = scmp.ne.s32.totalorder %s196, %s198
    %p205 = scmp.eq.s32.totalorder %s20, 1
    %p206 = por %p204, %p205
    %p207 = scmp.ne.s32.totalorder %s198, %s199
    %p208 = scmp.eq.s32.totalorder %s20, 0
    %p209 = por %p207, %p208
    %p210 = scmp.ne.s32.totalorder %s198, %s199
    %p211 = scmp.eq.s32.totalorder %s21, 1
    %p212 = por %p210, %p211
    %p214 = scmp.ne.s32.totalorder %s199, %s213
    %p215 = scmp.eq.s32.totalorder %s21, 0
    %p216 = por %p214, %p215
    %s217 = ssub.s32 %s15, %s22
    %p218 = scmp.eq.s32.totalorder %s217, 0
    %s220 = sadd.s32 %s219, 1
    %s221 = scalar_select %p218, %s219, %s220
    %p224 = pneg %p218
    %p225 = scmp.eq.s32.totalorder %s15, 1
    %p226 = por %p224, %p225
    %p227 = scmp.ne.s32.totalorder %s219, %s222
    %p228 = scmp.eq.s32.totalorder %s15, 0
    %p229 = por %p227, %p228
    %p230 = scmp.ne.s32.totalorder %s219, %s222
    %p231 = scmp.eq.s32.totalorder %s20, 1
    %p232 = por %p230, %p231
    %p233 = scmp.ne.s32.totalorder %s222, %s223
    %p234 = scmp.eq.s32.totalorder %s20, 0
    %p235 = por %p233, %p234
    %p236 = scmp.ne.s32.totalorder %s222, %s223
    %p237 = scmp.eq.s32.totalorder %s21, 1
    %p238 = por %p236, %p237
    %p240 = scmp.ne.s32.totalorder %s223, %s239
    %p241 = scmp.eq.s32.totalorder %s21, 0
    %p242 = por %p240, %p241
    %p243 = scmp.le.s32.totalorder 1, %s15
    %p244 = scmp.lt.s32.totalorder %s15, 3
    %p245 = pnand %p243, %p244
    %p246 = pneg %p245
    // Predicated region
    $region9: #{tpu_custom_call.1} parent=5 // pred_check
      _
    $region10: #{tpu_custom_call.1} parent=5 // pred_check_branch
      %248 = sbr.rel (%p245) target = $region12
    $region11: #{tpu_custom_call.1} parent=5 // pred_region
      %s249 = ssub.s32 %s15, 1
      // Predicated region
      $region13: #{tpu_custom_call.1} parent=11 // pred_check
        %p250 = pneg %p62
      $region14: #{tpu_custom_call.1} parent=11 // pred_check_branch
        %252 = sbr.rel (%p250) target = $region16
      $region15: #{tpu_custom_call.1} parent=11 // pred_region
        _
      $region16: #{tpu_custom_call.1} parent=11 // pred_fallthru
        _
      // Predicated region
      $region17: #{tpu_custom_call.1} parent=11 // pred_check
        %p253 = pneg %p83
      $region18: #{tpu_custom_call.1} parent=11 // pred_check_branch
        %255 = sbr.rel (%p253) target = $region20
      $region19: #{tpu_custom_call.1} parent=11 // pred_region
        _
      $region20: #{tpu_custom_call.1} parent=11 // pred_fallthru
        _
      // Predicated region
      $region21: #{tpu_custom_call.1} parent=11 // pred_check
        %p256 = pneg %p104
      $region22: #{tpu_custom_call.1} parent=11 // pred_check_branch
        %258 = sbr.rel (%p256) target = $region24
      $region23: #{tpu_custom_call.1} parent=11 // pred_region
        _
      $region24: #{tpu_custom_call.1} parent=11 // pred_fallthru
        _
      // Predicated region
      $region25: #{tpu_custom_call.1} parent=11 // pred_check
        %p259 = pneg %p125
      $region26: #{tpu_custom_call.1} parent=11 // pred_check_branch
        %261 = sbr.rel (%p259) target = $region28
      $region27: #{tpu_custom_call.1} parent=11 // pred_region
        _
      $region28: #{tpu_custom_call.1} parent=11 // pred_fallthru
        _
      // Predicated region
      $region29: #{tpu_custom_call.1} parent=11 // pred_check
        %p262 = pneg %p146
      $region30: #{tpu_custom_call.1} parent=11 // pred_check_branch
        %264 = sbr.rel (%p262) target = $region32
      $region31: #{tpu_custom_call.1} parent=11 // pred_region
        _
      $region32: #{tpu_custom_call.1} parent=11 // pred_fallthru
        _
      // Predicated region
      $region33: #{tpu_custom_call.1} parent=11 // pred_check
        %p265 = pneg %p167
      $region34: #{tpu_custom_call.1} parent=11 // pred_check_branch
        %267 = sbr.rel (%p265) target = $region36
      $region35: #{tpu_custom_call.1} parent=11 // pred_region
        _
      $region36: #{tpu_custom_call.1} parent=11 // pred_fallthru
        _
      // Predicated region
      $region37: #{tpu_custom_call.1} parent=11 // pred_check
        %p268 = pneg %p188
      $region38: #{tpu_custom_call.1} parent=11 // pred_check_branch
        %270 = sbr.rel (%p268) target = $region40
      $region39: #{tpu_custom_call.1} parent=11 // pred_region
        _
      $region40: #{tpu_custom_call.1} parent=11 // pred_fallthru
        _
      // Predicated region
      $region41: #{tpu_custom_call.1} parent=11 // pred_check
        %p271 = pneg %p209
      $region42: #{tpu_custom_call.1} parent=11 // pred_check_branch
        %273 = sbr.rel (%p271) target = $region44
      $region43: #{tpu_custom_call.1} parent=11 // pred_region
        _
      $region44: #{tpu_custom_call.1} parent=11 // pred_fallthru
        _
    $region12: #{tpu_custom_call.1} parent=5 // pred_fallthru
      _
    %p274 = scmp.lt.s32.totalorder %s15, 2
    // Predicated region
    $region45: #{tpu_custom_call.1} parent=5 // pred_check
      %p275 = pneg %p274
    $region46: #{tpu_custom_call.1} parent=5 // pred_check_branch
      %277 = sbr.rel (%p275) target = $region48
    $region47: #{tpu_custom_call.1} parent=5 // pred_region
      // Predicated region
      $region49: #{tpu_custom_call.1} parent=47 // pred_check
        %p278 = pneg %p35
      $region50: #{tpu_custom_call.1} parent=47 // pred_check_branch
        %280 = sbr.rel (%p278) target = $region52
      $region51: #{tpu_custom_call.1} parent=47 // pred_region
        %p281 = scmp.lt.s32.totalorder %s15, 1
        %s282 = scalar_select %p281, %s15, 1
        %s283 = smul.addr %s282, 54
        %s284 = smul.addr %s283, 8
        %s285 = scalar_lea.vmem %s0, %s284
      $region52: #{tpu_custom_call.1} parent=47 // pred_fallthru
        _
    $region48: #{tpu_custom_call.1} parent=5 // pred_fallthru
      _
    %p286 = scmp.le.s32.totalorder 1, %s15
    %p287 = scmp.lt.s32.totalorder %s15, 3
    %p288 = pnand %p286, %p287
    %p289 = pneg %p288
    // Predicated region
    $region53: #{tpu_custom_call.1} parent=5 // pred_check
      _
    $region54: #{tpu_custom_call.1} parent=5 // pred_check_branch
      %291 = sbr.rel (%p288) target = $region56
    $region55: #{tpu_custom_call.1} parent=5 // pred_region
      %s292 = ssub.s32 %s15, 1
      %p293 = scmp.lt.s32.totalorder %s20, 1
      %s294 = scalar_select %p293, %s20, 1
      %s295 = smul.addr %s294, 54
      %s296 = smul.addr %s295, 8
      %s297 = scalar_lea.vmem %s0, %s296
      %p298 = pneg %p41
      %p299 = pneg %p38
      %p300 = pneg %p62
      %p301 = pneg %p59
      %p302 = pneg %p83
      %p303 = pneg %p80
      %p304 = pneg %p104
      %p305 = pneg %p101
      %p306 = pneg %p125
      %p307 = pneg %p122
      %p308 = pneg %p146
      %p309 = pneg %p143
      %p310 = pneg %p167
      %p311 = pneg %p164
      %p312 = pneg %p188
      %p313 = pneg %p185
      %p314 = pneg %p209
      %p315 = pneg %p206
      %p316 = pneg %p235
      %p317 = pneg %p232
      %p318 = scmp.lt.s32.totalorder %s20, 1
      %s319 = scalar_select %p318, %s20, 1
      %s320 = smul.addr %s319, 8
      %s321 = smul.addr %s320, 8
      %s322 = scalar_lea.vmem %s9, %s321
      %p323 = scmp.lt.s32.totalorder %s20, 1
      %s324 = scalar_select %p323, %s20, 1
      %s325 = smul.addr %s324, 54
      %s326 = smul.addr %s325, 8
      %s327 = scalar_lea.vmem %s0, %s326
      %p328 = scmp.lt.s32.totalorder %s20, 1
      %s329 = scalar_select %p328, %s20, 1
      %s330 = smul.addr %s329, 8
      %s331 = smul.addr %s330, 8
      %s332 = scalar_lea.vmem %s9, %s331
      %vm334 = vcmask 31744
      %335 = vst.msk [vmem:[#allocation2] sm:$0xff] %vm334, 0.0
      %336 = vst.msk [vmem:[#allocation2 + $0x8] sm:$0xff] %vm334, 0.0
      %vm337 = vcmask 25600
      %338 = vst.msk [vmem:[#allocation2 + $0x10] sm:$0x3] %vm337, 0.0
      %s339 = scalar_lea.vmem [#allocation2], 408
      %340 = vst.msk [vmem:[%s339] sm:$0xff] %vm334, 0.0
      %341 = vst.msk [vmem:[%s339 + $0x8] sm:$0xff] %vm334, 0.0
      %342 = vst.msk [vmem:[%s339 + $0x10] sm:$0x3] %vm337, 0.0
      %vm343 = vcmask 24576
      %344 = vst.msk [vmem:[#allocation2] sm:$0x1] %vm343, 0.0
      %345 = vst.msk [vmem:[#allocation2 + $0x18] sm:$0x1] %vm343, 0.0
      %346 = vst.msk [vmem:[#allocation2 + $0x30] sm:$0x1] %vm343, 0.0
      %347 = vst.msk [vmem:[#allocation2 + $0x48] sm:$0x1] %vm343, 0.0
      %348 = vst.msk [vmem:[#allocation2 + $0x60] sm:$0x1] %vm343, 0.0
      %349 = vst.msk [vmem:[#allocation2 + $0x78] sm:$0x1] %vm343, 0.0
      %350 = vst.msk [vmem:[#allocation2 + $0x90] sm:$0x1] %vm343, 0.0
      %351 = vst.msk [vmem:[#allocation2 + $0xa8] sm:$0x1] %vm343, 0.0
      %352 = vst.msk [vmem:[#allocation2 + $0xc0] sm:$0x1] %vm343, 0.0
      %353 = vst.msk [vmem:[#allocation2 + $0xd8] sm:$0x1] %vm343, 0.0
      %354 = vst.msk [vmem:[#allocation2 + $0xf0] sm:$0x1] %vm343, 0.0
      %355 = vst.msk [vmem:[#allocation2 + $0x108] sm:$0x1] %vm343, 0.0
      %356 = vst.msk [vmem:[#allocation2 + $0x120] sm:$0x1] %vm343, 0.0
      %357 = vst.msk [vmem:[#allocation2 + $0x138] sm:$0x1] %vm343, 0.0
      %358 = vst.msk [vmem:[#allocation2 + $0x150] sm:$0x1] %vm343, 0.0
      %359 = vst.msk [vmem:[#allocation2 + $0x168] sm:$0x1] %vm343, 0.0
      %360 = vst.msk [vmem:[#allocation2 + $0x180] sm:$0x1] %vm343, 0.0
      %361 = vst.msk [vmem:[#allocation2 + $0x198] sm:$0x1] %vm343, 0.0
      %362 = vst.msk [vmem:[#allocation2 + $0x11] sm:$0x1] %vm343, 0.0
      %363 = vst.msk [vmem:[#allocation2 + $0x29] sm:$0x1] %vm343, 0.0
      %364 = vst.msk [vmem:[#allocation2 + $0x41] sm:$0x1] %vm343, 0.0
      %365 = vst.msk [vmem:[#allocation2 + $0x59] sm:$0x1] %vm343, 0.0
      %366 = vst.msk [vmem:[#allocation2 + $0x71] sm:$0x1] %vm343, 0.0
      %367 = vst.msk [vmem:[#allocation2 + $0x89] sm:$0x1] %vm343, 0.0
      %368 = vst.msk [vmem:[#allocation2 + $0xa1] sm:$0x1] %vm343, 0.0
      %369 = vst.msk [vmem:[#allocation2 + $0xb9] sm:$0x1] %vm343, 0.0
      %370 = vst.msk [vmem:[#allocation2 + $0xd1] sm:$0x1] %vm343, 0.0
      %371 = vst.msk [vmem:[#allocation2 + $0xe9] sm:$0x1] %vm343, 0.0
      %372 = vst.msk [vmem:[#allocation2 + $0x101] sm:$0x1] %vm343, 0.0
      %373 = vst.msk [vmem:[#allocation2 + $0x119] sm:$0x1] %vm343, 0.0
      %374 = vst.msk [vmem:[#allocation2 + $0x131] sm:$0x1] %vm343, 0.0
      %375 = vst.msk [vmem:[#allocation2 + $0x149] sm:$0x1] %vm343, 0.0
      %376 = vst.msk [vmem:[#allocation2 + $0x161] sm:$0x1] %vm343, 0.0
      %377 = vst.msk [vmem:[#allocation2 + $0x179] sm:$0x1] %vm343, 0.0
      %378 = vst.msk [vmem:[#allocation2 + $0x191] sm:$0x1] %vm343, 0.0
      %379 = vst.msk [vmem:[#allocation2 + $0x1a9] sm:$0x1] %vm343, 0.0
      %v380 = vld [vmem:[%s327] sm:$0xff]
      %v381 = vld [vmem:[%s327 + $0x8] sm:$0xff]
      %v382 = vld [vmem:[%s327 + $0x18] sm:$0xff]
      %v383 = vld [vmem:[%s327 + $0x20] sm:$0xff]
      %v384 = vld [vmem:[%s327 + $0x30] sm:$0xff]
      %v385 = vld [vmem:[%s327 + $0x38] sm:$0xff]
      %v386 = vld [vmem:[%s327 + $0x48] sm:$0xff]
      %v387 = vld [vmem:[%s327 + $0x50] sm:$0xff]
      %v388 = vld [vmem:[%s327 + $0x60] sm:$0xff]
      %v389 = vld [vmem:[%s327 + $0x68] sm:$0xff]
      %v390 = vld [vmem:[%s327 + $0x78] sm:$0xff]
      %v391 = vld [vmem:[%s327 + $0x80] sm:$0xff]
      %v392 = vld [vmem:[%s327 + $0x90] sm:$0xff]
      %v393 = vld [vmem:[%s327 + $0x98] sm:$0xff]
      %v394 = vld [vmem:[%s327 + $0xa8] sm:$0xff]
      %v395 = vld [vmem:[%s327 + $0xb0] sm:$0xff]
      %v396 = vld [vmem:[%s327 + $0xc0] sm:$0xff]
      %v397 = vld [vmem:[%s327 + $0xc8] sm:$0xff]
      %v398 = vld [vmem:[%s327 + $0xd8] sm:$0xff]
      %v399 = vld [vmem:[%s327 + $0xe0] sm:$0xff]
      %v400 = vld [vmem:[%s327 + $0xf0] sm:$0xff]
      %v401 = vld [vmem:[%s327 + $0xf8] sm:$0xff]
      %v402 = vld [vmem:[%s327 + $0x108] sm:$0xff]
      %v403 = vld [vmem:[%s327 + $0x110] sm:$0xff]
      %v404 = vld [vmem:[%s327 + $0x120] sm:$0xff]
      %v405 = vld [vmem:[%s327 + $0x128] sm:$0xff]
      %v406 = vld [vmem:[%s327 + $0x138] sm:$0xff]
      %v407 = vld [vmem:[%s327 + $0x140] sm:$0xff]
      %v408 = vld [vmem:[%s327 + $0x150] sm:$0xff]
      %v409 = vld [vmem:[%s327 + $0x158] sm:$0xff]
      %v410 = vld [vmem:[%s327 + $0x168] sm:$0xff]
      %v411 = vld [vmem:[%s327 + $0x170] sm:$0xff]
      %v412 = vld [vmem:[%s327 + $0x1] sm:$0xff]
      %v413 = vld [vmem:[%s327 + $0x9] sm:$0xff]
      %v414 = vld [vmem:[%s327 + $0x19] sm:$0xff]
      %v415 = vld [vmem:[%s327 + $0x21] sm:$0xff]
      %v416 = vld [vmem:[%s327 + $0x31] sm:$0xff]
      %v417 = vld [vmem:[%s327 + $0x39] sm:$0xff]
      %v418 = vld [vmem:[%s327 + $0x49] sm:$0xff]
      %v419 = vld [vmem:[%s327 + $0x51] sm:$0xff]
      %v420 = vld [vmem:[%s327 + $0x61] sm:$0xff]
      %v421 = vld [vmem:[%s327 + $0x69] sm:$0xff]
      %v422 = vld [vmem:[%s327 + $0x79] sm:$0xff]
      %v423 = vld [vmem:[%s327 + $0x81] sm:$0xff]
      %v424 = vld [vmem:[%s327 + $0x91] sm:$0xff]
      %v425 = vld [vmem:[%s327 + $0x99] sm:$0xff]
      %v426 = vld [vmem:[%s327 + $0xa9] sm:$0xff]
      %v427 = vld [vmem:[%s327 + $0xb1] sm:$0xff]
      %v428 = vld [vmem:[%s327 + $0xc1] sm:$0xff]
      %v429 = vld [vmem:[%s327 + $0xc9] sm:$0xff]
      %v430 = vld [vmem:[%s327 + $0xd9] sm:$0xff]
      %v431 = vld [vmem:[%s327 + $0xe1] sm:$0xff]
      %v432 = vld [vmem:[%s327 + $0xf1] sm:$0xff]
      %v433 = vld [vmem:[%s327 + $0xf9] sm:$0xff]
      %v434 = vld [vmem:[%s327 + $0x109] sm:$0xff]
      %v435 = vld [vmem:[%s327 + $0x111] sm:$0xff]
      %v436 = vld [vmem:[%s327 + $0x121] sm:$0xff]
      %v437 = vld [vmem:[%s327 + $0x129] sm:$0xff]
      %v438 = vld [vmem:[%s327 + $0x139] sm:$0xff]
      %v439 = vld [vmem:[%s327 + $0x141] sm:$0xff]
      %v440 = vld [vmem:[%s327 + $0x151] sm:$0xff]
      %v441 = vld [vmem:[%s327 + $0x159] sm:$0xff]
      %v442 = vld [vmem:[%s327 + $0x169] sm:$0xff]
      %v443 = vld [vmem:[%s327 + $0x171] sm:$0xff]
      %v444 = vld [vmem:[%s327 + $0x2] sm:$0xff]
      %v445 = vld [vmem:[%s327 + $0xa] sm:$0xff]
      %v446 = vld [vmem:[%s327 + $0x1a] sm:$0xff]
      %v447 = vld [vmem:[%s327 + $0x22] sm:$0xff]
      %v448 = vld [vmem:[%s327 + $0x32] sm:$0xff]
      %v449 = vld [vmem:[%s327 + $0x3a] sm:$0xff]
      %v450 = vld [vmem:[%s327 + $0x4a] sm:$0xff]
      %v451 = vld [vmem:[%s327 + $0x52] sm:$0xff]
      %v452 = vld [vmem:[%s327 + $0x62] sm:$0xff]
      %v453 = vld [vmem:[%s327 + $0x6a] sm:$0xff]
      %v454 = vld [vmem:[%s327 + $0x7a] sm:$0xff]
      %v455 = vld [vmem:[%s327 + $0x82] sm:$0xff]
      %v456 = vld [vmem:[%s327 + $0x92] sm:$0xff]
      %v457 = vld [vmem:[%s327 + $0x9a] sm:$0xff]
      %v458 = vld [vmem:[%s327 + $0xaa] sm:$0xff]
      %v459 = vld [vmem:[%s327 + $0xb2] sm:$0xff]
      %v460 = vld [vmem:[%s327 + $0xc2] sm:$0xff]
      %v461 = vld [vmem:[%s327 + $0xca] sm:$0xff]
      %v462 = vld [vmem:[%s327 + $0xda] sm:$0xff]
      %v463 = vld [vmem:[%s327 + $0xe2] sm:$0xff]
      %v464 = vld [vmem:[%s327 + $0xf2] sm:$0xff]
      %v465 = vld [vmem:[%s327 + $0xfa] sm:$0xff]
      %v466 = vld [vmem:[%s327 + $0x10a] sm:$0xff]
      %v467 = vld [vmem:[%s327 + $0x112] sm:$0xff]
      %v468 = vld [vmem:[%s327 + $0x122] sm:$0xff]
      %v469 = vld [vmem:[%s327 + $0x12a] sm:$0xff]
      %v470 = vld [vmem:[%s327 + $0x13a] sm:$0xff]
      %v471 = vld [vmem:[%s327 + $0x142] sm:$0xff]
      %v472 = vld [vmem:[%s327 + $0x152] sm:$0xff]
      %v473 = vld [vmem:[%s327 + $0x15a] sm:$0xff]
      %v474 = vld [vmem:[%s327 + $0x16a] sm:$0xff]
      %v475 = vld [vmem:[%s327 + $0x172] sm:$0xff]
      %508 = vrot.lane.b32.xlu0 %v412, 10
      %v509 = vpop.permute.xlu0 %508
      %510 = vrot.lane.b32.xlu0 %v413, 10
      %v511 = vpop.permute.xlu0 %510
      %512 = vrot.lane.b32.xlu0 %v414, 10
      %v513 = vpop.permute.xlu0 %512
      %514 = vrot.lane.b32.xlu0 %v415, 10
      %v515 = vpop.permute.xlu0 %514
      %516 = vrot.lane.b32.xlu0 %v416, 10
      %v517 = vpop.permute.xlu0 %516
      %518 = vrot.lane.b32.xlu0 %v417, 10
      %v519 = vpop.permute.xlu0 %518
      %520 = vrot.lane.b32.xlu0 %v418, 10
      %v521 = vpop.permute.xlu0 %520
      %522 = vrot.lane.b32.xlu0 %v419, 10
      %v523 = vpop.permute.xlu0 %522
      %524 = vrot.lane.b32.xlu0 %v420, 10
      %v525 = vpop.permute.xlu0 %524
      %526 = vrot.lane.b32.xlu0 %v421, 10
      %v527 = vpop.permute.xlu0 %526
      %528 = vrot.lane.b32.xlu0 %v422, 10
      %v529 = vpop.permute.xlu0 %528
      %530 = vrot.lane.b32.xlu0 %v423, 10
      %v531 = vpop.permute.xlu0 %530
      %532 = vrot.lane.b32.xlu0 %v424, 10
      %v533 = vpop.permute.xlu0 %532
      %534 = vrot.lane.b32.xlu0 %v425, 10
      %v535 = vpop.permute.xlu0 %534
      %536 = vrot.lane.b32.xlu0 %v426, 10
      %v537 = vpop.permute.xlu0 %536
      %538 = vrot.lane.b32.xlu0 %v427, 10
      %v539 = vpop.permute.xlu0 %538
      %540 = vrot.lane.b32.xlu0 %v428, 10
      %v541 = vpop.permute.xlu0 %540
      %542 = vrot.lane.b32.xlu0 %v429, 10
      %v543 = vpop.permute.xlu0 %542
      %544 = vrot.lane.b32.xlu0 %v430, 10
      %v545 = vpop.permute.xlu0 %544
      %546 = vrot.lane.b32.xlu0 %v431, 10
      %v547 = vpop.permute.xlu0 %546
      %548 = vrot.lane.b32.xlu0 %v432, 10
      %v549 = vpop.permute.xlu0 %548
      %550 = vrot.lane.b32.xlu0 %v433, 10
      %v551 = vpop.permute.xlu0 %550
      %552 = vrot.lane.b32.xlu0 %v434, 10
      %v553 = vpop.permute.xlu0 %552
      %554 = vrot.lane.b32.xlu0 %v435, 10
      %v555 = vpop.permute.xlu0 %554
      %556 = vrot.lane.b32.xlu0 %v436, 10
      %v557 = vpop.permute.xlu0 %556
      %558 = vrot.lane.b32.xlu0 %v437, 10
      %v559 = vpop.permute.xlu0 %558
      %560 = vrot.lane.b32.xlu0 %v438, 10
      %v561 = vpop.permute.xlu0 %560
      %562 = vrot.lane.b32.xlu0 %v439, 10
      %v563 = vpop.permute.xlu0 %562
      %564 = vrot.lane.b32.xlu0 %v440, 10
      %v565 = vpop.permute.xlu0 %564
      %566 = vrot.lane.b32.xlu0 %v441, 10
      %v567 = vpop.permute.xlu0 %566
      %568 = vrot.lane.b32.xlu0 %v442, 10
      %v569 = vpop.permute.xlu0 %568
      %570 = vrot.lane.b32.xlu0 %v443, 10
      %v571 = vpop.permute.xlu0 %570
      %636 = vrot.lane.b32.xlu0 %v444, 20
      %v637 = vpop.permute.xlu0 %636
      %638 = vrot.lane.b32.xlu0 %v445, 20
      %v639 = vpop.permute.xlu0 %638
      %640 = vrot.lane.b32.xlu0 %v446, 20
      %v641 = vpop.permute.xlu0 %640
      %642 = vrot.lane.b32.xlu0 %v447, 20
      %v643 = vpop.permute.xlu0 %642
      %644 = vrot.lane.b32.xlu0 %v448, 20
      %v645 = vpop.permute.xlu0 %644
      %646 = vrot.lane.b32.xlu0 %v449, 20
      %v647 = vpop.permute.xlu0 %646
      %648 = vrot.lane.b32.xlu0 %v450, 20
      %v649 = vpop.permute.xlu0 %648
      %650 = vrot.lane.b32.xlu0 %v451, 20
      %v651 = vpop.permute.xlu0 %650
      %652 = vrot.lane.b32.xlu0 %v452, 20
      %v653 = vpop.permute.xlu0 %652
      %654 = vrot.lane.b32.xlu0 %v453, 20
      %v655 = vpop.permute.xlu0 %654
      %656 = vrot.lane.b32.xlu0 %v454, 20
      %v657 = vpop.permute.xlu0 %656
      %658 = vrot.lane.b32.xlu0 %v455, 20
      %v659 = vpop.permute.xlu0 %658
      %660 = vrot.lane.b32.xlu0 %v456, 20
      %v661 = vpop.permute.xlu0 %660
      %662 = vrot.lane.b32.xlu0 %v457, 20
      %v663 = vpop.permute.xlu0 %662
      %664 = vrot.lane.b32.xlu0 %v458, 20
      %v665 = vpop.permute.xlu0 %664
      %666 = vrot.lane.b32.xlu0 %v459, 20
      %v667 = vpop.permute.xlu0 %666
      %668 = vrot.lane.b32.xlu0 %v460, 20
      %v669 = vpop.permute.xlu0 %668
      %670 = vrot.lane.b32.xlu0 %v461, 20
      %v671 = vpop.permute.xlu0 %670
      %672 = vrot.lane.b32.xlu0 %v462, 20
      %v673 = vpop.permute.xlu0 %672
      %674 = vrot.lane.b32.xlu0 %v463, 20
      %v675 = vpop.permute.xlu0 %674
      %676 = vrot.lane.b32.xlu0 %v464, 20
      %v677 = vpop.permute.xlu0 %676
      %678 = vrot.lane.b32.xlu0 %v465, 20
      %v679 = vpop.permute.xlu0 %678
      %680 = vrot.lane.b32.xlu0 %v466, 20
      %v681 = vpop.permute.xlu0 %680
      %682 = vrot.lane.b32.xlu0 %v467, 20
      %v683 = vpop.permute.xlu0 %682
      %684 = vrot.lane.b32.xlu0 %v468, 20
      %v685 = vpop.permute.xlu0 %684
      %686 = vrot.lane.b32.xlu0 %v469, 20
      %v687 = vpop.permute.xlu0 %686
      %688 = vrot.lane.b32.xlu0 %v470, 20
      %v689 = vpop.permute.xlu0 %688
      %690 = vrot.lane.b32.xlu0 %v471, 20
      %v691 = vpop.permute.xlu0 %690
      %692 = vrot.lane.b32.xlu0 %v472, 20
      %v693 = vpop.permute.xlu0 %692
      %694 = vrot.lane.b32.xlu0 %v473, 20
      %v695 = vpop.permute.xlu0 %694
      %696 = vrot.lane.b32.xlu0 %v474, 20
      %v697 = vpop.permute.xlu0 %696
      %698 = vrot.lane.b32.xlu0 %v475, 20
      %v699 = vpop.permute.xlu0 %698
      %vm732 = vcmask 80896
      %v733 = vsel %vm732, %v380, %v509
      %v734 = vsel %vm732, %v381, %v511
      %v735 = vsel %vm732, %v382, %v513
      %v736 = vsel %vm732, %v383, %v515
      %v737 = vsel %vm732, %v384, %v517
      %v738 = vsel %vm732, %v385, %v519
      %v739 = vsel %vm732, %v386, %v521
      %v740 = vsel %vm732, %v387, %v523
      %v741 = vsel %vm732, %v388, %v525
      %v742 = vsel %vm732, %v389, %v527
      %v743 = vsel %vm732, %v390, %v529
      %v744 = vsel %vm732, %v391, %v531
      %v745 = vsel %vm732, %v392, %v533
      %v746 = vsel %vm732, %v393, %v535
      %v747 = vsel %vm732, %v394, %v537
      %v748 = vsel %vm732, %v395, %v539
      %v749 = vsel %vm732, %v396, %v541
      %v750 = vsel %vm732, %v397, %v543
      %v751 = vsel %vm732, %v398, %v545
      %v752 = vsel %vm732, %v399, %v547
      %v753 = vsel %vm732, %v400, %v549
      %v754 = vsel %vm732, %v401, %v551
      %v755 = vsel %vm732, %v402, %v553
      %v756 = vsel %vm732, %v403, %v555
      %v757 = vsel %vm732, %v404, %v557
      %v758 = vsel %vm732, %v405, %v559
      %v759 = vsel %vm732, %v406, %v561
      %v760 = vsel %vm732, %v407, %v563
      %v761 = vsel %vm732, %v408, %v565
      %v762 = vsel %vm732, %v409, %v567
      %v763 = vsel %vm732, %v410, %v569
      %v764 = vsel %vm732, %v411, %v571
      %vm765 = vcmask 162816
      %v766 = vsel %vm765, %v733, %v637
      %v767 = vsel %vm765, %v734, %v639
      %v768 = vsel %vm765, %v735, %v641
      %v769 = vsel %vm765, %v736, %v643
      %v770 = vsel %vm765, %v737, %v645
      %v771 = vsel %vm765, %v738, %v647
      %v772 = vsel %vm765, %v739, %v649
      %v773 = vsel %vm765, %v740, %v651
      %v774 = vsel %vm765, %v741, %v653
      %v775 = vsel %vm765, %v742, %v655
      %v776 = vsel %vm765, %v743, %v657
      %v777 = vsel %vm765, %v744, %v659
      %v778 = vsel %vm765, %v745, %v661
      %v779 = vsel %vm765, %v746, %v663
      %v780 = vsel %vm765, %v747, %v665
      %v781 = vsel %vm765, %v748, %v667
      %v782 = vsel %vm765, %v749, %v669
      %v783 = vsel %vm765, %v750, %v671
      %v784 = vsel %vm765, %v751, %v673
      %v785 = vsel %vm765, %v752, %v675
      %v786 = vsel %vm765, %v753, %v677
      %v787 = vsel %vm765, %v754, %v679
      %v788 = vsel %vm765, %v755, %v681
      %v789 = vsel %vm765, %v756, %v683
      %v790 = vsel %vm765, %v757, %v685
      %v791 = vsel %vm765, %v758, %v687
      %v792 = vsel %vm765, %v759, %v689
      %v793 = vsel %vm765, %v760, %v691
      %v794 = vsel %vm765, %v761, %v693
      %v795 = vsel %vm765, %v762, %v695
      %v796 = vsel %vm765, %v763, %v697
      %v797 = vsel %vm765, %v764, %v699
      %v798 = vpack.c.bf16 %v767, %v766
      %v799 = vpack.c.bf16 %v769, %v768
      %v800 = vpack.c.bf16 %v771, %v770
      %v801 = vpack.c.bf16 %v773, %v772
      %v802 = vpack.c.bf16 %v775, %v774
      %v803 = vpack.c.bf16 %v777, %v776
      %v804 = vpack.c.bf16 %v779, %v778
      %v805 = vpack.c.bf16 %v781, %v780
      %v806 = vpack.c.bf16 %v783, %v782
      %v807 = vpack.c.bf16 %v785, %v784
      %v808 = vpack.c.bf16 %v787, %v786
      %v809 = vpack.c.bf16 %v789, %v788
      %v810 = vpack.c.bf16 %v791, %v790
      %v811 = vpack.c.bf16 %v793, %v792
      %v812 = vpack.c.bf16 %v795, %v794
      %v813 = vpack.c.bf16 %v797, %v796
      %v814 = vld [vmem:[%s1] sm:$0xf]
      %v815 = vld [vmem:[%s1 + $0x4] sm:$0xf]
      %v816 = vld [vmem:[%s1 + $0x8] sm:$0xf]
      %v817 = vld [vmem:[%s1 + $0xc] sm:$0x7]
      %s818 = scalar_lea.vmem %s327, 24
      %v819 = vld [vmem:[%s818] sm:$0xff]
      %v820 = vld [vmem:[%s818 + $0x8] sm:$0xff]
      %v821 = vld [vmem:[%s818 + $0x18] sm:$0xff]
      %v822 = vld [vmem:[%s818 + $0x20] sm:$0xff]
      %v823 = vld [vmem:[%s818 + $0x30] sm:$0xff]
      %v824 = vld [vmem:[%s818 + $0x38] sm:$0xff]
      %v825 = vld [vmem:[%s818 + $0x48] sm:$0xff]
      %v826 = vld [vmem:[%s818 + $0x50] sm:$0xff]
      %v827 = vld [vmem:[%s818 + $0x60] sm:$0xff]
      %v828 = vld [vmem:[%s818 + $0x68] sm:$0xff]
      %v829 = vld [vmem:[%s818 + $0x78] sm:$0xff]
      %v830 = vld [vmem:[%s818 + $0x80] sm:$0xff]
      %v831 = vld [vmem:[%s818 + $0x90] sm:$0xff]
      %v832 = vld [vmem:[%s818 + $0x98] sm:$0xff]
      %v833 = vld [vmem:[%s818 + $0xa8] sm:$0xff]
      %v834 = vld [vmem:[%s818 + $0xb0] sm:$0xff]
      %v835 = vld [vmem:[%s818 + $0xc0] sm:$0xff]
      %v836 = vld [vmem:[%s818 + $0xc8] sm:$0xff]
      %v837 = vld [vmem:[%s818 + $0xd8] sm:$0xff]
      %v838 = vld [vmem:[%s818 + $0xe0] sm:$0xff]
      %v839 = vld [vmem:[%s818 + $0xf0] sm:$0xff]
      %v840 = vld [vmem:[%s818 + $0xf8] sm:$0xff]
      %v841 = vld [vmem:[%s818 + $0x108] sm:$0xff]
      %v842 = vld [vmem:[%s818 + $0x110] sm:$0xff]
      %v843 = vld [vmem:[%s818 + $0x120] sm:$0xff]
      %v844 = vld [vmem:[%s818 + $0x128] sm:$0xff]
      %v845 = vld [vmem:[%s818 + $0x138] sm:$0xff]
      %v846 = vld [vmem:[%s818 + $0x140] sm:$0xff]
      %v847 = vld [vmem:[%s818 + $0x150] sm:$0xff]
      %v848 = vld [vmem:[%s818 + $0x158] sm:$0xff]
      %v849 = vld [vmem:[%s818 + $0x168] sm:$0xff]
      %v850 = vld [vmem:[%s818 + $0x170] sm:$0xff]
      %v851 = vld [vmem:[%s818 + $0x1] sm:$0xff]
      %v852 = vld [vmem:[%s818 + $0x9] sm:$0xff]
      %v853 = vld [vmem:[%s818 + $0x19] sm:$0xff]
      %v854 = vld [vmem:[%s818 + $0x21] sm:$0xff]
      %v855 = vld [vmem:[%s818 + $0x31] sm:$0xff]
      %v856 = vld [vmem:[%s818 + $0x39] sm:$0xff]
      %v857 = vld [vmem:[%s818 + $0x49] sm:$0xff]
      %v858 = vld [vmem:[%s818 + $0x51] sm:$0xff]
      %v859 = vld [vmem:[%s818 + $0x61] sm:$0xff]
      %v860 = vld [vmem:[%s818 + $0x69] sm:$0xff]
      %v861 = vld [vmem:[%s818 + $0x79] sm:$0xff]
      %v862 = vld [vmem:[%s818 + $0x81] sm:$0xff]
      %v863 = vld [vmem:[%s818 + $0x91] sm:$0xff]
      %v864 = vld [vmem:[%s818 + $0x99] sm:$0xff]
      %v865 = vld [vmem:[%s818 + $0xa9] sm:$0xff]
      %v866 = vld [vmem:[%s818 + $0xb1] sm:$0xff]
      %v867 = vld [vmem:[%s818 + $0xc1] sm:$0xff]
      %v868 = vld [vmem:[%s818 + $0xc9] sm:$0xff]
      %v869 = vld [vmem:[%s818 + $0xd9] sm:$0xff]
      %v870 = vld [vmem:[%s818 + $0xe1] sm:$0xff]
      %v871 = vld [vmem:[%s818 + $0xf1] sm:$0xff]
      %v872 = vld [vmem:[%s818 + $0xf9] sm:$0xff]
      %v873 = vld [vmem:[%s818 + $0x109] sm:$0xff]
      %v874 = vld [vmem:[%s818 + $0x111] sm:$0xff]
      %v875 = vld [vmem:[%s818 + $0x121] sm:$0xff]
      %v876 = vld [vmem:[%s818 + $0x129] sm:$0xff]
      %v877 = vld [vmem:[%s818 + $0x139] sm:$0xff]
      %v878 = vld [vmem:[%s818 + $0x141] sm:$0xff]
      %v879 = vld [vmem:[%s818 + $0x151] sm:$0xff]
      %v880 = vld [vmem:[%s818 + $0x159] sm:$0xff]
      %v881 = vld [vmem:[%s818 + $0x169] sm:$0xff]
      %v882 = vld [vmem:[%s818 + $0x171] sm:$0xff]
      %v883 = vld [vmem:[%s818 + $0x2] sm:$0xff]
      %v884 = vld [vmem:[%s818 + $0xa] sm:$0xff]
      %v885 = vld [vmem:[%s818 + $0x1a] sm:$0xff]
      %v886 = vld [vmem:[%s818 + $0x22] sm:$0xff]
      %v887 = vld [vmem:[%s818 + $0x32] sm:$0xff]
      %v888 = vld [vmem:[%s818 + $0x3a] sm:$0xff]
      %v889 = vld [vmem:[%s818 + $0x4a] sm:$0xff]
      %v890 = vld [vmem:[%s818 + $0x52] sm:$0xff]
      %v891 = vld [vmem:[%s818 + $0x62] sm:$0xff]
      %v892 = vld [vmem:[%s818 + $0x6a] sm:$0xff]
      %v893 = vld [vmem:[%s818 + $0x7a] sm:$0xff]
      %v894 = vld [vmem:[%s818 + $0x82] sm:$0xff]
      %v895 = vld [vmem:[%s818 + $0x92] sm:$0xff]
      %v896 = vld [vmem:[%s818 + $0x9a] sm:$0xff]
      %v897 = vld [vmem:[%s818 + $0xaa] sm:$0xff]
      %v898 = vld [vmem:[%s818 + $0xb2] sm:$0xff]
      %v899 = vld [vmem:[%s818 + $0xc2] sm:$0xff]
      %v900 = vld [vmem:[%s818 + $0xca] sm:$0xff]
      %v901 = vld [vmem:[%s818 + $0xda] sm:$0xff]
      %v902 = vld [vmem:[%s818 + $0xe2] sm:$0xff]
      %v903 = vld [vmem:[%s818 + $0xf2] sm:$0xff]
      %v904 = vld [vmem:[%s818 + $0xfa] sm:$0xff]
      %v905 = vld [vmem:[%s818 + $0x10a] sm:$0xff]
      %v906 = vld [vmem:[%s818 + $0x112] sm:$0xff]
      %v907 = vld [vmem:[%s818 + $0x122] sm:$0xff]
      %v908 = vld [vmem:[%s818 + $0x12a] sm:$0xff]
      %v909 = vld [vmem:[%s818 + $0x13a] sm:$0xff]
      %v910 = vld [vmem:[%s818 + $0x142] sm:$0xff]
      %v911 = vld [vmem:[%s818 + $0x152] sm:$0xff]
      %v912 = vld [vmem:[%s818 + $0x15a] sm:$0xff]
      %v913 = vld [vmem:[%s818 + $0x16a] sm:$0xff]
      %v914 = vld [vmem:[%s818 + $0x172] sm:$0xff]
      %947 = vrot.lane.b32.xlu0 %v851, 10
      %v948 = vpop.permute.xlu0 %947
      %949 = vrot.lane.b32.xlu0 %v852, 10
      %v950 = vpop.permute.xlu0 %949
      %951 = vrot.lane.b32.xlu0 %v853, 10
      %v952 = vpop.permute.xlu0 %951
      %953 = vrot.lane.b32.xlu0 %v854, 10
      %v954 = vpop.permute.xlu0 %953
      %955 = vrot.lane.b32.xlu0 %v855, 10
      %v956 = vpop.permute.xlu0 %955
      %957 = vrot.lane.b32.xlu0 %v856, 10
      %v958 = vpop.permute.xlu0 %957
      %959 = vrot.lane.b32.xlu0 %v857, 10
      %v960 = vpop.permute.xlu0 %959
      %961 = vrot.lane.b32.xlu0 %v858, 10
      %v962 = vpop.permute.xlu0 %961
      %963 = vrot.lane.b32.xlu0 %v859, 10
      %v964 = vpop.permute.xlu0 %963
      %965 = vrot.lane.b32.xlu0 %v860, 10
      %v966 = vpop.permute.xlu0 %965
      %967 = vrot.lane.b32.xlu0 %v861, 10
      %v968 = vpop.permute.xlu0 %967
      %969 = vrot.lane.b32.xlu0 %v862, 10
      %v970 = vpop.permute.xlu0 %969
      %971 = vrot.lane.b32.xlu0 %v863, 10
      %v972 = vpop.permute.xlu0 %971
      %973 = vrot.lane.b32.xlu0 %v864, 10
      %v974 = vpop.permute.xlu0 %973
      %975 = vrot.lane.b32.xlu0 %v865, 10
      %v976 = vpop.permute.xlu0 %975
      %977 = vrot.lane.b32.xlu0 %v866, 10
      %v978 = vpop.permute.xlu0 %977
      %979 = vrot.lane.b32.xlu0 %v867, 10
      %v980 = vpop.permute.xlu0 %979
      %981 = vrot.lane.b32.xlu0 %v868, 10
      %v982 = vpop.permute.xlu0 %981
      %983 = vrot.lane.b32.xlu0 %v869, 10
      %v984 = vpop.permute.xlu0 %983
      %985 = vrot.lane.b32.xlu0 %v870, 10
      %v986 = vpop.permute.xlu0 %985
      %987 = vrot.lane.b32.xlu0 %v871, 10
      %v988 = vpop.permute.xlu0 %987
      %989 = vrot.lane.b32.xlu0 %v872, 10
      %v990 = vpop.permute.xlu0 %989
      %991 = vrot.lane.b32.xlu0 %v873, 10
      %v992 = vpop.permute.xlu0 %991
      %993 = vrot.lane.b32.xlu0 %v874, 10
      %v994 = vpop.permute.xlu0 %993
      %995 = vrot.lane.b32.xlu0 %v875, 10
      %v996 = vpop.permute.xlu0 %995
      %997 = vrot.lane.b32.xlu0 %v876, 10
      %v998 = vpop.permute.xlu0 %997
      %999 = vrot.lane.b32.xlu0 %v877, 10
      %v1000 = vpop.permute.xlu0 %999
      %1001 = vrot.lane.b32.xlu0 %v878, 10
      %v1002 = vpop.permute.xlu0 %1001
      %1003 = vrot.lane.b32.xlu0 %v879, 10
      %v1004 = vpop.permute.xlu0 %1003
      %1005 = vrot.lane.b32.xlu0 %v880, 10
      %v1006 = vpop.permute.xlu0 %1005
      %1007 = vrot.lane.b32.xlu0 %v881, 10
      %v1008 = vpop.permute.xlu0 %1007
      %1009 = vrot.lane.b32.xlu0 %v882, 10
      %v1010 = vpop.permute.xlu0 %1009
      %1075 = vrot.lane.b32.xlu0 %v883, 20
      %v1076 = vpop.permute.xlu0 %1075
      %1077 = vrot.lane.b32.xlu0 %v884, 20
      %v1078 = vpop.permute.xlu0 %1077
      %1079 = vrot.lane.b32.xlu0 %v885, 20
      %v1080 = vpop.permute.xlu0 %1079
      %1081 = vrot.lane.b32.xlu0 %v886, 20
      %v1082 = vpop.permute.xlu0 %1081
      %1083 = vrot.lane.b32.xlu0 %v887, 20
      %v1084 = vpop.permute.xlu0 %1083
      %1085 = vrot.lane.b32.xlu0 %v888, 20
      %v1086 = vpop.permute.xlu0 %1085
      %1087 = vrot.lane.b32.xlu0 %v889, 20
      %v1088 = vpop.permute.xlu0 %1087
      %1089 = vrot.lane.b32.xlu0 %v890, 20
      %v1090 = vpop.permute.xlu0 %1089
      %1091 = vrot.lane.b32.xlu0 %v891, 20
      %v1092 = vpop.permute.xlu0 %1091
      %1093 = vrot.lane.b32.xlu0 %v892, 20
      %v1094 = vpop.permute.xlu0 %1093
      %1095 = vrot.lane.b32.xlu0 %v893, 20
      %v1096 = vpop.permute.xlu0 %1095
      %1097 = vrot.lane.b32.xlu0 %v894, 20
      %v1098 = vpop.permute.xlu0 %1097
      %1099 = vrot.lane.b32.xlu0 %v895, 20
      %v1100 = vpop.permute.xlu0 %1099
      %1101 = vrot.lane.b32.xlu0 %v896, 20
      %v1102 = vpop.permute.xlu0 %1101
      %1103 = vrot.lane.b32.xlu0 %v897, 20
      %v1104 = vpop.permute.xlu0 %1103
      %1105 = vrot.lane.b32.xlu0 %v898, 20
      %v1106 = vpop.permute.xlu0 %1105
      %1107 = vrot.lane.b32.xlu0 %v899, 20
      %v1108 = vpop.permute.xlu0 %1107
      %1109 = vrot.lane.b32.xlu0 %v900, 20
      %v1110 = vpop.permute.xlu0 %1109
      %1111 = vrot.lane.b32.xlu0 %v901, 20
      %v1112 = vpop.permute.xlu0 %1111
      %1113 = vrot.lane.b32.xlu0 %v902, 20
      %v1114 = vpop.permute.xlu0 %1113
      %1115 = vrot.lane.b32.xlu0 %v903, 20
      %v1116 = vpop.permute.xlu0 %1115
      %1117 = vrot.lane.b32.xlu0 %v904, 20
      %v1118 = vpop.permute.xlu0 %1117
      %1119 = vrot.lane.b32.xlu0 %v905, 20
      %v1120 = vpop.permute.xlu0 %1119
      %1121 = vrot.lane.b32.xlu0 %v906, 20
      %v1122 = vpop.permute.xlu0 %1121
      %1123 = vrot.lane.b32.xlu0 %v907, 20
      %v1124 = vpop.permute.xlu0 %1123
      %1125 = vrot.lane.b32.xlu0 %v908, 20
      %v1126 = vpop.permute.xlu0 %1125
      %1127 = vrot.lane.b32.xlu0 %v909, 20
      %v1128 = vpop.permute.xlu0 %1127
      %1129 = vrot.lane.b32.xlu0 %v910, 20
      %v1130 = vpop.permute.xlu0 %1129
      %1131 = vrot.lane.b32.xlu0 %v911, 20
      %v1132 = vpop.permute.xlu0 %1131
      %1133 = vrot.lane.b32.xlu0 %v912, 20
      %v1134 = vpop.permute.xlu0 %1133
      %1135 = vrot.lane.b32.xlu0 %v913, 20
      %v1136 = vpop.permute.xlu0 %1135
      %1137 = vrot.lane.b32.xlu0 %v914, 20
      %v1138 = vpop.permute.xlu0 %1137
      %v1171 = vsel %vm732, %v819, %v948
      %v1172 = vsel %vm732, %v820, %v950
      %v1173 = vsel %vm732, %v821, %v952
      %v1174 = vsel %vm732, %v822, %v954
      %v1175 = vsel %vm732, %v823, %v956
      %v1176 = vsel %vm732, %v824, %v958
      %v1177 = vsel %vm732, %v825, %v960
      %v1178 = vsel %vm732, %v826, %v962
      %v1179 = vsel %vm732, %v827, %v964
      %v1180 = vsel %vm732, %v828, %v966
      %v1181 = vsel %vm732, %v829, %v968
      %v1182 = vsel %vm732, %v830, %v970
      %v1183 = vsel %vm732, %v831, %v972
      %v1184 = vsel %vm732, %v832, %v974
      %v1185 = vsel %vm732, %v833, %v976
      %v1186 = vsel %vm732, %v834, %v978
      %v1187 = vsel %vm732, %v835, %v980
      %v1188 = vsel %vm732, %v836, %v982
      %v1189 = vsel %vm732, %v837, %v984
      %v1190 = vsel %vm732, %v838, %v986
      %v1191 = vsel %vm732, %v839, %v988
      %v1192 = vsel %vm732, %v840, %v990
      %v1193 = vsel %vm732, %v841, %v992
      %v1194 = vsel %vm732, %v842, %v994
      %v1195 = vsel %vm732, %v843, %v996
      %v1196 = vsel %vm732, %v844, %v998
      %v1197 = vsel %vm732, %v845, %v1000
      %v1198 = vsel %vm732, %v846, %v1002
      %v1199 = vsel %vm732, %v847, %v1004
      %v1200 = vsel %vm732, %v848, %v1006
      %v1201 = vsel %vm732, %v849, %v1008
      %v1202 = vsel %vm732, %v850, %v1010
      %v1203 = vsel %vm765, %v1171, %v1076
      %v1204 = vsel %vm765, %v1172, %v1078
      %v1205 = vsel %vm765, %v1173, %v1080
      %v1206 = vsel %vm765, %v1174, %v1082
      %v1207 = vsel %vm765, %v1175, %v1084
      %v1208 = vsel %vm765, %v1176, %v1086
      %v1209 = vsel %vm765, %v1177, %v1088
      %v1210 = vsel %vm765, %v1178, %v1090
      %v1211 = vsel %vm765, %v1179, %v1092
      %v1212 = vsel %vm765, %v1180, %v1094
      %v1213 = vsel %vm765, %v1181, %v1096
      %v1214 = vsel %vm765, %v1182, %v1098
      %v1215 = vsel %vm765, %v1183, %v1100
      %v1216 = vsel %vm765, %v1184, %v1102
      %v1217 = vsel %vm765, %v1185, %v1104
      %v1218 = vsel %vm765, %v1186, %v1106
      %v1219 = vsel %vm765, %v1187, %v1108
      %v1220 = vsel %vm765, %v1188, %v1110
      %v1221 = vsel %vm765, %v1189, %v1112
      %v1222 = vsel %vm765, %v1190, %v1114
      %v1223 = vsel %vm765, %v1191, %v1116
      %v1224 = vsel %vm765, %v1192, %v1118
      %v1225 = vsel %vm765, %v1193, %v1120
      %v1226 = vsel %vm765, %v1194, %v1122
      %v1227 = vsel %vm765, %v1195, %v1124
      %v1228 = vsel %vm765, %v1196, %v1126
      %v1229 = vsel %vm765, %v1197, %v1128
      %v1230 = vsel %vm765, %v1198, %v1130
      %v1231 = vsel %vm765, %v1199, %v1132
      %v1232 = vsel %vm765, %v1200, %v1134
      %v1233 = vsel %vm765, %v1201, %v1136
      %v1234 = vsel %vm765, %v1202, %v1138
      %v1235 = vpack.c.bf16 %v1204, %v1203
      %v1236 = vpack.c.bf16 %v1206, %v1205
      %v1237 = vpack.c.bf16 %v1208, %v1207
      %v1238 = vpack.c.bf16 %v1210, %v1209
      %v1239 = vpack.c.bf16 %v1212, %v1211
      %v1240 = vpack.c.bf16 %v1214, %v1213
      %v1241 = vpack.c.bf16 %v1216, %v1215
      %v1242 = vpack.c.bf16 %v1218, %v1217
      %v1243 = vpack.c.bf16 %v1220, %v1219
      %v1244 = vpack.c.bf16 %v1222, %v1221
      %v1245 = vpack.c.bf16 %v1224, %v1223
      %v1246 = vpack.c.bf16 %v1226, %v1225
      %v1247 = vpack.c.bf16 %v1228, %v1227
      %v1248 = vpack.c.bf16 %v1230, %v1229
      %v1249 = vpack.c.bf16 %v1232, %v1231
      %v1250 = vpack.c.bf16 %v1234, %v1233
      %s1251 = scalar_lea.vmem %s1, 16
      %v1252 = vld [vmem:[%s1251] sm:$0xf]
      %v1253 = vld [vmem:[%s1251 + $0x4] sm:$0xf]
      %v1254 = vld [vmem:[%s1251 + $0x8] sm:$0xf]
      %v1255 = vld [vmem:[%s1251 + $0xc] sm:$0x7]
      %v1260 = vunpack.c.l.b16 %v1252
      %v1261 = vunpack.c.l.b16 %v1253
      %v1262 = vunpack.c.l.b16 %v1254
      %v1263 = vunpack.c.l.b16 %v1255
      %v1264 = vpack.c.b16 %v1261, %v1260
      %v1265 = vpack.c.b16 %v1263, %v1262
      %vm1267 = vcmask 244736
      %v1269 = vsel %vm1267, %v1235, 0
      %v1272 = vsel %vm1267, %v1236, 0
      %v1275 = vsel %vm1267, %v1237, 0
      %v1278 = vsel %vm1267, %v1238, 0
      %v1281 = vsel %vm1267, %v1239, 0
      %v1284 = vsel %vm1267, %v1240, 0
      %v1287 = vsel %vm1267, %v1241, 0
      %v1290 = vsel %vm1267, %v1242, 0
      %v1293 = vsel %vm1267, %v1243, 0
      %v1296 = vsel %vm1267, %v1244, 0
      %v1299 = vsel %vm1267, %v1245, 0
      %v1302 = vsel %vm1267, %v1246, 0
      %v1305 = vsel %vm1267, %v1247, 0
      %v1308 = vsel %vm1267, %v1248, 0
      %v1311 = vsel %vm1267, %v1249, 0
      %v1314 = vsel %vm1267, %v1250, 0
      %vm1316 = vcmask 1046528
      %v1318 = vsel %vm1316, %v1265, 0
      %1320 = vmatprep.subr.bf16.mxu0 0
      %1321 = vmatpush1.bf16.msra.mxu0 0
      %1322 = vmatprep.subr.bf16.mxu0 0
      %1323 = vmatpush1.bf16.msra.mxu0 0
      %1324 = vmatprep.subr.bf16.mxu0 0
      %1325 = vmatpush1.bf16.msra.mxu0 0
      %1326 = vmatprep.subr.bf16.mxu0 0
      %1327 = vmatpush1.bf16.msra.mxu0 0
      %1328 = vmatprep.subr.bf16.mxu0 0
      %1329 = vmatpush1.bf16.msra.mxu0 0
      %1330 = vmatprep.subr.bf16.mxu0 0
      %1331 = vmatpush1.bf16.msra.mxu0 0
      %1332 = vmatprep.subr.bf16.mxu0 0
      %1333 = vmatpush1.bf16.msra.mxu0 %v1318
      %1334 = vmatprep.subr.bf16.mxu0 0
      %1335 = vmatpush1.bf16.msra.mxu0 %v1264
      %1336 = vmatprep.subr.bf16.mxu0 0
      %1337 = vmatpush2.bf16.msra.mxu0 0
      %1338 = vmatprep.subr.bf16.mxu0 0
      %1339 = vmatpush2.bf16.msra.mxu0 0
      %1340 = vmatprep.subr.bf16.mxu0 0
      %1341 = vmatpush2.bf16.msra.mxu0 0
      %1342 = vmatprep.subr.bf16.mxu0 0
      %1343 = vmatpush2.bf16.msra.mxu0 0
      %1344 = vmatprep.subr.bf16.mxu0 0
      %1345 = vmatpush2.bf16.msra.mxu0 0
      %1346 = vmatprep.subr.bf16.mxu0 0
      %1347 = vmatpush2.bf16.msra.mxu0 0
      %1348 = vmatprep.subr.bf16.mxu0 0
      %1349 = vmatpush2.bf16.msra.mxu0 0
      %1350 = vmatprep.subr.bf16.mxu0 0
      %1351 = vmatpush2.bf16.msra.mxu0 0
      %1352 = vmatprep.mubr.bf16.mxu0 0
      %1353 = vmatmul.mubr.bf16.gmra.mxu0 %v1269
      %v1354 = vpop.f32.mrf.mxu0
      %v1355 = vadd.f32 0.0, %v1354
      %v1356 = vpop.f32.mrf.mxu0
      %v1357 = vpop.f32.mrf.mxu0
      %v1358 = vadd.f32 0.0, %v1357
      %v1359 = vpop.f32.mrf.mxu0
      %1360 = vmatprep.mubr.bf16.mxu0 0
      %1361 = vmatmul.mubr.bf16.gmra.mxu0 %v1272
      %v1362 = vpop.f32.mrf.mxu0
      %v1363 = vadd.f32 0.0, %v1362
      %v1364 = vpop.f32.mrf.mxu0
      %v1365 = vpop.f32.mrf.mxu0
      %v1366 = vadd.f32 0.0, %v1365
      %v1367 = vpop.f32.mrf.mxu0
      %1368 = vmatprep.mubr.bf16.mxu0 0
      %1369 = vmatmul.mubr.bf16.gmra.mxu0 %v1275
      %v1370 = vpop.f32.mrf.mxu0
      %v1371 = vadd.f32 0.0, %v1370
      %v1372 = vpop.f32.mrf.mxu0
      %v1373 = vpop.f32.mrf.mxu0
      %v1374 = vadd.f32 0.0, %v1373
      %v1375 = vpop.f32.mrf.mxu0
      %1376 = vmatprep.mubr.bf16.mxu0 0
      %1377 = vmatmul.mubr.bf16.gmra.mxu0 %v1278
      %v1378 = vpop.f32.mrf.mxu0
      %v1379 = vadd.f32 0.0, %v1378
      %v1380 = vpop.f32.mrf.mxu0
      %v1381 = vpop.f32.mrf.mxu0
      %v1382 = vadd.f32 0.0, %v1381
      %v1383 = vpop.f32.mrf.mxu0
      %1384 = vmatprep.mubr.bf16.mxu0 0
      %1385 = vmatmul.mubr.bf16.gmra.mxu0 %v1281
      %v1386 = vpop.f32.mrf.mxu0
      %v1387 = vadd.f32 0.0, %v1386
      %v1388 = vpop.f32.mrf.mxu0
      %v1389 = vpop.f32.mrf.mxu0
      %v1390 = vadd.f32 0.0, %v1389
      %v1391 = vpop.f32.mrf.mxu0
      %1392 = vmatprep.mubr.bf16.mxu0 0
      %1393 = vmatmul.mubr.bf16.gmra.mxu0 %v1284
      %v1394 = vpop.f32.mrf.mxu0
      %v1395 = vadd.f32 0.0, %v1394
      %v1396 = vpop.f32.mrf.mxu0
      %v1397 = vpop.f32.mrf.mxu0
      %v1398 = vadd.f32 0.0, %v1397
      %v1399 = vpop.f32.mrf.mxu0
      %1400 = vmatprep.mubr.bf16.mxu0 0
      %1401 = vmatmul.mubr.bf16.gmra.mxu0 %v1287
      %v1402 = vpop.f32.mrf.mxu0
      %v1403 = vadd.f32 0.0, %v1402
      %v1404 = vpop.f32.mrf.mxu0
      %v1405 = vpop.f32.mrf.mxu0
      %v1406 = vadd.f32 0.0, %v1405
      %v1407 = vpop.f32.mrf.mxu0
      %1408 = vmatprep.mubr.bf16.mxu0 0
      %1409 = vmatmul.mubr.bf16.gmra.mxu0 %v1290
      %v1410 = vpop.f32.mrf.mxu0
      %v1411 = vadd.f32 0.0, %v1410
      %v1412 = vpop.f32.mrf.mxu0
      %v1413 = vpop.f32.mrf.mxu0
      %v1414 = vadd.f32 0.0, %v1413
      %v1415 = vpop.f32.mrf.mxu0
      %1416 = vmatprep.mubr.bf16.mxu0 0
      %1417 = vmatmul.mubr.bf16.gmra.mxu0 %v1293
      %v1418 = vpop.f32.mrf.mxu0
      %v1419 = vadd.f32 0.0, %v1418
      %v1420 = vpop.f32.mrf.mxu0
      %v1421 = vpop.f32.mrf.mxu0
      %v1422 = vadd.f32 0.0, %v1421
      %v1423 = vpop.f32.mrf.mxu0
      %1424 = vmatprep.mubr.bf16.mxu0 0
      %1425 = vmatmul.mubr.bf16.gmra.mxu0 %v1296
      %v1426 = vpop.f32.mrf.mxu0
      %v1427 = vadd.f32 0.0, %v1426
      %v1428 = vpop.f32.mrf.mxu0
      %v1429 = vpop.f32.mrf.mxu0
      %v1430 = vadd.f32 0.0, %v1429
      %v1431 = vpop.f32.mrf.mxu0
      %1432 = vmatprep.mubr.bf16.mxu0 0
      %1433 = vmatmul.mubr.bf16.gmra.mxu0 %v1299
      %v1434 = vpop.f32.mrf.mxu0
      %v1435 = vadd.f32 0.0, %v1434
      %v1436 = vpop.f32.mrf.mxu0
      %v1437 = vpop.f32.mrf.mxu0
      %v1438 = vadd.f32 0.0, %v1437
      %v1439 = vpop.f32.mrf.mxu0
      %1440 = vmatprep.mubr.bf16.mxu0 0
      %1441 = vmatmul.mubr.bf16.gmra.mxu0 %v1302
      %v1442 = vpop.f32.mrf.mxu0
      %v1443 = vadd.f32 0.0, %v1442
      %v1444 = vpop.f32.mrf.mxu0
      %v1445 = vpop.f32.mrf.mxu0
      %v1446 = vadd.f32 0.0, %v1445
      %v1447 = vpop.f32.mrf.mxu0
      %1448 = vmatprep.mubr.bf16.mxu0 0
      %1449 = vmatmul.mubr.bf16.gmra.mxu0 %v1305
      %v1450 = vpop.f32.mrf.mxu0
      %v1451 = vadd.f32 0.0, %v1450
      %v1452 = vpop.f32.mrf.mxu0
      %v1453 = vpop.f32.mrf.mxu0
      %v1454 = vadd.f32 0.0, %v1453
      %v1455 = vpop.f32.mrf.mxu0
      %1456 = vmatprep.mubr.bf16.mxu0 0
      %1457 = vmatmul.mubr.bf16.gmra.mxu0 %v1308
      %v1458 = vpop.f32.mrf.mxu0
      %v1459 = vadd.f32 0.0, %v1458
      %v1460 = vpop.f32.mrf.mxu0
      %v1461 = vpop.f32.mrf.mxu0
      %v1462 = vadd.f32 0.0, %v1461
      %v1463 = vpop.f32.mrf.mxu0
      %1464 = vmatprep.mubr.bf16.mxu0 0
      %1465 = vmatmul.mubr.bf16.gmra.mxu0 %v1311
      %v1466 = vpop.f32.mrf.mxu0
      %v1467 = vadd.f32 0.0, %v1466
      %v1468 = vpop.f32.mrf.mxu0
      %v1469 = vpop.f32.mrf.mxu0
      %v1470 = vadd.f32 0.0, %v1469
      %v1471 = vpop.f32.mrf.mxu0
      %1472 = vmatprep.mubr.bf16.mxu0 0
      %1473 = vmatmul.mubr.bf16.gmra.mxu0 %v1314
      %v1474 = vpop.f32.mrf.mxu0
      %v1475 = vadd.f32 0.0, %v1474
      %v1476 = vpop.f32.mrf.mxu0
      %v1477 = vpop.f32.mrf.mxu0
      %v1478 = vadd.f32 0.0, %v1477
      %v1479 = vpop.f32.mrf.mxu0
      %1480 = vdwg.mxu0
      %v1485 = vunpack.c.l.b16 %v814
      %v1486 = vunpack.c.l.b16 %v815
      %v1487 = vunpack.c.l.b16 %v816
      %v1488 = vunpack.c.l.b16 %v817
      %v1489 = vpack.c.b16 %v1486, %v1485
      %v1490 = vpack.c.b16 %v1488, %v1487
      %v1493 = vsel %vm1267, %v798, 0
      %v1496 = vsel %vm1267, %v799, 0
      %v1499 = vsel %vm1267, %v800, 0
      %v1502 = vsel %vm1267, %v801, 0
      %v1505 = vsel %vm1267, %v802, 0
      %v1508 = vsel %vm1267, %v803, 0
      %v1511 = vsel %vm1267, %v804, 0
      %v1514 = vsel %vm1267, %v805, 0
      %v1517 = vsel %vm1267, %v806, 0
      %v1520 = vsel %vm1267, %v807, 0
      %v1523 = vsel %vm1267, %v808, 0
      %v1526 = vsel %vm1267, %v809, 0
      %v1529 = vsel %vm1267, %v810, 0
      %v1532 = vsel %vm1267, %v811, 0
      %v1535 = vsel %vm1267, %v812, 0
      %v1538 = vsel %vm1267, %v813, 0
      %v1541 = vsel %vm1316, %v1490, 0
      %1543 = vmatprep.subr.bf16.mxu0 0
      %1544 = vmatpush1.bf16.msra.mxu0 0
      %1545 = vmatprep.subr.bf16.mxu0 0
      %1546 = vmatpush1.bf16.msra.mxu0 0
      %1547 = vmatprep.subr.bf16.mxu0 0
      %1548 = vmatpush1.bf16.msra.mxu0 0
      %1549 = vmatprep.subr.bf16.mxu0 0
      %1550 = vmatpush1.bf16.msra.mxu0 0
      %1551 = vmatprep.subr.bf16.mxu0 0
      %1552 = vmatpush1.bf16.msra.mxu0 0
      %1553 = vmatprep.subr.bf16.mxu0 0
      %1554 = vmatpush1.bf16.msra.mxu0 0
      %1555 = vmatprep.subr.bf16.mxu0 0
      %1556 = vmatpush1.bf16.msra.mxu0 %v1541
      %1557 = vmatprep.subr.bf16.mxu0 0
      %1558 = vmatpush1.bf16.msra.mxu0 %v1489
      %1559 = vmatprep.subr.bf16.mxu0 0
      %1560 = vmatpush2.bf16.msra.mxu0 0
      %1561 = vmatprep.subr.bf16.mxu0 0
      %1562 = vmatpush2.bf16.msra.mxu0 0
      %1563 = vmatprep.subr.bf16.mxu0 0
      %1564 = vmatpush2.bf16.msra.mxu0 0
      %1565 = vmatprep.subr.bf16.mxu0 0
      %1566 = vmatpush2.bf16.msra.mxu0 0
      %1567 = vmatprep.subr.bf16.mxu0 0
      %1568 = vmatpush2.bf16.msra.mxu0 0
      %1569 = vmatprep.subr.bf16.mxu0 0
      %1570 = vmatpush2.bf16.msra.mxu0 0
      %1571 = vmatprep.subr.bf16.mxu0 0
      %1572 = vmatpush2.bf16.msra.mxu0 0
      %1573 = vmatprep.subr.bf16.mxu0 0
      %1574 = vmatpush2.bf16.msra.mxu0 0
      %1575 = vmatprep.mubr.bf16.mxu0 0
      %1576 = vmatmul.mubr.bf16.gmra.mxu0 %v1493
      %v1577 = vpop.f32.mrf.mxu0
      %v1578 = vadd.f32 %v1355, %v1577
      %v1579 = vpop.f32.mrf.mxu0
      %v1580 = vpop.f32.mrf.mxu0
      %v1581 = vadd.f32 %v1358, %v1580
      %v1582 = vpop.f32.mrf.mxu0
      %1583 = vmatprep.mubr.bf16.mxu0 0
      %1584 = vmatmul.mubr.bf16.gmra.mxu0 %v1496
      %v1585 = vpop.f32.mrf.mxu0
      %v1586 = vadd.f32 %v1363, %v1585
      %v1587 = vpop.f32.mrf.mxu0
      %v1588 = vpop.f32.mrf.mxu0
      %v1589 = vadd.f32 %v1366, %v1588
      %v1590 = vpop.f32.mrf.mxu0
      %1591 = vmatprep.mubr.bf16.mxu0 0
      %1592 = vmatmul.mubr.bf16.gmra.mxu0 %v1499
      %v1593 = vpop.f32.mrf.mxu0
      %v1594 = vadd.f32 %v1371, %v1593
      %v1595 = vpop.f32.mrf.mxu0
      %v1596 = vpop.f32.mrf.mxu0
      %v1597 = vadd.f32 %v1374, %v1596
      %v1598 = vpop.f32.mrf.mxu0
      %1599 = vmatprep.mubr.bf16.mxu0 0
      %1600 = vmatmul.mubr.bf16.gmra.mxu0 %v1502
      %v1601 = vpop.f32.mrf.mxu0
      %v1602 = vadd.f32 %v1379, %v1601
      %v1603 = vpop.f32.mrf.mxu0
      %v1604 = vpop.f32.mrf.mxu0
      %v1605 = vadd.f32 %v1382, %v1604
      %v1606 = vpop.f32.mrf.mxu0
      %1607 = vmatprep.mubr.bf16.mxu0 0
      %1608 = vmatmul.mubr.bf16.gmra.mxu0 %v1505
      %v1609 = vpop.f32.mrf.mxu0
      %v1610 = vadd.f32 %v1387, %v1609
      %v1611 = vpop.f32.mrf.mxu0
      %v1612 = vpop.f32.mrf.mxu0
      %v1613 = vadd.f32 %v1390, %v1612
      %v1614 = vpop.f32.mrf.mxu0
      %1615 = vmatprep.mubr.bf16.mxu0 0
      %1616 = vmatmul.mubr.bf16.gmra.mxu0 %v1508
      %v1617 = vpop.f32.mrf.mxu0
      %v1618 = vadd.f32 %v1395, %v1617
      %v1619 = vpop.f32.mrf.mxu0
      %v1620 = vpop.f32.mrf.mxu0
      %v1621 = vadd.f32 %v1398, %v1620
      %v1622 = vpop.f32.mrf.mxu0
      %1623 = vmatprep.mubr.bf16.mxu0 0
      %1624 = vmatmul.mubr.bf16.gmra.mxu0 %v1511
      %v1625 = vpop.f32.mrf.mxu0
      %v1626 = vadd.f32 %v1403, %v1625
      %v1627 = vpop.f32.mrf.mxu0
      %v1628 = vpop.f32.mrf.mxu0
      %v1629 = vadd.f32 %v1406, %v1628
      %v1630 = vpop.f32.mrf.mxu0
      %1631 = vmatprep.mubr.bf16.mxu0 0
      %1632 = vmatmul.mubr.bf16.gmra.mxu0 %v1514
      %v1633 = vpop.f32.mrf.mxu0
      %v1634 = vadd.f32 %v1411, %v1633
      %v1635 = vpop.f32.mrf.mxu0
      %v1636 = vpop.f32.mrf.mxu0
      %v1637 = vadd.f32 %v1414, %v1636
      %v1638 = vpop.f32.mrf.mxu0
      %1639 = vmatprep.mubr.bf16.mxu0 0
      %1640 = vmatmul.mubr.bf16.gmra.mxu0 %v1517
      %v1641 = vpop.f32.mrf.mxu0
      %v1642 = vadd.f32 %v1419, %v1641
      %v1643 = vpop.f32.mrf.mxu0
      %v1644 = vpop.f32.mrf.mxu0
      %v1645 = vadd.f32 %v1422, %v1644
      %v1646 = vpop.f32.mrf.mxu0
      %1647 = vmatprep.mubr.bf16.mxu0 0
      %1648 = vmatmul.mubr.bf16.gmra.mxu0 %v1520
      %v1649 = vpop.f32.mrf.mxu0
      %v1650 = vadd.f32 %v1427, %v1649
      %v1651 = vpop.f32.mrf.mxu0
      %v1652 = vpop.f32.mrf.mxu0
      %v1653 = vadd.f32 %v1430, %v1652
      %v1654 = vpop.f32.mrf.mxu0
      %1655 = vmatprep.mubr.bf16.mxu0 0
      %1656 = vmatmul.mubr.bf16.gmra.mxu0 %v1523
      %v1657 = vpop.f32.mrf.mxu0
      %v1658 = vadd.f32 %v1435, %v1657
      %v1659 = vpop.f32.mrf.mxu0
      %v1660 = vpop.f32.mrf.mxu0
      %v1661 = vadd.f32 %v1438, %v1660
      %v1662 = vpop.f32.mrf.mxu0
      %1663 = vmatprep.mubr.bf16.mxu0 0
      %1664 = vmatmul.mubr.bf16.gmra.mxu0 %v1526
      %v1665 = vpop.f32.mrf.mxu0
      %v1666 = vadd.f32 %v1443, %v1665
      %v1667 = vpop.f32.mrf.mxu0
      %v1668 = vpop.f32.mrf.mxu0
      %v1669 = vadd.f32 %v1446, %v1668
      %v1670 = vpop.f32.mrf.mxu0
      %1671 = vmatprep.mubr.bf16.mxu0 0
      %1672 = vmatmul.mubr.bf16.gmra.mxu0 %v1529
      %v1673 = vpop.f32.mrf.mxu0
      %v1674 = vadd.f32 %v1451, %v1673
      %v1675 = vpop.f32.mrf.mxu0
      %v1676 = vpop.f32.mrf.mxu0
      %v1677 = vadd.f32 %v1454, %v1676
      %v1678 = vpop.f32.mrf.mxu0
      %1679 = vmatprep.mubr.bf16.mxu0 0
      %1680 = vmatmul.mubr.bf16.gmra.mxu0 %v1532
      %v1681 = vpop.f32.mrf.mxu0
      %v1682 = vadd.f32 %v1459, %v1681
      %v1683 = vpop.f32.mrf.mxu0
      %v1684 = vpop.f32.mrf.mxu0
      %v1685 = vadd.f32 %v1462, %v1684
      %v1686 = vpop.f32.mrf.mxu0
      %1687 = vmatprep.mubr.bf16.mxu0 0
      %1688 = vmatmul.mubr.bf16.gmra.mxu0 %v1535
      %v1689 = vpop.f32.mrf.mxu0
      %v1690 = vadd.f32 %v1467, %v1689
      %v1691 = vpop.f32.mrf.mxu0
      %v1692 = vpop.f32.mrf.mxu0
      %v1693 = vadd.f32 %v1470, %v1692
      %v1694 = vpop.f32.mrf.mxu0
      %1695 = vmatprep.mubr.bf16.mxu0 0
      %1696 = vmatmul.mubr.bf16.gmra.mxu0 %v1538
      %v1697 = vpop.f32.mrf.mxu0
      %v1698 = vadd.f32 %v1475, %v1697
      %v1699 = vpop.f32.mrf.mxu0
      %v1700 = vpop.f32.mrf.mxu0
      %v1701 = vadd.f32 %v1478, %v1700
      %v1702 = vpop.f32.mrf.mxu0
      %1703 = vdwg.mxu0
      %s1704 = scalar_lea.vmem %s327, 48
      %v1705 = vld [vmem:[%s1704] sm:$0xff]
      %v1706 = vld [vmem:[%s1704 + $0x8] sm:$0xff]
      %v1707 = vld [vmem:[%s1704 + $0x18] sm:$0xff]
      %v1708 = vld [vmem:[%s1704 + $0x20] sm:$0xff]
      %v1709 = vld [vmem:[%s1704 + $0x30] sm:$0xff]
      %v1710 = vld [vmem:[%s1704 + $0x38] sm:$0xff]
      %v1711 = vld [vmem:[%s1704 + $0x48] sm:$0xff]
      %v1712 = vld [vmem:[%s1704 + $0x50] sm:$0xff]
      %v1713 = vld [vmem:[%s1704 + $0x60] sm:$0xff]
      %v1714 = vld [vmem:[%s1704 + $0x68] sm:$0xff]
      %v1715 = vld [vmem:[%s1704 + $0x78] sm:$0xff]
      %v1716 = vld [vmem:[%s1704 + $0x80] sm:$0xff]
      %v1717 = vld [vmem:[%s1704 + $0x90] sm:$0xff]
      %v1718 = vld [vmem:[%s1704 + $0x98] sm:$0xff]
      %v1719 = vld [vmem:[%s1704 + $0xa8] sm:$0xff]
      %v1720 = vld [vmem:[%s1704 + $0xb0] sm:$0xff]
      %v1721 = vld [vmem:[%s1704 + $0xc0] sm:$0xff]
      %v1722 = vld [vmem:[%s1704 + $0xc8] sm:$0xff]
      %v1723 = vld [vmem:[%s1704 + $0xd8] sm:$0xff]
      %v1724 = vld [vmem:[%s1704 + $0xe0] sm:$0xff]
      %v1725 = vld [vmem:[%s1704 + $0xf0] sm:$0xff]
      %v1726 = vld [vmem:[%s1704 + $0xf8] sm:$0xff]
      %v1727 = vld [vmem:[%s1704 + $0x108] sm:$0xff]
      %v1728 = vld [vmem:[%s1704 + $0x110] sm:$0xff]
      %v1729 = vld [vmem:[%s1704 + $0x120] sm:$0xff]
      %v1730 = vld [vmem:[%s1704 + $0x128] sm:$0xff]
      %v1731 = vld [vmem:[%s1704 + $0x138] sm:$0xff]
      %v1732 = vld [vmem:[%s1704 + $0x140] sm:$0xff]
      %v1733 = vld [vmem:[%s1704 + $0x150] sm:$0xff]
      %v1734 = vld [vmem:[%s1704 + $0x158] sm:$0xff]
      %v1735 = vld [vmem:[%s1704 + $0x168] sm:$0xff]
      %v1736 = vld [vmem:[%s1704 + $0x170] sm:$0xff]
      %v1737 = vld [vmem:[%s1704 + $0x1] sm:$0xff]
      %v1738 = vld [vmem:[%s1704 + $0x9] sm:$0xff]
      %v1739 = vld [vmem:[%s1704 + $0x19] sm:$0xff]
      %v1740 = vld [vmem:[%s1704 + $0x21] sm:$0xff]
      %v1741 = vld [vmem:[%s1704 + $0x31] sm:$0xff]
      %v1742 = vld [vmem:[%s1704 + $0x39] sm:$0xff]
      %v1743 = vld [vmem:[%s1704 + $0x49] sm:$0xff]
      %v1744 = vld [vmem:[%s1704 + $0x51] sm:$0xff]
      %v1745 = vld [vmem:[%s1704 + $0x61] sm:$0xff]
      %v1746 = vld [vmem:[%s1704 + $0x69] sm:$0xff]
      %v1747 = vld [vmem:[%s1704 + $0x79] sm:$0xff]
      %v1748 = vld [vmem:[%s1704 + $0x81] sm:$0xff]
      %v1749 = vld [vmem:[%s1704 + $0x91] sm:$0xff]
      %v1750 = vld [vmem:[%s1704 + $0x99] sm:$0xff]
      %v1751 = vld [vmem:[%s1704 + $0xa9] sm:$0xff]
      %v1752 = vld [vmem:[%s1704 + $0xb1] sm:$0xff]
      %v1753 = vld [vmem:[%s1704 + $0xc1] sm:$0xff]
      %v1754 = vld [vmem:[%s1704 + $0xc9] sm:$0xff]
      %v1755 = vld [vmem:[%s1704 + $0xd9] sm:$0xff]
      %v1756 = vld [vmem:[%s1704 + $0xe1] sm:$0xff]
      %v1757 = vld [vmem:[%s1704 + $0xf1] sm:$0xff]
      %v1758 = vld [vmem:[%s1704 + $0xf9] sm:$0xff]
      %v1759 = vld [vmem:[%s1704 + $0x109] sm:$0xff]
      %v1760 = vld [vmem:[%s1704 + $0x111] sm:$0xff]
      %v1761 = vld [vmem:[%s1704 + $0x121] sm:$0xff]
      %v1762 = vld [vmem:[%s1704 + $0x129] sm:$0xff]
      %v1763 = vld [vmem:[%s1704 + $0x139] sm:$0xff]
      %v1764 = vld [vmem:[%s1704 + $0x141] sm:$0xff]
      %v1765 = vld [vmem:[%s1704 + $0x151] sm:$0xff]
      %v1766 = vld [vmem:[%s1704 + $0x159] sm:$0xff]
      %v1767 = vld [vmem:[%s1704 + $0x169] sm:$0xff]
      %v1768 = vld [vmem:[%s1704 + $0x171] sm:$0xff]
      %v1769 = vld [vmem:[%s1704 + $0x2] sm:$0xff]
      %v1770 = vld [vmem:[%s1704 + $0xa] sm:$0xff]
      %v1771 = vld [vmem:[%s1704 + $0x1a] sm:$0xff]
      %v1772 = vld [vmem:[%s1704 + $0x22] sm:$0xff]
      %v1773 = vld [vmem:[%s1704 + $0x32] sm:$0xff]
      %v1774 = vld [vmem:[%s1704 + $0x3a] sm:$0xff]
      %v1775 = vld [vmem:[%s1704 + $0x4a] sm:$0xff]
      %v1776 = vld [vmem:[%s1704 + $0x52] sm:$0xff]
      %v1777 = vld [vmem:[%s1704 + $0x62] sm:$0xff]
      %v1778 = vld [vmem:[%s1704 + $0x6a] sm:$0xff]
      %v1779 = vld [vmem:[%s1704 + $0x7a] sm:$0xff]
      %v1780 = vld [vmem:[%s1704 + $0x82] sm:$0xff]
      %v1781 = vld [vmem:[%s1704 + $0x92] sm:$0xff]
      %v1782 = vld [vmem:[%s1704 + $0x9a] sm:$0xff]
      %v1783 = vld [vmem:[%s1704 + $0xaa] sm:$0xff]
      %v1784 = vld [vmem:[%s1704 + $0xb2] sm:$0xff]
      %v1785 = vld [vmem:[%s1704 + $0xc2] sm:$0xff]
      %v1786 = vld [vmem:[%s1704 + $0xca] sm:$0xff]
      %v1787 = vld [vmem:[%s1704 + $0xda] sm:$0xff]
      %v1788 = vld [vmem:[%s1704 + $0xe2] sm:$0xff]
      %v1789 = vld [vmem:[%s1704 + $0xf2] sm:$0xff]
      %v1790 = vld [vmem:[%s1704 + $0xfa] sm:$0xff]
      %v1791 = vld [vmem:[%s1704 + $0x10a] sm:$0xff]
      %v1792 = vld [vmem:[%s1704 + $0x112] sm:$0xff]
      %v1793 = vld [vmem:[%s1704 + $0x122] sm:$0xff]
      %v1794 = vld [vmem:[%s1704 + $0x12a] sm:$0xff]
      %v1795 = vld [vmem:[%s1704 + $0x13a] sm:$0xff]
      %v1796 = vld [vmem:[%s1704 + $0x142] sm:$0xff]
      %v1797 = vld [vmem:[%s1704 + $0x152] sm:$0xff]
      %v1798 = vld [vmem:[%s1704 + $0x15a] sm:$0xff]
      %v1799 = vld [vmem:[%s1704 + $0x16a] sm:$0xff]
      %v1800 = vld [vmem:[%s1704 + $0x172] sm:$0xff]
      %1833 = vrot.lane.b32.xlu0 %v1737, 10
      %v1834 = vpop.permute.xlu0 %1833
      %1835 = vrot.lane.b32.xlu0 %v1738, 10
      %v1836 = vpop.permute.xlu0 %1835
      %1837 = vrot.lane.b32.xlu0 %v1739, 10
      %v1838 = vpop.permute.xlu0 %1837
      %1839 = vrot.lane.b32.xlu0 %v1740, 10
      %v1840 = vpop.permute.xlu0 %1839
      %1841 = vrot.lane.b32.xlu0 %v1741, 10
      %v1842 = vpop.permute.xlu0 %1841
      %1843 = vrot.lane.b32.xlu0 %v1742, 10
      %v1844 = vpop.permute.xlu0 %1843
      %1845 = vrot.lane.b32.xlu0 %v1743, 10
      %v1846 = vpop.permute.xlu0 %1845
      %1847 = vrot.lane.b32.xlu0 %v1744, 10
      %v1848 = vpop.permute.xlu0 %1847
      %1849 = vrot.lane.b32.xlu0 %v1745, 10
      %v1850 = vpop.permute.xlu0 %1849
      %1851 = vrot.lane.b32.xlu0 %v1746, 10
      %v1852 = vpop.permute.xlu0 %1851
      %1853 = vrot.lane.b32.xlu0 %v1747, 10
      %v1854 = vpop.permute.xlu0 %1853
      %1855 = vrot.lane.b32.xlu0 %v1748, 10
      %v1856 = vpop.permute.xlu0 %1855
      %1857 = vrot.lane.b32.xlu0 %v1749, 10
      %v1858 = vpop.permute.xlu0 %1857
      %1859 = vrot.lane.b32.xlu0 %v1750, 10
      %v1860 = vpop.permute.xlu0 %1859
      %1861 = vrot.lane.b32.xlu0 %v1751, 10
      %v1862 = vpop.permute.xlu0 %1861
      %1863 = vrot.lane.b32.xlu0 %v1752, 10
      %v1864 = vpop.permute.xlu0 %1863
      %1865 = vrot.lane.b32.xlu0 %v1753, 10
      %v1866 = vpop.permute.xlu0 %1865
      %1867 = vrot.lane.b32.xlu0 %v1754, 10
      %v1868 = vpop.permute.xlu0 %1867
      %1869 = vrot.lane.b32.xlu0 %v1755, 10
      %v1870 = vpop.permute.xlu0 %1869
      %1871 = vrot.lane.b32.xlu0 %v1756, 10
      %v1872 = vpop.permute.xlu0 %1871
      %1873 = vrot.lane.b32.xlu0 %v1757, 10
      %v1874 = vpop.permute.xlu0 %1873
      %1875 = vrot.lane.b32.xlu0 %v1758, 10
      %v1876 = vpop.permute.xlu0 %1875
      %1877 = vrot.lane.b32.xlu0 %v1759, 10
      %v1878 = vpop.permute.xlu0 %1877
      %1879 = vrot.lane.b32.xlu0 %v1760, 10
      %v1880 = vpop.permute.xlu0 %1879
      %1881 = vrot.lane.b32.xlu0 %v1761, 10
      %v1882 = vpop.permute.xlu0 %1881
      %1883 = vrot.lane.b32.xlu0 %v1762, 10
      %v1884 = vpop.permute.xlu0 %1883
      %1885 = vrot.lane.b32.xlu0 %v1763, 10
      %v1886 = vpop.permute.xlu0 %1885
      %1887 = vrot.lane.b32.xlu0 %v1764, 10
      %v1888 = vpop.permute.xlu0 %1887
      %1889 = vrot.lane.b32.xlu0 %v1765, 10
      %v1890 = vpop.permute.xlu0 %1889
      %1891 = vrot.lane.b32.xlu0 %v1766, 10
      %v1892 = vpop.permute.xlu0 %1891
      %1893 = vrot.lane.b32.xlu0 %v1767, 10
      %v1894 = vpop.permute.xlu0 %1893
      %1895 = vrot.lane.b32.xlu0 %v1768, 10
      %v1896 = vpop.permute.xlu0 %1895
      %1961 = vrot.lane.b32.xlu0 %v1769, 20
      %v1962 = vpop.permute.xlu0 %1961
      %1963 = vrot.lane.b32.xlu0 %v1770, 20
      %v1964 = vpop.permute.xlu0 %1963
      %1965 = vrot.lane.b32.xlu0 %v1771, 20
      %v1966 = vpop.permute.xlu0 %1965
      %1967 = vrot.lane.b32.xlu0 %v1772, 20
      %v1968 = vpop.permute.xlu0 %1967
      %1969 = vrot.lane.b32.xlu0 %v1773, 20
      %v1970 = vpop.permute.xlu0 %1969
      %1971 = vrot.lane.b32.xlu0 %v1774, 20
      %v1972 = vpop.permute.xlu0 %1971
      %1973 = vrot.lane.b32.xlu0 %v1775, 20
      %v1974 = vpop.permute.xlu0 %1973
      %1975 = vrot.lane.b32.xlu0 %v1776, 20
      %v1976 = vpop.permute.xlu0 %1975
      %1977 = vrot.lane.b32.xlu0 %v1777, 20
      %v1978 = vpop.permute.xlu0 %1977
      %1979 = vrot.lane.b32.xlu0 %v1778, 20
      %v1980 = vpop.permute.xlu0 %1979
      %1981 = vrot.lane.b32.xlu0 %v1779, 20
      %v1982 = vpop.permute.xlu0 %1981
      %1983 = vrot.lane.b32.xlu0 %v1780, 20
      %v1984 = vpop.permute.xlu0 %1983
      %1985 = vrot.lane.b32.xlu0 %v1781, 20
      %v1986 = vpop.permute.xlu0 %1985
      %1987 = vrot.lane.b32.xlu0 %v1782, 20
      %v1988 = vpop.permute.xlu0 %1987
      %1989 = vrot.lane.b32.xlu0 %v1783, 20
      %v1990 = vpop.permute.xlu0 %1989
      %1991 = vrot.lane.b32.xlu0 %v1784, 20
      %v1992 = vpop.permute.xlu0 %1991
      %1993 = vrot.lane.b32.xlu0 %v1785, 20
      %v1994 = vpop.permute.xlu0 %1993
      %1995 = vrot.lane.b32.xlu0 %v1786, 20
      %v1996 = vpop.permute.xlu0 %1995
      %1997 = vrot.lane.b32.xlu0 %v1787, 20
      %v1998 = vpop.permute.xlu0 %1997
      %1999 = vrot.lane.b32.xlu0 %v1788, 20
      %v2000 = vpop.permute.xlu0 %1999
      %2001 = vrot.lane.b32.xlu0 %v1789, 20
      %v2002 = vpop.permute.xlu0 %2001
      %2003 = vrot.lane.b32.xlu0 %v1790, 20
      %v2004 = vpop.permute.xlu0 %2003
      %2005 = vrot.lane.b32.xlu0 %v1791, 20
      %v2006 = vpop.permute.xlu0 %2005
      %2007 = vrot.lane.b32.xlu0 %v1792, 20
      %v2008 = vpop.permute.xlu0 %2007
      %2009 = vrot.lane.b32.xlu0 %v1793, 20
      %v2010 = vpop.permute.xlu0 %2009
      %2011 = vrot.lane.b32.xlu0 %v1794, 20
      %v2012 = vpop.permute.xlu0 %2011
      %2013 = vrot.lane.b32.xlu0 %v1795, 20
      %v2014 = vpop.permute.xlu0 %2013
      %2015 = vrot.lane.b32.xlu0 %v1796, 20
      %v2016 = vpop.permute.xlu0 %2015
      %2017 = vrot.lane.b32.xlu0 %v1797, 20
      %v2018 = vpop.permute.xlu0 %2017
      %2019 = vrot.lane.b32.xlu0 %v1798, 20
      %v2020 = vpop.permute.xlu0 %2019
      %2021 = vrot.lane.b32.xlu0 %v1799, 20
      %v2022 = vpop.permute.xlu0 %2021
      %2023 = vrot.lane.b32.xlu0 %v1800, 20
      %v2024 = vpop.permute.xlu0 %2023
      %v2057 = vsel %vm732, %v1705, %v1834
      %v2058 = vsel %vm732, %v1706, %v1836
      %v2059 = vsel %vm732, %v1707, %v1838
      %v2060 = vsel %vm732, %v1708, %v1840
      %v2061 = vsel %vm732, %v1709, %v1842
      %v2062 = vsel %vm732, %v1710, %v1844
      %v2063 = vsel %vm732, %v1711, %v1846
      %v2064 = vsel %vm732, %v1712, %v1848
      %v2065 = vsel %vm732, %v1713, %v1850
      %v2066 = vsel %vm732, %v1714, %v1852
      %v2067 = vsel %vm732, %v1715, %v1854
      %v2068 = vsel %vm732, %v1716, %v1856
      %v2069 = vsel %vm732, %v1717, %v1858
      %v2070 = vsel %vm732, %v1718, %v1860
      %v2071 = vsel %vm732, %v1719, %v1862
      %v2072 = vsel %vm732, %v1720, %v1864
      %v2073 = vsel %vm732, %v1721, %v1866
      %v2074 = vsel %vm732, %v1722, %v1868
      %v2075 = vsel %vm732, %v1723, %v1870
      %v2076 = vsel %vm732, %v1724, %v1872
      %v2077 = vsel %vm732, %v1725, %v1874
      %v2078 = vsel %vm732, %v1726, %v1876
      %v2079 = vsel %vm732, %v1727, %v1878
      %v2080 = vsel %vm732, %v1728, %v1880
      %v2081 = vsel %vm732, %v1729, %v1882
      %v2082 = vsel %vm732, %v1730, %v1884
      %v2083 = vsel %vm732, %v1731, %v1886
      %v2084 = vsel %vm732, %v1732, %v1888
      %v2085 = vsel %vm732, %v1733, %v1890
      %v2086 = vsel %vm732, %v1734, %v1892
      %v2087 = vsel %vm732, %v1735, %v1894
      %v2088 = vsel %vm732, %v1736, %v1896
      %v2089 = vsel %vm765, %v2057, %v1962
      %v2090 = vsel %vm765, %v2058, %v1964
      %v2091 = vsel %vm765, %v2059, %v1966
      %v2092 = vsel %vm765, %v2060, %v1968
      %v2093 = vsel %vm765, %v2061, %v1970
      %v2094 = vsel %vm765, %v2062, %v1972
      %v2095 = vsel %vm765, %v2063, %v1974
      %v2096 = vsel %vm765, %v2064, %v1976
      %v2097 = vsel %vm765, %v2065, %v1978
      %v2098 = vsel %vm765, %v2066, %v1980
      %v2099 = vsel %vm765, %v2067, %v1982
      %v2100 = vsel %vm765, %v2068, %v1984
      %v2101 = vsel %vm765, %v2069, %v1986
      %v2102 = vsel %vm765, %v2070, %v1988
      %v2103 = vsel %vm765, %v2071, %v1990
      %v2104 = vsel %vm765, %v2072, %v1992
      %v2105 = vsel %vm765, %v2073, %v1994
      %v2106 = vsel %vm765, %v2074, %v1996
      %v2107 = vsel %vm765, %v2075, %v1998
      %v2108 = vsel %vm765, %v2076, %v2000
      %v2109 = vsel %vm765, %v2077, %v2002
      %v2110 = vsel %vm765, %v2078, %v2004
      %v2111 = vsel %vm765, %v2079, %v2006
      %v2112 = vsel %vm765, %v2080, %v2008
      %v2113 = vsel %vm765, %v2081, %v2010
      %v2114 = vsel %vm765, %v2082, %v2012
      %v2115 = vsel %vm765, %v2083, %v2014
      %v2116 = vsel %vm765, %v2084, %v2016
      %v2117 = vsel %vm765, %v2085, %v2018
      %v2118 = vsel %vm765, %v2086, %v2020
      %v2119 = vsel %vm765, %v2087, %v2022
      %v2120 = vsel %vm765, %v2088, %v2024
      %v2121 = vpack.c.bf16 %v2090, %v2089
      %v2122 = vpack.c.bf16 %v2092, %v2091
      %v2123 = vpack.c.bf16 %v2094, %v2093
      %v2124 = vpack.c.bf16 %v2096, %v2095
      %v2125 = vpack.c.bf16 %v2098, %v2097
      %v2126 = vpack.c.bf16 %v2100, %v2099
      %v2127 = vpack.c.bf16 %v2102, %v2101
      %v2128 = vpack.c.bf16 %v2104, %v2103
      %v2129 = vpack.c.bf16 %v2106, %v2105
      %v2130 = vpack.c.bf16 %v2108, %v2107
      %v2131 = vpack.c.bf16 %v2110, %v2109
      %v2132 = vpack.c.bf16 %v2112, %v2111
      %v2133 = vpack.c.bf16 %v2114, %v2113
      %v2134 = vpack.c.bf16 %v2116, %v2115
      %v2135 = vpack.c.bf16 %v2118, %v2117
      %v2136 = vpack.c.bf16 %v2120, %v2119
      %s2137 = scalar_lea.vmem %s1, 32
      %v2138 = vld [vmem:[%s2137] sm:$0xf]
      %v2139 = vld [vmem:[%s2137 + $0x4] sm:$0xf]
      %v2140 = vld [vmem:[%s2137 + $0x8] sm:$0xf]
      %v2141 = vld [vmem:[%s2137 + $0xc] sm:$0x7]
      %v2146 = vunpack.c.l.b16 %v2138
      %v2147 = vunpack.c.l.b16 %v2139
      %v2148 = vunpack.c.l.b16 %v2140
      %v2149 = vunpack.c.l.b16 %v2141
      %v2150 = vpack.c.b16 %v2147, %v2146
      %v2151 = vpack.c.b16 %v2149, %v2148
      %v2154 = vsel %vm1267, %v2121, 0
      %v2157 = vsel %vm1267, %v2122, 0
      %v2160 = vsel %vm1267, %v2123, 0
      %v2163 = vsel %vm1267, %v2124, 0
      %v2166 = vsel %vm1267, %v2125, 0
      %v2169 = vsel %vm1267, %v2126, 0
      %v2172 = vsel %vm1267, %v2127, 0
      %v2175 = vsel %vm1267, %v2128, 0
      %v2178 = vsel %vm1267, %v2129, 0
      %v2181 = vsel %vm1267, %v2130, 0
      %v2184 = vsel %vm1267, %v2131, 0
      %v2187 = vsel %vm1267, %v2132, 0
      %v2190 = vsel %vm1267, %v2133, 0
      %v2193 = vsel %vm1267, %v2134, 0
      %v2196 = vsel %vm1267, %v2135, 0
      %v2199 = vsel %vm1267, %v2136, 0
      %v2202 = vsel %vm1316, %v2151, 0
      %2204 = vmatprep.subr.bf16.mxu0 0
      %2205 = vmatpush1.bf16.msra.mxu0 0
      %2206 = vmatprep.subr.bf16.mxu0 0
      %2207 = vmatpush1.bf16.msra.mxu0 0
      %2208 = vmatprep.subr.bf16.mxu0 0
      %2209 = vmatpush1.bf16.msra.mxu0 0
      %2210 = vmatprep.subr.bf16.mxu0 0
      %2211 = vmatpush1.bf16.msra.mxu0 0
      %2212 = vmatprep.subr.bf16.mxu0 0
      %2213 = vmatpush1.bf16.msra.mxu0 0
      %2214 = vmatprep.subr.bf16.mxu0 0
      %2215 = vmatpush1.bf16.msra.mxu0 0
      %2216 = vmatprep.subr.bf16.mxu0 0
      %2217 = vmatpush1.bf16.msra.mxu0 %v2202
      %2218 = vmatprep.subr.bf16.mxu0 0
      %2219 = vmatpush1.bf16.msra.mxu0 %v2150
      %2220 = vmatprep.subr.bf16.mxu0 0
      %2221 = vmatpush2.bf16.msra.mxu0 0
      %2222 = vmatprep.subr.bf16.mxu0 0
      %2223 = vmatpush2.bf16.msra.mxu0 0
      %2224 = vmatprep.subr.bf16.mxu0 0
      %2225 = vmatpush2.bf16.msra.mxu0 0
      %2226 = vmatprep.subr.bf16.mxu0 0
      %2227 = vmatpush2.bf16.msra.mxu0 0
      %2228 = vmatprep.subr.bf16.mxu0 0
      %2229 = vmatpush2.bf16.msra.mxu0 0
      %2230 = vmatprep.subr.bf16.mxu0 0
      %2231 = vmatpush2.bf16.msra.mxu0 0
      %2232 = vmatprep.subr.bf16.mxu0 0
      %2233 = vmatpush2.bf16.msra.mxu0 0
      %2234 = vmatprep.subr.bf16.mxu0 0
      %2235 = vmatpush2.bf16.msra.mxu0 0
      %2236 = vmatprep.mubr.bf16.mxu0 0
      %2237 = vmatmul.mubr.bf16.gmra.mxu0 %v2154
      %v2238 = vpop.f32.mrf.mxu0
      %v2239 = vadd.f32 0.0, %v2238
      %v2240 = vpop.f32.mrf.mxu0
      %v2241 = vpop.f32.mrf.mxu0
      %v2242 = vadd.f32 0.0, %v2241
      %v2243 = vpop.f32.mrf.mxu0
      %2244 = vmatprep.mubr.bf16.mxu0 0
      %2245 = vmatmul.mubr.bf16.gmra.mxu0 %v2157
      %v2246 = vpop.f32.mrf.mxu0
      %v2247 = vadd.f32 0.0, %v2246
      %v2248 = vpop.f32.mrf.mxu0
      %v2249 = vpop.f32.mrf.mxu0
      %v2250 = vadd.f32 0.0, %v2249
      %v2251 = vpop.f32.mrf.mxu0
      %2252 = vmatprep.mubr.bf16.mxu0 0
      %2253 = vmatmul.mubr.bf16.gmra.mxu0 %v2160
      %v2254 = vpop.f32.mrf.mxu0
      %v2255 = vadd.f32 0.0, %v2254
      %v2256 = vpop.f32.mrf.mxu0
      %v2257 = vpop.f32.mrf.mxu0
      %v2258 = vadd.f32 0.0, %v2257
      %v2259 = vpop.f32.mrf.mxu0
      %2260 = vmatprep.mubr.bf16.mxu0 0
      %2261 = vmatmul.mubr.bf16.gmra.mxu0 %v2163
      %v2262 = vpop.f32.mrf.mxu0
      %v2263 = vadd.f32 0.0, %v2262
      %v2264 = vpop.f32.mrf.mxu0
      %v2265 = vpop.f32.mrf.mxu0
      %v2266 = vadd.f32 0.0, %v2265
      %v2267 = vpop.f32.mrf.mxu0
      %2268 = vmatprep.mubr.bf16.mxu0 0
      %2269 = vmatmul.mubr.bf16.gmra.mxu0 %v2166
      %v2270 = vpop.f32.mrf.mxu0
      %v2271 = vadd.f32 0.0, %v2270
      %v2272 = vpop.f32.mrf.mxu0
      %v2273 = vpop.f32.mrf.mxu0
      %v2274 = vadd.f32 0.0, %v2273
      %v2275 = vpop.f32.mrf.mxu0
      %2276 = vmatprep.mubr.bf16.mxu0 0
      %2277 = vmatmul.mubr.bf16.gmra.mxu0 %v2169
      %v2278 = vpop.f32.mrf.mxu0
      %v2279 = vadd.f32 0.0, %v2278
      %v2280 = vpop.f32.mrf.mxu0
      %v2281 = vpop.f32.mrf.mxu0
      %v2282 = vadd.f32 0.0, %v2281
      %v2283 = vpop.f32.mrf.mxu0
      %2284 = vmatprep.mubr.bf16.mxu0 0
      %2285 = vmatmul.mubr.bf16.gmra.mxu0 %v2172
      %v2286 = vpop.f32.mrf.mxu0
      %v2287 = vadd.f32 0.0, %v2286
      %v2288 = vpop.f32.mrf.mxu0
      %v2289 = vpop.f32.mrf.mxu0
      %v2290 = vadd.f32 0.0, %v2289
      %v2291 = vpop.f32.mrf.mxu0
      %2292 = vmatprep.mubr.bf16.mxu0 0
      %2293 = vmatmul.mubr.bf16.gmra.mxu0 %v2175
      %v2294 = vpop.f32.mrf.mxu0
      %v2295 = vadd.f32 0.0, %v2294
      %v2296 = vpop.f32.mrf.mxu0
      %v2297 = vpop.f32.mrf.mxu0
      %v2298 = vadd.f32 0.0, %v2297
      %v2299 = vpop.f32.mrf.mxu0
      %2300 = vmatprep.mubr.bf16.mxu0 0
      %2301 = vmatmul.mubr.bf16.gmra.mxu0 %v2178
      %v2302 = vpop.f32.mrf.mxu0
      %v2303 = vadd.f32 0.0, %v2302
      %v2304 = vpop.f32.mrf.mxu0
      %v2305 = vpop.f32.mrf.mxu0
      %v2306 = vadd.f32 0.0, %v2305
      %v2307 = vpop.f32.mrf.mxu0
      %2308 = vmatprep.mubr.bf16.mxu0 0
      %2309 = vmatmul.mubr.bf16.gmra.mxu0 %v2181
      %v2310 = vpop.f32.mrf.mxu0
      %v2311 = vadd.f32 0.0, %v2310
      %v2312 = vpop.f32.mrf.mxu0
      %v2313 = vpop.f32.mrf.mxu0
      %v2314 = vadd.f32 0.0, %v2313
      %v2315 = vpop.f32.mrf.mxu0
      %2316 = vmatprep.mubr.bf16.mxu0 0
      %2317 = vmatmul.mubr.bf16.gmra.mxu0 %v2184
      %v2318 = vpop.f32.mrf.mxu0
      %v2319 = vadd.f32 0.0, %v2318
      %v2320 = vpop.f32.mrf.mxu0
      %v2321 = vpop.f32.mrf.mxu0
      %v2322 = vadd.f32 0.0, %v2321
      %v2323 = vpop.f32.mrf.mxu0
      %2324 = vmatprep.mubr.bf16.mxu0 0
      %2325 = vmatmul.mubr.bf16.gmra.mxu0 %v2187
      %v2326 = vpop.f32.mrf.mxu0
      %v2327 = vadd.f32 0.0, %v2326
      %v2328 = vpop.f32.mrf.mxu0
      %v2329 = vpop.f32.mrf.mxu0
      %v2330 = vadd.f32 0.0, %v2329
      %v2331 = vpop.f32.mrf.mxu0
      %2332 = vmatprep.mubr.bf16.mxu0 0
      %2333 = vmatmul.mubr.bf16.gmra.mxu0 %v2190
      %v2334 = vpop.f32.mrf.mxu0
      %v2335 = vadd.f32 0.0, %v2334
      %v2336 = vpop.f32.mrf.mxu0
      %v2337 = vpop.f32.mrf.mxu0
      %v2338 = vadd.f32 0.0, %v2337
      %v2339 = vpop.f32.mrf.mxu0
      %2340 = vmatprep.mubr.bf16.mxu0 0
      %2341 = vmatmul.mubr.bf16.gmra.mxu0 %v2193
      %v2342 = vpop.f32.mrf.mxu0
      %v2343 = vadd.f32 0.0, %v2342
      %v2344 = vpop.f32.mrf.mxu0
      %v2345 = vpop.f32.mrf.mxu0
      %v2346 = vadd.f32 0.0, %v2345
      %v2347 = vpop.f32.mrf.mxu0
      %2348 = vmatprep.mubr.bf16.mxu0 0
      %2349 = vmatmul.mubr.bf16.gmra.mxu0 %v2196
      %v2350 = vpop.f32.mrf.mxu0
      %v2351 = vadd.f32 0.0, %v2350
      %v2352 = vpop.f32.mrf.mxu0
      %v2353 = vpop.f32.mrf.mxu0
      %v2354 = vadd.f32 0.0, %v2353
      %v2355 = vpop.f32.mrf.mxu0
      %2356 = vmatprep.mubr.bf16.mxu0 0
      %2357 = vmatmul.mubr.bf16.gmra.mxu0 %v2199
      %v2358 = vpop.f32.mrf.mxu0
      %v2359 = vadd.f32 0.0, %v2358
      %v2360 = vpop.f32.mrf.mxu0
      %v2361 = vpop.f32.mrf.mxu0
      %v2362 = vadd.f32 0.0, %v2361
      %v2363 = vpop.f32.mrf.mxu0
      %2364 = vdwg.mxu0
      %v2365 = vadd.f32 %v1578, %v2239
      %v2366 = vadd.f32 %v1581, %v2242
      %v2367 = vadd.f32 %v1586, %v2247
      %v2368 = vadd.f32 %v1589, %v2250
      %v2369 = vadd.f32 %v1594, %v2255
      %v2370 = vadd.f32 %v1597, %v2258
      %v2371 = vadd.f32 %v1602, %v2263
      %v2372 = vadd.f32 %v1605, %v2266
      %v2373 = vadd.f32 %v1610, %v2271
      %v2374 = vadd.f32 %v1613, %v2274
      %v2375 = vadd.f32 %v1618, %v2279
      %v2376 = vadd.f32 %v1621, %v2282
      %v2377 = vadd.f32 %v1626, %v2287
      %v2378 = vadd.f32 %v1629, %v2290
      %v2379 = vadd.f32 %v1634, %v2295
      %v2380 = vadd.f32 %v1637, %v2298
      %v2381 = vadd.f32 %v1642, %v2303
      %v2382 = vadd.f32 %v1645, %v2306
      %v2383 = vadd.f32 %v1650, %v2311
      %v2384 = vadd.f32 %v1653, %v2314
      %v2385 = vadd.f32 %v1658, %v2319
      %v2386 = vadd.f32 %v1661, %v2322
      %v2387 = vadd.f32 %v1666, %v2327
      %v2388 = vadd.f32 %v1669, %v2330
      %v2389 = vadd.f32 %v1674, %v2335
      %v2390 = vadd.f32 %v1677, %v2338
      %v2391 = vadd.f32 %v1682, %v2343
      %v2392 = vadd.f32 %v1685, %v2346
      %v2393 = vadd.f32 %v1690, %v2351
      %v2394 = vadd.f32 %v1693, %v2354
      %v2395 = vadd.f32 %v1698, %v2359
      %v2396 = vadd.f32 %v1701, %v2362
      %v2397 = vld [vmem:[%s2] sm:$0x1]
      %v2399 = vlaneseq
      %v2400 = vshrl.u32 %v2399, 7
      %v2401 = vsub.s32 0, %v2400
      %v2402 = vrot.slane %v2397, %v2401
      %v2404 = vadd.f32 %v2365, %v2402
      %v2405 = vadd.f32 %v2366, %v2402
      %v2406 = vadd.f32 %v2367, %v2402
      %v2407 = vadd.f32 %v2368, %v2402
      %v2408 = vadd.f32 %v2369, %v2402
      %v2409 = vadd.f32 %v2370, %v2402
      %v2410 = vadd.f32 %v2371, %v2402
      %v2411 = vadd.f32 %v2372, %v2402
      %v2412 = vadd.f32 %v2373, %v2402
      %v2413 = vadd.f32 %v2374, %v2402
      %v2414 = vadd.f32 %v2375, %v2402
      %v2415 = vadd.f32 %v2376, %v2402
      %v2416 = vadd.f32 %v2377, %v2402
      %v2417 = vadd.f32 %v2378, %v2402
      %v2418 = vadd.f32 %v2379, %v2402
      %v2419 = vadd.f32 %v2380, %v2402
      %v2420 = vadd.f32 %v2381, %v2402
      %v2421 = vadd.f32 %v2382, %v2402
      %v2422 = vadd.f32 %v2383, %v2402
      %v2423 = vadd.f32 %v2384, %v2402
      %v2424 = vadd.f32 %v2385, %v2402
      %v2425 = vadd.f32 %v2386, %v2402
      %v2426 = vadd.f32 %v2387, %v2402
      %v2427 = vadd.f32 %v2388, %v2402
      %v2428 = vadd.f32 %v2389, %v2402
      %v2429 = vadd.f32 %v2390, %v2402
      %v2430 = vadd.f32 %v2391, %v2402
      %v2431 = vadd.f32 %v2392, %v2402
      %v2432 = vadd.f32 %v2393, %v2402
      %v2433 = vadd.f32 %v2394, %v2402
      %v2434 = vadd.f32 %v2395, %v2402
      %v2435 = vadd.f32 %v2396, %v2402
      %vm2436 = vcmp.ge.f32.partialorder %v2404, 0.0
      %vm2437 = vcmp.ge.f32.partialorder %v2405, 0.0
      %vm2438 = vcmp.ge.f32.partialorder %v2406, 0.0
      %vm2439 = vcmp.ge.f32.partialorder %v2407, 0.0
      %vm2440 = vcmp.ge.f32.partialorder %v2408, 0.0
      %vm2441 = vcmp.ge.f32.partialorder %v2409, 0.0
      %vm2442 = vcmp.ge.f32.partialorder %v2410, 0.0
      %vm2443 = vcmp.ge.f32.partialorder %v2411, 0.0
      %vm2444 = vcmp.ge.f32.partialorder %v2412, 0.0
      %vm2445 = vcmp.ge.f32.partialorder %v2413, 0.0
      %vm2446 = vcmp.ge.f32.partialorder %v2414, 0.0
      %vm2447 = vcmp.ge.f32.partialorder %v2415, 0.0
      %vm2448 = vcmp.ge.f32.partialorder %v2416, 0.0
      %vm2449 = vcmp.ge.f32.partialorder %v2417, 0.0
      %vm2450 = vcmp.ge.f32.partialorder %v2418, 0.0
      %vm2451 = vcmp.ge.f32.partialorder %v2419, 0.0
      %vm2452 = vcmp.ge.f32.partialorder %v2420, 0.0
      %vm2453 = vcmp.ge.f32.partialorder %v2421, 0.0
      %vm2454 = vcmp.ge.f32.partialorder %v2422, 0.0
      %vm2455 = vcmp.ge.f32.partialorder %v2423, 0.0
      %vm2456 = vcmp.ge.f32.partialorder %v2424, 0.0
      %vm2457 = vcmp.ge.f32.partialorder %v2425, 0.0
      %vm2458 = vcmp.ge.f32.partialorder %v2426, 0.0
      %vm2459 = vcmp.ge.f32.partialorder %v2427, 0.0
      %vm2460 = vcmp.ge.f32.partialorder %v2428, 0.0
      %vm2461 = vcmp.ge.f32.partialorder %v2429, 0.0
      %vm2462 = vcmp.ge.f32.partialorder %v2430, 0.0
      %vm2463 = vcmp.ge.f32.partialorder %v2431, 0.0
      %vm2464 = vcmp.ge.f32.partialorder %v2432, 0.0
      %vm2465 = vcmp.ge.f32.partialorder %v2433, 0.0
      %vm2466 = vcmp.ge.f32.partialorder %v2434, 0.0
      %vm2467 = vcmp.ge.f32.partialorder %v2435, 0.0
      %v2468 = vmul.f32 %v2404, 0.1
      %v2469 = vmul.f32 %v2405, 0.1
      %v2470 = vmul.f32 %v2406, 0.1
      %v2471 = vmul.f32 %v2407, 0.1
      %v2472 = vmul.f32 %v2408, 0.1
      %v2473 = vmul.f32 %v2409, 0.1
      %v2474 = vmul.f32 %v2410, 0.1
      %v2475 = vmul.f32 %v2411, 0.1
      %v2476 = vmul.f32 %v2412, 0.1
      %v2477 = vmul.f32 %v2413, 0.1
      %v2478 = vmul.f32 %v2414, 0.1
      %v2479 = vmul.f32 %v2415, 0.1
      %v2480 = vmul.f32 %v2416, 0.1
      %v2481 = vmul.f32 %v2417, 0.1
      %v2482 = vmul.f32 %v2418, 0.1
      %v2483 = vmul.f32 %v2419, 0.1
      %v2484 = vmul.f32 %v2420, 0.1
      %v2485 = vmul.f32 %v2421, 0.1
      %v2486 = vmul.f32 %v2422, 0.1
      %v2487 = vmul.f32 %v2423, 0.1
      %v2488 = vmul.f32 %v2424, 0.1
      %v2489 = vmul.f32 %v2425, 0.1
      %v2490 = vmul.f32 %v2426, 0.1
      %v2491 = vmul.f32 %v2427, 0.1
      %v2492 = vmul.f32 %v2428, 0.1
      %v2493 = vmul.f32 %v2429, 0.1
      %v2494 = vmul.f32 %v2430, 0.1
      %v2495 = vmul.f32 %v2431, 0.1
      %v2496 = vmul.f32 %v2432, 0.1
      %v2497 = vmul.f32 %v2433, 0.1
      %v2498 = vmul.f32 %v2434, 0.1
      %v2499 = vmul.f32 %v2435, 0.1
      %v2500 = vsel %vm2436, %v2404, %v2468
      %v2501 = vsel %vm2437, %v2405, %v2469
      %v2502 = vsel %vm2438, %v2406, %v2470
      %v2503 = vsel %vm2439, %v2407, %v2471
      %v2504 = vsel %vm2440, %v2408, %v2472
      %v2505 = vsel %vm2441, %v2409, %v2473
      %v2506 = vsel %vm2442, %v2410, %v2474
      %v2507 = vsel %vm2443, %v2411, %v2475
      %v2508 = vsel %vm2444, %v2412, %v2476
      %v2509 = vsel %vm2445, %v2413, %v2477
      %v2510 = vsel %vm2446, %v2414, %v2478
      %v2511 = vsel %vm2447, %v2415, %v2479
      %v2512 = vsel %vm2448, %v2416, %v2480
      %v2513 = vsel %vm2449, %v2417, %v2481
      %v2514 = vsel %vm2450, %v2418, %v2482
      %v2515 = vsel %vm2451, %v2419, %v2483
      %v2516 = vsel %vm2452, %v2420, %v2484
      %v2517 = vsel %vm2453, %v2421, %v2485
      %v2518 = vsel %vm2454, %v2422, %v2486
      %v2519 = vsel %vm2455, %v2423, %v2487
      %v2520 = vsel %vm2456, %v2424, %v2488
      %v2521 = vsel %vm2457, %v2425, %v2489
      %v2522 = vsel %vm2458, %v2426, %v2490
      %v2523 = vsel %vm2459, %v2427, %v2491
      %v2524 = vsel %vm2460, %v2428, %v2492
      %v2525 = vsel %vm2461, %v2429, %v2493
      %v2526 = vsel %vm2462, %v2430, %v2494
      %v2527 = vsel %vm2463, %v2431, %v2495
      %v2528 = vsel %vm2464, %v2432, %v2496
      %v2529 = vsel %vm2465, %v2433, %v2497
      %v2530 = vsel %vm2466, %v2434, %v2498
      %v2531 = vsel %vm2467, %v2435, %v2499
      %s2532 = scalar_lea.vmem [#allocation2], 24
      %2533 = vst.msk [vmem:[%s2532 + $0x1] sm:$0xff] %vm334, %v2500
      %2534 = vst.msk [vmem:[%s2532 + $0x9] sm:$0xff] %vm334, %v2501
      %2535 = vst.msk [vmem:[%s2532 + $0x19] sm:$0xff] %vm334, %v2502
      %2536 = vst.msk [vmem:[%s2532 + $0x21] sm:$0xff] %vm334, %v2503
      %2537 = vst.msk [vmem:[%s2532 + $0x31] sm:$0xff] %vm334, %v2504
      %2538 = vst.msk [vmem:[%s2532 + $0x39] sm:$0xff] %vm334, %v2505
      %2539 = vst.msk [vmem:[%s2532 + $0x49] sm:$0xff] %vm334, %v2506
      %2540 = vst.msk [vmem:[%s2532 + $0x51] sm:$0xff] %vm334, %v2507
      %2541 = vst.msk [vmem:[%s2532 + $0x61] sm:$0xff] %vm334, %v2508
      %2542 = vst.msk [vmem:[%s2532 + $0x69] sm:$0xff] %vm334, %v2509
      %2543 = vst.msk [vmem:[%s2532 + $0x79] sm:$0xff] %vm334, %v2510
      %2544 = vst.msk [vmem:[%s2532 + $0x81] sm:$0xff] %vm334, %v2511
      %2545 = vst.msk [vmem:[%s2532 + $0x91] sm:$0xff] %vm334, %v2512
      %2546 = vst.msk [vmem:[%s2532 + $0x99] sm:$0xff] %vm334, %v2513
      %2547 = vst.msk [vmem:[%s2532 + $0xa9] sm:$0xff] %vm334, %v2514
      %2548 = vst.msk [vmem:[%s2532 + $0xb1] sm:$0xff] %vm334, %v2515
      %2549 = vst.msk [vmem:[%s2532 + $0xc1] sm:$0xff] %vm334, %v2516
      %2550 = vst.msk [vmem:[%s2532 + $0xc9] sm:$0xff] %vm334, %v2517
      %2551 = vst.msk [vmem:[%s2532 + $0xd9] sm:$0xff] %vm334, %v2518
      %2552 = vst.msk [vmem:[%s2532 + $0xe1] sm:$0xff] %vm334, %v2519
      %2553 = vst.msk [vmem:[%s2532 + $0xf1] sm:$0xff] %vm334, %v2520
      %2554 = vst.msk [vmem:[%s2532 + $0xf9] sm:$0xff] %vm334, %v2521
      %2555 = vst.msk [vmem:[%s2532 + $0x109] sm:$0xff] %vm334, %v2522
      %2556 = vst.msk [vmem:[%s2532 + $0x111] sm:$0xff] %vm334, %v2523
      %2557 = vst.msk [vmem:[%s2532 + $0x121] sm:$0xff] %vm334, %v2524
      %2558 = vst.msk [vmem:[%s2532 + $0x129] sm:$0xff] %vm334, %v2525
      %2559 = vst.msk [vmem:[%s2532 + $0x139] sm:$0xff] %vm334, %v2526
      %2560 = vst.msk [vmem:[%s2532 + $0x141] sm:$0xff] %vm334, %v2527
      %2561 = vst.msk [vmem:[%s2532 + $0x151] sm:$0xff] %vm334, %v2528
      %2562 = vst.msk [vmem:[%s2532 + $0x159] sm:$0xff] %vm334, %v2529
      %2563 = vst.msk [vmem:[%s2532 + $0x169] sm:$0xff] %vm334, %v2530
      %2564 = vst.msk [vmem:[%s2532 + $0x171] sm:$0xff] %vm334, %v2531
      %v2565 = vld [vmem:[#allocation2] sm:$0xff]
      %v2566 = vld [vmem:[#allocation2 + $0x8] sm:$0xff]
      %v2567 = vld [vmem:[#allocation2 + $0x18] sm:$0xff]
      %v2568 = vld [vmem:[#allocation2 + $0x20] sm:$0xff]
      %v2569 = vld [vmem:[#allocation2 + $0x30] sm:$0xff]
      %v2570 = vld [vmem:[#allocation2 + $0x38] sm:$0xff]
      %v2571 = vld [vmem:[#allocation2 + $0x48] sm:$0xff]
      %v2572 = vld [vmem:[#allocation2 + $0x50] sm:$0xff]
      %v2573 = vld [vmem:[#allocation2 + $0x60] sm:$0xff]
      %v2574 = vld [vmem:[#allocation2 + $0x68] sm:$0xff]
      %v2575 = vld [vmem:[#allocation2 + $0x78] sm:$0xff]
      %v2576 = vld [vmem:[#allocation2 + $0x80] sm:$0xff]
      %v2577 = vld [vmem:[#allocation2 + $0x90] sm:$0xff]
      %v2578 = vld [vmem:[#allocation2 + $0x98] sm:$0xff]
      %v2579 = vld [vmem:[#allocation2 + $0xa8] sm:$0xff]
      %v2580 = vld [vmem:[#allocation2 + $0xb0] sm:$0xff]
      %v2581 = vld [vmem:[#allocation2 + $0xc0] sm:$0xff]
      %v2582 = vld [vmem:[#allocation2 + $0xc8] sm:$0xff]
      %v2583 = vld [vmem:[#allocation2 + $0xd8] sm:$0xff]
      %v2584 = vld [vmem:[#allocation2 + $0xe0] sm:$0xff]
      %v2585 = vld [vmem:[#allocation2 + $0xf0] sm:$0xff]
      %v2586 = vld [vmem:[#allocation2 + $0xf8] sm:$0xff]
      %v2587 = vld [vmem:[#allocation2 + $0x108] sm:$0xff]
      %v2588 = vld [vmem:[#allocation2 + $0x110] sm:$0xff]
      %v2589 = vld [vmem:[#allocation2 + $0x120] sm:$0xff]
      %v2590 = vld [vmem:[#allocation2 + $0x128] sm:$0xff]
      %v2591 = vld [vmem:[#allocation2 + $0x138] sm:$0xff]
      %v2592 = vld [vmem:[#allocation2 + $0x140] sm:$0xff]
      %v2593 = vld [vmem:[#allocation2 + $0x150] sm:$0xff]
      %v2594 = vld [vmem:[#allocation2 + $0x158] sm:$0xff]
      %v2595 = vld [vmem:[#allocation2 + $0x168] sm:$0xff]
      %v2596 = vld [vmem:[#allocation2 + $0x170] sm:$0xff]
      %v2597 = vld [vmem:[#allocation2 + $0x1] sm:$0xff]
      %v2598 = vld [vmem:[#allocation2 + $0x9] sm:$0xff]
      %v2599 = vld [vmem:[#allocation2 + $0x19] sm:$0xff]
      %v2600 = vld [vmem:[#allocation2 + $0x21] sm:$0xff]
      %v2601 = vld [vmem:[#allocation2 + $0x31] sm:$0xff]
      %v2602 = vld [vmem:[#allocation2 + $0x39] sm:$0xff]
      %v2603 = vld [vmem:[#allocation2 + $0x49] sm:$0xff]
      %v2604 = vld [vmem:[#allocation2 + $0x51] sm:$0xff]
      %v2605 = vld [vmem:[#allocation2 + $0x61] sm:$0xff]
      %v2606 = vld [vmem:[#allocation2 + $0x69] sm:$0xff]
      %v2607 = vld [vmem:[#allocation2 + $0x79] sm:$0xff]
      %v2608 = vld [vmem:[#allocation2 + $0x81] sm:$0xff]
      %v2609 = vld [vmem:[#allocation2 + $0x91] sm:$0xff]
      %v2610 = vld [vmem:[#allocation2 + $0x99] sm:$0xff]
      %v2611 = vld [vmem:[#allocation2 + $0xa9] sm:$0xff]
      %v2612 = vld [vmem:[#allocation2 + $0xb1] sm:$0xff]
      %v2613 = vld [vmem:[#allocation2 + $0xc1] sm:$0xff]
      %v2614 = vld [vmem:[#allocation2 + $0xc9] sm:$0xff]
      %v2615 = vld [vmem:[#allocation2 + $0xd9] sm:$0xff]
      %v2616 = vld [vmem:[#allocation2 + $0xe1] sm:$0xff]
      %v2617 = vld [vmem:[#allocation2 + $0xf1] sm:$0xff]
      %v2618 = vld [vmem:[#allocation2 + $0xf9] sm:$0xff]
      %v2619 = vld [vmem:[#allocation2 + $0x109] sm:$0xff]
      %v2620 = vld [vmem:[#allocation2 + $0x111] sm:$0xff]
      %v2621 = vld [vmem:[#allocation2 + $0x121] sm:$0xff]
      %v2622 = vld [vmem:[#allocation2 + $0x129] sm:$0xff]
      %v2623 = vld [vmem:[#allocation2 + $0x139] sm:$0xff]
      %v2624 = vld [vmem:[#allocation2 + $0x141] sm:$0xff]
      %v2625 = vld [vmem:[#allocation2 + $0x151] sm:$0xff]
      %v2626 = vld [vmem:[#allocation2 + $0x159] sm:$0xff]
      %v2627 = vld [vmem:[#allocation2 + $0x169] sm:$0xff]
      %v2628 = vld [vmem:[#allocation2 + $0x171] sm:$0xff]
      %v2629 = vld [vmem:[#allocation2 + $0x2] sm:$0xff]
      %v2630 = vld [vmem:[#allocation2 + $0xa] sm:$0xff]
      %v2631 = vld [vmem:[#allocation2 + $0x1a] sm:$0xff]
      %v2632 = vld [vmem:[#allocation2 + $0x22] sm:$0xff]
      %v2633 = vld [vmem:[#allocation2 + $0x32] sm:$0xff]
      %v2634 = vld [vmem:[#allocation2 + $0x3a] sm:$0xff]
      %v2635 = vld [vmem:[#allocation2 + $0x4a] sm:$0xff]
      %v2636 = vld [vmem:[#allocation2 + $0x52] sm:$0xff]
      %v2637 = vld [vmem:[#allocation2 + $0x62] sm:$0xff]
      %v2638 = vld [vmem:[#allocation2 + $0x6a] sm:$0xff]
      %v2639 = vld [vmem:[#allocation2 + $0x7a] sm:$0xff]
      %v2640 = vld [vmem:[#allocation2 + $0x82] sm:$0xff]
      %v2641 = vld [vmem:[#allocation2 + $0x92] sm:$0xff]
      %v2642 = vld [vmem:[#allocation2 + $0x9a] sm:$0xff]
      %v2643 = vld [vmem:[#allocation2 + $0xaa] sm:$0xff]
      %v2644 = vld [vmem:[#allocation2 + $0xb2] sm:$0xff]
      %v2645 = vld [vmem:[#allocation2 + $0xc2] sm:$0xff]
      %v2646 = vld [vmem:[#allocation2 + $0xca] sm:$0xff]
      %v2647 = vld [vmem:[#allocation2 + $0xda] sm:$0xff]
      %v2648 = vld [vmem:[#allocation2 + $0xe2] sm:$0xff]
      %v2649 = vld [vmem:[#allocation2 + $0xf2] sm:$0xff]
      %v2650 = vld [vmem:[#allocation2 + $0xfa] sm:$0xff]
      %v2651 = vld [vmem:[#allocation2 + $0x10a] sm:$0xff]
      %v2652 = vld [vmem:[#allocation2 + $0x112] sm:$0xff]
      %v2653 = vld [vmem:[#allocation2 + $0x122] sm:$0xff]
      %v2654 = vld [vmem:[#allocation2 + $0x12a] sm:$0xff]
      %v2655 = vld [vmem:[#allocation2 + $0x13a] sm:$0xff]
      %v2656 = vld [vmem:[#allocation2 + $0x142] sm:$0xff]
      %v2657 = vld [vmem:[#allocation2 + $0x152] sm:$0xff]
      %v2658 = vld [vmem:[#allocation2 + $0x15a] sm:$0xff]
      %v2659 = vld [vmem:[#allocation2 + $0x16a] sm:$0xff]
      %v2660 = vld [vmem:[#allocation2 + $0x172] sm:$0xff]
      %2693 = vrot.lane.b32.xlu0 %v2597, 4
      %v2694 = vpop.permute.xlu0 %2693
      %2695 = vrot.lane.b32.xlu0 %v2598, 4
      %v2696 = vpop.permute.xlu0 %2695
      %2697 = vrot.lane.b32.xlu0 %v2599, 4
      %v2698 = vpop.permute.xlu0 %2697
      %2699 = vrot.lane.b32.xlu0 %v2600, 4
      %v2700 = vpop.permute.xlu0 %2699
      %2701 = vrot.lane.b32.xlu0 %v2601, 4
      %v2702 = vpop.permute.xlu0 %2701
      %2703 = vrot.lane.b32.xlu0 %v2602, 4
      %v2704 = vpop.permute.xlu0 %2703
      %2705 = vrot.lane.b32.xlu0 %v2603, 4
      %v2706 = vpop.permute.xlu0 %2705
      %2707 = vrot.lane.b32.xlu0 %v2604, 4
      %v2708 = vpop.permute.xlu0 %2707
      %2709 = vrot.lane.b32.xlu0 %v2605, 4
      %v2710 = vpop.permute.xlu0 %2709
      %2711 = vrot.lane.b32.xlu0 %v2606, 4
      %v2712 = vpop.permute.xlu0 %2711
      %2713 = vrot.lane.b32.xlu0 %v2607, 4
      %v2714 = vpop.permute.xlu0 %2713
      %2715 = vrot.lane.b32.xlu0 %v2608, 4
      %v2716 = vpop.permute.xlu0 %2715
      %2717 = vrot.lane.b32.xlu0 %v2609, 4
      %v2718 = vpop.permute.xlu0 %2717
      %2719 = vrot.lane.b32.xlu0 %v2610, 4
      %v2720 = vpop.permute.xlu0 %2719
      %2721 = vrot.lane.b32.xlu0 %v2611, 4
      %v2722 = vpop.permute.xlu0 %2721
      %2723 = vrot.lane.b32.xlu0 %v2612, 4
      %v2724 = vpop.permute.xlu0 %2723
      %2725 = vrot.lane.b32.xlu0 %v2613, 4
      %v2726 = vpop.permute.xlu0 %2725
      %2727 = vrot.lane.b32.xlu0 %v2614, 4
      %v2728 = vpop.permute.xlu0 %2727
      %2729 = vrot.lane.b32.xlu0 %v2615, 4
      %v2730 = vpop.permute.xlu0 %2729
      %2731 = vrot.lane.b32.xlu0 %v2616, 4
      %v2732 = vpop.permute.xlu0 %2731
      %2733 = vrot.lane.b32.xlu0 %v2617, 4
      %v2734 = vpop.permute.xlu0 %2733
      %2735 = vrot.lane.b32.xlu0 %v2618, 4
      %v2736 = vpop.permute.xlu0 %2735
      %2737 = vrot.lane.b32.xlu0 %v2619, 4
      %v2738 = vpop.permute.xlu0 %2737
      %2739 = vrot.lane.b32.xlu0 %v2620, 4
      %v2740 = vpop.permute.xlu0 %2739
      %2741 = vrot.lane.b32.xlu0 %v2621, 4
      %v2742 = vpop.permute.xlu0 %2741
      %2743 = vrot.lane.b32.xlu0 %v2622, 4
      %v2744 = vpop.permute.xlu0 %2743
      %2745 = vrot.lane.b32.xlu0 %v2623, 4
      %v2746 = vpop.permute.xlu0 %2745
      %2747 = vrot.lane.b32.xlu0 %v2624, 4
      %v2748 = vpop.permute.xlu0 %2747
      %2749 = vrot.lane.b32.xlu0 %v2625, 4
      %v2750 = vpop.permute.xlu0 %2749
      %2751 = vrot.lane.b32.xlu0 %v2626, 4
      %v2752 = vpop.permute.xlu0 %2751
      %2753 = vrot.lane.b32.xlu0 %v2627, 4
      %v2754 = vpop.permute.xlu0 %2753
      %2755 = vrot.lane.b32.xlu0 %v2628, 4
      %v2756 = vpop.permute.xlu0 %2755
      %2821 = vrot.lane.b32.xlu0 %v2629, 8
      %v2822 = vpop.permute.xlu0 %2821
      %2823 = vrot.lane.b32.xlu0 %v2630, 8
      %v2824 = vpop.permute.xlu0 %2823
      %2825 = vrot.lane.b32.xlu0 %v2631, 8
      %v2826 = vpop.permute.xlu0 %2825
      %2827 = vrot.lane.b32.xlu0 %v2632, 8
      %v2828 = vpop.permute.xlu0 %2827
      %2829 = vrot.lane.b32.xlu0 %v2633, 8
      %v2830 = vpop.permute.xlu0 %2829
      %2831 = vrot.lane.b32.xlu0 %v2634, 8
      %v2832 = vpop.permute.xlu0 %2831
      %2833 = vrot.lane.b32.xlu0 %v2635, 8
      %v2834 = vpop.permute.xlu0 %2833
      %2835 = vrot.lane.b32.xlu0 %v2636, 8
      %v2836 = vpop.permute.xlu0 %2835
      %2837 = vrot.lane.b32.xlu0 %v2637, 8
      %v2838 = vpop.permute.xlu0 %2837
      %2839 = vrot.lane.b32.xlu0 %v2638, 8
      %v2840 = vpop.permute.xlu0 %2839
      %2841 = vrot.lane.b32.xlu0 %v2639, 8
      %v2842 = vpop.permute.xlu0 %2841
      %2843 = vrot.lane.b32.xlu0 %v2640, 8
      %v2844 = vpop.permute.xlu0 %2843
      %2845 = vrot.lane.b32.xlu0 %v2641, 8
      %v2846 = vpop.permute.xlu0 %2845
      %2847 = vrot.lane.b32.xlu0 %v2642, 8
      %v2848 = vpop.permute.xlu0 %2847
      %2849 = vrot.lane.b32.xlu0 %v2643, 8
      %v2850 = vpop.permute.xlu0 %2849
      %2851 = vrot.lane.b32.xlu0 %v2644, 8
      %v2852 = vpop.permute.xlu0 %2851
      %2853 = vrot.lane.b32.xlu0 %v2645, 8
      %v2854 = vpop.permute.xlu0 %2853
      %2855 = vrot.lane.b32.xlu0 %v2646, 8
      %v2856 = vpop.permute.xlu0 %2855
      %2857 = vrot.lane.b32.xlu0 %v2647, 8
      %v2858 = vpop.permute.xlu0 %2857
      %2859 = vrot.lane.b32.xlu0 %v2648, 8
      %v2860 = vpop.permute.xlu0 %2859
      %2861 = vrot.lane.b32.xlu0 %v2649, 8
      %v2862 = vpop.permute.xlu0 %2861
      %2863 = vrot.lane.b32.xlu0 %v2650, 8
      %v2864 = vpop.permute.xlu0 %2863
      %2865 = vrot.lane.b32.xlu0 %v2651, 8
      %v2866 = vpop.permute.xlu0 %2865
      %2867 = vrot.lane.b32.xlu0 %v2652, 8
      %v2868 = vpop.permute.xlu0 %2867
      %2869 = vrot.lane.b32.xlu0 %v2653, 8
      %v2870 = vpop.permute.xlu0 %2869
      %2871 = vrot.lane.b32.xlu0 %v2654, 8
      %v2872 = vpop.permute.xlu0 %2871
      %2873 = vrot.lane.b32.xlu0 %v2655, 8
      %v2874 = vpop.permute.xlu0 %2873
      %2875 = vrot.lane.b32.xlu0 %v2656, 8
      %v2876 = vpop.permute.xlu0 %2875
      %2877 = vrot.lane.b32.xlu0 %v2657, 8
      %v2878 = vpop.permute.xlu0 %2877
      %2879 = vrot.lane.b32.xlu0 %v2658, 8
      %v2880 = vpop.permute.xlu0 %2879
      %2881 = vrot.lane.b32.xlu0 %v2659, 8
      %v2882 = vpop.permute.xlu0 %2881
      %2883 = vrot.lane.b32.xlu0 %v2660, 8
      %v2884 = vpop.permute.xlu0 %2883
      %v2917 = vsel %vm334, %v2565, %v2694
      %v2918 = vsel %vm334, %v2566, %v2696
      %v2919 = vsel %vm334, %v2567, %v2698
      %v2920 = vsel %vm334, %v2568, %v2700
      %v2921 = vsel %vm334, %v2569, %v2702
      %v2922 = vsel %vm334, %v2570, %v2704
      %v2923 = vsel %vm334, %v2571, %v2706
      %v2924 = vsel %vm334, %v2572, %v2708
      %v2925 = vsel %vm334, %v2573, %v2710
      %v2926 = vsel %vm334, %v2574, %v2712
      %v2927 = vsel %vm334, %v2575, %v2714
      %v2928 = vsel %vm334, %v2576, %v2716
      %v2929 = vsel %vm334, %v2577, %v2718
      %v2930 = vsel %vm334, %v2578, %v2720
      %v2931 = vsel %vm334, %v2579, %v2722
      %v2932 = vsel %vm334, %v2580, %v2724
      %v2933 = vsel %vm334, %v2581, %v2726
      %v2934 = vsel %vm334, %v2582, %v2728
      %v2935 = vsel %vm334, %v2583, %v2730
      %v2936 = vsel %vm334, %v2584, %v2732
      %v2937 = vsel %vm334, %v2585, %v2734
      %v2938 = vsel %vm334, %v2586, %v2736
      %v2939 = vsel %vm334, %v2587, %v2738
      %v2940 = vsel %vm334, %v2588, %v2740
      %v2941 = vsel %vm334, %v2589, %v2742
      %v2942 = vsel %vm334, %v2590, %v2744
      %v2943 = vsel %vm334, %v2591, %v2746
      %v2944 = vsel %vm334, %v2592, %v2748
      %v2945 = vsel %vm334, %v2593, %v2750
      %v2946 = vsel %vm334, %v2594, %v2752
      %v2947 = vsel %vm334, %v2595, %v2754
      %v2948 = vsel %vm334, %v2596, %v2756
      %vm2949 = vcmask 64512
      %v2950 = vsel %vm2949, %v2917, %v2822
      %v2951 = vsel %vm2949, %v2918, %v2824
      %v2952 = vsel %vm2949, %v2919, %v2826
      %v2953 = vsel %vm2949, %v2920, %v2828
      %v2954 = vsel %vm2949, %v2921, %v2830
      %v2955 = vsel %vm2949, %v2922, %v2832
      %v2956 = vsel %vm2949, %v2923, %v2834
      %v2957 = vsel %vm2949, %v2924, %v2836
      %v2958 = vsel %vm2949, %v2925, %v2838
      %v2959 = vsel %vm2949, %v2926, %v2840
      %v2960 = vsel %vm2949, %v2927, %v2842
      %v2961 = vsel %vm2949, %v2928, %v2844
      %v2962 = vsel %vm2949, %v2929, %v2846
      %v2963 = vsel %vm2949, %v2930, %v2848
      %v2964 = vsel %vm2949, %v2931, %v2850
      %v2965 = vsel %vm2949, %v2932, %v2852
      %v2966 = vsel %vm2949, %v2933, %v2854
      %v2967 = vsel %vm2949, %v2934, %v2856
      %v2968 = vsel %vm2949, %v2935, %v2858
      %v2969 = vsel %vm2949, %v2936, %v2860
      %v2970 = vsel %vm2949, %v2937, %v2862
      %v2971 = vsel %vm2949, %v2938, %v2864
      %v2972 = vsel %vm2949, %v2939, %v2866
      %v2973 = vsel %vm2949, %v2940, %v2868
      %v2974 = vsel %vm2949, %v2941, %v2870
      %v2975 = vsel %vm2949, %v2942, %v2872
      %v2976 = vsel %vm2949, %v2943, %v2874
      %v2977 = vsel %vm2949, %v2944, %v2876
      %v2978 = vsel %vm2949, %v2945, %v2878
      %v2979 = vsel %vm2949, %v2946, %v2880
      %v2980 = vsel %vm2949, %v2947, %v2882
      %v2981 = vsel %vm2949, %v2948, %v2884
      %v2982 = vpack.c.bf16 %v2951, %v2950
      %v2983 = vpack.c.bf16 %v2953, %v2952
      %v2984 = vpack.c.bf16 %v2955, %v2954
      %v2985 = vpack.c.bf16 %v2957, %v2956
      %v2986 = vpack.c.bf16 %v2959, %v2958
      %v2987 = vpack.c.bf16 %v2961, %v2960
      %v2988 = vpack.c.bf16 %v2963, %v2962
      %v2989 = vpack.c.bf16 %v2965, %v2964
      %v2990 = vpack.c.bf16 %v2967, %v2966
      %v2991 = vpack.c.bf16 %v2969, %v2968
      %v2992 = vpack.c.bf16 %v2971, %v2970
      %v2993 = vpack.c.bf16 %v2973, %v2972
      %v2994 = vpack.c.bf16 %v2975, %v2974
      %v2995 = vpack.c.bf16 %v2977, %v2976
      %v2996 = vpack.c.bf16 %v2979, %v2978
      %v2997 = vpack.c.bf16 %v2981, %v2980
      %v2998 = vld [vmem:[%s3] sm:$0xf]
      %v2999 = vld [vmem:[%s3 + $0x4] sm:$0x3]
      %v3000 = vld [vmem:[%s2532] sm:$0xff]
      %v3001 = vld [vmem:[%s2532 + $0x8] sm:$0xff]
      %v3002 = vld [vmem:[%s2532 + $0x18] sm:$0xff]
      %v3003 = vld [vmem:[%s2532 + $0x20] sm:$0xff]
      %v3004 = vld [vmem:[%s2532 + $0x30] sm:$0xff]
      %v3005 = vld [vmem:[%s2532 + $0x38] sm:$0xff]
      %v3006 = vld [vmem:[%s2532 + $0x48] sm:$0xff]
      %v3007 = vld [vmem:[%s2532 + $0x50] sm:$0xff]
      %v3008 = vld [vmem:[%s2532 + $0x60] sm:$0xff]
      %v3009 = vld [vmem:[%s2532 + $0x68] sm:$0xff]
      %v3010 = vld [vmem:[%s2532 + $0x78] sm:$0xff]
      %v3011 = vld [vmem:[%s2532 + $0x80] sm:$0xff]
      %v3012 = vld [vmem:[%s2532 + $0x90] sm:$0xff]
      %v3013 = vld [vmem:[%s2532 + $0x98] sm:$0xff]
      %v3014 = vld [vmem:[%s2532 + $0xa8] sm:$0xff]
      %v3015 = vld [vmem:[%s2532 + $0xb0] sm:$0xff]
      %v3016 = vld [vmem:[%s2532 + $0xc0] sm:$0xff]
      %v3017 = vld [vmem:[%s2532 + $0xc8] sm:$0xff]
      %v3018 = vld [vmem:[%s2532 + $0xd8] sm:$0xff]
      %v3019 = vld [vmem:[%s2532 + $0xe0] sm:$0xff]
      %v3020 = vld [vmem:[%s2532 + $0xf0] sm:$0xff]
      %v3021 = vld [vmem:[%s2532 + $0xf8] sm:$0xff]
      %v3022 = vld [vmem:[%s2532 + $0x108] sm:$0xff]
      %v3023 = vld [vmem:[%s2532 + $0x110] sm:$0xff]
      %v3024 = vld [vmem:[%s2532 + $0x120] sm:$0xff]
      %v3025 = vld [vmem:[%s2532 + $0x128] sm:$0xff]
      %v3026 = vld [vmem:[%s2532 + $0x138] sm:$0xff]
      %v3027 = vld [vmem:[%s2532 + $0x140] sm:$0xff]
      %v3028 = vld [vmem:[%s2532 + $0x150] sm:$0xff]
      %v3029 = vld [vmem:[%s2532 + $0x158] sm:$0xff]
      %v3030 = vld [vmem:[%s2532 + $0x168] sm:$0xff]
      %v3031 = vld [vmem:[%s2532 + $0x170] sm:$0xff]
      %v3032 = vld [vmem:[%s2532 + $0x1] sm:$0xff]
      %v3033 = vld [vmem:[%s2532 + $0x9] sm:$0xff]
      %v3034 = vld [vmem:[%s2532 + $0x19] sm:$0xff]
      %v3035 = vld [vmem:[%s2532 + $0x21] sm:$0xff]
      %v3036 = vld [vmem:[%s2532 + $0x31] sm:$0xff]
      %v3037 = vld [vmem:[%s2532 + $0x39] sm:$0xff]
      %v3038 = vld [vmem:[%s2532 + $0x49] sm:$0xff]
      %v3039 = vld [vmem:[%s2532 + $0x51] sm:$0xff]
      %v3040 = vld [vmem:[%s2532 + $0x61] sm:$0xff]
      %v3041 = vld [vmem:[%s2532 + $0x69] sm:$0xff]
      %v3042 = vld [vmem:[%s2532 + $0x79] sm:$0xff]
      %v3043 = vld [vmem:[%s2532 + $0x81] sm:$0xff]
      %v3044 = vld [vmem:[%s2532 + $0x91] sm:$0xff]
      %v3045 = vld [vmem:[%s2532 + $0x99] sm:$0xff]
      %v3046 = vld [vmem:[%s2532 + $0xa9] sm:$0xff]
      %v3047 = vld [vmem:[%s2532 + $0xb1] sm:$0xff]
      %v3048 = vld [vmem:[%s2532 + $0xc1] sm:$0xff]
      %v3049 = vld [vmem:[%s2532 + $0xc9] sm:$0xff]
      %v3050 = vld [vmem:[%s2532 + $0xd9] sm:$0xff]
      %v3051 = vld [vmem:[%s2532 + $0xe1] sm:$0xff]
      %v3052 = vld [vmem:[%s2532 + $0xf1] sm:$0xff]
      %v3053 = vld [vmem:[%s2532 + $0xf9] sm:$0xff]
      %v3054 = vld [vmem:[%s2532 + $0x109] sm:$0xff]
      %v3055 = vld [vmem:[%s2532 + $0x111] sm:$0xff]
      %v3056 = vld [vmem:[%s2532 + $0x121] sm:$0xff]
      %v3057 = vld [vmem:[%s2532 + $0x129] sm:$0xff]
      %v3058 = vld [vmem:[%s2532 + $0x139] sm:$0xff]
      %v3059 = vld [vmem:[%s2532 + $0x141] sm:$0xff]
      %v3060 = vld [vmem:[%s2532 + $0x151] sm:$0xff]
      %v3061 = vld [vmem:[%s2532 + $0x159] sm:$0xff]
      %v3062 = vld [vmem:[%s2532 + $0x169] sm:$0xff]
      %v3063 = vld [vmem:[%s2532 + $0x171] sm:$0xff]
      %v3064 = vld [vmem:[%s2532 + $0x2] sm:$0xff]
      %v3065 = vld [vmem:[%s2532 + $0xa] sm:$0xff]
      %v3066 = vld [vmem:[%s2532 + $0x1a] sm:$0xff]
      %v3067 = vld [vmem:[%s2532 + $0x22] sm:$0xff]
      %v3068 = vld [vmem:[%s2532 + $0x32] sm:$0xff]
      %v3069 = vld [vmem:[%s2532 + $0x3a] sm:$0xff]
      %v3070 = vld [vmem:[%s2532 + $0x4a] sm:$0xff]
      %v3071 = vld [vmem:[%s2532 + $0x52] sm:$0xff]
      %v3072 = vld [vmem:[%s2532 + $0x62] sm:$0xff]
      %v3073 = vld [vmem:[%s2532 + $0x6a] sm:$0xff]
      %v3074 = vld [vmem:[%s2532 + $0x7a] sm:$0xff]
      %v3075 = vld [vmem:[%s2532 + $0x82] sm:$0xff]
      %v3076 = vld [vmem:[%s2532 + $0x92] sm:$0xff]
      %v3077 = vld [vmem:[%s2532 + $0x9a] sm:$0xff]
      %v3078 = vld [vmem:[%s2532 + $0xaa] sm:$0xff]
      %v3079 = vld [vmem:[%s2532 + $0xb2] sm:$0xff]
      %v3080 = vld [vmem:[%s2532 + $0xc2] sm:$0xff]
      %v3081 = vld [vmem:[%s2532 + $0xca] sm:$0xff]
      %v3082 = vld [vmem:[%s2532 + $0xda] sm:$0xff]
      %v3083 = vld [vmem:[%s2532 + $0xe2] sm:$0xff]
      %v3084 = vld [vmem:[%s2532 + $0xf2] sm:$0xff]
      %v3085 = vld [vmem:[%s2532 + $0xfa] sm:$0xff]
      %v3086 = vld [vmem:[%s2532 + $0x10a] sm:$0xff]
      %v3087 = vld [vmem:[%s2532 + $0x112] sm:$0xff]
      %v3088 = vld [vmem:[%s2532 + $0x122] sm:$0xff]
      %v3089 = vld [vmem:[%s2532 + $0x12a] sm:$0xff]
      %v3090 = vld [vmem:[%s2532 + $0x13a] sm:$0xff]
      %v3091 = vld [vmem:[%s2532 + $0x142] sm:$0xff]
      %v3092 = vld [vmem:[%s2532 + $0x152] sm:$0xff]
      %v3093 = vld [vmem:[%s2532 + $0x15a] sm:$0xff]
      %v3094 = vld [vmem:[%s2532 + $0x16a] sm:$0xff]
      %v3095 = vld [vmem:[%s2532 + $0x172] sm:$0xff]
      %3128 = vrot.lane.b32.xlu0 %v3032, 4
      %v3129 = vpop.permute.xlu0 %3128
      %3130 = vrot.lane.b32.xlu0 %v3033, 4
      %v3131 = vpop.permute.xlu0 %3130
      %3132 = vrot.lane.b32.xlu0 %v3034, 4
      %v3133 = vpop.permute.xlu0 %3132
      %3134 = vrot.lane.b32.xlu0 %v3035, 4
      %v3135 = vpop.permute.xlu0 %3134
      %3136 = vrot.lane.b32.xlu0 %v3036, 4
      %v3137 = vpop.permute.xlu0 %3136
      %3138 = vrot.lane.b32.xlu0 %v3037, 4
      %v3139 = vpop.permute.xlu0 %3138
      %3140 = vrot.lane.b32.xlu0 %v3038, 4
      %v3141 = vpop.permute.xlu0 %3140
      %3142 = vrot.lane.b32.xlu0 %v3039, 4
      %v3143 = vpop.permute.xlu0 %3142
      %3144 = vrot.lane.b32.xlu0 %v3040, 4
      %v3145 = vpop.permute.xlu0 %3144
      %3146 = vrot.lane.b32.xlu0 %v3041, 4
      %v3147 = vpop.permute.xlu0 %3146
      %3148 = vrot.lane.b32.xlu0 %v3042, 4
      %v3149 = vpop.permute.xlu0 %3148
      %3150 = vrot.lane.b32.xlu0 %v3043, 4
      %v3151 = vpop.permute.xlu0 %3150
      %3152 = vrot.lane.b32.xlu0 %v3044, 4
      %v3153 = vpop.permute.xlu0 %3152
      %3154 = vrot.lane.b32.xlu0 %v3045, 4
      %v3155 = vpop.permute.xlu0 %3154
      %3156 = vrot.lane.b32.xlu0 %v3046, 4
      %v3157 = vpop.permute.xlu0 %3156
      %3158 = vrot.lane.b32.xlu0 %v3047, 4
      %v3159 = vpop.permute.xlu0 %3158
      %3160 = vrot.lane.b32.xlu0 %v3048, 4
      %v3161 = vpop.permute.xlu0 %3160
      %3162 = vrot.lane.b32.xlu0 %v3049, 4
      %v3163 = vpop.permute.xlu0 %3162
      %3164 = vrot.lane.b32.xlu0 %v3050, 4
      %v3165 = vpop.permute.xlu0 %3164
      %3166 = vrot.lane.b32.xlu0 %v3051, 4
      %v3167 = vpop.permute.xlu0 %3166
      %3168 = vrot.lane.b32.xlu0 %v3052, 4
      %v3169 = vpop.permute.xlu0 %3168
      %3170 = vrot.lane.b32.xlu0 %v3053, 4
      %v3171 = vpop.permute.xlu0 %3170
      %3172 = vrot.lane.b32.xlu0 %v3054, 4
      %v3173 = vpop.permute.xlu0 %3172
      %3174 = vrot.lane.b32.xlu0 %v3055, 4
      %v3175 = vpop.permute.xlu0 %3174
      %3176 = vrot.lane.b32.xlu0 %v3056, 4
      %v3177 = vpop.permute.xlu0 %3176
      %3178 = vrot.lane.b32.xlu0 %v3057, 4
      %v3179 = vpop.permute.xlu0 %3178
      %3180 = vrot.lane.b32.xlu0 %v3058, 4
      %v3181 = vpop.permute.xlu0 %3180
      %3182 = vrot.lane.b32.xlu0 %v3059, 4
      %v3183 = vpop.permute.xlu0 %3182
      %3184 = vrot.lane.b32.xlu0 %v3060, 4
      %v3185 = vpop.permute.xlu0 %3184
      %3186 = vrot.lane.b32.xlu0 %v3061, 4
      %v3187 = vpop.permute.xlu0 %3186
      %3188 = vrot.lane.b32.xlu0 %v3062, 4
      %v3189 = vpop.permute.xlu0 %3188
      %3190 = vrot.lane.b32.xlu0 %v3063, 4
      %v3191 = vpop.permute.xlu0 %3190
      %3256 = vrot.lane.b32.xlu0 %v3064, 8
      %v3257 = vpop.permute.xlu0 %3256
      %3258 = vrot.lane.b32.xlu0 %v3065, 8
      %v3259 = vpop.permute.xlu0 %3258
      %3260 = vrot.lane.b32.xlu0 %v3066, 8
      %v3261 = vpop.permute.xlu0 %3260
      %3262 = vrot.lane.b32.xlu0 %v3067, 8
      %v3263 = vpop.permute.xlu0 %3262
      %3264 = vrot.lane.b32.xlu0 %v3068, 8
      %v3265 = vpop.permute.xlu0 %3264
      %3266 = vrot.lane.b32.xlu0 %v3069, 8
      %v3267 = vpop.permute.xlu0 %3266
      %3268 = vrot.lane.b32.xlu0 %v3070, 8
      %v3269 = vpop.permute.xlu0 %3268
      %3270 = vrot.lane.b32.xlu0 %v3071, 8
      %v3271 = vpop.permute.xlu0 %3270
      %3272 = vrot.lane.b32.xlu0 %v3072, 8
      %v3273 = vpop.permute.xlu0 %3272
      %3274 = vrot.lane.b32.xlu0 %v3073, 8
      %v3275 = vpop.permute.xlu0 %3274
      %3276 = vrot.lane.b32.xlu0 %v3074, 8
      %v3277 = vpop.permute.xlu0 %3276
      %3278 = vrot.lane.b32.xlu0 %v3075, 8
      %v3279 = vpop.permute.xlu0 %3278
      %3280 = vrot.lane.b32.xlu0 %v3076, 8
      %v3281 = vpop.permute.xlu0 %3280
      %3282 = vrot.lane.b32.xlu0 %v3077, 8
      %v3283 = vpop.permute.xlu0 %3282
      %3284 = vrot.lane.b32.xlu0 %v3078, 8
      %v3285 = vpop.permute.xlu0 %3284
      %3286 = vrot.lane.b32.xlu0 %v3079, 8
      %v3287 = vpop.permute.xlu0 %3286
      %3288 = vrot.lane.b32.xlu0 %v3080, 8
      %v3289 = vpop.permute.xlu0 %3288
      %3290 = vrot.lane.b32.xlu0 %v3081, 8
      %v3291 = vpop.permute.xlu0 %3290
      %3292 = vrot.lane.b32.xlu0 %v3082, 8
      %v3293 = vpop.permute.xlu0 %3292
      %3294 = vrot.lane.b32.xlu0 %v3083, 8
      %v3295 = vpop.permute.xlu0 %3294
      %3296 = vrot.lane.b32.xlu0 %v3084, 8
      %v3297 = vpop.permute.xlu0 %3296
      %3298 = vrot.lane.b32.xlu0 %v3085, 8
      %v3299 = vpop.permute.xlu0 %3298
      %3300 = vrot.lane.b32.xlu0 %v3086, 8
      %v3301 = vpop.permute.xlu0 %3300
      %3302 = vrot.lane.b32.xlu0 %v3087, 8
      %v3303 = vpop.permute.xlu0 %3302
      %3304 = vrot.lane.b32.xlu0 %v3088, 8
      %v3305 = vpop.permute.xlu0 %3304
      %3306 = vrot.lane.b32.xlu0 %v3089, 8
      %v3307 = vpop.permute.xlu0 %3306
      %3308 = vrot.lane.b32.xlu0 %v3090, 8
      %v3309 = vpop.permute.xlu0 %3308
      %3310 = vrot.lane.b32.xlu0 %v3091, 8
      %v3311 = vpop.permute.xlu0 %3310
      %3312 = vrot.lane.b32.xlu0 %v3092, 8
      %v3313 = vpop.permute.xlu0 %3312
      %3314 = vrot.lane.b32.xlu0 %v3093, 8
      %v3315 = vpop.permute.xlu0 %3314
      %3316 = vrot.lane.b32.xlu0 %v3094, 8
      %v3317 = vpop.permute.xlu0 %3316
      %3318 = vrot.lane.b32.xlu0 %v3095, 8
      %v3319 = vpop.permute.xlu0 %3318
      %v3352 = vsel %vm334, %v3000, %v3129
      %v3353 = vsel %vm334, %v3001, %v3131
      %v3354 = vsel %vm334, %v3002, %v3133
      %v3355 = vsel %vm334, %v3003, %v3135
      %v3356 = vsel %vm334, %v3004, %v3137
      %v3357 = vsel %vm334, %v3005, %v3139
      %v3358 = vsel %vm334, %v3006, %v3141
      %v3359 = vsel %vm334, %v3007, %v3143
      %v3360 = vsel %vm334, %v3008, %v3145
      %v3361 = vsel %vm334, %v3009, %v3147
      %v3362 = vsel %vm334, %v3010, %v3149
      %v3363 = vsel %vm334, %v3011, %v3151
      %v3364 = vsel %vm334, %v3012, %v3153
      %v3365 = vsel %vm334, %v3013, %v3155
      %v3366 = vsel %vm334, %v3014, %v3157
      %v3367 = vsel %vm334, %v3015, %v3159
      %v3368 = vsel %vm334, %v3016, %v3161
      %v3369 = vsel %vm334, %v3017, %v3163
      %v3370 = vsel %vm334, %v3018, %v3165
      %v3371 = vsel %vm334, %v3019, %v3167
      %v3372 = vsel %vm334, %v3020, %v3169
      %v3373 = vsel %vm334, %v3021, %v3171
      %v3374 = vsel %vm334, %v3022, %v3173
      %v3375 = vsel %vm334, %v3023, %v3175
      %v3376 = vsel %vm334, %v3024, %v3177
      %v3377 = vsel %vm334, %v3025, %v3179
      %v3378 = vsel %vm334, %v3026, %v3181
      %v3379 = vsel %vm334, %v3027, %v3183
      %v3380 = vsel %vm334, %v3028, %v3185
      %v3381 = vsel %vm334, %v3029, %v3187
      %v3382 = vsel %vm334, %v3030, %v3189
      %v3383 = vsel %vm334, %v3031, %v3191
      %v3384 = vsel %vm2949, %v3352, %v3257
      %v3385 = vsel %vm2949, %v3353, %v3259
      %v3386 = vsel %vm2949, %v3354, %v3261
      %v3387 = vsel %vm2949, %v3355, %v3263
      %v3388 = vsel %vm2949, %v3356, %v3265
      %v3389 = vsel %vm2949, %v3357, %v3267
      %v3390 = vsel %vm2949, %v3358, %v3269
      %v3391 = vsel %vm2949, %v3359, %v3271
      %v3392 = vsel %vm2949, %v3360, %v3273
      %v3393 = vsel %vm2949, %v3361, %v3275
      %v3394 = vsel %vm2949, %v3362, %v3277
      %v3395 = vsel %vm2949, %v3363, %v3279
      %v3396 = vsel %vm2949, %v3364, %v3281
      %v3397 = vsel %vm2949, %v3365, %v3283
      %v3398 = vsel %vm2949, %v3366, %v3285
      %v3399 = vsel %vm2949, %v3367, %v3287
      %v3400 = vsel %vm2949, %v3368, %v3289
      %v3401 = vsel %vm2949, %v3369, %v3291
      %v3402 = vsel %vm2949, %v3370, %v3293
      %v3403 = vsel %vm2949, %v3371, %v3295
      %v3404 = vsel %vm2949, %v3372, %v3297
      %v3405 = vsel %vm2949, %v3373, %v3299
      %v3406 = vsel %vm2949, %v3374, %v3301
      %v3407 = vsel %vm2949, %v3375, %v3303
      %v3408 = vsel %vm2949, %v3376, %v3305
      %v3409 = vsel %vm2949, %v3377, %v3307
      %v3410 = vsel %vm2949, %v3378, %v3309
      %v3411 = vsel %vm2949, %v3379, %v3311
      %v3412 = vsel %vm2949, %v3380, %v3313
      %v3413 = vsel %vm2949, %v3381, %v3315
      %v3414 = vsel %vm2949, %v3382, %v3317
      %v3415 = vsel %vm2949, %v3383, %v3319
      %v3416 = vpack.c.bf16 %v3385, %v3384
      %v3417 = vpack.c.bf16 %v3387, %v3386
      %v3418 = vpack.c.bf16 %v3389, %v3388
      %v3419 = vpack.c.bf16 %v3391, %v3390
      %v3420 = vpack.c.bf16 %v3393, %v3392
      %v3421 = vpack.c.bf16 %v3395, %v3394
      %v3422 = vpack.c.bf16 %v3397, %v3396
      %v3423 = vpack.c.bf16 %v3399, %v3398
      %v3424 = vpack.c.bf16 %v3401, %v3400
      %v3425 = vpack.c.bf16 %v3403, %v3402
      %v3426 = vpack.c.bf16 %v3405, %v3404
      %v3427 = vpack.c.bf16 %v3407, %v3406
      %v3428 = vpack.c.bf16 %v3409, %v3408
      %v3429 = vpack.c.bf16 %v3411, %v3410
      %v3430 = vpack.c.bf16 %v3413, %v3412
      %v3431 = vpack.c.bf16 %v3415, %v3414
      %s3432 = scalar_lea.vmem %s3, 8
      %v3433 = vld [vmem:[%s3432] sm:$0xf]
      %v3434 = vld [vmem:[%s3432 + $0x4] sm:$0x3]
      %v3437 = vunpack.c.l.b16 %v3433
      %v3438 = vunpack.c.l.b16 %v3434
      %v3439 = vpack.c.b16 %v3438, %v3437
      %vm3440 = vcmask 97280
      %v3442 = vsel %vm3440, %v3416, 0
      %v3445 = vsel %vm3440, %v3417, 0
      %v3448 = vsel %vm3440, %v3418, 0
      %v3451 = vsel %vm3440, %v3419, 0
      %v3454 = vsel %vm3440, %v3420, 0
      %v3457 = vsel %vm3440, %v3421, 0
      %v3460 = vsel %vm3440, %v3422, 0
      %v3463 = vsel %vm3440, %v3423, 0
      %v3466 = vsel %vm3440, %v3424, 0
      %v3469 = vsel %vm3440, %v3425, 0
      %v3472 = vsel %vm3440, %v3426, 0
      %v3475 = vsel %vm3440, %v3427, 0
      %v3478 = vsel %vm3440, %v3428, 0
      %v3481 = vsel %vm3440, %v3429, 0
      %v3484 = vsel %vm3440, %v3430, 0
      %v3487 = vsel %vm3440, %v3431, 0
      %vm3489 = vcmask 1045504
      %v3491 = vsel %vm3489, %v3439, 0
      %3493 = vmatprep.subr.bf16.mxu0 0
      %3494 = vmatpush1.bf16.msra.mxu0 0
      %3495 = vmatprep.subr.bf16.mxu0 0
      %3496 = vmatpush1.bf16.msra.mxu0 0
      %3497 = vmatprep.subr.bf16.mxu0 0
      %3498 = vmatpush1.bf16.msra.mxu0 0
      %3499 = vmatprep.subr.bf16.mxu0 0
      %3500 = vmatpush1.bf16.msra.mxu0 0
      %3501 = vmatprep.subr.bf16.mxu0 0
      %3502 = vmatpush1.bf16.msra.mxu0 0
      %3503 = vmatprep.subr.bf16.mxu0 0
      %3504 = vmatpush1.bf16.msra.mxu0 0
      %3505 = vmatprep.subr.bf16.mxu0 0
      %3506 = vmatpush1.bf16.msra.mxu0 0
      %3507 = vmatprep.subr.bf16.mxu0 0
      %3508 = vmatpush1.bf16.msra.mxu0 %v3491
      %3509 = vmatprep.subr.bf16.mxu0 0
      %3510 = vmatpush2.bf16.msra.mxu0 0
      %3511 = vmatprep.subr.bf16.mxu0 0
      %3512 = vmatpush2.bf16.msra.mxu0 0
      %3513 = vmatprep.subr.bf16.mxu0 0
      %3514 = vmatpush2.bf16.msra.mxu0 0
      %3515 = vmatprep.subr.bf16.mxu0 0
      %3516 = vmatpush2.bf16.msra.mxu0 0
      %3517 = vmatprep.subr.bf16.mxu0 0
      %3518 = vmatpush2.bf16.msra.mxu0 0
      %3519 = vmatprep.subr.bf16.mxu0 0
      %3520 = vmatpush2.bf16.msra.mxu0 0
      %3521 = vmatprep.subr.bf16.mxu0 0
      %3522 = vmatpush2.bf16.msra.mxu0 0
      %3523 = vmatprep.subr.bf16.mxu0 0
      %3524 = vmatpush2.bf16.msra.mxu0 0
      %3525 = vmatprep.mubr.bf16.mxu0 0
      %3526 = vmatmul.mubr.bf16.gmra.mxu0 %v3442
      %v3527 = vpop.f32.mrf.mxu0
      %v3528 = vadd.f32 0.0, %v3527
      %v3529 = vpop.f32.mrf.mxu0
      %v3530 = vpop.f32.mrf.mxu0
      %v3531 = vadd.f32 0.0, %v3530
      %v3532 = vpop.f32.mrf.mxu0
      %3533 = vmatprep.mubr.bf16.mxu0 0
      %3534 = vmatmul.mubr.bf16.gmra.mxu0 %v3445
      %v3535 = vpop.f32.mrf.mxu0
      %v3536 = vadd.f32 0.0, %v3535
      %v3537 = vpop.f32.mrf.mxu0
      %v3538 = vpop.f32.mrf.mxu0
      %v3539 = vadd.f32 0.0, %v3538
      %v3540 = vpop.f32.mrf.mxu0
      %3541 = vmatprep.mubr.bf16.mxu0 0
      %3542 = vmatmul.mubr.bf16.gmra.mxu0 %v3448
      %v3543 = vpop.f32.mrf.mxu0
      %v3544 = vadd.f32 0.0, %v3543
      %v3545 = vpop.f32.mrf.mxu0
      %v3546 = vpop.f32.mrf.mxu0
      %v3547 = vadd.f32 0.0, %v3546
      %v3548 = vpop.f32.mrf.mxu0
      %3549 = vmatprep.mubr.bf16.mxu0 0
      %3550 = vmatmul.mubr.bf16.gmra.mxu0 %v3451
      %v3551 = vpop.f32.mrf.mxu0
      %v3552 = vadd.f32 0.0, %v3551
      %v3553 = vpop.f32.mrf.mxu0
      %v3554 = vpop.f32.mrf.mxu0
      %v3555 = vadd.f32 0.0, %v3554
      %v3556 = vpop.f32.mrf.mxu0
      %3557 = vmatprep.mubr.bf16.mxu0 0
      %3558 = vmatmul.mubr.bf16.gmra.mxu0 %v3454
      %v3559 = vpop.f32.mrf.mxu0
      %v3560 = vadd.f32 0.0, %v3559
      %v3561 = vpop.f32.mrf.mxu0
      %v3562 = vpop.f32.mrf.mxu0
      %v3563 = vadd.f32 0.0, %v3562
      %v3564 = vpop.f32.mrf.mxu0
      %3565 = vmatprep.mubr.bf16.mxu0 0
      %3566 = vmatmul.mubr.bf16.gmra.mxu0 %v3457
      %v3567 = vpop.f32.mrf.mxu0
      %v3568 = vadd.f32 0.0, %v3567
      %v3569 = vpop.f32.mrf.mxu0
      %v3570 = vpop.f32.mrf.mxu0
      %v3571 = vadd.f32 0.0, %v3570
      %v3572 = vpop.f32.mrf.mxu0
      %3573 = vmatprep.mubr.bf16.mxu0 0
      %3574 = vmatmul.mubr.bf16.gmra.mxu0 %v3460
      %v3575 = vpop.f32.mrf.mxu0
      %v3576 = vadd.f32 0.0, %v3575
      %v3577 = vpop.f32.mrf.mxu0
      %v3578 = vpop.f32.mrf.mxu0
      %v3579 = vadd.f32 0.0, %v3578
      %v3580 = vpop.f32.mrf.mxu0
      %3581 = vmatprep.mubr.bf16.mxu0 0
      %3582 = vmatmul.mubr.bf16.gmra.mxu0 %v3463
      %v3583 = vpop.f32.mrf.mxu0
      %v3584 = vadd.f32 0.0, %v3583
      %v3585 = vpop.f32.mrf.mxu0
      %v3586 = vpop.f32.mrf.mxu0
      %v3587 = vadd.f32 0.0, %v3586
      %v3588 = vpop.f32.mrf.mxu0
      %3589 = vmatprep.mubr.bf16.mxu0 0
      %3590 = vmatmul.mubr.bf16.gmra.mxu0 %v3466
      %v3591 = vpop.f32.mrf.mxu0
      %v3592 = vadd.f32 0.0, %v3591
      %v3593 = vpop.f32.mrf.mxu0
      %v3594 = vpop.f32.mrf.mxu0
      %v3595 = vadd.f32 0.0, %v3594
      %v3596 = vpop.f32.mrf.mxu0
      %3597 = vmatprep.mubr.bf16.mxu0 0
      %3598 = vmatmul.mubr.bf16.gmra.mxu0 %v3469
      %v3599 = vpop.f32.mrf.mxu0
      %v3600 = vadd.f32 0.0, %v3599
      %v3601 = vpop.f32.mrf.mxu0
      %v3602 = vpop.f32.mrf.mxu0
      %v3603 = vadd.f32 0.0, %v3602
      %v3604 = vpop.f32.mrf.mxu0
      %3605 = vmatprep.mubr.bf16.mxu0 0
      %3606 = vmatmul.mubr.bf16.gmra.mxu0 %v3472
      %v3607 = vpop.f32.mrf.mxu0
      %v3608 = vadd.f32 0.0, %v3607
      %v3609 = vpop.f32.mrf.mxu0
      %v3610 = vpop.f32.mrf.mxu0
      %v3611 = vadd.f32 0.0, %v3610
      %v3612 = vpop.f32.mrf.mxu0
      %3613 = vmatprep.mubr.bf16.mxu0 0
      %3614 = vmatmul.mubr.bf16.gmra.mxu0 %v3475
      %v3615 = vpop.f32.mrf.mxu0
      %v3616 = vadd.f32 0.0, %v3615
      %v3617 = vpop.f32.mrf.mxu0
      %v3618 = vpop.f32.mrf.mxu0
      %v3619 = vadd.f32 0.0, %v3618
      %v3620 = vpop.f32.mrf.mxu0
      %3621 = vmatprep.mubr.bf16.mxu0 0
      %3622 = vmatmul.mubr.bf16.gmra.mxu0 %v3478
      %v3623 = vpop.f32.mrf.mxu0
      %v3624 = vadd.f32 0.0, %v3623
      %v3625 = vpop.f32.mrf.mxu0
      %v3626 = vpop.f32.mrf.mxu0
      %v3627 = vadd.f32 0.0, %v3626
      %v3628 = vpop.f32.mrf.mxu0
      %3629 = vmatprep.mubr.bf16.mxu0 0
      %3630 = vmatmul.mubr.bf16.gmra.mxu0 %v3481
      %v3631 = vpop.f32.mrf.mxu0
      %v3632 = vadd.f32 0.0, %v3631
      %v3633 = vpop.f32.mrf.mxu0
      %v3634 = vpop.f32.mrf.mxu0
      %v3635 = vadd.f32 0.0, %v3634
      %v3636 = vpop.f32.mrf.mxu0
      %3637 = vmatprep.mubr.bf16.mxu0 0
      %3638 = vmatmul.mubr.bf16.gmra.mxu0 %v3484
      %v3639 = vpop.f32.mrf.mxu0
      %v3640 = vadd.f32 0.0, %v3639
      %v3641 = vpop.f32.mrf.mxu0
      %v3642 = vpop.f32.mrf.mxu0
      %v3643 = vadd.f32 0.0, %v3642
      %v3644 = vpop.f32.mrf.mxu0
      %3645 = vmatprep.mubr.bf16.mxu0 0
      %3646 = vmatmul.mubr.bf16.gmra.mxu0 %v3487
      %v3647 = vpop.f32.mrf.mxu0
      %v3648 = vadd.f32 0.0, %v3647
      %v3649 = vpop.f32.mrf.mxu0
      %v3650 = vpop.f32.mrf.mxu0
      %v3651 = vadd.f32 0.0, %v3650
      %v3652 = vpop.f32.mrf.mxu0
      %3653 = vdwg.mxu0
      %v3656 = vunpack.c.l.b16 %v2998
      %v3657 = vunpack.c.l.b16 %v2999
      %v3658 = vpack.c.b16 %v3657, %v3656
      %v3660 = vsel %vm3440, %v2982, 0
      %v3663 = vsel %vm3440, %v2983, 0
      %v3666 = vsel %vm3440, %v2984, 0
      %v3669 = vsel %vm3440, %v2985, 0
      %v3672 = vsel %vm3440, %v2986, 0
      %v3675 = vsel %vm3440, %v2987, 0
      %v3678 = vsel %vm3440, %v2988, 0
      %v3681 = vsel %vm3440, %v2989, 0
      %v3684 = vsel %vm3440, %v2990, 0
      %v3687 = vsel %vm3440, %v2991, 0
      %v3690 = vsel %vm3440, %v2992, 0
      %v3693 = vsel %vm3440, %v2993, 0
      %v3696 = vsel %vm3440, %v2994, 0
      %v3699 = vsel %vm3440, %v2995, 0
      %v3702 = vsel %vm3440, %v2996, 0
      %v3705 = vsel %vm3440, %v2997, 0
      %v3708 = vsel %vm3489, %v3658, 0
      %3710 = vmatprep.subr.bf16.mxu0 0
      %3711 = vmatpush1.bf16.msra.mxu0 0
      %3712 = vmatprep.subr.bf16.mxu0 0
      %3713 = vmatpush1.bf16.msra.mxu0 0
      %3714 = vmatprep.subr.bf16.mxu0 0
      %3715 = vmatpush1.bf16.msra.mxu0 0
      %3716 = vmatprep.subr.bf16.mxu0 0
      %3717 = vmatpush1.bf16.msra.mxu0 0
      %3718 = vmatprep.subr.bf16.mxu0 0
      %3719 = vmatpush1.bf16.msra.mxu0 0
      %3720 = vmatprep.subr.bf16.mxu0 0
      %3721 = vmatpush1.bf16.msra.mxu0 0
      %3722 = vmatprep.subr.bf16.mxu0 0
      %3723 = vmatpush1.bf16.msra.mxu0 0
      %3724 = vmatprep.subr.bf16.mxu0 0
      %3725 = vmatpush1.bf16.msra.mxu0 %v3708
      %3726 = vmatprep.subr.bf16.mxu0 0
      %3727 = vmatpush2.bf16.msra.mxu0 0
      %3728 = vmatprep.subr.bf16.mxu0 0
      %3729 = vmatpush2.bf16.msra.mxu0 0
      %3730 = vmatprep.subr.bf16.mxu0 0
      %3731 = vmatpush2.bf16.msra.mxu0 0
      %3732 = vmatprep.subr.bf16.mxu0 0
      %3733 = vmatpush2.bf16.msra.mxu0 0
      %3734 = vmatprep.subr.bf16.mxu0 0
      %3735 = vmatpush2.bf16.msra.mxu0 0
      %3736 = vmatprep.subr.bf16.mxu0 0
      %3737 = vmatpush2.bf16.msra.mxu0 0
      %3738 = vmatprep.subr.bf16.mxu0 0
      %3739 = vmatpush2.bf16.msra.mxu0 0
      %3740 = vmatprep.subr.bf16.mxu0 0
      %3741 = vmatpush2.bf16.msra.mxu0 0
      %3742 = vmatprep.mubr.bf16.mxu0 0
      %3743 = vmatmul.mubr.bf16.gmra.mxu0 %v3660
      %v3744 = vpop.f32.mrf.mxu0
      %v3745 = vadd.f32 %v3528, %v3744
      %v3746 = vpop.f32.mrf.mxu0
      %v3747 = vpop.f32.mrf.mxu0
      %v3748 = vadd.f32 %v3531, %v3747
      %v3749 = vpop.f32.mrf.mxu0
      %3750 = vmatprep.mubr.bf16.mxu0 0
      %3751 = vmatmul.mubr.bf16.gmra.mxu0 %v3663
      %v3752 = vpop.f32.mrf.mxu0
      %v3753 = vadd.f32 %v3536, %v3752
      %v3754 = vpop.f32.mrf.mxu0
      %v3755 = vpop.f32.mrf.mxu0
      %v3756 = vadd.f32 %v3539, %v3755
      %v3757 = vpop.f32.mrf.mxu0
      %3758 = vmatprep.mubr.bf16.mxu0 0
      %3759 = vmatmul.mubr.bf16.gmra.mxu0 %v3666
      %v3760 = vpop.f32.mrf.mxu0
      %v3761 = vadd.f32 %v3544, %v3760
      %v3762 = vpop.f32.mrf.mxu0
      %v3763 = vpop.f32.mrf.mxu0
      %v3764 = vadd.f32 %v3547, %v3763
      %v3765 = vpop.f32.mrf.mxu0
      %3766 = vmatprep.mubr.bf16.mxu0 0
      %3767 = vmatmul.mubr.bf16.gmra.mxu0 %v3669
      %v3768 = vpop.f32.mrf.mxu0
      %v3769 = vadd.f32 %v3552, %v3768
      %v3770 = vpop.f32.mrf.mxu0
      %v3771 = vpop.f32.mrf.mxu0
      %v3772 = vadd.f32 %v3555, %v3771
      %v3773 = vpop.f32.mrf.mxu0
      %3774 = vmatprep.mubr.bf16.mxu0 0
      %3775 = vmatmul.mubr.bf16.gmra.mxu0 %v3672
      %v3776 = vpop.f32.mrf.mxu0
      %v3777 = vadd.f32 %v3560, %v3776
      %v3778 = vpop.f32.mrf.mxu0
      %v3779 = vpop.f32.mrf.mxu0
      %v3780 = vadd.f32 %v3563, %v3779
      %v3781 = vpop.f32.mrf.mxu0
      %3782 = vmatprep.mubr.bf16.mxu0 0
      %3783 = vmatmul.mubr.bf16.gmra.mxu0 %v3675
      %v3784 = vpop.f32.mrf.mxu0
      %v3785 = vadd.f32 %v3568, %v3784
      %v3786 = vpop.f32.mrf.mxu0
      %v3787 = vpop.f32.mrf.mxu0
      %v3788 = vadd.f32 %v3571, %v3787
      %v3789 = vpop.f32.mrf.mxu0
      %3790 = vmatprep.mubr.bf16.mxu0 0
      %3791 = vmatmul.mubr.bf16.gmra.mxu0 %v3678
      %v3792 = vpop.f32.mrf.mxu0
      %v3793 = vadd.f32 %v3576, %v3792
      %v3794 = vpop.f32.mrf.mxu0
      %v3795 = vpop.f32.mrf.mxu0
      %v3796 = vadd.f32 %v3579, %v3795
      %v3797 = vpop.f32.mrf.mxu0
      %3798 = vmatprep.mubr.bf16.mxu0 0
      %3799 = vmatmul.mubr.bf16.gmra.mxu0 %v3681
      %v3800 = vpop.f32.mrf.mxu0
      %v3801 = vadd.f32 %v3584, %v3800
      %v3802 = vpop.f32.mrf.mxu0
      %v3803 = vpop.f32.mrf.mxu0
      %v3804 = vadd.f32 %v3587, %v3803
      %v3805 = vpop.f32.mrf.mxu0
      %3806 = vmatprep.mubr.bf16.mxu0 0
      %3807 = vmatmul.mubr.bf16.gmra.mxu0 %v3684
      %v3808 = vpop.f32.mrf.mxu0
      %v3809 = vadd.f32 %v3592, %v3808
      %v3810 = vpop.f32.mrf.mxu0
      %v3811 = vpop.f32.mrf.mxu0
      %v3812 = vadd.f32 %v3595, %v3811
      %v3813 = vpop.f32.mrf.mxu0
      %3814 = vmatprep.mubr.bf16.mxu0 0
      %3815 = vmatmul.mubr.bf16.gmra.mxu0 %v3687
      %v3816 = vpop.f32.mrf.mxu0
      %v3817 = vadd.f32 %v3600, %v3816
      %v3818 = vpop.f32.mrf.mxu0
      %v3819 = vpop.f32.mrf.mxu0
      %v3820 = vadd.f32 %v3603, %v3819
      %v3821 = vpop.f32.mrf.mxu0
      %3822 = vmatprep.mubr.bf16.mxu0 0
      %3823 = vmatmul.mubr.bf16.gmra.mxu0 %v3690
      %v3824 = vpop.f32.mrf.mxu0
      %v3825 = vadd.f32 %v3608, %v3824
      %v3826 = vpop.f32.mrf.mxu0
      %v3827 = vpop.f32.mrf.mxu0
      %v3828 = vadd.f32 %v3611, %v3827
      %v3829 = vpop.f32.mrf.mxu0
      %3830 = vmatprep.mubr.bf16.mxu0 0
      %3831 = vmatmul.mubr.bf16.gmra.mxu0 %v3693
      %v3832 = vpop.f32.mrf.mxu0
      %v3833 = vadd.f32 %v3616, %v3832
      %v3834 = vpop.f32.mrf.mxu0
      %v3835 = vpop.f32.mrf.mxu0
      %v3836 = vadd.f32 %v3619, %v3835
      %v3837 = vpop.f32.mrf.mxu0
      %3838 = vmatprep.mubr.bf16.mxu0 0
      %3839 = vmatmul.mubr.bf16.gmra.mxu0 %v3696
      %v3840 = vpop.f32.mrf.mxu0
      %v3841 = vadd.f32 %v3624, %v3840
      %v3842 = vpop.f32.mrf.mxu0
      %v3843 = vpop.f32.mrf.mxu0
      %v3844 = vadd.f32 %v3627, %v3843
      %v3845 = vpop.f32.mrf.mxu0
      %3846 = vmatprep.mubr.bf16.mxu0 0
      %3847 = vmatmul.mubr.bf16.gmra.mxu0 %v3699
      %v3848 = vpop.f32.mrf.mxu0
      %v3849 = vadd.f32 %v3632, %v3848
      %v3850 = vpop.f32.mrf.mxu0
      %v3851 = vpop.f32.mrf.mxu0
      %v3852 = vadd.f32 %v3635, %v3851
      %v3853 = vpop.f32.mrf.mxu0
      %3854 = vmatprep.mubr.bf16.mxu0 0
      %3855 = vmatmul.mubr.bf16.gmra.mxu0 %v3702
      %v3856 = vpop.f32.mrf.mxu0
      %v3857 = vadd.f32 %v3640, %v3856
      %v3858 = vpop.f32.mrf.mxu0
      %v3859 = vpop.f32.mrf.mxu0
      %v3860 = vadd.f32 %v3643, %v3859
      %v3861 = vpop.f32.mrf.mxu0
      %3862 = vmatprep.mubr.bf16.mxu0 0
      %3863 = vmatmul.mubr.bf16.gmra.mxu0 %v3705
      %v3864 = vpop.f32.mrf.mxu0
      %v3865 = vadd.f32 %v3648, %v3864
      %v3866 = vpop.f32.mrf.mxu0
      %v3867 = vpop.f32.mrf.mxu0
      %v3868 = vadd.f32 %v3651, %v3867
      %v3869 = vpop.f32.mrf.mxu0
      %3870 = vdwg.mxu0
      %s3871 = scalar_lea.vmem [#allocation2], 48
      %v3872 = vld [vmem:[%s3871] sm:$0xff]
      %v3873 = vld [vmem:[%s3871 + $0x8] sm:$0xff]
      %v3874 = vld [vmem:[%s3871 + $0x18] sm:$0xff]
      %v3875 = vld [vmem:[%s3871 + $0x20] sm:$0xff]
      %v3876 = vld [vmem:[%s3871 + $0x30] sm:$0xff]
      %v3877 = vld [vmem:[%s3871 + $0x38] sm:$0xff]
      %v3878 = vld [vmem:[%s3871 + $0x48] sm:$0xff]
      %v3879 = vld [vmem:[%s3871 + $0x50] sm:$0xff]
      %v3880 = vld [vmem:[%s3871 + $0x60] sm:$0xff]
      %v3881 = vld [vmem:[%s3871 + $0x68] sm:$0xff]
      %v3882 = vld [vmem:[%s3871 + $0x78] sm:$0xff]
      %v3883 = vld [vmem:[%s3871 + $0x80] sm:$0xff]
      %v3884 = vld [vmem:[%s3871 + $0x90] sm:$0xff]
      %v3885 = vld [vmem:[%s3871 + $0x98] sm:$0xff]
      %v3886 = vld [vmem:[%s3871 + $0xa8] sm:$0xff]
      %v3887 = vld [vmem:[%s3871 + $0xb0] sm:$0xff]
      %v3888 = vld [vmem:[%s3871 + $0xc0] sm:$0xff]
      %v3889 = vld [vmem:[%s3871 + $0xc8] sm:$0xff]
      %v3890 = vld [vmem:[%s3871 + $0xd8] sm:$0xff]
      %v3891 = vld [vmem:[%s3871 + $0xe0] sm:$0xff]
      %v3892 = vld [vmem:[%s3871 + $0xf0] sm:$0xff]
      %v3893 = vld [vmem:[%s3871 + $0xf8] sm:$0xff]
      %v3894 = vld [vmem:[%s3871 + $0x108] sm:$0xff]
      %v3895 = vld [vmem:[%s3871 + $0x110] sm:$0xff]
      %v3896 = vld [vmem:[%s3871 + $0x120] sm:$0xff]
      %v3897 = vld [vmem:[%s3871 + $0x128] sm:$0xff]
      %v3898 = vld [vmem:[%s3871 + $0x138] sm:$0xff]
      %v3899 = vld [vmem:[%s3871 + $0x140] sm:$0xff]
      %v3900 = vld [vmem:[%s3871 + $0x150] sm:$0xff]
      %v3901 = vld [vmem:[%s3871 + $0x158] sm:$0xff]
      %v3902 = vld [vmem:[%s3871 + $0x168] sm:$0xff]
      %v3903 = vld [vmem:[%s3871 + $0x170] sm:$0xff]
      %v3904 = vld [vmem:[%s3871 + $0x1] sm:$0xff]
      %v3905 = vld [vmem:[%s3871 + $0x9] sm:$0xff]
      %v3906 = vld [vmem:[%s3871 + $0x19] sm:$0xff]
      %v3907 = vld [vmem:[%s3871 + $0x21] sm:$0xff]
      %v3908 = vld [vmem:[%s3871 + $0x31] sm:$0xff]
      %v3909 = vld [vmem:[%s3871 + $0x39] sm:$0xff]
      %v3910 = vld [vmem:[%s3871 + $0x49] sm:$0xff]
      %v3911 = vld [vmem:[%s3871 + $0x51] sm:$0xff]
      %v3912 = vld [vmem:[%s3871 + $0x61] sm:$0xff]
      %v3913 = vld [vmem:[%s3871 + $0x69] sm:$0xff]
      %v3914 = vld [vmem:[%s3871 + $0x79] sm:$0xff]
      %v3915 = vld [vmem:[%s3871 + $0x81] sm:$0xff]
      %v3916 = vld [vmem:[%s3871 + $0x91] sm:$0xff]
      %v3917 = vld [vmem:[%s3871 + $0x99] sm:$0xff]
      %v3918 = vld [vmem:[%s3871 + $0xa9] sm:$0xff]
      %v3919 = vld [vmem:[%s3871 + $0xb1] sm:$0xff]
      %v3920 = vld [vmem:[%s3871 + $0xc1] sm:$0xff]
      %v3921 = vld [vmem:[%s3871 + $0xc9] sm:$0xff]
      %v3922 = vld [vmem:[%s3871 + $0xd9] sm:$0xff]
      %v3923 = vld [vmem:[%s3871 + $0xe1] sm:$0xff]
      %v3924 = vld [vmem:[%s3871 + $0xf1] sm:$0xff]
      %v3925 = vld [vmem:[%s3871 + $0xf9] sm:$0xff]
      %v3926 = vld [vmem:[%s3871 + $0x109] sm:$0xff]
      %v3927 = vld [vmem:[%s3871 + $0x111] sm:$0xff]
      %v3928 = vld [vmem:[%s3871 + $0x121] sm:$0xff]
      %v3929 = vld [vmem:[%s3871 + $0x129] sm:$0xff]
      %v3930 = vld [vmem:[%s3871 + $0x139] sm:$0xff]
      %v3931 = vld [vmem:[%s3871 + $0x141] sm:$0xff]
      %v3932 = vld [vmem:[%s3871 + $0x151] sm:$0xff]
      %v3933 = vld [vmem:[%s3871 + $0x159] sm:$0xff]
      %v3934 = vld [vmem:[%s3871 + $0x169] sm:$0xff]
      %v3935 = vld [vmem:[%s3871 + $0x171] sm:$0xff]
      %v3936 = vld [vmem:[%s3871 + $0x2] sm:$0xff]
      %v3937 = vld [vmem:[%s3871 + $0xa] sm:$0xff]
      %v3938 = vld [vmem:[%s3871 + $0x1a] sm:$0xff]
      %v3939 = vld [vmem:[%s3871 + $0x22] sm:$0xff]
      %v3940 = vld [vmem:[%s3871 + $0x32] sm:$0xff]
      %v3941 = vld [vmem:[%s3871 + $0x3a] sm:$0xff]
      %v3942 = vld [vmem:[%s3871 + $0x4a] sm:$0xff]
      %v3943 = vld [vmem:[%s3871 + $0x52] sm:$0xff]
      %v3944 = vld [vmem:[%s3871 + $0x62] sm:$0xff]
      %v3945 = vld [vmem:[%s3871 + $0x6a] sm:$0xff]
      %v3946 = vld [vmem:[%s3871 + $0x7a] sm:$0xff]
      %v3947 = vld [vmem:[%s3871 + $0x82] sm:$0xff]
      %v3948 = vld [vmem:[%s3871 + $0x92] sm:$0xff]
      %v3949 = vld [vmem:[%s3871 + $0x9a] sm:$0xff]
      %v3950 = vld [vmem:[%s3871 + $0xaa] sm:$0xff]
      %v3951 = vld [vmem:[%s3871 + $0xb2] sm:$0xff]
      %v3952 = vld [vmem:[%s3871 + $0xc2] sm:$0xff]
      %v3953 = vld [vmem:[%s3871 + $0xca] sm:$0xff]
      %v3954 = vld [vmem:[%s3871 + $0xda] sm:$0xff]
      %v3955 = vld [vmem:[%s3871 + $0xe2] sm:$0xff]
      %v3956 = vld [vmem:[%s3871 + $0xf2] sm:$0xff]
      %v3957 = vld [vmem:[%s3871 + $0xfa] sm:$0xff]
      %v3958 = vld [vmem:[%s3871 + $0x10a] sm:$0xff]
      %v3959 = vld [vmem:[%s3871 + $0x112] sm:$0xff]
      %v3960 = vld [vmem:[%s3871 + $0x122] sm:$0xff]
      %v3961 = vld [vmem:[%s3871 + $0x12a] sm:$0xff]
      %v3962 = vld [vmem:[%s3871 + $0x13a] sm:$0xff]
      %v3963 = vld [vmem:[%s3871 + $0x142] sm:$0xff]
      %v3964 = vld [vmem:[%s3871 + $0x152] sm:$0xff]
      %v3965 = vld [vmem:[%s3871 + $0x15a] sm:$0xff]
      %v3966 = vld [vmem:[%s3871 + $0x16a] sm:$0xff]
      %v3967 = vld [vmem:[%s3871 + $0x172] sm:$0xff]
      %4000 = vrot.lane.b32.xlu0 %v3904, 4
      %v4001 = vpop.permute.xlu0 %4000
      %4002 = vrot.lane.b32.xlu0 %v3905, 4
      %v4003 = vpop.permute.xlu0 %4002
      %4004 = vrot.lane.b32.xlu0 %v3906, 4
      %v4005 = vpop.permute.xlu0 %4004
      %4006 = vrot.lane.b32.xlu0 %v3907, 4
      %v4007 = vpop.permute.xlu0 %4006
      %4008 = vrot.lane.b32.xlu0 %v3908, 4
      %v4009 = vpop.permute.xlu0 %4008
      %4010 = vrot.lane.b32.xlu0 %v3909, 4
      %v4011 = vpop.permute.xlu0 %4010
      %4012 = vrot.lane.b32.xlu0 %v3910, 4
      %v4013 = vpop.permute.xlu0 %4012
      %4014 = vrot.lane.b32.xlu0 %v3911, 4
      %v4015 = vpop.permute.xlu0 %4014
      %4016 = vrot.lane.b32.xlu0 %v3912, 4
      %v4017 = vpop.permute.xlu0 %4016
      %4018 = vrot.lane.b32.xlu0 %v3913, 4
      %v4019 = vpop.permute.xlu0 %4018
      %4020 = vrot.lane.b32.xlu0 %v3914, 4
      %v4021 = vpop.permute.xlu0 %4020
      %4022 = vrot.lane.b32.xlu0 %v3915, 4
      %v4023 = vpop.permute.xlu0 %4022
      %4024 = vrot.lane.b32.xlu0 %v3916, 4
      %v4025 = vpop.permute.xlu0 %4024
      %4026 = vrot.lane.b32.xlu0 %v3917, 4
      %v4027 = vpop.permute.xlu0 %4026
      %4028 = vrot.lane.b32.xlu0 %v3918, 4
      %v4029 = vpop.permute.xlu0 %4028
      %4030 = vrot.lane.b32.xlu0 %v3919, 4
      %v4031 = vpop.permute.xlu0 %4030
      %4032 = vrot.lane.b32.xlu0 %v3920, 4
      %v4033 = vpop.permute.xlu0 %4032
      %4034 = vrot.lane.b32.xlu0 %v3921, 4
      %v4035 = vpop.permute.xlu0 %4034
      %4036 = vrot.lane.b32.xlu0 %v3922, 4
      %v4037 = vpop.permute.xlu0 %4036
      %4038 = vrot.lane.b32.xlu0 %v3923, 4
      %v4039 = vpop.permute.xlu0 %4038
      %4040 = vrot.lane.b32.xlu0 %v3924, 4
      %v4041 = vpop.permute.xlu0 %4040
      %4042 = vrot.lane.b32.xlu0 %v3925, 4
      %v4043 = vpop.permute.xlu0 %4042
      %4044 = vrot.lane.b32.xlu0 %v3926, 4
      %v4045 = vpop.permute.xlu0 %4044
      %4046 = vrot.lane.b32.xlu0 %v3927, 4
      %v4047 = vpop.permute.xlu0 %4046
      %4048 = vrot.lane.b32.xlu0 %v3928, 4
      %v4049 = vpop.permute.xlu0 %4048
      %4050 = vrot.lane.b32.xlu0 %v3929, 4
      %v4051 = vpop.permute.xlu0 %4050
      %4052 = vrot.lane.b32.xlu0 %v3930, 4
      %v4053 = vpop.permute.xlu0 %4052
      %4054 = vrot.lane.b32.xlu0 %v3931, 4
      %v4055 = vpop.permute.xlu0 %4054
      %4056 = vrot.lane.b32.xlu0 %v3932, 4
      %v4057 = vpop.permute.xlu0 %4056
      %4058 = vrot.lane.b32.xlu0 %v3933, 4
      %v4059 = vpop.permute.xlu0 %4058
      %4060 = vrot.lane.b32.xlu0 %v3934, 4
      %v4061 = vpop.permute.xlu0 %4060
      %4062 = vrot.lane.b32.xlu0 %v3935, 4
      %v4063 = vpop.permute.xlu0 %4062
      %4128 = vrot.lane.b32.xlu0 %v3936, 8
      %v4129 = vpop.permute.xlu0 %4128
      %4130 = vrot.lane.b32.xlu0 %v3937, 8
      %v4131 = vpop.permute.xlu0 %4130
      %4132 = vrot.lane.b32.xlu0 %v3938, 8
      %v4133 = vpop.permute.xlu0 %4132
      %4134 = vrot.lane.b32.xlu0 %v3939, 8
      %v4135 = vpop.permute.xlu0 %4134
      %4136 = vrot.lane.b32.xlu0 %v3940, 8
      %v4137 = vpop.permute.xlu0 %4136
      %4138 = vrot.lane.b32.xlu0 %v3941, 8
      %v4139 = vpop.permute.xlu0 %4138
      %4140 = vrot.lane.b32.xlu0 %v3942, 8
      %v4141 = vpop.permute.xlu0 %4140
      %4142 = vrot.lane.b32.xlu0 %v3943, 8
      %v4143 = vpop.permute.xlu0 %4142
      %4144 = vrot.lane.b32.xlu0 %v3944, 8
      %v4145 = vpop.permute.xlu0 %4144
      %4146 = vrot.lane.b32.xlu0 %v3945, 8
      %v4147 = vpop.permute.xlu0 %4146
      %4148 = vrot.lane.b32.xlu0 %v3946, 8
      %v4149 = vpop.permute.xlu0 %4148
      %4150 = vrot.lane.b32.xlu0 %v3947, 8
      %v4151 = vpop.permute.xlu0 %4150
      %4152 = vrot.lane.b32.xlu0 %v3948, 8
      %v4153 = vpop.permute.xlu0 %4152
      %4154 = vrot.lane.b32.xlu0 %v3949, 8
      %v4155 = vpop.permute.xlu0 %4154
      %4156 = vrot.lane.b32.xlu0 %v3950, 8
      %v4157 = vpop.permute.xlu0 %4156
      %4158 = vrot.lane.b32.xlu0 %v3951, 8
      %v4159 = vpop.permute.xlu0 %4158
      %4160 = vrot.lane.b32.xlu0 %v3952, 8
      %v4161 = vpop.permute.xlu0 %4160
      %4162 = vrot.lane.b32.xlu0 %v3953, 8
      %v4163 = vpop.permute.xlu0 %4162
      %4164 = vrot.lane.b32.xlu0 %v3954, 8
      %v4165 = vpop.permute.xlu0 %4164
      %4166 = vrot.lane.b32.xlu0 %v3955, 8
      %v4167 = vpop.permute.xlu0 %4166
      %4168 = vrot.lane.b32.xlu0 %v3956, 8
      %v4169 = vpop.permute.xlu0 %4168
      %4170 = vrot.lane.b32.xlu0 %v3957, 8
      %v4171 = vpop.permute.xlu0 %4170
      %4172 = vrot.lane.b32.xlu0 %v3958, 8
      %v4173 = vpop.permute.xlu0 %4172
      %4174 = vrot.lane.b32.xlu0 %v3959, 8
      %v4175 = vpop.permute.xlu0 %4174
      %4176 = vrot.lane.b32.xlu0 %v3960, 8
      %v4177 = vpop.permute.xlu0 %4176
      %4178 = vrot.lane.b32.xlu0 %v3961, 8
      %v4179 = vpop.permute.xlu0 %4178
      %4180 = vrot.lane.b32.xlu0 %v3962, 8
      %v4181 = vpop.permute.xlu0 %4180
      %4182 = vrot.lane.b32.xlu0 %v3963, 8
      %v4183 = vpop.permute.xlu0 %4182
      %4184 = vrot.lane.b32.xlu0 %v3964, 8
      %v4185 = vpop.permute.xlu0 %4184
      %4186 = vrot.lane.b32.xlu0 %v3965, 8
      %v4187 = vpop.permute.xlu0 %4186
      %4188 = vrot.lane.b32.xlu0 %v3966, 8
      %v4189 = vpop.permute.xlu0 %4188
      %4190 = vrot.lane.b32.xlu0 %v3967, 8
      %v4191 = vpop.permute.xlu0 %4190
      %v4224 = vsel %vm334, %v3872, %v4001
      %v4225 = vsel %vm334, %v3873, %v4003
      %v4226 = vsel %vm334, %v3874, %v4005
      %v4227 = vsel %vm334, %v3875, %v4007
      %v4228 = vsel %vm334, %v3876, %v4009
      %v4229 = vsel %vm334, %v3877, %v4011
      %v4230 = vsel %vm334, %v3878, %v4013
      %v4231 = vsel %vm334, %v3879, %v4015
      %v4232 = vsel %vm334, %v3880, %v4017
      %v4233 = vsel %vm334, %v3881, %v4019
      %v4234 = vsel %vm334, %v3882, %v4021
      %v4235 = vsel %vm334, %v3883, %v4023
      %v4236 = vsel %vm334, %v3884, %v4025
      %v4237 = vsel %vm334, %v3885, %v4027
      %v4238 = vsel %vm334, %v3886, %v4029
      %v4239 = vsel %vm334, %v3887, %v4031
      %v4240 = vsel %vm334, %v3888, %v4033
      %v4241 = vsel %vm334, %v3889, %v4035
      %v4242 = vsel %vm334, %v3890, %v4037
      %v4243 = vsel %vm334, %v3891, %v4039
      %v4244 = vsel %vm334, %v3892, %v4041
      %v4245 = vsel %vm334, %v3893, %v4043
      %v4246 = vsel %vm334, %v3894, %v4045
      %v4247 = vsel %vm334, %v3895, %v4047
      %v4248 = vsel %vm334, %v3896, %v4049
      %v4249 = vsel %vm334, %v3897, %v4051
      %v4250 = vsel %vm334, %v3898, %v4053
      %v4251 = vsel %vm334, %v3899, %v4055
      %v4252 = vsel %vm334, %v3900, %v4057
      %v4253 = vsel %vm334, %v3901, %v4059
      %v4254 = vsel %vm334, %v3902, %v4061
      %v4255 = vsel %vm334, %v3903, %v4063
      %v4256 = vsel %vm2949, %v4224, %v4129
      %v4257 = vsel %vm2949, %v4225, %v4131
      %v4258 = vsel %vm2949, %v4226, %v4133
      %v4259 = vsel %vm2949, %v4227, %v4135
      %v4260 = vsel %vm2949, %v4228, %v4137
      %v4261 = vsel %vm2949, %v4229, %v4139
      %v4262 = vsel %vm2949, %v4230, %v4141
      %v4263 = vsel %vm2949, %v4231, %v4143
      %v4264 = vsel %vm2949, %v4232, %v4145
      %v4265 = vsel %vm2949, %v4233, %v4147
      %v4266 = vsel %vm2949, %v4234, %v4149
      %v4267 = vsel %vm2949, %v4235, %v4151
      %v4268 = vsel %vm2949, %v4236, %v4153
      %v4269 = vsel %vm2949, %v4237, %v4155
      %v4270 = vsel %vm2949, %v4238, %v4157
      %v4271 = vsel %vm2949, %v4239, %v4159
      %v4272 = vsel %vm2949, %v4240, %v4161
      %v4273 = vsel %vm2949, %v4241, %v4163
      %v4274 = vsel %vm2949, %v4242, %v4165
      %v4275 = vsel %vm2949, %v4243, %v4167
      %v4276 = vsel %vm2949, %v4244, %v4169
      %v4277 = vsel %vm2949, %v4245, %v4171
      %v4278 = vsel %vm2949, %v4246, %v4173
      %v4279 = vsel %vm2949, %v4247, %v4175
      %v4280 = vsel %vm2949, %v4248, %v4177
      %v4281 = vsel %vm2949, %v4249, %v4179
      %v4282 = vsel %vm2949, %v4250, %v4181
      %v4283 = vsel %vm2949, %v4251, %v4183
      %v4284 = vsel %vm2949, %v4252, %v4185
      %v4285 = vsel %vm2949, %v4253, %v4187
      %v4286 = vsel %vm2949, %v4254, %v4189
      %v4287 = vsel %vm2949, %v4255, %v4191
      %v4288 = vpack.c.bf16 %v4257, %v4256
      %v4289 = vpack.c.bf16 %v4259, %v4258
      %v4290 = vpack.c.bf16 %v4261, %v4260
      %v4291 = vpack.c.bf16 %v4263, %v4262
      %v4292 = vpack.c.bf16 %v4265, %v4264
      %v4293 = vpack.c.bf16 %v4267, %v4266
      %v4294 = vpack.c.bf16 %v4269, %v4268
      %v4295 = vpack.c.bf16 %v4271, %v4270
      %v4296 = vpack.c.bf16 %v4273, %v4272
      %v4297 = vpack.c.bf16 %v4275, %v4274
      %v4298 = vpack.c.bf16 %v4277, %v4276
      %v4299 = vpack.c.bf16 %v4279, %v4278
      %v4300 = vpack.c.bf16 %v4281, %v4280
      %v4301 = vpack.c.bf16 %v4283, %v4282
      %v4302 = vpack.c.bf16 %v4285, %v4284
      %v4303 = vpack.c.bf16 %v4287, %v4286
      %s4304 = scalar_lea.vmem %s3, 16
      %v4305 = vld [vmem:[%s4304] sm:$0xf]
      %v4306 = vld [vmem:[%s4304 + $0x4] sm:$0x3]
      %v4309 = vunpack.c.l.b16 %v4305
      %v4310 = vunpack.c.l.b16 %v4306
      %v4311 = vpack.c.b16 %v4310, %v4309
      %v4313 = vsel %vm3440, %v4288, 0
      %v4316 = vsel %vm3440, %v4289, 0
      %v4319 = vsel %vm3440, %v4290, 0
      %v4322 = vsel %vm3440, %v4291, 0
      %v4325 = vsel %vm3440, %v4292, 0
      %v4328 = vsel %vm3440, %v4293, 0
      %v4331 = vsel %vm3440, %v4294, 0
      %v4334 = vsel %vm3440, %v4295, 0
      %v4337 = vsel %vm3440, %v4296, 0
      %v4340 = vsel %vm3440, %v4297, 0
      %v4343 = vsel %vm3440, %v4298, 0
      %v4346 = vsel %vm3440, %v4299, 0
      %v4349 = vsel %vm3440, %v4300, 0
      %v4352 = vsel %vm3440, %v4301, 0
      %v4355 = vsel %vm3440, %v4302, 0
      %v4358 = vsel %vm3440, %v4303, 0
      %v4361 = vsel %vm3489, %v4311, 0
      %4363 = vmatprep.subr.bf16.mxu0 0
      %4364 = vmatpush1.bf16.msra.mxu0 0
      %4365 = vmatprep.subr.bf16.mxu0 0
      %4366 = vmatpush1.bf16.msra.mxu0 0
      %4367 = vmatprep.subr.bf16.mxu0 0
      %4368 = vmatpush1.bf16.msra.mxu0 0
      %4369 = vmatprep.subr.bf16.mxu0 0
      %4370 = vmatpush1.bf16.msra.mxu0 0
      %4371 = vmatprep.subr.bf16.mxu0 0
      %4372 = vmatpush1.bf16.msra.mxu0 0
      %4373 = vmatprep.subr.bf16.mxu0 0
      %4374 = vmatpush1.bf16.msra.mxu0 0
      %4375 = vmatprep.subr.bf16.mxu0 0
      %4376 = vmatpush1.bf16.msra.mxu0 0
      %4377 = vmatprep.subr.bf16.mxu0 0
      %4378 = vmatpush1.bf16.msra.mxu0 %v4361
      %4379 = vmatprep.subr.bf16.mxu0 0
      %4380 = vmatpush2.bf16.msra.mxu0 0
      %4381 = vmatprep.subr.bf16.mxu0 0
      %4382 = vmatpush2.bf16.msra.mxu0 0
      %4383 = vmatprep.subr.bf16.mxu0 0
      %4384 = vmatpush2.bf16.msra.mxu0 0
      %4385 = vmatprep.subr.bf16.mxu0 0
      %4386 = vmatpush2.bf16.msra.mxu0 0
      %4387 = vmatprep.subr.bf16.mxu0 0
      %4388 = vmatpush2.bf16.msra.mxu0 0
      %4389 = vmatprep.subr.bf16.mxu0 0
      %4390 = vmatpush2.bf16.msra.mxu0 0
      %4391 = vmatprep.subr.bf16.mxu0 0
      %4392 = vmatpush2.bf16.msra.mxu0 0
      %4393 = vmatprep.subr.bf16.mxu0 0
      %4394 = vmatpush2.bf16.msra.mxu0 0
      %4395 = vmatprep.mubr.bf16.mxu0 0
      %4396 = vmatmul.mubr.bf16.gmra.mxu0 %v4313
      %v4397 = vpop.f32.mrf.mxu0
      %v4398 = vadd.f32 0.0, %v4397
      %v4399 = vpop.f32.mrf.mxu0
      %v4400 = vpop.f32.mrf.mxu0
      %v4401 = vadd.f32 0.0, %v4400
      %v4402 = vpop.f32.mrf.mxu0
      %4403 = vmatprep.mubr.bf16.mxu0 0
      %4404 = vmatmul.mubr.bf16.gmra.mxu0 %v4316
      %v4405 = vpop.f32.mrf.mxu0
      %v4406 = vadd.f32 0.0, %v4405
      %v4407 = vpop.f32.mrf.mxu0
      %v4408 = vpop.f32.mrf.mxu0
      %v4409 = vadd.f32 0.0, %v4408
      %v4410 = vpop.f32.mrf.mxu0
      %4411 = vmatprep.mubr.bf16.mxu0 0
      %4412 = vmatmul.mubr.bf16.gmra.mxu0 %v4319
      %v4413 = vpop.f32.mrf.mxu0
      %v4414 = vadd.f32 0.0, %v4413
      %v4415 = vpop.f32.mrf.mxu0
      %v4416 = vpop.f32.mrf.mxu0
      %v4417 = vadd.f32 0.0, %v4416
      %v4418 = vpop.f32.mrf.mxu0
      %4419 = vmatprep.mubr.bf16.mxu0 0
      %4420 = vmatmul.mubr.bf16.gmra.mxu0 %v4322
      %v4421 = vpop.f32.mrf.mxu0
      %v4422 = vadd.f32 0.0, %v4421
      %v4423 = vpop.f32.mrf.mxu0
      %v4424 = vpop.f32.mrf.mxu0
      %v4425 = vadd.f32 0.0, %v4424
      %v4426 = vpop.f32.mrf.mxu0
      %4427 = vmatprep.mubr.bf16.mxu0 0
      %4428 = vmatmul.mubr.bf16.gmra.mxu0 %v4325
      %v4429 = vpop.f32.mrf.mxu0
      %v4430 = vadd.f32 0.0, %v4429
      %v4431 = vpop.f32.mrf.mxu0
      %v4432 = vpop.f32.mrf.mxu0
      %v4433 = vadd.f32 0.0, %v4432
      %v4434 = vpop.f32.mrf.mxu0
      %4435 = vmatprep.mubr.bf16.mxu0 0
      %4436 = vmatmul.mubr.bf16.gmra.mxu0 %v4328
      %v4437 = vpop.f32.mrf.mxu0
      %v4438 = vadd.f32 0.0, %v4437
      %v4439 = vpop.f32.mrf.mxu0
      %v4440 = vpop.f32.mrf.mxu0
      %v4441 = vadd.f32 0.0, %v4440
      %v4442 = vpop.f32.mrf.mxu0
      %4443 = vmatprep.mubr.bf16.mxu0 0
      %4444 = vmatmul.mubr.bf16.gmra.mxu0 %v4331
      %v4445 = vpop.f32.mrf.mxu0
      %v4446 = vadd.f32 0.0, %v4445
      %v4447 = vpop.f32.mrf.mxu0
      %v4448 = vpop.f32.mrf.mxu0
      %v4449 = vadd.f32 0.0, %v4448
      %v4450 = vpop.f32.mrf.mxu0
      %4451 = vmatprep.mubr.bf16.mxu0 0
      %4452 = vmatmul.mubr.bf16.gmra.mxu0 %v4334
      %v4453 = vpop.f32.mrf.mxu0
      %v4454 = vadd.f32 0.0, %v4453
      %v4455 = vpop.f32.mrf.mxu0
      %v4456 = vpop.f32.mrf.mxu0
      %v4457 = vadd.f32 0.0, %v4456
      %v4458 = vpop.f32.mrf.mxu0
      %4459 = vmatprep.mubr.bf16.mxu0 0
      %4460 = vmatmul.mubr.bf16.gmra.mxu0 %v4337
      %v4461 = vpop.f32.mrf.mxu0
      %v4462 = vadd.f32 0.0, %v4461
      %v4463 = vpop.f32.mrf.mxu0
      %v4464 = vpop.f32.mrf.mxu0
      %v4465 = vadd.f32 0.0, %v4464
      %v4466 = vpop.f32.mrf.mxu0
      %4467 = vmatprep.mubr.bf16.mxu0 0
      %4468 = vmatmul.mubr.bf16.gmra.mxu0 %v4340
      %v4469 = vpop.f32.mrf.mxu0
      %v4470 = vadd.f32 0.0, %v4469
      %v4471 = vpop.f32.mrf.mxu0
      %v4472 = vpop.f32.mrf.mxu0
      %v4473 = vadd.f32 0.0, %v4472
      %v4474 = vpop.f32.mrf.mxu0
      %4475 = vmatprep.mubr.bf16.mxu0 0
      %4476 = vmatmul.mubr.bf16.gmra.mxu0 %v4343
      %v4477 = vpop.f32.mrf.mxu0
      %v4478 = vadd.f32 0.0, %v4477
      %v4479 = vpop.f32.mrf.mxu0
      %v4480 = vpop.f32.mrf.mxu0
      %v4481 = vadd.f32 0.0, %v4480
      %v4482 = vpop.f32.mrf.mxu0
      %4483 = vmatprep.mubr.bf16.mxu0 0
      %4484 = vmatmul.mubr.bf16.gmra.mxu0 %v4346
      %v4485 = vpop.f32.mrf.mxu0
      %v4486 = vadd.f32 0.0, %v4485
      %v4487 = vpop.f32.mrf.mxu0
      %v4488 = vpop.f32.mrf.mxu0
      %v4489 = vadd.f32 0.0, %v4488
      %v4490 = vpop.f32.mrf.mxu0
      %4491 = vmatprep.mubr.bf16.mxu0 0
      %4492 = vmatmul.mubr.bf16.gmra.mxu0 %v4349
      %v4493 = vpop.f32.mrf.mxu0
      %v4494 = vadd.f32 0.0, %v4493
      %v4495 = vpop.f32.mrf.mxu0
      %v4496 = vpop.f32.mrf.mxu0
      %v4497 = vadd.f32 0.0, %v4496
      %v4498 = vpop.f32.mrf.mxu0
      %4499 = vmatprep.mubr.bf16.mxu0 0
      %4500 = vmatmul.mubr.bf16.gmra.mxu0 %v4352
      %v4501 = vpop.f32.mrf.mxu0
      %v4502 = vadd.f32 0.0, %v4501
      %v4503 = vpop.f32.mrf.mxu0
      %v4504 = vpop.f32.mrf.mxu0
      %v4505 = vadd.f32 0.0, %v4504
      %v4506 = vpop.f32.mrf.mxu0
      %4507 = vmatprep.mubr.bf16.mxu0 0
      %4508 = vmatmul.mubr.bf16.gmra.mxu0 %v4355
      %v4509 = vpop.f32.mrf.mxu0
      %v4510 = vadd.f32 0.0, %v4509
      %v4511 = vpop.f32.mrf.mxu0
      %v4512 = vpop.f32.mrf.mxu0
      %v4513 = vadd.f32 0.0, %v4512
      %v4514 = vpop.f32.mrf.mxu0
      %4515 = vmatprep.mubr.bf16.mxu0 0
      %4516 = vmatmul.mubr.bf16.gmra.mxu0 %v4358
      %v4517 = vpop.f32.mrf.mxu0
      %v4518 = vadd.f32 0.0, %v4517
      %v4519 = vpop.f32.mrf.mxu0
      %v4520 = vpop.f32.mrf.mxu0
      %v4521 = vadd.f32 0.0, %v4520
      %v4522 = vpop.f32.mrf.mxu0
      %4523 = vdwg.mxu0
      %v4524 = vadd.f32 %v3745, %v4398
      %v4525 = vadd.f32 %v3748, %v4401
      %v4526 = vadd.f32 %v3753, %v4406
      %v4527 = vadd.f32 %v3756, %v4409
      %v4528 = vadd.f32 %v3761, %v4414
      %v4529 = vadd.f32 %v3764, %v4417
      %v4530 = vadd.f32 %v3769, %v4422
      %v4531 = vadd.f32 %v3772, %v4425
      %v4532 = vadd.f32 %v3777, %v4430
      %v4533 = vadd.f32 %v3780, %v4433
      %v4534 = vadd.f32 %v3785, %v4438
      %v4535 = vadd.f32 %v3788, %v4441
      %v4536 = vadd.f32 %v3793, %v4446
      %v4537 = vadd.f32 %v3796, %v4449
      %v4538 = vadd.f32 %v3801, %v4454
      %v4539 = vadd.f32 %v3804, %v4457
      %v4540 = vadd.f32 %v3809, %v4462
      %v4541 = vadd.f32 %v3812, %v4465
      %v4542 = vadd.f32 %v3817, %v4470
      %v4543 = vadd.f32 %v3820, %v4473
      %v4544 = vadd.f32 %v3825, %v4478
      %v4545 = vadd.f32 %v3828, %v4481
      %v4546 = vadd.f32 %v3833, %v4486
      %v4547 = vadd.f32 %v3836, %v4489
      %v4548 = vadd.f32 %v3841, %v4494
      %v4549 = vadd.f32 %v3844, %v4497
      %v4550 = vadd.f32 %v3849, %v4502
      %v4551 = vadd.f32 %v3852, %v4505
      %v4552 = vadd.f32 %v3857, %v4510
      %v4553 = vadd.f32 %v3860, %v4513
      %v4554 = vadd.f32 %v3865, %v4518
      %v4555 = vadd.f32 %v3868, %v4521
      %v4556 = vld [vmem:[%s4] sm:$0x1]
      %v4558 = vlaneseq
      %v4559 = vshrl.u32 %v4558, 7
      %v4560 = vsub.s32 0, %v4559
      %v4561 = vrot.slane %v4556, %v4560
      %v4563 = vadd.f32 %v4524, %v4561
      %v4564 = vadd.f32 %v4525, %v4561
      %v4565 = vadd.f32 %v4526, %v4561
      %v4566 = vadd.f32 %v4527, %v4561
      %v4567 = vadd.f32 %v4528, %v4561
      %v4568 = vadd.f32 %v4529, %v4561
      %v4569 = vadd.f32 %v4530, %v4561
      %v4570 = vadd.f32 %v4531, %v4561
      %v4571 = vadd.f32 %v4532, %v4561
      %v4572 = vadd.f32 %v4533, %v4561
      %v4573 = vadd.f32 %v4534, %v4561
      %v4574 = vadd.f32 %v4535, %v4561
      %v4575 = vadd.f32 %v4536, %v4561
      %v4576 = vadd.f32 %v4537, %v4561
      %v4577 = vadd.f32 %v4538, %v4561
      %v4578 = vadd.f32 %v4539, %v4561
      %v4579 = vadd.f32 %v4540, %v4561
      %v4580 = vadd.f32 %v4541, %v4561
      %v4581 = vadd.f32 %v4542, %v4561
      %v4582 = vadd.f32 %v4543, %v4561
      %v4583 = vadd.f32 %v4544, %v4561
      %v4584 = vadd.f32 %v4545, %v4561
      %v4585 = vadd.f32 %v4546, %v4561
      %v4586 = vadd.f32 %v4547, %v4561
      %v4587 = vadd.f32 %v4548, %v4561
      %v4588 = vadd.f32 %v4549, %v4561
      %v4589 = vadd.f32 %v4550, %v4561
      %v4590 = vadd.f32 %v4551, %v4561
      %v4591 = vadd.f32 %v4552, %v4561
      %v4592 = vadd.f32 %v4553, %v4561
      %v4593 = vadd.f32 %v4554, %v4561
      %v4594 = vadd.f32 %v4555, %v4561
      %vm4595 = vcmp.ge.f32.partialorder %v4563, 0.0
      %vm4596 = vcmp.ge.f32.partialorder %v4564, 0.0
      %vm4597 = vcmp.ge.f32.partialorder %v4565, 0.0
      %vm4598 = vcmp.ge.f32.partialorder %v4566, 0.0
      %vm4599 = vcmp.ge.f32.partialorder %v4567, 0.0
      %vm4600 = vcmp.ge.f32.partialorder %v4568, 0.0
      %vm4601 = vcmp.ge.f32.partialorder %v4569, 0.0
      %vm4602 = vcmp.ge.f32.partialorder %v4570, 0.0
      %vm4603 = vcmp.ge.f32.partialorder %v4571, 0.0
      %vm4604 = vcmp.ge.f32.partialorder %v4572, 0.0
      %vm4605 = vcmp.ge.f32.partialorder %v4573, 0.0
      %vm4606 = vcmp.ge.f32.partialorder %v4574, 0.0
      %vm4607 = vcmp.ge.f32.partialorder %v4575, 0.0
      %vm4608 = vcmp.ge.f32.partialorder %v4576, 0.0
      %vm4609 = vcmp.ge.f32.partialorder %v4577, 0.0
      %vm4610 = vcmp.ge.f32.partialorder %v4578, 0.0
      %vm4611 = vcmp.ge.f32.partialorder %v4579, 0.0
      %vm4612 = vcmp.ge.f32.partialorder %v4580, 0.0
      %vm4613 = vcmp.ge.f32.partialorder %v4581, 0.0
      %vm4614 = vcmp.ge.f32.partialorder %v4582, 0.0
      %vm4615 = vcmp.ge.f32.partialorder %v4583, 0.0
      %vm4616 = vcmp.ge.f32.partialorder %v4584, 0.0
      %vm4617 = vcmp.ge.f32.partialorder %v4585, 0.0
      %vm4618 = vcmp.ge.f32.partialorder %v4586, 0.0
      %vm4619 = vcmp.ge.f32.partialorder %v4587, 0.0
      %vm4620 = vcmp.ge.f32.partialorder %v4588, 0.0
      %vm4621 = vcmp.ge.f32.partialorder %v4589, 0.0
      %vm4622 = vcmp.ge.f32.partialorder %v4590, 0.0
      %vm4623 = vcmp.ge.f32.partialorder %v4591, 0.0
      %vm4624 = vcmp.ge.f32.partialorder %v4592, 0.0
      %vm4625 = vcmp.ge.f32.partialorder %v4593, 0.0
      %vm4626 = vcmp.ge.f32.partialorder %v4594, 0.0
      %v4627 = vmul.f32 %v4563, 0.1
      %v4628 = vmul.f32 %v4564, 0.1
      %v4629 = vmul.f32 %v4565, 0.1
      %v4630 = vmul.f32 %v4566, 0.1
      %v4631 = vmul.f32 %v4567, 0.1
      %v4632 = vmul.f32 %v4568, 0.1
      %v4633 = vmul.f32 %v4569, 0.1
      %v4634 = vmul.f32 %v4570, 0.1
      %v4635 = vmul.f32 %v4571, 0.1
      %v4636 = vmul.f32 %v4572, 0.1
      %v4637 = vmul.f32 %v4573, 0.1
      %v4638 = vmul.f32 %v4574, 0.1
      %v4639 = vmul.f32 %v4575, 0.1
      %v4640 = vmul.f32 %v4576, 0.1
      %v4641 = vmul.f32 %v4577, 0.1
      %v4642 = vmul.f32 %v4578, 0.1
      %v4643 = vmul.f32 %v4579, 0.1
      %v4644 = vmul.f32 %v4580, 0.1
      %v4645 = vmul.f32 %v4581, 0.1
      %v4646 = vmul.f32 %v4582, 0.1
      %v4647 = vmul.f32 %v4583, 0.1
      %v4648 = vmul.f32 %v4584, 0.1
      %v4649 = vmul.f32 %v4585, 0.1
      %v4650 = vmul.f32 %v4586, 0.1
      %v4651 = vmul.f32 %v4587, 0.1
      %v4652 = vmul.f32 %v4588, 0.1
      %v4653 = vmul.f32 %v4589, 0.1
      %v4654 = vmul.f32 %v4590, 0.1
      %v4655 = vmul.f32 %v4591, 0.1
      %v4656 = vmul.f32 %v4592, 0.1
      %v4657 = vmul.f32 %v4593, 0.1
      %v4658 = vmul.f32 %v4594, 0.1
      %v4659 = vsel %vm4595, %v4563, %v4627
      %v4660 = vsel %vm4596, %v4564, %v4628
      %v4661 = vsel %vm4597, %v4565, %v4629
      %v4662 = vsel %vm4598, %v4566, %v4630
      %v4663 = vsel %vm4599, %v4567, %v4631
      %v4664 = vsel %vm4600, %v4568, %v4632
      %v4665 = vsel %vm4601, %v4569, %v4633
      %v4666 = vsel %vm4602, %v4570, %v4634
      %v4667 = vsel %vm4603, %v4571, %v4635
      %v4668 = vsel %vm4604, %v4572, %v4636
      %v4669 = vsel %vm4605, %v4573, %v4637
      %v4670 = vsel %vm4606, %v4574, %v4638
      %v4671 = vsel %vm4607, %v4575, %v4639
      %v4672 = vsel %vm4608, %v4576, %v4640
      %v4673 = vsel %vm4609, %v4577, %v4641
      %v4674 = vsel %vm4610, %v4578, %v4642
      %v4675 = vsel %vm4611, %v4579, %v4643
      %v4676 = vsel %vm4612, %v4580, %v4644
      %v4677 = vsel %vm4613, %v4581, %v4645
      %v4678 = vsel %vm4614, %v4582, %v4646
      %v4679 = vsel %vm4615, %v4583, %v4647
      %v4680 = vsel %vm4616, %v4584, %v4648
      %v4681 = vsel %vm4617, %v4585, %v4649
      %v4682 = vsel %vm4618, %v4586, %v4650
      %v4683 = vsel %vm4619, %v4587, %v4651
      %v4684 = vsel %vm4620, %v4588, %v4652
      %v4685 = vsel %vm4621, %v4589, %v4653
      %v4686 = vsel %vm4622, %v4590, %v4654
      %v4687 = vsel %vm4623, %v4591, %v4655
      %v4688 = vsel %vm4624, %v4592, %v4656
      %v4689 = vsel %vm4625, %v4593, %v4657
      %v4690 = vsel %vm4626, %v4594, %v4658
      %4691 = vst.msk [vmem:[%s2532 + $0x1] sm:$0xff] %vm334, %v4659
      %4692 = vst.msk [vmem:[%s2532 + $0x9] sm:$0xff] %vm334, %v4660
      %4693 = vst.msk [vmem:[%s2532 + $0x19] sm:$0xff] %vm334, %v4661
      %4694 = vst.msk [vmem:[%s2532 + $0x21] sm:$0xff] %vm334, %v4662
      %4695 = vst.msk [vmem:[%s2532 + $0x31] sm:$0xff] %vm334, %v4663
      %4696 = vst.msk [vmem:[%s2532 + $0x39] sm:$0xff] %vm334, %v4664
      %4697 = vst.msk [vmem:[%s2532 + $0x49] sm:$0xff] %vm334, %v4665
      %4698 = vst.msk [vmem:[%s2532 + $0x51] sm:$0xff] %vm334, %v4666
      %4699 = vst.msk [vmem:[%s2532 + $0x61] sm:$0xff] %vm334, %v4667
      %4700 = vst.msk [vmem:[%s2532 + $0x69] sm:$0xff] %vm334, %v4668
      %4701 = vst.msk [vmem:[%s2532 + $0x79] sm:$0xff] %vm334, %v4669
      %4702 = vst.msk [vmem:[%s2532 + $0x81] sm:$0xff] %vm334, %v4670
      %4703 = vst.msk [vmem:[%s2532 + $0x91] sm:$0xff] %vm334, %v4671
      %4704 = vst.msk [vmem:[%s2532 + $0x99] sm:$0xff] %vm334, %v4672
      %4705 = vst.msk [vmem:[%s2532 + $0xa9] sm:$0xff] %vm334, %v4673
      %4706 = vst.msk [vmem:[%s2532 + $0xb1] sm:$0xff] %vm334, %v4674
      %4707 = vst.msk [vmem:[%s2532 + $0xc1] sm:$0xff] %vm334, %v4675
      %4708 = vst.msk [vmem:[%s2532 + $0xc9] sm:$0xff] %vm334, %v4676
      %4709 = vst.msk [vmem:[%s2532 + $0xd9] sm:$0xff] %vm334, %v4677
      %4710 = vst.msk [vmem:[%s2532 + $0xe1] sm:$0xff] %vm334, %v4678
      %4711 = vst.msk [vmem:[%s2532 + $0xf1] sm:$0xff] %vm334, %v4679
      %4712 = vst.msk [vmem:[%s2532 + $0xf9] sm:$0xff] %vm334, %v4680
      %4713 = vst.msk [vmem:[%s2532 + $0x109] sm:$0xff] %vm334, %v4681
      %4714 = vst.msk [vmem:[%s2532 + $0x111] sm:$0xff] %vm334, %v4682
      %4715 = vst.msk [vmem:[%s2532 + $0x121] sm:$0xff] %vm334, %v4683
      %4716 = vst.msk [vmem:[%s2532 + $0x129] sm:$0xff] %vm334, %v4684
      %4717 = vst.msk [vmem:[%s2532 + $0x139] sm:$0xff] %vm334, %v4685
      %4718 = vst.msk [vmem:[%s2532 + $0x141] sm:$0xff] %vm334, %v4686
      %4719 = vst.msk [vmem:[%s2532 + $0x151] sm:$0xff] %vm334, %v4687
      %4720 = vst.msk [vmem:[%s2532 + $0x159] sm:$0xff] %vm334, %v4688
      %4721 = vst.msk [vmem:[%s2532 + $0x169] sm:$0xff] %vm334, %v4689
      %4722 = vst.msk [vmem:[%s2532 + $0x171] sm:$0xff] %vm334, %v4690
      %v4723 = vld [vmem:[#allocation2] sm:$0xff]
      %v4724 = vld [vmem:[#allocation2 + $0x8] sm:$0xff]
      %v4725 = vld [vmem:[#allocation2 + $0x18] sm:$0xff]
      %v4726 = vld [vmem:[#allocation2 + $0x20] sm:$0xff]
      %v4727 = vld [vmem:[#allocation2 + $0x30] sm:$0xff]
      %v4728 = vld [vmem:[#allocation2 + $0x38] sm:$0xff]
      %v4729 = vld [vmem:[#allocation2 + $0x48] sm:$0xff]
      %v4730 = vld [vmem:[#allocation2 + $0x50] sm:$0xff]
      %v4731 = vld [vmem:[#allocation2 + $0x60] sm:$0xff]
      %v4732 = vld [vmem:[#allocation2 + $0x68] sm:$0xff]
      %v4733 = vld [vmem:[#allocation2 + $0x78] sm:$0xff]
      %v4734 = vld [vmem:[#allocation2 + $0x80] sm:$0xff]
      %v4735 = vld [vmem:[#allocation2 + $0x90] sm:$0xff]
      %v4736 = vld [vmem:[#allocation2 + $0x98] sm:$0xff]
      %v4737 = vld [vmem:[#allocation2 + $0xa8] sm:$0xff]
      %v4738 = vld [vmem:[#allocation2 + $0xb0] sm:$0xff]
      %v4739 = vld [vmem:[#allocation2 + $0xc0] sm:$0xff]
      %v4740 = vld [vmem:[#allocation2 + $0xc8] sm:$0xff]
      %v4741 = vld [vmem:[#allocation2 + $0xd8] sm:$0xff]
      %v4742 = vld [vmem:[#allocation2 + $0xe0] sm:$0xff]
      %v4743 = vld [vmem:[#allocation2 + $0xf0] sm:$0xff]
      %v4744 = vld [vmem:[#allocation2 + $0xf8] sm:$0xff]
      %v4745 = vld [vmem:[#allocation2 + $0x108] sm:$0xff]
      %v4746 = vld [vmem:[#allocation2 + $0x110] sm:$0xff]
      %v4747 = vld [vmem:[#allocation2 + $0x120] sm:$0xff]
      %v4748 = vld [vmem:[#allocation2 + $0x128] sm:$0xff]
      %v4749 = vld [vmem:[#allocation2 + $0x138] sm:$0xff]
      %v4750 = vld [vmem:[#allocation2 + $0x140] sm:$0xff]
      %v4751 = vld [vmem:[#allocation2 + $0x150] sm:$0xff]
      %v4752 = vld [vmem:[#allocation2 + $0x158] sm:$0xff]
      %v4753 = vld [vmem:[#allocation2 + $0x168] sm:$0xff]
      %v4754 = vld [vmem:[#allocation2 + $0x170] sm:$0xff]
      %v4755 = vld [vmem:[#allocation2 + $0x1] sm:$0xff]
      %v4756 = vld [vmem:[#allocation2 + $0x9] sm:$0xff]
      %v4757 = vld [vmem:[#allocation2 + $0x19] sm:$0xff]
      %v4758 = vld [vmem:[#allocation2 + $0x21] sm:$0xff]
      %v4759 = vld [vmem:[#allocation2 + $0x31] sm:$0xff]
      %v4760 = vld [vmem:[#allocation2 + $0x39] sm:$0xff]
      %v4761 = vld [vmem:[#allocation2 + $0x49] sm:$0xff]
      %v4762 = vld [vmem:[#allocation2 + $0x51] sm:$0xff]
      %v4763 = vld [vmem:[#allocation2 + $0x61] sm:$0xff]
      %v4764 = vld [vmem:[#allocation2 + $0x69] sm:$0xff]
      %v4765 = vld [vmem:[#allocation2 + $0x79] sm:$0xff]
      %v4766 = vld [vmem:[#allocation2 + $0x81] sm:$0xff]
      %v4767 = vld [vmem:[#allocation2 + $0x91] sm:$0xff]
      %v4768 = vld [vmem:[#allocation2 + $0x99] sm:$0xff]
      %v4769 = vld [vmem:[#allocation2 + $0xa9] sm:$0xff]
      %v4770 = vld [vmem:[#allocation2 + $0xb1] sm:$0xff]
      %v4771 = vld [vmem:[#allocation2 + $0xc1] sm:$0xff]
      %v4772 = vld [vmem:[#allocation2 + $0xc9] sm:$0xff]
      %v4773 = vld [vmem:[#allocation2 + $0xd9] sm:$0xff]
      %v4774 = vld [vmem:[#allocation2 + $0xe1] sm:$0xff]
      %v4775 = vld [vmem:[#allocation2 + $0xf1] sm:$0xff]
      %v4776 = vld [vmem:[#allocation2 + $0xf9] sm:$0xff]
      %v4777 = vld [vmem:[#allocation2 + $0x109] sm:$0xff]
      %v4778 = vld [vmem:[#allocation2 + $0x111] sm:$0xff]
      %v4779 = vld [vmem:[#allocation2 + $0x121] sm:$0xff]
      %v4780 = vld [vmem:[#allocation2 + $0x129] sm:$0xff]
      %v4781 = vld [vmem:[#allocation2 + $0x139] sm:$0xff]
      %v4782 = vld [vmem:[#allocation2 + $0x141] sm:$0xff]
      %v4783 = vld [vmem:[#allocation2 + $0x151] sm:$0xff]
      %v4784 = vld [vmem:[#allocation2 + $0x159] sm:$0xff]
      %v4785 = vld [vmem:[#allocation2 + $0x169] sm:$0xff]
      %v4786 = vld [vmem:[#allocation2 + $0x171] sm:$0xff]
      %v4787 = vld [vmem:[#allocation2 + $0x2] sm:$0xff]
      %v4788 = vld [vmem:[#allocation2 + $0xa] sm:$0xff]
      %v4789 = vld [vmem:[#allocation2 + $0x1a] sm:$0xff]
      %v4790 = vld [vmem:[#allocation2 + $0x22] sm:$0xff]
      %v4791 = vld [vmem:[#allocation2 + $0x32] sm:$0xff]
      %v4792 = vld [vmem:[#allocation2 + $0x3a] sm:$0xff]
      %v4793 = vld [vmem:[#allocation2 + $0x4a] sm:$0xff]
      %v4794 = vld [vmem:[#allocation2 + $0x52] sm:$0xff]
      %v4795 = vld [vmem:[#allocation2 + $0x62] sm:$0xff]
      %v4796 = vld [vmem:[#allocation2 + $0x6a] sm:$0xff]
      %v4797 = vld [vmem:[#allocation2 + $0x7a] sm:$0xff]
      %v4798 = vld [vmem:[#allocation2 + $0x82] sm:$0xff]
      %v4799 = vld [vmem:[#allocation2 + $0x92] sm:$0xff]
      %v4800 = vld [vmem:[#allocation2 + $0x9a] sm:$0xff]
      %v4801 = vld [vmem:[#allocation2 + $0xaa] sm:$0xff]
      %v4802 = vld [vmem:[#allocation2 + $0xb2] sm:$0xff]
      %v4803 = vld [vmem:[#allocation2 + $0xc2] sm:$0xff]
      %v4804 = vld [vmem:[#allocation2 + $0xca] sm:$0xff]
      %v4805 = vld [vmem:[#allocation2 + $0xda] sm:$0xff]
      %v4806 = vld [vmem:[#allocation2 + $0xe2] sm:$0xff]
      %v4807 = vld [vmem:[#allocation2 + $0xf2] sm:$0xff]
      %v4808 = vld [vmem:[#allocation2 + $0xfa] sm:$0xff]
      %v4809 = vld [vmem:[#allocation2 + $0x10a] sm:$0xff]
      %v4810 = vld [vmem:[#allocation2 + $0x112] sm:$0xff]
      %v4811 = vld [vmem:[#allocation2 + $0x122] sm:$0xff]
      %v4812 = vld [vmem:[#allocation2 + $0x12a] sm:$0xff]
      %v4813 = vld [vmem:[#allocation2 + $0x13a] sm:$0xff]
      %v4814 = vld [vmem:[#allocation2 + $0x142] sm:$0xff]
      %v4815 = vld [vmem:[#allocation2 + $0x152] sm:$0xff]
      %v4816 = vld [vmem:[#allocation2 + $0x15a] sm:$0xff]
      %v4817 = vld [vmem:[#allocation2 + $0x16a] sm:$0xff]
      %v4818 = vld [vmem:[#allocation2 + $0x172] sm:$0xff]
      %4851 = vrot.lane.b32.xlu0 %v4755, 4
      %v4852 = vpop.permute.xlu0 %4851
      %4853 = vrot.lane.b32.xlu0 %v4756, 4
      %v4854 = vpop.permute.xlu0 %4853
      %4855 = vrot.lane.b32.xlu0 %v4757, 4
      %v4856 = vpop.permute.xlu0 %4855
      %4857 = vrot.lane.b32.xlu0 %v4758, 4
      %v4858 = vpop.permute.xlu0 %4857
      %4859 = vrot.lane.b32.xlu0 %v4759, 4
      %v4860 = vpop.permute.xlu0 %4859
      %4861 = vrot.lane.b32.xlu0 %v4760, 4
      %v4862 = vpop.permute.xlu0 %4861
      %4863 = vrot.lane.b32.xlu0 %v4761, 4
      %v4864 = vpop.permute.xlu0 %4863
      %4865 = vrot.lane.b32.xlu0 %v4762, 4
      %v4866 = vpop.permute.xlu0 %4865
      %4867 = vrot.lane.b32.xlu0 %v4763, 4
      %v4868 = vpop.permute.xlu0 %4867
      %4869 = vrot.lane.b32.xlu0 %v4764, 4
      %v4870 = vpop.permute.xlu0 %4869
      %4871 = vrot.lane.b32.xlu0 %v4765, 4
      %v4872 = vpop.permute.xlu0 %4871
      %4873 = vrot.lane.b32.xlu0 %v4766, 4
      %v4874 = vpop.permute.xlu0 %4873
      %4875 = vrot.lane.b32.xlu0 %v4767, 4
      %v4876 = vpop.permute.xlu0 %4875
      %4877 = vrot.lane.b32.xlu0 %v4768, 4
      %v4878 = vpop.permute.xlu0 %4877
      %4879 = vrot.lane.b32.xlu0 %v4769, 4
      %v4880 = vpop.permute.xlu0 %4879
      %4881 = vrot.lane.b32.xlu0 %v4770, 4
      %v4882 = vpop.permute.xlu0 %4881
      %4883 = vrot.lane.b32.xlu0 %v4771, 4
      %v4884 = vpop.permute.xlu0 %4883
      %4885 = vrot.lane.b32.xlu0 %v4772, 4
      %v4886 = vpop.permute.xlu0 %4885
      %4887 = vrot.lane.b32.xlu0 %v4773, 4
      %v4888 = vpop.permute.xlu0 %4887
      %4889 = vrot.lane.b32.xlu0 %v4774, 4
      %v4890 = vpop.permute.xlu0 %4889
      %4891 = vrot.lane.b32.xlu0 %v4775, 4
      %v4892 = vpop.permute.xlu0 %4891
      %4893 = vrot.lane.b32.xlu0 %v4776, 4
      %v4894 = vpop.permute.xlu0 %4893
      %4895 = vrot.lane.b32.xlu0 %v4777, 4
      %v4896 = vpop.permute.xlu0 %4895
      %4897 = vrot.lane.b32.xlu0 %v4778, 4
      %v4898 = vpop.permute.xlu0 %4897
      %4899 = vrot.lane.b32.xlu0 %v4779, 4
      %v4900 = vpop.permute.xlu0 %4899
      %4901 = vrot.lane.b32.xlu0 %v4780, 4
      %v4902 = vpop.permute.xlu0 %4901
      %4903 = vrot.lane.b32.xlu0 %v4781, 4
      %v4904 = vpop.permute.xlu0 %4903
      %4905 = vrot.lane.b32.xlu0 %v4782, 4
      %v4906 = vpop.permute.xlu0 %4905
      %4907 = vrot.lane.b32.xlu0 %v4783, 4
      %v4908 = vpop.permute.xlu0 %4907
      %4909 = vrot.lane.b32.xlu0 %v4784, 4
      %v4910 = vpop.permute.xlu0 %4909
      %4911 = vrot.lane.b32.xlu0 %v4785, 4
      %v4912 = vpop.permute.xlu0 %4911
      %4913 = vrot.lane.b32.xlu0 %v4786, 4
      %v4914 = vpop.permute.xlu0 %4913
      %4979 = vrot.lane.b32.xlu0 %v4787, 8
      %v4980 = vpop.permute.xlu0 %4979
      %4981 = vrot.lane.b32.xlu0 %v4788, 8
      %v4982 = vpop.permute.xlu0 %4981
      %4983 = vrot.lane.b32.xlu0 %v4789, 8
      %v4984 = vpop.permute.xlu0 %4983
      %4985 = vrot.lane.b32.xlu0 %v4790, 8
      %v4986 = vpop.permute.xlu0 %4985
      %4987 = vrot.lane.b32.xlu0 %v4791, 8
      %v4988 = vpop.permute.xlu0 %4987
      %4989 = vrot.lane.b32.xlu0 %v4792, 8
      %v4990 = vpop.permute.xlu0 %4989
      %4991 = vrot.lane.b32.xlu0 %v4793, 8
      %v4992 = vpop.permute.xlu0 %4991
      %4993 = vrot.lane.b32.xlu0 %v4794, 8
      %v4994 = vpop.permute.xlu0 %4993
      %4995 = vrot.lane.b32.xlu0 %v4795, 8
      %v4996 = vpop.permute.xlu0 %4995
      %4997 = vrot.lane.b32.xlu0 %v4796, 8
      %v4998 = vpop.permute.xlu0 %4997
      %4999 = vrot.lane.b32.xlu0 %v4797, 8
      %v5000 = vpop.permute.xlu0 %4999
      %5001 = vrot.lane.b32.xlu0 %v4798, 8
      %v5002 = vpop.permute.xlu0 %5001
      %5003 = vrot.lane.b32.xlu0 %v4799, 8
      %v5004 = vpop.permute.xlu0 %5003
      %5005 = vrot.lane.b32.xlu0 %v4800, 8
      %v5006 = vpop.permute.xlu0 %5005
      %5007 = vrot.lane.b32.xlu0 %v4801, 8
      %v5008 = vpop.permute.xlu0 %5007
      %5009 = vrot.lane.b32.xlu0 %v4802, 8
      %v5010 = vpop.permute.xlu0 %5009
      %5011 = vrot.lane.b32.xlu0 %v4803, 8
      %v5012 = vpop.permute.xlu0 %5011
      %5013 = vrot.lane.b32.xlu0 %v4804, 8
      %v5014 = vpop.permute.xlu0 %5013
      %5015 = vrot.lane.b32.xlu0 %v4805, 8
      %v5016 = vpop.permute.xlu0 %5015
      %5017 = vrot.lane.b32.xlu0 %v4806, 8
      %v5018 = vpop.permute.xlu0 %5017
      %5019 = vrot.lane.b32.xlu0 %v4807, 8
      %v5020 = vpop.permute.xlu0 %5019
      %5021 = vrot.lane.b32.xlu0 %v4808, 8
      %v5022 = vpop.permute.xlu0 %5021
      %5023 = vrot.lane.b32.xlu0 %v4809, 8
      %v5024 = vpop.permute.xlu0 %5023
      %5025 = vrot.lane.b32.xlu0 %v4810, 8
      %v5026 = vpop.permute.xlu0 %5025
      %5027 = vrot.lane.b32.xlu0 %v4811, 8
      %v5028 = vpop.permute.xlu0 %5027
      %5029 = vrot.lane.b32.xlu0 %v4812, 8
      %v5030 = vpop.permute.xlu0 %5029
      %5031 = vrot.lane.b32.xlu0 %v4813, 8
      %v5032 = vpop.permute.xlu0 %5031
      %5033 = vrot.lane.b32.xlu0 %v4814, 8
      %v5034 = vpop.permute.xlu0 %5033
      %5035 = vrot.lane.b32.xlu0 %v4815, 8
      %v5036 = vpop.permute.xlu0 %5035
      %5037 = vrot.lane.b32.xlu0 %v4816, 8
      %v5038 = vpop.permute.xlu0 %5037
      %5039 = vrot.lane.b32.xlu0 %v4817, 8
      %v5040 = vpop.permute.xlu0 %5039
      %5041 = vrot.lane.b32.xlu0 %v4818, 8
      %v5042 = vpop.permute.xlu0 %5041
      %v5075 = vsel %vm334, %v4723, %v4852
      %v5076 = vsel %vm334, %v4724, %v4854
      %v5077 = vsel %vm334, %v4725, %v4856
      %v5078 = vsel %vm334, %v4726, %v4858
      %v5079 = vsel %vm334, %v4727, %v4860
      %v5080 = vsel %vm334, %v4728, %v4862
      %v5081 = vsel %vm334, %v4729, %v4864
      %v5082 = vsel %vm334, %v4730, %v4866
      %v5083 = vsel %vm334, %v4731, %v4868
      %v5084 = vsel %vm334, %v4732, %v4870
      %v5085 = vsel %vm334, %v4733, %v4872
      %v5086 = vsel %vm334, %v4734, %v4874
      %v5087 = vsel %vm334, %v4735, %v4876
      %v5088 = vsel %vm334, %v4736, %v4878
      %v5089 = vsel %vm334, %v4737, %v4880
      %v5090 = vsel %vm334, %v4738, %v4882
      %v5091 = vsel %vm334, %v4739, %v4884
      %v5092 = vsel %vm334, %v4740, %v4886
      %v5093 = vsel %vm334, %v4741, %v4888
      %v5094 = vsel %vm334, %v4742, %v4890
      %v5095 = vsel %vm334, %v4743, %v4892
      %v5096 = vsel %vm334, %v4744, %v4894
      %v5097 = vsel %vm334, %v4745, %v4896
      %v5098 = vsel %vm334, %v4746, %v4898
      %v5099 = vsel %vm334, %v4747, %v4900
      %v5100 = vsel %vm334, %v4748, %v4902
      %v5101 = vsel %vm334, %v4749, %v4904
      %v5102 = vsel %vm334, %v4750, %v4906
      %v5103 = vsel %vm334, %v4751, %v4908
      %v5104 = vsel %vm334, %v4752, %v4910
      %v5105 = vsel %vm334, %v4753, %v4912
      %v5106 = vsel %vm334, %v4754, %v4914
      %v5107 = vsel %vm2949, %v5075, %v4980
      %v5108 = vsel %vm2949, %v5076, %v4982
      %v5109 = vsel %vm2949, %v5077, %v4984
      %v5110 = vsel %vm2949, %v5078, %v4986
      %v5111 = vsel %vm2949, %v5079, %v4988
      %v5112 = vsel %vm2949, %v5080, %v4990
      %v5113 = vsel %vm2949, %v5081, %v4992
      %v5114 = vsel %vm2949, %v5082, %v4994
      %v5115 = vsel %vm2949, %v5083, %v4996
      %v5116 = vsel %vm2949, %v5084, %v4998
      %v5117 = vsel %vm2949, %v5085, %v5000
      %v5118 = vsel %vm2949, %v5086, %v5002
      %v5119 = vsel %vm2949, %v5087, %v5004
      %v5120 = vsel %vm2949, %v5088, %v5006
      %v5121 = vsel %vm2949, %v5089, %v5008
      %v5122 = vsel %vm2949, %v5090, %v5010
      %v5123 = vsel %vm2949, %v5091, %v5012
      %v5124 = vsel %vm2949, %v5092, %v5014
      %v5125 = vsel %vm2949, %v5093, %v5016
      %v5126 = vsel %vm2949, %v5094, %v5018
      %v5127 = vsel %vm2949, %v5095, %v5020
      %v5128 = vsel %vm2949, %v5096, %v5022
      %v5129 = vsel %vm2949, %v5097, %v5024
      %v5130 = vsel %vm2949, %v5098, %v5026
      %v5131 = vsel %vm2949, %v5099, %v5028
      %v5132 = vsel %vm2949, %v5100, %v5030
      %v5133 = vsel %vm2949, %v5101, %v5032
      %v5134 = vsel %vm2949, %v5102, %v5034
      %v5135 = vsel %vm2949, %v5103, %v5036
      %v5136 = vsel %vm2949, %v5104, %v5038
      %v5137 = vsel %vm2949, %v5105, %v5040
      %v5138 = vsel %vm2949, %v5106, %v5042
      %v5139 = vpack.c.bf16 %v5108, %v5107
      %v5140 = vpack.c.bf16 %v5110, %v5109
      %v5141 = vpack.c.bf16 %v5112, %v5111
      %v5142 = vpack.c.bf16 %v5114, %v5113
      %v5143 = vpack.c.bf16 %v5116, %v5115
      %v5144 = vpack.c.bf16 %v5118, %v5117
      %v5145 = vpack.c.bf16 %v5120, %v5119
      %v5146 = vpack.c.bf16 %v5122, %v5121
      %v5147 = vpack.c.bf16 %v5124, %v5123
      %v5148 = vpack.c.bf16 %v5126, %v5125
      %v5149 = vpack.c.bf16 %v5128, %v5127
      %v5150 = vpack.c.bf16 %v5130, %v5129
      %v5151 = vpack.c.bf16 %v5132, %v5131
      %v5152 = vpack.c.bf16 %v5134, %v5133
      %v5153 = vpack.c.bf16 %v5136, %v5135
      %v5154 = vpack.c.bf16 %v5138, %v5137
      %v5155 = vld [vmem:[%s5] sm:$0xf]
      %v5156 = vld [vmem:[%s5 + $0x4] sm:$0x3]
      %v5157 = vld [vmem:[%s2532] sm:$0xff]
      %v5158 = vld [vmem:[%s2532 + $0x8] sm:$0xff]
      %v5159 = vld [vmem:[%s2532 + $0x18] sm:$0xff]
      %v5160 = vld [vmem:[%s2532 + $0x20] sm:$0xff]
      %v5161 = vld [vmem:[%s2532 + $0x30] sm:$0xff]
      %v5162 = vld [vmem:[%s2532 + $0x38] sm:$0xff]
      %v5163 = vld [vmem:[%s2532 + $0x48] sm:$0xff]
      %v5164 = vld [vmem:[%s2532 + $0x50] sm:$0xff]
      %v5165 = vld [vmem:[%s2532 + $0x60] sm:$0xff]
      %v5166 = vld [vmem:[%s2532 + $0x68] sm:$0xff]
      %v5167 = vld [vmem:[%s2532 + $0x78] sm:$0xff]
      %v5168 = vld [vmem:[%s2532 + $0x80] sm:$0xff]
      %v5169 = vld [vmem:[%s2532 + $0x90] sm:$0xff]
      %v5170 = vld [vmem:[%s2532 + $0x98] sm:$0xff]
      %v5171 = vld [vmem:[%s2532 + $0xa8] sm:$0xff]
      %v5172 = vld [vmem:[%s2532 + $0xb0] sm:$0xff]
      %v5173 = vld [vmem:[%s2532 + $0xc0] sm:$0xff]
      %v5174 = vld [vmem:[%s2532 + $0xc8] sm:$0xff]
      %v5175 = vld [vmem:[%s2532 + $0xd8] sm:$0xff]
      %v5176 = vld [vmem:[%s2532 + $0xe0] sm:$0xff]
      %v5177 = vld [vmem:[%s2532 + $0xf0] sm:$0xff]
      %v5178 = vld [vmem:[%s2532 + $0xf8] sm:$0xff]
      %v5179 = vld [vmem:[%s2532 + $0x108] sm:$0xff]
      %v5180 = vld [vmem:[%s2532 + $0x110] sm:$0xff]
      %v5181 = vld [vmem:[%s2532 + $0x120] sm:$0xff]
      %v5182 = vld [vmem:[%s2532 + $0x128] sm:$0xff]
      %v5183 = vld [vmem:[%s2532 + $0x138] sm:$0xff]
      %v5184 = vld [vmem:[%s2532 + $0x140] sm:$0xff]
      %v5185 = vld [vmem:[%s2532 + $0x150] sm:$0xff]
      %v5186 = vld [vmem:[%s2532 + $0x158] sm:$0xff]
      %v5187 = vld [vmem:[%s2532 + $0x168] sm:$0xff]
      %v5188 = vld [vmem:[%s2532 + $0x170] sm:$0xff]
      %v5189 = vld [vmem:[%s2532 + $0x1] sm:$0xff]
      %v5190 = vld [vmem:[%s2532 + $0x9] sm:$0xff]
      %v5191 = vld [vmem:[%s2532 + $0x19] sm:$0xff]
      %v5192 = vld [vmem:[%s2532 + $0x21] sm:$0xff]
      %v5193 = vld [vmem:[%s2532 + $0x31] sm:$0xff]
      %v5194 = vld [vmem:[%s2532 + $0x39] sm:$0xff]
      %v5195 = vld [vmem:[%s2532 + $0x49] sm:$0xff]
      %v5196 = vld [vmem:[%s2532 + $0x51] sm:$0xff]
      %v5197 = vld [vmem:[%s2532 + $0x61] sm:$0xff]
      %v5198 = vld [vmem:[%s2532 + $0x69] sm:$0xff]
      %v5199 = vld [vmem:[%s2532 + $0x79] sm:$0xff]
      %v5200 = vld [vmem:[%s2532 + $0x81] sm:$0xff]
      %v5201 = vld [vmem:[%s2532 + $0x91] sm:$0xff]
      %v5202 = vld [vmem:[%s2532 + $0x99] sm:$0xff]
      %v5203 = vld [vmem:[%s2532 + $0xa9] sm:$0xff]
      %v5204 = vld [vmem:[%s2532 + $0xb1] sm:$0xff]
      %v5205 = vld [vmem:[%s2532 + $0xc1] sm:$0xff]
      %v5206 = vld [vmem:[%s2532 + $0xc9] sm:$0xff]
      %v5207 = vld [vmem:[%s2532 + $0xd9] sm:$0xff]
      %v5208 = vld [vmem:[%s2532 + $0xe1] sm:$0xff]
      %v5209 = vld [vmem:[%s2532 + $0xf1] sm:$0xff]
      %v5210 = vld [vmem:[%s2532 + $0xf9] sm:$0xff]
      %v5211 = vld [vmem:[%s2532 + $0x109] sm:$0xff]
      %v5212 = vld [vmem:[%s2532 + $0x111] sm:$0xff]
      %v5213 = vld [vmem:[%s2532 + $0x121] sm:$0xff]
      %v5214 = vld [vmem:[%s2532 + $0x129] sm:$0xff]
      %v5215 = vld [vmem:[%s2532 + $0x139] sm:$0xff]
      %v5216 = vld [vmem:[%s2532 + $0x141] sm:$0xff]
      %v5217 = vld [vmem:[%s2532 + $0x151] sm:$0xff]
      %v5218 = vld [vmem:[%s2532 + $0x159] sm:$0xff]
      %v5219 = vld [vmem:[%s2532 + $0x169] sm:$0xff]
      %v5220 = vld [vmem:[%s2532 + $0x171] sm:$0xff]
      %v5221 = vld [vmem:[%s2532 + $0x2] sm:$0xff]
      %v5222 = vld [vmem:[%s2532 + $0xa] sm:$0xff]
      %v5223 = vld [vmem:[%s2532 + $0x1a] sm:$0xff]
      %v5224 = vld [vmem:[%s2532 + $0x22] sm:$0xff]
      %v5225 = vld [vmem:[%s2532 + $0x32] sm:$0xff]
      %v5226 = vld [vmem:[%s2532 + $0x3a] sm:$0xff]
      %v5227 = vld [vmem:[%s2532 + $0x4a] sm:$0xff]
      %v5228 = vld [vmem:[%s2532 + $0x52] sm:$0xff]
      %v5229 = vld [vmem:[%s2532 + $0x62] sm:$0xff]
      %v5230 = vld [vmem:[%s2532 + $0x6a] sm:$0xff]
      %v5231 = vld [vmem:[%s2532 + $0x7a] sm:$0xff]
      %v5232 = vld [vmem:[%s2532 + $0x82] sm:$0xff]
      %v5233 = vld [vmem:[%s2532 + $0x92] sm:$0xff]
      %v5234 = vld [vmem:[%s2532 + $0x9a] sm:$0xff]
      %v5235 = vld [vmem:[%s2532 + $0xaa] sm:$0xff]
      %v5236 = vld [vmem:[%s2532 + $0xb2] sm:$0xff]
      %v5237 = vld [vmem:[%s2532 + $0xc2] sm:$0xff]
      %v5238 = vld [vmem:[%s2532 + $0xca] sm:$0xff]
      %v5239 = vld [vmem:[%s2532 + $0xda] sm:$0xff]
      %v5240 = vld [vmem:[%s2532 + $0xe2] sm:$0xff]
      %v5241 = vld [vmem:[%s2532 + $0xf2] sm:$0xff]
      %v5242 = vld [vmem:[%s2532 + $0xfa] sm:$0xff]
      %v5243 = vld [vmem:[%s2532 + $0x10a] sm:$0xff]
      %v5244 = vld [vmem:[%s2532 + $0x112] sm:$0xff]
      %v5245 = vld [vmem:[%s2532 + $0x122] sm:$0xff]
      %v5246 = vld [vmem:[%s2532 + $0x12a] sm:$0xff]
      %v5247 = vld [vmem:[%s2532 + $0x13a] sm:$0xff]
      %v5248 = vld [vmem:[%s2532 + $0x142] sm:$0xff]
      %v5249 = vld [vmem:[%s2532 + $0x152] sm:$0xff]
      %v5250 = vld [vmem:[%s2532 + $0x15a] sm:$0xff]
      %v5251 = vld [vmem:[%s2532 + $0x16a] sm:$0xff]
      %v5252 = vld [vmem:[%s2532 + $0x172] sm:$0xff]
      %5285 = vrot.lane.b32.xlu0 %v5189, 4
      %v5286 = vpop.permute.xlu0 %5285
      %5287 = vrot.lane.b32.xlu0 %v5190, 4
      %v5288 = vpop.permute.xlu0 %5287
      %5289 = vrot.lane.b32.xlu0 %v5191, 4
      %v5290 = vpop.permute.xlu0 %5289
      %5291 = vrot.lane.b32.xlu0 %v5192, 4
      %v5292 = vpop.permute.xlu0 %5291
      %5293 = vrot.lane.b32.xlu0 %v5193, 4
      %v5294 = vpop.permute.xlu0 %5293
      %5295 = vrot.lane.b32.xlu0 %v5194, 4
      %v5296 = vpop.permute.xlu0 %5295
      %5297 = vrot.lane.b32.xlu0 %v5195, 4
      %v5298 = vpop.permute.xlu0 %5297
      %5299 = vrot.lane.b32.xlu0 %v5196, 4
      %v5300 = vpop.permute.xlu0 %5299
      %5301 = vrot.lane.b32.xlu0 %v5197, 4
      %v5302 = vpop.permute.xlu0 %5301
      %5303 = vrot.lane.b32.xlu0 %v5198, 4
      %v5304 = vpop.permute.xlu0 %5303
      %5305 = vrot.lane.b32.xlu0 %v5199, 4
      %v5306 = vpop.permute.xlu0 %5305
      %5307 = vrot.lane.b32.xlu0 %v5200, 4
      %v5308 = vpop.permute.xlu0 %5307
      %5309 = vrot.lane.b32.xlu0 %v5201, 4
      %v5310 = vpop.permute.xlu0 %5309
      %5311 = vrot.lane.b32.xlu0 %v5202, 4
      %v5312 = vpop.permute.xlu0 %5311
      %5313 = vrot.lane.b32.xlu0 %v5203, 4
      %v5314 = vpop.permute.xlu0 %5313
      %5315 = vrot.lane.b32.xlu0 %v5204, 4
      %v5316 = vpop.permute.xlu0 %5315
      %5317 = vrot.lane.b32.xlu0 %v5205, 4
      %v5318 = vpop.permute.xlu0 %5317
      %5319 = vrot.lane.b32.xlu0 %v5206, 4
      %v5320 = vpop.permute.xlu0 %5319
      %5321 = vrot.lane.b32.xlu0 %v5207, 4
      %v5322 = vpop.permute.xlu0 %5321
      %5323 = vrot.lane.b32.xlu0 %v5208, 4
      %v5324 = vpop.permute.xlu0 %5323
      %5325 = vrot.lane.b32.xlu0 %v5209, 4
      %v5326 = vpop.permute.xlu0 %5325
      %5327 = vrot.lane.b32.xlu0 %v5210, 4
      %v5328 = vpop.permute.xlu0 %5327
      %5329 = vrot.lane.b32.xlu0 %v5211, 4
      %v5330 = vpop.permute.xlu0 %5329
      %5331 = vrot.lane.b32.xlu0 %v5212, 4
      %v5332 = vpop.permute.xlu0 %5331
      %5333 = vrot.lane.b32.xlu0 %v5213, 4
      %v5334 = vpop.permute.xlu0 %5333
      %5335 = vrot.lane.b32.xlu0 %v5214, 4
      %v5336 = vpop.permute.xlu0 %5335
      %5337 = vrot.lane.b32.xlu0 %v5215, 4
      %v5338 = vpop.permute.xlu0 %5337
      %5339 = vrot.lane.b32.xlu0 %v5216, 4
      %v5340 = vpop.permute.xlu0 %5339
      %5341 = vrot.lane.b32.xlu0 %v5217, 4
      %v5342 = vpop.permute.xlu0 %5341
      %5343 = vrot.lane.b32.xlu0 %v5218, 4
      %v5344 = vpop.permute.xlu0 %5343
      %5345 = vrot.lane.b32.xlu0 %v5219, 4
      %v5346 = vpop.permute.xlu0 %5345
      %5347 = vrot.lane.b32.xlu0 %v5220, 4
      %v5348 = vpop.permute.xlu0 %5347
      %5413 = vrot.lane.b32.xlu0 %v5221, 8
      %v5414 = vpop.permute.xlu0 %5413
      %5415 = vrot.lane.b32.xlu0 %v5222, 8
      %v5416 = vpop.permute.xlu0 %5415
      %5417 = vrot.lane.b32.xlu0 %v5223, 8
      %v5418 = vpop.permute.xlu0 %5417
      %5419 = vrot.lane.b32.xlu0 %v5224, 8
      %v5420 = vpop.permute.xlu0 %5419
      %5421 = vrot.lane.b32.xlu0 %v5225, 8
      %v5422 = vpop.permute.xlu0 %5421
      %5423 = vrot.lane.b32.xlu0 %v5226, 8
      %v5424 = vpop.permute.xlu0 %5423
      %5425 = vrot.lane.b32.xlu0 %v5227, 8
      %v5426 = vpop.permute.xlu0 %5425
      %5427 = vrot.lane.b32.xlu0 %v5228, 8
      %v5428 = vpop.permute.xlu0 %5427
      %5429 = vrot.lane.b32.xlu0 %v5229, 8
      %v5430 = vpop.permute.xlu0 %5429
      %5431 = vrot.lane.b32.xlu0 %v5230, 8
      %v5432 = vpop.permute.xlu0 %5431
      %5433 = vrot.lane.b32.xlu0 %v5231, 8
      %v5434 = vpop.permute.xlu0 %5433
      %5435 = vrot.lane.b32.xlu0 %v5232, 8
      %v5436 = vpop.permute.xlu0 %5435
      %5437 = vrot.lane.b32.xlu0 %v5233, 8
      %v5438 = vpop.permute.xlu0 %5437
      %5439 = vrot.lane.b32.xlu0 %v5234, 8
      %v5440 = vpop.permute.xlu0 %5439
      %5441 = vrot.lane.b32.xlu0 %v5235, 8
      %v5442 = vpop.permute.xlu0 %5441
      %5443 = vrot.lane.b32.xlu0 %v5236, 8
      %v5444 = vpop.permute.xlu0 %5443
      %5445 = vrot.lane.b32.xlu0 %v5237, 8
      %v5446 = vpop.permute.xlu0 %5445
      %5447 = vrot.lane.b32.xlu0 %v5238, 8
      %v5448 = vpop.permute.xlu0 %5447
      %5449 = vrot.lane.b32.xlu0 %v5239, 8
      %v5450 = vpop.permute.xlu0 %5449
      %5451 = vrot.lane.b32.xlu0 %v5240, 8
      %v5452 = vpop.permute.xlu0 %5451
      %5453 = vrot.lane.b32.xlu0 %v5241, 8
      %v5454 = vpop.permute.xlu0 %5453
      %5455 = vrot.lane.b32.xlu0 %v5242, 8
      %v5456 = vpop.permute.xlu0 %5455
      %5457 = vrot.lane.b32.xlu0 %v5243, 8
      %v5458 = vpop.permute.xlu0 %5457
      %5459 = vrot.lane.b32.xlu0 %v5244, 8
      %v5460 = vpop.permute.xlu0 %5459
      %5461 = vrot.lane.b32.xlu0 %v5245, 8
      %v5462 = vpop.permute.xlu0 %5461
      %5463 = vrot.lane.b32.xlu0 %v5246, 8
      %v5464 = vpop.permute.xlu0 %5463
      %5465 = vrot.lane.b32.xlu0 %v5247, 8
      %v5466 = vpop.permute.xlu0 %5465
      %5467 = vrot.lane.b32.xlu0 %v5248, 8
      %v5468 = vpop.permute.xlu0 %5467
      %5469 = vrot.lane.b32.xlu0 %v5249, 8
      %v5470 = vpop.permute.xlu0 %5469
      %5471 = vrot.lane.b32.xlu0 %v5250, 8
      %v5472 = vpop.permute.xlu0 %5471
      %5473 = vrot.lane.b32.xlu0 %v5251, 8
      %v5474 = vpop.permute.xlu0 %5473
      %5475 = vrot.lane.b32.xlu0 %v5252, 8
      %v5476 = vpop.permute.xlu0 %5475
      %v5509 = vsel %vm334, %v5157, %v5286
      %v5510 = vsel %vm334, %v5158, %v5288
      %v5511 = vsel %vm334, %v5159, %v5290
      %v5512 = vsel %vm334, %v5160, %v5292
      %v5513 = vsel %vm334, %v5161, %v5294
      %v5514 = vsel %vm334, %v5162, %v5296
      %v5515 = vsel %vm334, %v5163, %v5298
      %v5516 = vsel %vm334, %v5164, %v5300
      %v5517 = vsel %vm334, %v5165, %v5302
      %v5518 = vsel %vm334, %v5166, %v5304
      %v5519 = vsel %vm334, %v5167, %v5306
      %v5520 = vsel %vm334, %v5168, %v5308
      %v5521 = vsel %vm334, %v5169, %v5310
      %v5522 = vsel %vm334, %v5170, %v5312
      %v5523 = vsel %vm334, %v5171, %v5314
      %v5524 = vsel %vm334, %v5172, %v5316
      %v5525 = vsel %vm334, %v5173, %v5318
      %v5526 = vsel %vm334, %v5174, %v5320
      %v5527 = vsel %vm334, %v5175, %v5322
      %v5528 = vsel %vm334, %v5176, %v5324
      %v5529 = vsel %vm334, %v5177, %v5326
      %v5530 = vsel %vm334, %v5178, %v5328
      %v5531 = vsel %vm334, %v5179, %v5330
      %v5532 = vsel %vm334, %v5180, %v5332
      %v5533 = vsel %vm334, %v5181, %v5334
      %v5534 = vsel %vm334, %v5182, %v5336
      %v5535 = vsel %vm334, %v5183, %v5338
      %v5536 = vsel %vm334, %v5184, %v5340
      %v5537 = vsel %vm334, %v5185, %v5342
      %v5538 = vsel %vm334, %v5186, %v5344
      %v5539 = vsel %vm334, %v5187, %v5346
      %v5540 = vsel %vm334, %v5188, %v5348
      %v5541 = vsel %vm2949, %v5509, %v5414
      %v5542 = vsel %vm2949, %v5510, %v5416
      %v5543 = vsel %vm2949, %v5511, %v5418
      %v5544 = vsel %vm2949, %v5512, %v5420
      %v5545 = vsel %vm2949, %v5513, %v5422
      %v5546 = vsel %vm2949, %v5514, %v5424
      %v5547 = vsel %vm2949, %v5515, %v5426
      %v5548 = vsel %vm2949, %v5516, %v5428
      %v5549 = vsel %vm2949, %v5517, %v5430
      %v5550 = vsel %vm2949, %v5518, %v5432
      %v5551 = vsel %vm2949, %v5519, %v5434
      %v5552 = vsel %vm2949, %v5520, %v5436
      %v5553 = vsel %vm2949, %v5521, %v5438
      %v5554 = vsel %vm2949, %v5522, %v5440
      %v5555 = vsel %vm2949, %v5523, %v5442
      %v5556 = vsel %vm2949, %v5524, %v5444
      %v5557 = vsel %vm2949, %v5525, %v5446
      %v5558 = vsel %vm2949, %v5526, %v5448
      %v5559 = vsel %vm2949, %v5527, %v5450
      %v5560 = vsel %vm2949, %v5528, %v5452
      %v5561 = vsel %vm2949, %v5529, %v5454
      %v5562 = vsel %vm2949, %v5530, %v5456
      %v5563 = vsel %vm2949, %v5531, %v5458
      %v5564 = vsel %vm2949, %v5532, %v5460
      %v5565 = vsel %vm2949, %v5533, %v5462
      %v5566 = vsel %vm2949, %v5534, %v5464
      %v5567 = vsel %vm2949, %v5535, %v5466
      %v5568 = vsel %vm2949, %v5536, %v5468
      %v5569 = vsel %vm2949, %v5537, %v5470
      %v5570 = vsel %vm2949, %v5538, %v5472
      %v5571 = vsel %vm2949, %v5539, %v5474
      %v5572 = vsel %vm2949, %v5540, %v5476
      %v5573 = vpack.c.bf16 %v5542, %v5541
      %v5574 = vpack.c.bf16 %v5544, %v5543
      %v5575 = vpack.c.bf16 %v5546, %v5545
      %v5576 = vpack.c.bf16 %v5548, %v5547
      %v5577 = vpack.c.bf16 %v5550, %v5549
      %v5578 = vpack.c.bf16 %v5552, %v5551
      %v5579 = vpack.c.bf16 %v5554, %v5553
      %v5580 = vpack.c.bf16 %v5556, %v5555
      %v5581 = vpack.c.bf16 %v5558, %v5557
      %v5582 = vpack.c.bf16 %v5560, %v5559
      %v5583 = vpack.c.bf16 %v5562, %v5561
      %v5584 = vpack.c.bf16 %v5564, %v5563
      %v5585 = vpack.c.bf16 %v5566, %v5565
      %v5586 = vpack.c.bf16 %v5568, %v5567
      %v5587 = vpack.c.bf16 %v5570, %v5569
      %v5588 = vpack.c.bf16 %v5572, %v5571
      %s5589 = scalar_lea.vmem %s5, 8
      %v5590 = vld [vmem:[%s5589] sm:$0xf]
      %v5591 = vld [vmem:[%s5589 + $0x4] sm:$0x3]
      %v5594 = vunpack.c.l.b16 %v5590
      %v5595 = vunpack.c.l.b16 %v5591
      %v5596 = vpack.c.b16 %v5595, %v5594
      %v5598 = vsel %vm3440, %v5573, 0
      %v5601 = vsel %vm3440, %v5574, 0
      %v5604 = vsel %vm3440, %v5575, 0
      %v5607 = vsel %vm3440, %v5576, 0
      %v5610 = vsel %vm3440, %v5577, 0
      %v5613 = vsel %vm3440, %v5578, 0
      %v5616 = vsel %vm3440, %v5579, 0
      %v5619 = vsel %vm3440, %v5580, 0
      %v5622 = vsel %vm3440, %v5581, 0
      %v5625 = vsel %vm3440, %v5582, 0
      %v5628 = vsel %vm3440, %v5583, 0
      %v5631 = vsel %vm3440, %v5584, 0
      %v5634 = vsel %vm3440, %v5585, 0
      %v5637 = vsel %vm3440, %v5586, 0
      %v5640 = vsel %vm3440, %v5587, 0
      %v5643 = vsel %vm3440, %v5588, 0
      %v5646 = vsel %vm3489, %v5596, 0
      %5648 = vmatprep.subr.bf16.mxu0 0
      %5649 = vmatpush1.bf16.msra.mxu0 0
      %5650 = vmatprep.subr.bf16.mxu0 0
      %5651 = vmatpush1.bf16.msra.mxu0 0
      %5652 = vmatprep.subr.bf16.mxu0 0
      %5653 = vmatpush1.bf16.msra.mxu0 0
      %5654 = vmatprep.subr.bf16.mxu0 0
      %5655 = vmatpush1.bf16.msra.mxu0 0
      %5656 = vmatprep.subr.bf16.mxu0 0
      %5657 = vmatpush1.bf16.msra.mxu0 0
      %5658 = vmatprep.subr.bf16.mxu0 0
      %5659 = vmatpush1.bf16.msra.mxu0 0
      %5660 = vmatprep.subr.bf16.mxu0 0
      %5661 = vmatpush1.bf16.msra.mxu0 0
      %5662 = vmatprep.subr.bf16.mxu0 0
      %5663 = vmatpush1.bf16.msra.mxu0 %v5646
      %5664 = vmatprep.subr.bf16.mxu0 0
      %5665 = vmatpush2.bf16.msra.mxu0 0
      %5666 = vmatprep.subr.bf16.mxu0 0
      %5667 = vmatpush2.bf16.msra.mxu0 0
      %5668 = vmatprep.subr.bf16.mxu0 0
      %5669 = vmatpush2.bf16.msra.mxu0 0
      %5670 = vmatprep.subr.bf16.mxu0 0
      %5671 = vmatpush2.bf16.msra.mxu0 0
      %5672 = vmatprep.subr.bf16.mxu0 0
      %5673 = vmatpush2.bf16.msra.mxu0 0
      %5674 = vmatprep.subr.bf16.mxu0 0
      %5675 = vmatpush2.bf16.msra.mxu0 0
      %5676 = vmatprep.subr.bf16.mxu0 0
      %5677 = vmatpush2.bf16.msra.mxu0 0
      %5678 = vmatprep.subr.bf16.mxu0 0
      %5679 = vmatpush2.bf16.msra.mxu0 0
      %5680 = vmatprep.mubr.bf16.mxu0 0
      %5681 = vmatmul.mubr.bf16.gmra.mxu0 %v5598
      %v5682 = vpop.f32.mrf.mxu0
      %v5683 = vadd.f32 0.0, %v5682
      %v5684 = vpop.f32.mrf.mxu0
      %v5685 = vpop.f32.mrf.mxu0
      %v5686 = vadd.f32 0.0, %v5685
      %v5687 = vpop.f32.mrf.mxu0
      %5688 = vmatprep.mubr.bf16.mxu0 0
      %5689 = vmatmul.mubr.bf16.gmra.mxu0 %v5601
      %v5690 = vpop.f32.mrf.mxu0
      %v5691 = vadd.f32 0.0, %v5690
      %v5692 = vpop.f32.mrf.mxu0
      %v5693 = vpop.f32.mrf.mxu0
      %v5694 = vadd.f32 0.0, %v5693
      %v5695 = vpop.f32.mrf.mxu0
      %5696 = vmatprep.mubr.bf16.mxu0 0
      %5697 = vmatmul.mubr.bf16.gmra.mxu0 %v5604
      %v5698 = vpop.f32.mrf.mxu0
      %v5699 = vadd.f32 0.0, %v5698
      %v5700 = vpop.f32.mrf.mxu0
      %v5701 = vpop.f32.mrf.mxu0
      %v5702 = vadd.f32 0.0, %v5701
      %v5703 = vpop.f32.mrf.mxu0
      %5704 = vmatprep.mubr.bf16.mxu0 0
      %5705 = vmatmul.mubr.bf16.gmra.mxu0 %v5607
      %v5706 = vpop.f32.mrf.mxu0
      %v5707 = vadd.f32 0.0, %v5706
      %v5708 = vpop.f32.mrf.mxu0
      %v5709 = vpop.f32.mrf.mxu0
      %v5710 = vadd.f32 0.0, %v5709
      %v5711 = vpop.f32.mrf.mxu0
      %5712 = vmatprep.mubr.bf16.mxu0 0
      %5713 = vmatmul.mubr.bf16.gmra.mxu0 %v5610
      %v5714 = vpop.f32.mrf.mxu0
      %v5715 = vadd.f32 0.0, %v5714
      %v5716 = vpop.f32.mrf.mxu0
      %v5717 = vpop.f32.mrf.mxu0
      %v5718 = vadd.f32 0.0, %v5717
      %v5719 = vpop.f32.mrf.mxu0
      %5720 = vmatprep.mubr.bf16.mxu0 0
      %5721 = vmatmul.mubr.bf16.gmra.mxu0 %v5613
      %v5722 = vpop.f32.mrf.mxu0
      %v5723 = vadd.f32 0.0, %v5722
      %v5724 = vpop.f32.mrf.mxu0
      %v5725 = vpop.f32.mrf.mxu0
      %v5726 = vadd.f32 0.0, %v5725
      %v5727 = vpop.f32.mrf.mxu0
      %5728 = vmatprep.mubr.bf16.mxu0 0
      %5729 = vmatmul.mubr.bf16.gmra.mxu0 %v5616
      %v5730 = vpop.f32.mrf.mxu0
      %v5731 = vadd.f32 0.0, %v5730
      %v5732 = vpop.f32.mrf.mxu0
      %v5733 = vpop.f32.mrf.mxu0
      %v5734 = vadd.f32 0.0, %v5733
      %v5735 = vpop.f32.mrf.mxu0
      %5736 = vmatprep.mubr.bf16.mxu0 0
      %5737 = vmatmul.mubr.bf16.gmra.mxu0 %v5619
      %v5738 = vpop.f32.mrf.mxu0
      %v5739 = vadd.f32 0.0, %v5738
      %v5740 = vpop.f32.mrf.mxu0
      %v5741 = vpop.f32.mrf.mxu0
      %v5742 = vadd.f32 0.0, %v5741
      %v5743 = vpop.f32.mrf.mxu0
      %5744 = vmatprep.mubr.bf16.mxu0 0
      %5745 = vmatmul.mubr.bf16.gmra.mxu0 %v5622
      %v5746 = vpop.f32.mrf.mxu0
      %v5747 = vadd.f32 0.0, %v5746
      %v5748 = vpop.f32.mrf.mxu0
      %v5749 = vpop.f32.mrf.mxu0
      %v5750 = vadd.f32 0.0, %v5749
      %v5751 = vpop.f32.mrf.mxu0
      %5752 = vmatprep.mubr.bf16.mxu0 0
      %5753 = vmatmul.mubr.bf16.gmra.mxu0 %v5625
      %v5754 = vpop.f32.mrf.mxu0
      %v5755 = vadd.f32 0.0, %v5754
      %v5756 = vpop.f32.mrf.mxu0
      %v5757 = vpop.f32.mrf.mxu0
      %v5758 = vadd.f32 0.0, %v5757
      %v5759 = vpop.f32.mrf.mxu0
      %5760 = vmatprep.mubr.bf16.mxu0 0
      %5761 = vmatmul.mubr.bf16.gmra.mxu0 %v5628
      %v5762 = vpop.f32.mrf.mxu0
      %v5763 = vadd.f32 0.0, %v5762
      %v5764 = vpop.f32.mrf.mxu0
      %v5765 = vpop.f32.mrf.mxu0
      %v5766 = vadd.f32 0.0, %v5765
      %v5767 = vpop.f32.mrf.mxu0
      %5768 = vmatprep.mubr.bf16.mxu0 0
      %5769 = vmatmul.mubr.bf16.gmra.mxu0 %v5631
      %v5770 = vpop.f32.mrf.mxu0
      %v5771 = vadd.f32 0.0, %v5770
      %v5772 = vpop.f32.mrf.mxu0
      %v5773 = vpop.f32.mrf.mxu0
      %v5774 = vadd.f32 0.0, %v5773
      %v5775 = vpop.f32.mrf.mxu0
      %5776 = vmatprep.mubr.bf16.mxu0 0
      %5777 = vmatmul.mubr.bf16.gmra.mxu0 %v5634
      %v5778 = vpop.f32.mrf.mxu0
      %v5779 = vadd.f32 0.0, %v5778
      %v5780 = vpop.f32.mrf.mxu0
      %v5781 = vpop.f32.mrf.mxu0
      %v5782 = vadd.f32 0.0, %v5781
      %v5783 = vpop.f32.mrf.mxu0
      %5784 = vmatprep.mubr.bf16.mxu0 0
      %5785 = vmatmul.mubr.bf16.gmra.mxu0 %v5637
      %v5786 = vpop.f32.mrf.mxu0
      %v5787 = vadd.f32 0.0, %v5786
      %v5788 = vpop.f32.mrf.mxu0
      %v5789 = vpop.f32.mrf.mxu0
      %v5790 = vadd.f32 0.0, %v5789
      %v5791 = vpop.f32.mrf.mxu0
      %5792 = vmatprep.mubr.bf16.mxu0 0
      %5793 = vmatmul.mubr.bf16.gmra.mxu0 %v5640
      %v5794 = vpop.f32.mrf.mxu0
      %v5795 = vadd.f32 0.0, %v5794
      %v5796 = vpop.f32.mrf.mxu0
      %v5797 = vpop.f32.mrf.mxu0
      %v5798 = vadd.f32 0.0, %v5797
      %v5799 = vpop.f32.mrf.mxu0
      %5800 = vmatprep.mubr.bf16.mxu0 0
      %5801 = vmatmul.mubr.bf16.gmra.mxu0 %v5643
      %v5802 = vpop.f32.mrf.mxu0
      %v5803 = vadd.f32 0.0, %v5802
      %v5804 = vpop.f32.mrf.mxu0
      %v5805 = vpop.f32.mrf.mxu0
      %v5806 = vadd.f32 0.0, %v5805
      %v5807 = vpop.f32.mrf.mxu0
      %5808 = vdwg.mxu0
      %v5811 = vunpack.c.l.b16 %v5155
      %v5812 = vunpack.c.l.b16 %v5156
      %v5813 = vpack.c.b16 %v5812, %v5811
      %v5815 = vsel %vm3440, %v5139, 0
      %v5818 = vsel %vm3440, %v5140, 0
      %v5821 = vsel %vm3440, %v5141, 0
      %v5824 = vsel %vm3440, %v5142, 0
      %v5827 = vsel %vm3440, %v5143, 0
      %v5830 = vsel %vm3440, %v5144, 0
      %v5833 = vsel %vm3440, %v5145, 0
      %v5836 = vsel %vm3440, %v5146, 0
      %v5839 = vsel %vm3440, %v5147, 0
      %v5842 = vsel %vm3440, %v5148, 0
      %v5845 = vsel %vm3440, %v5149, 0
      %v5848 = vsel %vm3440, %v5150, 0
      %v5851 = vsel %vm3440, %v5151, 0
      %v5854 = vsel %vm3440, %v5152, 0
      %v5857 = vsel %vm3440, %v5153, 0
      %v5860 = vsel %vm3440, %v5154, 0
      %v5863 = vsel %vm3489, %v5813, 0
      %5865 = vmatprep.subr.bf16.mxu0 0
      %5866 = vmatpush1.bf16.msra.mxu0 0
      %5867 = vmatprep.subr.bf16.mxu0 0
      %5868 = vmatpush1.bf16.msra.mxu0 0
      %5869 = vmatprep.subr.bf16.mxu0 0
      %5870 = vmatpush1.bf16.msra.mxu0 0
      %5871 = vmatprep.subr.bf16.mxu0 0
      %5872 = vmatpush1.bf16.msra.mxu0 0
      %5873 = vmatprep.subr.bf16.mxu0 0
      %5874 = vmatpush1.bf16.msra.mxu0 0
      %5875 = vmatprep.subr.bf16.mxu0 0
      %5876 = vmatpush1.bf16.msra.mxu0 0
      %5877 = vmatprep.subr.bf16.mxu0 0
      %5878 = vmatpush1.bf16.msra.mxu0 0
      %5879 = vmatprep.subr.bf16.mxu0 0
      %5880 = vmatpush1.bf16.msra.mxu0 %v5863
      %5881 = vmatprep.subr.bf16.mxu0 0
      %5882 = vmatpush2.bf16.msra.mxu0 0
      %5883 = vmatprep.subr.bf16.mxu0 0
      %5884 = vmatpush2.bf16.msra.mxu0 0
      %5885 = vmatprep.subr.bf16.mxu0 0
      %5886 = vmatpush2.bf16.msra.mxu0 0
      %5887 = vmatprep.subr.bf16.mxu0 0
      %5888 = vmatpush2.bf16.msra.mxu0 0
      %5889 = vmatprep.subr.bf16.mxu0 0
      %5890 = vmatpush2.bf16.msra.mxu0 0
      %5891 = vmatprep.subr.bf16.mxu0 0
      %5892 = vmatpush2.bf16.msra.mxu0 0
      %5893 = vmatprep.subr.bf16.mxu0 0
      %5894 = vmatpush2.bf16.msra.mxu0 0
      %5895 = vmatprep.subr.bf16.mxu0 0
      %5896 = vmatpush2.bf16.msra.mxu0 0
      %5897 = vmatprep.mubr.bf16.mxu0 0
      %5898 = vmatmul.mubr.bf16.gmra.mxu0 %v5815
      %v5899 = vpop.f32.mrf.mxu0
      %v5900 = vadd.f32 %v5683, %v5899
      %v5901 = vpop.f32.mrf.mxu0
      %v5902 = vpop.f32.mrf.mxu0
      %v5903 = vadd.f32 %v5686, %v5902
      %v5904 = vpop.f32.mrf.mxu0
      %5905 = vmatprep.mubr.bf16.mxu0 0
      %5906 = vmatmul.mubr.bf16.gmra.mxu0 %v5818
      %v5907 = vpop.f32.mrf.mxu0
      %v5908 = vadd.f32 %v5691, %v5907
      %v5909 = vpop.f32.mrf.mxu0
      %v5910 = vpop.f32.mrf.mxu0
      %v5911 = vadd.f32 %v5694, %v5910
      %v5912 = vpop.f32.mrf.mxu0
      %5913 = vmatprep.mubr.bf16.mxu0 0
      %5914 = vmatmul.mubr.bf16.gmra.mxu0 %v5821
      %v5915 = vpop.f32.mrf.mxu0
      %v5916 = vadd.f32 %v5699, %v5915
      %v5917 = vpop.f32.mrf.mxu0
      %v5918 = vpop.f32.mrf.mxu0
      %v5919 = vadd.f32 %v5702, %v5918
      %v5920 = vpop.f32.mrf.mxu0
      %5921 = vmatprep.mubr.bf16.mxu0 0
      %5922 = vmatmul.mubr.bf16.gmra.mxu0 %v5824
      %v5923 = vpop.f32.mrf.mxu0
      %v5924 = vadd.f32 %v5707, %v5923
      %v5925 = vpop.f32.mrf.mxu0
      %v5926 = vpop.f32.mrf.mxu0
      %v5927 = vadd.f32 %v5710, %v5926
      %v5928 = vpop.f32.mrf.mxu0
      %5929 = vmatprep.mubr.bf16.mxu0 0
      %5930 = vmatmul.mubr.bf16.gmra.mxu0 %v5827
      %v5931 = vpop.f32.mrf.mxu0
      %v5932 = vadd.f32 %v5715, %v5931
      %v5933 = vpop.f32.mrf.mxu0
      %v5934 = vpop.f32.mrf.mxu0
      %v5935 = vadd.f32 %v5718, %v5934
      %v5936 = vpop.f32.mrf.mxu0
      %5937 = vmatprep.mubr.bf16.mxu0 0
      %5938 = vmatmul.mubr.bf16.gmra.mxu0 %v5830
      %v5939 = vpop.f32.mrf.mxu0
      %v5940 = vadd.f32 %v5723, %v5939
      %v5941 = vpop.f32.mrf.mxu0
      %v5942 = vpop.f32.mrf.mxu0
      %v5943 = vadd.f32 %v5726, %v5942
      %v5944 = vpop.f32.mrf.mxu0
      %5945 = vmatprep.mubr.bf16.mxu0 0
      %5946 = vmatmul.mubr.bf16.gmra.mxu0 %v5833
      %v5947 = vpop.f32.mrf.mxu0
      %v5948 = vadd.f32 %v5731, %v5947
      %v5949 = vpop.f32.mrf.mxu0
      %v5950 = vpop.f32.mrf.mxu0
      %v5951 = vadd.f32 %v5734, %v5950
      %v5952 = vpop.f32.mrf.mxu0
      %5953 = vmatprep.mubr.bf16.mxu0 0
      %5954 = vmatmul.mubr.bf16.gmra.mxu0 %v5836
      %v5955 = vpop.f32.mrf.mxu0
      %v5956 = vadd.f32 %v5739, %v5955
      %v5957 = vpop.f32.mrf.mxu0
      %v5958 = vpop.f32.mrf.mxu0
      %v5959 = vadd.f32 %v5742, %v5958
      %v5960 = vpop.f32.mrf.mxu0
      %5961 = vmatprep.mubr.bf16.mxu0 0
      %5962 = vmatmul.mubr.bf16.gmra.mxu0 %v5839
      %v5963 = vpop.f32.mrf.mxu0
      %v5964 = vadd.f32 %v5747, %v5963
      %v5965 = vpop.f32.mrf.mxu0
      %v5966 = vpop.f32.mrf.mxu0
      %v5967 = vadd.f32 %v5750, %v5966
      %v5968 = vpop.f32.mrf.mxu0
      %5969 = vmatprep.mubr.bf16.mxu0 0
      %5970 = vmatmul.mubr.bf16.gmra.mxu0 %v5842
      %v5971 = vpop.f32.mrf.mxu0
      %v5972 = vadd.f32 %v5755, %v5971
      %v5973 = vpop.f32.mrf.mxu0
      %v5974 = vpop.f32.mrf.mxu0
      %v5975 = vadd.f32 %v5758, %v5974
      %v5976 = vpop.f32.mrf.mxu0
      %5977 = vmatprep.mubr.bf16.mxu0 0
      %5978 = vmatmul.mubr.bf16.gmra.mxu0 %v5845
      %v5979 = vpop.f32.mrf.mxu0
      %v5980 = vadd.f32 %v5763, %v5979
      %v5981 = vpop.f32.mrf.mxu0
      %v5982 = vpop.f32.mrf.mxu0
      %v5983 = vadd.f32 %v5766, %v5982
      %v5984 = vpop.f32.mrf.mxu0
      %5985 = vmatprep.mubr.bf16.mxu0 0
      %5986 = vmatmul.mubr.bf16.gmra.mxu0 %v5848
      %v5987 = vpop.f32.mrf.mxu0
      %v5988 = vadd.f32 %v5771, %v5987
      %v5989 = vpop.f32.mrf.mxu0
      %v5990 = vpop.f32.mrf.mxu0
      %v5991 = vadd.f32 %v5774, %v5990
      %v5992 = vpop.f32.mrf.mxu0
      %5993 = vmatprep.mubr.bf16.mxu0 0
      %5994 = vmatmul.mubr.bf16.gmra.mxu0 %v5851
      %v5995 = vpop.f32.mrf.mxu0
      %v5996 = vadd.f32 %v5779, %v5995
      %v5997 = vpop.f32.mrf.mxu0
      %v5998 = vpop.f32.mrf.mxu0
      %v5999 = vadd.f32 %v5782, %v5998
      %v6000 = vpop.f32.mrf.mxu0
      %6001 = vmatprep.mubr.bf16.mxu0 0
      %6002 = vmatmul.mubr.bf16.gmra.mxu0 %v5854
      %v6003 = vpop.f32.mrf.mxu0
      %v6004 = vadd.f32 %v5787, %v6003
      %v6005 = vpop.f32.mrf.mxu0
      %v6006 = vpop.f32.mrf.mxu0
      %v6007 = vadd.f32 %v5790, %v6006
      %v6008 = vpop.f32.mrf.mxu0
      %6009 = vmatprep.mubr.bf16.mxu0 0
      %6010 = vmatmul.mubr.bf16.gmra.mxu0 %v5857
      %v6011 = vpop.f32.mrf.mxu0
      %v6012 = vadd.f32 %v5795, %v6011
      %v6013 = vpop.f32.mrf.mxu0
      %v6014 = vpop.f32.mrf.mxu0
      %v6015 = vadd.f32 %v5798, %v6014
      %v6016 = vpop.f32.mrf.mxu0
      %6017 = vmatprep.mubr.bf16.mxu0 0
      %6018 = vmatmul.mubr.bf16.gmra.mxu0 %v5860
      %v6019 = vpop.f32.mrf.mxu0
      %v6020 = vadd.f32 %v5803, %v6019
      %v6021 = vpop.f32.mrf.mxu0
      %v6022 = vpop.f32.mrf.mxu0
      %v6023 = vadd.f32 %v5806, %v6022
      %v6024 = vpop.f32.mrf.mxu0
      %6025 = vdwg.mxu0
      %v6026 = vld [vmem:[%s3871] sm:$0xff]
      %v6027 = vld [vmem:[%s3871 + $0x8] sm:$0xff]
      %v6028 = vld [vmem:[%s3871 + $0x18] sm:$0xff]
      %v6029 = vld [vmem:[%s3871 + $0x20] sm:$0xff]
      %v6030 = vld [vmem:[%s3871 + $0x30] sm:$0xff]
      %v6031 = vld [vmem:[%s3871 + $0x38] sm:$0xff]
      %v6032 = vld [vmem:[%s3871 + $0x48] sm:$0xff]
      %v6033 = vld [vmem:[%s3871 + $0x50] sm:$0xff]
      %v6034 = vld [vmem:[%s3871 + $0x60] sm:$0xff]
      %v6035 = vld [vmem:[%s3871 + $0x68] sm:$0xff]
      %v6036 = vld [vmem:[%s3871 + $0x78] sm:$0xff]
      %v6037 = vld [vmem:[%s3871 + $0x80] sm:$0xff]
      %v6038 = vld [vmem:[%s3871 + $0x90] sm:$0xff]
      %v6039 = vld [vmem:[%s3871 + $0x98] sm:$0xff]
      %v6040 = vld [vmem:[%s3871 + $0xa8] sm:$0xff]
      %v6041 = vld [vmem:[%s3871 + $0xb0] sm:$0xff]
      %v6042 = vld [vmem:[%s3871 + $0xc0] sm:$0xff]
      %v6043 = vld [vmem:[%s3871 + $0xc8] sm:$0xff]
      %v6044 = vld [vmem:[%s3871 + $0xd8] sm:$0xff]
      %v6045 = vld [vmem:[%s3871 + $0xe0] sm:$0xff]
      %v6046 = vld [vmem:[%s3871 + $0xf0] sm:$0xff]
      %v6047 = vld [vmem:[%s3871 + $0xf8] sm:$0xff]
      %v6048 = vld [vmem:[%s3871 + $0x108] sm:$0xff]
      %v6049 = vld [vmem:[%s3871 + $0x110] sm:$0xff]
      %v6050 = vld [vmem:[%s3871 + $0x120] sm:$0xff]
      %v6051 = vld [vmem:[%s3871 + $0x128] sm:$0xff]
      %v6052 = vld [vmem:[%s3871 + $0x138] sm:$0xff]
      %v6053 = vld [vmem:[%s3871 + $0x140] sm:$0xff]
      %v6054 = vld [vmem:[%s3871 + $0x150] sm:$0xff]
      %v6055 = vld [vmem:[%s3871 + $0x158] sm:$0xff]
      %v6056 = vld [vmem:[%s3871 + $0x168] sm:$0xff]
      %v6057 = vld [vmem:[%s3871 + $0x170] sm:$0xff]
      %v6058 = vld [vmem:[%s3871 + $0x1] sm:$0xff]
      %v6059 = vld [vmem:[%s3871 + $0x9] sm:$0xff]
      %v6060 = vld [vmem:[%s3871 + $0x19] sm:$0xff]
      %v6061 = vld [vmem:[%s3871 + $0x21] sm:$0xff]
      %v6062 = vld [vmem:[%s3871 + $0x31] sm:$0xff]
      %v6063 = vld [vmem:[%s3871 + $0x39] sm:$0xff]
      %v6064 = vld [vmem:[%s3871 + $0x49] sm:$0xff]
      %v6065 = vld [vmem:[%s3871 + $0x51] sm:$0xff]
      %v6066 = vld [vmem:[%s3871 + $0x61] sm:$0xff]
      %v6067 = vld [vmem:[%s3871 + $0x69] sm:$0xff]
      %v6068 = vld [vmem:[%s3871 + $0x79] sm:$0xff]
      %v6069 = vld [vmem:[%s3871 + $0x81] sm:$0xff]
      %v6070 = vld [vmem:[%s3871 + $0x91] sm:$0xff]
      %v6071 = vld [vmem:[%s3871 + $0x99] sm:$0xff]
      %v6072 = vld [vmem:[%s3871 + $0xa9] sm:$0xff]
      %v6073 = vld [vmem:[%s3871 + $0xb1] sm:$0xff]
      %v6074 = vld [vmem:[%s3871 + $0xc1] sm:$0xff]
      %v6075 = vld [vmem:[%s3871 + $0xc9] sm:$0xff]
      %v6076 = vld [vmem:[%s3871 + $0xd9] sm:$0xff]
      %v6077 = vld [vmem:[%s3871 + $0xe1] sm:$0xff]
      %v6078 = vld [vmem:[%s3871 + $0xf1] sm:$0xff]
      %v6079 = vld [vmem:[%s3871 + $0xf9] sm:$0xff]
      %v6080 = vld [vmem:[%s3871 + $0x109] sm:$0xff]
      %v6081 = vld [vmem:[%s3871 + $0x111] sm:$0xff]
      %v6082 = vld [vmem:[%s3871 + $0x121] sm:$0xff]
      %v6083 = vld [vmem:[%s3871 + $0x129] sm:$0xff]
      %v6084 = vld [vmem:[%s3871 + $0x139] sm:$0xff]
      %v6085 = vld [vmem:[%s3871 + $0x141] sm:$0xff]
      %v6086 = vld [vmem:[%s3871 + $0x151] sm:$0xff]
      %v6087 = vld [vmem:[%s3871 + $0x159] sm:$0xff]
      %v6088 = vld [vmem:[%s3871 + $0x169] sm:$0xff]
      %v6089 = vld [vmem:[%s3871 + $0x171] sm:$0xff]
      %v6090 = vld [vmem:[%s3871 + $0x2] sm:$0xff]
      %v6091 = vld [vmem:[%s3871 + $0xa] sm:$0xff]
      %v6092 = vld [vmem:[%s3871 + $0x1a] sm:$0xff]
      %v6093 = vld [vmem:[%s3871 + $0x22] sm:$0xff]
      %v6094 = vld [vmem:[%s3871 + $0x32] sm:$0xff]
      %v6095 = vld [vmem:[%s3871 + $0x3a] sm:$0xff]
      %v6096 = vld [vmem:[%s3871 + $0x4a] sm:$0xff]
      %v6097 = vld [vmem:[%s3871 + $0x52] sm:$0xff]
      %v6098 = vld [vmem:[%s3871 + $0x62] sm:$0xff]
      %v6099 = vld [vmem:[%s3871 + $0x6a] sm:$0xff]
      %v6100 = vld [vmem:[%s3871 + $0x7a] sm:$0xff]
      %v6101 = vld [vmem:[%s3871 + $0x82] sm:$0xff]
      %v6102 = vld [vmem:[%s3871 + $0x92] sm:$0xff]
      %v6103 = vld [vmem:[%s3871 + $0x9a] sm:$0xff]
      %v6104 = vld [vmem:[%s3871 + $0xaa] sm:$0xff]
      %v6105 = vld [vmem:[%s3871 + $0xb2] sm:$0xff]
      %v6106 = vld [vmem:[%s3871 + $0xc2] sm:$0xff]
      %v6107 = vld [vmem:[%s3871 + $0xca] sm:$0xff]
      %v6108 = vld [vmem:[%s3871 + $0xda] sm:$0xff]
      %v6109 = vld [vmem:[%s3871 + $0xe2] sm:$0xff]
      %v6110 = vld [vmem:[%s3871 + $0xf2] sm:$0xff]
      %v6111 = vld [vmem:[%s3871 + $0xfa] sm:$0xff]
      %v6112 = vld [vmem:[%s3871 + $0x10a] sm:$0xff]
      %v6113 = vld [vmem:[%s3871 + $0x112] sm:$0xff]
      %v6114 = vld [vmem:[%s3871 + $0x122] sm:$0xff]
      %v6115 = vld [vmem:[%s3871 + $0x12a] sm:$0xff]
      %v6116 = vld [vmem:[%s3871 + $0x13a] sm:$0xff]
      %v6117 = vld [vmem:[%s3871 + $0x142] sm:$0xff]
      %v6118 = vld [vmem:[%s3871 + $0x152] sm:$0xff]
      %v6119 = vld [vmem:[%s3871 + $0x15a] sm:$0xff]
      %v6120 = vld [vmem:[%s3871 + $0x16a] sm:$0xff]
      %v6121 = vld [vmem:[%s3871 + $0x172] sm:$0xff]
      %6154 = vrot.lane.b32.xlu0 %v6058, 4
      %v6155 = vpop.permute.xlu0 %6154
      %6156 = vrot.lane.b32.xlu0 %v6059, 4
      %v6157 = vpop.permute.xlu0 %6156
      %6158 = vrot.lane.b32.xlu0 %v6060, 4
      %v6159 = vpop.permute.xlu0 %6158
      %6160 = vrot.lane.b32.xlu0 %v6061, 4
      %v6161 = vpop.permute.xlu0 %6160
      %6162 = vrot.lane.b32.xlu0 %v6062, 4
      %v6163 = vpop.permute.xlu0 %6162
      %6164 = vrot.lane.b32.xlu0 %v6063, 4
      %v6165 = vpop.permute.xlu0 %6164
      %6166 = vrot.lane.b32.xlu0 %v6064, 4
      %v6167 = vpop.permute.xlu0 %6166
      %6168 = vrot.lane.b32.xlu0 %v6065, 4
      %v6169 = vpop.permute.xlu0 %6168
      %6170 = vrot.lane.b32.xlu0 %v6066, 4
      %v6171 = vpop.permute.xlu0 %6170
      %6172 = vrot.lane.b32.xlu0 %v6067, 4
      %v6173 = vpop.permute.xlu0 %6172
      %6174 = vrot.lane.b32.xlu0 %v6068, 4
      %v6175 = vpop.permute.xlu0 %6174
      %6176 = vrot.lane.b32.xlu0 %v6069, 4
      %v6177 = vpop.permute.xlu0 %6176
      %6178 = vrot.lane.b32.xlu0 %v6070, 4
      %v6179 = vpop.permute.xlu0 %6178
      %6180 = vrot.lane.b32.xlu0 %v6071, 4
      %v6181 = vpop.permute.xlu0 %6180
      %6182 = vrot.lane.b32.xlu0 %v6072, 4
      %v6183 = vpop.permute.xlu0 %6182
      %6184 = vrot.lane.b32.xlu0 %v6073, 4
      %v6185 = vpop.permute.xlu0 %6184
      %6186 = vrot.lane.b32.xlu0 %v6074, 4
      %v6187 = vpop.permute.xlu0 %6186
      %6188 = vrot.lane.b32.xlu0 %v6075, 4
      %v6189 = vpop.permute.xlu0 %6188
      %6190 = vrot.lane.b32.xlu0 %v6076, 4
      %v6191 = vpop.permute.xlu0 %6190
      %6192 = vrot.lane.b32.xlu0 %v6077, 4
      %v6193 = vpop.permute.xlu0 %6192
      %6194 = vrot.lane.b32.xlu0 %v6078, 4
      %v6195 = vpop.permute.xlu0 %6194
      %6196 = vrot.lane.b32.xlu0 %v6079, 4
      %v6197 = vpop.permute.xlu0 %6196
      %6198 = vrot.lane.b32.xlu0 %v6080, 4
      %v6199 = vpop.permute.xlu0 %6198
      %6200 = vrot.lane.b32.xlu0 %v6081, 4
      %v6201 = vpop.permute.xlu0 %6200
      %6202 = vrot.lane.b32.xlu0 %v6082, 4
      %v6203 = vpop.permute.xlu0 %6202
      %6204 = vrot.lane.b32.xlu0 %v6083, 4
      %v6205 = vpop.permute.xlu0 %6204
      %6206 = vrot.lane.b32.xlu0 %v6084, 4
      %v6207 = vpop.permute.xlu0 %6206
      %6208 = vrot.lane.b32.xlu0 %v6085, 4
      %v6209 = vpop.permute.xlu0 %6208
      %6210 = vrot.lane.b32.xlu0 %v6086, 4
      %v6211 = vpop.permute.xlu0 %6210
      %6212 = vrot.lane.b32.xlu0 %v6087, 4
      %v6213 = vpop.permute.xlu0 %6212
      %6214 = vrot.lane.b32.xlu0 %v6088, 4
      %v6215 = vpop.permute.xlu0 %6214
      %6216 = vrot.lane.b32.xlu0 %v6089, 4
      %v6217 = vpop.permute.xlu0 %6216
      %6282 = vrot.lane.b32.xlu0 %v6090, 8
      %v6283 = vpop.permute.xlu0 %6282
      %6284 = vrot.lane.b32.xlu0 %v6091, 8
      %v6285 = vpop.permute.xlu0 %6284
      %6286 = vrot.lane.b32.xlu0 %v6092, 8
      %v6287 = vpop.permute.xlu0 %6286
      %6288 = vrot.lane.b32.xlu0 %v6093, 8
      %v6289 = vpop.permute.xlu0 %6288
      %6290 = vrot.lane.b32.xlu0 %v6094, 8
      %v6291 = vpop.permute.xlu0 %6290
      %6292 = vrot.lane.b32.xlu0 %v6095, 8
      %v6293 = vpop.permute.xlu0 %6292
      %6294 = vrot.lane.b32.xlu0 %v6096, 8
      %v6295 = vpop.permute.xlu0 %6294
      %6296 = vrot.lane.b32.xlu0 %v6097, 8
      %v6297 = vpop.permute.xlu0 %6296
      %6298 = vrot.lane.b32.xlu0 %v6098, 8
      %v6299 = vpop.permute.xlu0 %6298
      %6300 = vrot.lane.b32.xlu0 %v6099, 8
      %v6301 = vpop.permute.xlu0 %6300
      %6302 = vrot.lane.b32.xlu0 %v6100, 8
      %v6303 = vpop.permute.xlu0 %6302
      %6304 = vrot.lane.b32.xlu0 %v6101, 8
      %v6305 = vpop.permute.xlu0 %6304
      %6306 = vrot.lane.b32.xlu0 %v6102, 8
      %v6307 = vpop.permute.xlu0 %6306
      %6308 = vrot.lane.b32.xlu0 %v6103, 8
      %v6309 = vpop.permute.xlu0 %6308
      %6310 = vrot.lane.b32.xlu0 %v6104, 8
      %v6311 = vpop.permute.xlu0 %6310
      %6312 = vrot.lane.b32.xlu0 %v6105, 8
      %v6313 = vpop.permute.xlu0 %6312
      %6314 = vrot.lane.b32.xlu0 %v6106, 8
      %v6315 = vpop.permute.xlu0 %6314
      %6316 = vrot.lane.b32.xlu0 %v6107, 8
      %v6317 = vpop.permute.xlu0 %6316
      %6318 = vrot.lane.b32.xlu0 %v6108, 8
      %v6319 = vpop.permute.xlu0 %6318
      %6320 = vrot.lane.b32.xlu0 %v6109, 8
      %v6321 = vpop.permute.xlu0 %6320
      %6322 = vrot.lane.b32.xlu0 %v6110, 8
      %v6323 = vpop.permute.xlu0 %6322
      %6324 = vrot.lane.b32.xlu0 %v6111, 8
      %v6325 = vpop.permute.xlu0 %6324
      %6326 = vrot.lane.b32.xlu0 %v6112, 8
      %v6327 = vpop.permute.xlu0 %6326
      %6328 = vrot.lane.b32.xlu0 %v6113, 8
      %v6329 = vpop.permute.xlu0 %6328
      %6330 = vrot.lane.b32.xlu0 %v6114, 8
      %v6331 = vpop.permute.xlu0 %6330
      %6332 = vrot.lane.b32.xlu0 %v6115, 8
      %v6333 = vpop.permute.xlu0 %6332
      %6334 = vrot.lane.b32.xlu0 %v6116, 8
      %v6335 = vpop.permute.xlu0 %6334
      %6336 = vrot.lane.b32.xlu0 %v6117, 8
      %v6337 = vpop.permute.xlu0 %6336
      %6338 = vrot.lane.b32.xlu0 %v6118, 8
      %v6339 = vpop.permute.xlu0 %6338
      %6340 = vrot.lane.b32.xlu0 %v6119, 8
      %v6341 = vpop.permute.xlu0 %6340
      %6342 = vrot.lane.b32.xlu0 %v6120, 8
      %v6343 = vpop.permute.xlu0 %6342
      %6344 = vrot.lane.b32.xlu0 %v6121, 8
      %v6345 = vpop.permute.xlu0 %6344
      %v6378 = vsel %vm334, %v6026, %v6155
      %v6379 = vsel %vm334, %v6027, %v6157
      %v6380 = vsel %vm334, %v6028, %v6159
      %v6381 = vsel %vm334, %v6029, %v6161
      %v6382 = vsel %vm334, %v6030, %v6163
      %v6383 = vsel %vm334, %v6031, %v6165
      %v6384 = vsel %vm334, %v6032, %v6167
      %v6385 = vsel %vm334, %v6033, %v6169
      %v6386 = vsel %vm334, %v6034, %v6171
      %v6387 = vsel %vm334, %v6035, %v6173
      %v6388 = vsel %vm334, %v6036, %v6175
      %v6389 = vsel %vm334, %v6037, %v6177
      %v6390 = vsel %vm334, %v6038, %v6179
      %v6391 = vsel %vm334, %v6039, %v6181
      %v6392 = vsel %vm334, %v6040, %v6183
      %v6393 = vsel %vm334, %v6041, %v6185
      %v6394 = vsel %vm334, %v6042, %v6187
      %v6395 = vsel %vm334, %v6043, %v6189
      %v6396 = vsel %vm334, %v6044, %v6191
      %v6397 = vsel %vm334, %v6045, %v6193
      %v6398 = vsel %vm334, %v6046, %v6195
      %v6399 = vsel %vm334, %v6047, %v6197
      %v6400 = vsel %vm334, %v6048, %v6199
      %v6401 = vsel %vm334, %v6049, %v6201
      %v6402 = vsel %vm334, %v6050, %v6203
      %v6403 = vsel %vm334, %v6051, %v6205
      %v6404 = vsel %vm334, %v6052, %v6207
      %v6405 = vsel %vm334, %v6053, %v6209
      %v6406 = vsel %vm334, %v6054, %v6211
      %v6407 = vsel %vm334, %v6055, %v6213
      %v6408 = vsel %vm334, %v6056, %v6215
      %v6409 = vsel %vm334, %v6057, %v6217
      %v6410 = vsel %vm2949, %v6378, %v6283
      %v6411 = vsel %vm2949, %v6379, %v6285
      %v6412 = vsel %vm2949, %v6380, %v6287
      %v6413 = vsel %vm2949, %v6381, %v6289
      %v6414 = vsel %vm2949, %v6382, %v6291
      %v6415 = vsel %vm2949, %v6383, %v6293
      %v6416 = vsel %vm2949, %v6384, %v6295
      %v6417 = vsel %vm2949, %v6385, %v6297
      %v6418 = vsel %vm2949, %v6386, %v6299
      %v6419 = vsel %vm2949, %v6387, %v6301
      %v6420 = vsel %vm2949, %v6388, %v6303
      %v6421 = vsel %vm2949, %v6389, %v6305
      %v6422 = vsel %vm2949, %v6390, %v6307
      %v6423 = vsel %vm2949, %v6391, %v6309
      %v6424 = vsel %vm2949, %v6392, %v6311
      %v6425 = vsel %vm2949, %v6393, %v6313
      %v6426 = vsel %vm2949, %v6394, %v6315
      %v6427 = vsel %vm2949, %v6395, %v6317
      %v6428 = vsel %vm2949, %v6396, %v6319
      %v6429 = vsel %vm2949, %v6397, %v6321
      %v6430 = vsel %vm2949, %v6398, %v6323
      %v6431 = vsel %vm2949, %v6399, %v6325
      %v6432 = vsel %vm2949, %v6400, %v6327
      %v6433 = vsel %vm2949, %v6401, %v6329
      %v6434 = vsel %vm2949, %v6402, %v6331
      %v6435 = vsel %vm2949, %v6403, %v6333
      %v6436 = vsel %vm2949, %v6404, %v6335
      %v6437 = vsel %vm2949, %v6405, %v6337
      %v6438 = vsel %vm2949, %v6406, %v6339
      %v6439 = vsel %vm2949, %v6407, %v6341
      %v6440 = vsel %vm2949, %v6408, %v6343
      %v6441 = vsel %vm2949, %v6409, %v6345
      %v6442 = vpack.c.bf16 %v6411, %v6410
      %v6443 = vpack.c.bf16 %v6413, %v6412
      %v6444 = vpack.c.bf16 %v6415, %v6414
      %v6445 = vpack.c.bf16 %v6417, %v6416
      %v6446 = vpack.c.bf16 %v6419, %v6418
      %v6447 = vpack.c.bf16 %v6421, %v6420
      %v6448 = vpack.c.bf16 %v6423, %v6422
      %v6449 = vpack.c.bf16 %v6425, %v6424
      %v6450 = vpack.c.bf16 %v6427, %v6426
      %v6451 = vpack.c.bf16 %v6429, %v6428
      %v6452 = vpack.c.bf16 %v6431, %v6430
      %v6453 = vpack.c.bf16 %v6433, %v6432
      %v6454 = vpack.c.bf16 %v6435, %v6434
      %v6455 = vpack.c.bf16 %v6437, %v6436
      %v6456 = vpack.c.bf16 %v6439, %v6438
      %v6457 = vpack.c.bf16 %v6441, %v6440
      %s6458 = scalar_lea.vmem %s5, 16
      %v6459 = vld [vmem:[%s6458] sm:$0xf]
      %v6460 = vld [vmem:[%s6458 + $0x4] sm:$0x3]
      %v6463 = vunpack.c.l.b16 %v6459
      %v6464 = vunpack.c.l.b16 %v6460
      %v6465 = vpack.c.b16 %v6464, %v6463
      %v6467 = vsel %vm3440, %v6442, 0
      %v6470 = vsel %vm3440, %v6443, 0
      %v6473 = vsel %vm3440, %v6444, 0
      %v6476 = vsel %vm3440, %v6445, 0
      %v6479 = vsel %vm3440, %v6446, 0
      %v6482 = vsel %vm3440, %v6447, 0
      %v6485 = vsel %vm3440, %v6448, 0
      %v6488 = vsel %vm3440, %v6449, 0
      %v6491 = vsel %vm3440, %v6450, 0
      %v6494 = vsel %vm3440, %v6451, 0
      %v6497 = vsel %vm3440, %v6452, 0
      %v6500 = vsel %vm3440, %v6453, 0
      %v6503 = vsel %vm3440, %v6454, 0
      %v6506 = vsel %vm3440, %v6455, 0
      %v6509 = vsel %vm3440, %v6456, 0
      %v6512 = vsel %vm3440, %v6457, 0
      %v6515 = vsel %vm3489, %v6465, 0
      %6517 = vmatprep.subr.bf16.mxu0 0
      %6518 = vmatpush1.bf16.msra.mxu0 0
      %6519 = vmatprep.subr.bf16.mxu0 0
      %6520 = vmatpush1.bf16.msra.mxu0 0
      %6521 = vmatprep.subr.bf16.mxu0 0
      %6522 = vmatpush1.bf16.msra.mxu0 0
      %6523 = vmatprep.subr.bf16.mxu0 0
      %6524 = vmatpush1.bf16.msra.mxu0 0
      %6525 = vmatprep.subr.bf16.mxu0 0
      %6526 = vmatpush1.bf16.msra.mxu0 0
      %6527 = vmatprep.subr.bf16.mxu0 0
      %6528 = vmatpush1.bf16.msra.mxu0 0
      %6529 = vmatprep.subr.bf16.mxu0 0
      %6530 = vmatpush1.bf16.msra.mxu0 0
      %6531 = vmatprep.subr.bf16.mxu0 0
      %6532 = vmatpush1.bf16.msra.mxu0 %v6515
      %6533 = vmatprep.subr.bf16.mxu0 0
      %6534 = vmatpush2.bf16.msra.mxu0 0
      %6535 = vmatprep.subr.bf16.mxu0 0
      %6536 = vmatpush2.bf16.msra.mxu0 0
      %6537 = vmatprep.subr.bf16.mxu0 0
      %6538 = vmatpush2.bf16.msra.mxu0 0
      %6539 = vmatprep.subr.bf16.mxu0 0
      %6540 = vmatpush2.bf16.msra.mxu0 0
      %6541 = vmatprep.subr.bf16.mxu0 0
      %6542 = vmatpush2.bf16.msra.mxu0 0
      %6543 = vmatprep.subr.bf16.mxu0 0
      %6544 = vmatpush2.bf16.msra.mxu0 0
      %6545 = vmatprep.subr.bf16.mxu0 0
      %6546 = vmatpush2.bf16.msra.mxu0 0
      %6547 = vmatprep.subr.bf16.mxu0 0
      %6548 = vmatpush2.bf16.msra.mxu0 0
      %6549 = vmatprep.mubr.bf16.mxu0 0
      %6550 = vmatmul.mubr.bf16.gmra.mxu0 %v6467
      %v6551 = vpop.f32.mrf.mxu0
      %v6552 = vadd.f32 0.0, %v6551
      %v6553 = vpop.f32.mrf.mxu0
      %v6554 = vpop.f32.mrf.mxu0
      %v6555 = vadd.f32 0.0, %v6554
      %v6556 = vpop.f32.mrf.mxu0
      %6557 = vmatprep.mubr.bf16.mxu0 0
      %6558 = vmatmul.mubr.bf16.gmra.mxu0 %v6470
      %v6559 = vpop.f32.mrf.mxu0
      %v6560 = vadd.f32 0.0, %v6559
      %v6561 = vpop.f32.mrf.mxu0
      %v6562 = vpop.f32.mrf.mxu0
      %v6563 = vadd.f32 0.0, %v6562
      %v6564 = vpop.f32.mrf.mxu0
      %6565 = vmatprep.mubr.bf16.mxu0 0
      %6566 = vmatmul.mubr.bf16.gmra.mxu0 %v6473
      %v6567 = vpop.f32.mrf.mxu0
      %v6568 = vadd.f32 0.0, %v6567
      %v6569 = vpop.f32.mrf.mxu0
      %v6570 = vpop.f32.mrf.mxu0
      %v6571 = vadd.f32 0.0, %v6570
      %v6572 = vpop.f32.mrf.mxu0
      %6573 = vmatprep.mubr.bf16.mxu0 0
      %6574 = vmatmul.mubr.bf16.gmra.mxu0 %v6476
      %v6575 = vpop.f32.mrf.mxu0
      %v6576 = vadd.f32 0.0, %v6575
      %v6577 = vpop.f32.mrf.mxu0
      %v6578 = vpop.f32.mrf.mxu0
      %v6579 = vadd.f32 0.0, %v6578
      %v6580 = vpop.f32.mrf.mxu0
      %6581 = vmatprep.mubr.bf16.mxu0 0
      %6582 = vmatmul.mubr.bf16.gmra.mxu0 %v6479
      %v6583 = vpop.f32.mrf.mxu0
      %v6584 = vadd.f32 0.0, %v6583
      %v6585 = vpop.f32.mrf.mxu0
      %v6586 = vpop.f32.mrf.mxu0
      %v6587 = vadd.f32 0.0, %v6586
      %v6588 = vpop.f32.mrf.mxu0
      %6589 = vmatprep.mubr.bf16.mxu0 0
      %6590 = vmatmul.mubr.bf16.gmra.mxu0 %v6482
      %v6591 = vpop.f32.mrf.mxu0
      %v6592 = vadd.f32 0.0, %v6591
      %v6593 = vpop.f32.mrf.mxu0
      %v6594 = vpop.f32.mrf.mxu0
      %v6595 = vadd.f32 0.0, %v6594
      %v6596 = vpop.f32.mrf.mxu0
      %6597 = vmatprep.mubr.bf16.mxu0 0
      %6598 = vmatmul.mubr.bf16.gmra.mxu0 %v6485
      %v6599 = vpop.f32.mrf.mxu0
      %v6600 = vadd.f32 0.0, %v6599
      %v6601 = vpop.f32.mrf.mxu0
      %v6602 = vpop.f32.mrf.mxu0
      %v6603 = vadd.f32 0.0, %v6602
      %v6604 = vpop.f32.mrf.mxu0
      %6605 = vmatprep.mubr.bf16.mxu0 0
      %6606 = vmatmul.mubr.bf16.gmra.mxu0 %v6488
      %v6607 = vpop.f32.mrf.mxu0
      %v6608 = vadd.f32 0.0, %v6607
      %v6609 = vpop.f32.mrf.mxu0
      %v6610 = vpop.f32.mrf.mxu0
      %v6611 = vadd.f32 0.0, %v6610
      %v6612 = vpop.f32.mrf.mxu0
      %6613 = vmatprep.mubr.bf16.mxu0 0
      %6614 = vmatmul.mubr.bf16.gmra.mxu0 %v6491
      %v6615 = vpop.f32.mrf.mxu0
      %v6616 = vadd.f32 0.0, %v6615
      %v6617 = vpop.f32.mrf.mxu0
      %v6618 = vpop.f32.mrf.mxu0
      %v6619 = vadd.f32 0.0, %v6618
      %v6620 = vpop.f32.mrf.mxu0
      %6621 = vmatprep.mubr.bf16.mxu0 0
      %6622 = vmatmul.mubr.bf16.gmra.mxu0 %v6494
      %v6623 = vpop.f32.mrf.mxu0
      %v6624 = vadd.f32 0.0, %v6623
      %v6625 = vpop.f32.mrf.mxu0
      %v6626 = vpop.f32.mrf.mxu0
      %v6627 = vadd.f32 0.0, %v6626
      %v6628 = vpop.f32.mrf.mxu0
      %6629 = vmatprep.mubr.bf16.mxu0 0
      %6630 = vmatmul.mubr.bf16.gmra.mxu0 %v6497
      %v6631 = vpop.f32.mrf.mxu0
      %v6632 = vadd.f32 0.0, %v6631
      %v6633 = vpop.f32.mrf.mxu0
      %v6634 = vpop.f32.mrf.mxu0
      %v6635 = vadd.f32 0.0, %v6634
      %v6636 = vpop.f32.mrf.mxu0
      %6637 = vmatprep.mubr.bf16.mxu0 0
      %6638 = vmatmul.mubr.bf16.gmra.mxu0 %v6500
      %v6639 = vpop.f32.mrf.mxu0
      %v6640 = vadd.f32 0.0, %v6639
      %v6641 = vpop.f32.mrf.mxu0
      %v6642 = vpop.f32.mrf.mxu0
      %v6643 = vadd.f32 0.0, %v6642
      %v6644 = vpop.f32.mrf.mxu0
      %6645 = vmatprep.mubr.bf16.mxu0 0
      %6646 = vmatmul.mubr.bf16.gmra.mxu0 %v6503
      %v6647 = vpop.f32.mrf.mxu0
      %v6648 = vadd.f32 0.0, %v6647
      %v6649 = vpop.f32.mrf.mxu0
      %v6650 = vpop.f32.mrf.mxu0
      %v6651 = vadd.f32 0.0, %v6650
      %v6652 = vpop.f32.mrf.mxu0
      %6653 = vmatprep.mubr.bf16.mxu0 0
      %6654 = vmatmul.mubr.bf16.gmra.mxu0 %v6506
      %v6655 = vpop.f32.mrf.mxu0
      %v6656 = vadd.f32 0.0, %v6655
      %v6657 = vpop.f32.mrf.mxu0
      %v6658 = vpop.f32.mrf.mxu0
      %v6659 = vadd.f32 0.0, %v6658
      %v6660 = vpop.f32.mrf.mxu0
      %6661 = vmatprep.mubr.bf16.mxu0 0
      %6662 = vmatmul.mubr.bf16.gmra.mxu0 %v6509
      %v6663 = vpop.f32.mrf.mxu0
      %v6664 = vadd.f32 0.0, %v6663
      %v6665 = vpop.f32.mrf.mxu0
      %v6666 = vpop.f32.mrf.mxu0
      %v6667 = vadd.f32 0.0, %v6666
      %v6668 = vpop.f32.mrf.mxu0
      %6669 = vmatprep.mubr.bf16.mxu0 0
      %6670 = vmatmul.mubr.bf16.gmra.mxu0 %v6512
      %v6671 = vpop.f32.mrf.mxu0
      %v6672 = vadd.f32 0.0, %v6671
      %v6673 = vpop.f32.mrf.mxu0
      %v6674 = vpop.f32.mrf.mxu0
      %v6675 = vadd.f32 0.0, %v6674
      %v6676 = vpop.f32.mrf.mxu0
      %6677 = vdwg.mxu0
      %v6678 = vadd.f32 %v5900, %v6552
      %v6679 = vadd.f32 %v5903, %v6555
      %v6680 = vadd.f32 %v5908, %v6560
      %v6681 = vadd.f32 %v5911, %v6563
      %v6682 = vadd.f32 %v5916, %v6568
      %v6683 = vadd.f32 %v5919, %v6571
      %v6684 = vadd.f32 %v5924, %v6576
      %v6685 = vadd.f32 %v5927, %v6579
      %v6686 = vadd.f32 %v5932, %v6584
      %v6687 = vadd.f32 %v5935, %v6587
      %v6688 = vadd.f32 %v5940, %v6592
      %v6689 = vadd.f32 %v5943, %v6595
      %v6690 = vadd.f32 %v5948, %v6600
      %v6691 = vadd.f32 %v5951, %v6603
      %v6692 = vadd.f32 %v5956, %v6608
      %v6693 = vadd.f32 %v5959, %v6611
      %v6694 = vadd.f32 %v5964, %v6616
      %v6695 = vadd.f32 %v5967, %v6619
      %v6696 = vadd.f32 %v5972, %v6624
      %v6697 = vadd.f32 %v5975, %v6627
      %v6698 = vadd.f32 %v5980, %v6632
      %v6699 = vadd.f32 %v5983, %v6635
      %v6700 = vadd.f32 %v5988, %v6640
      %v6701 = vadd.f32 %v5991, %v6643
      %v6702 = vadd.f32 %v5996, %v6648
      %v6703 = vadd.f32 %v5999, %v6651
      %v6704 = vadd.f32 %v6004, %v6656
      %v6705 = vadd.f32 %v6007, %v6659
      %v6706 = vadd.f32 %v6012, %v6664
      %v6707 = vadd.f32 %v6015, %v6667
      %v6708 = vadd.f32 %v6020, %v6672
      %v6709 = vadd.f32 %v6023, %v6675
      %v6710 = vld [vmem:[%s6] sm:$0x1]
      %v6712 = vlaneseq
      %v6713 = vshrl.u32 %v6712, 7
      %v6714 = vsub.s32 0, %v6713
      %v6715 = vrot.slane %v6710, %v6714
      %v6717 = vadd.f32 %v6678, %v6715
      %v6718 = vadd.f32 %v6679, %v6715
      %v6719 = vadd.f32 %v6680, %v6715
      %v6720 = vadd.f32 %v6681, %v6715
      %v6721 = vadd.f32 %v6682, %v6715
      %v6722 = vadd.f32 %v6683, %v6715
      %v6723 = vadd.f32 %v6684, %v6715
      %v6724 = vadd.f32 %v6685, %v6715
      %v6725 = vadd.f32 %v6686, %v6715
      %v6726 = vadd.f32 %v6687, %v6715
      %v6727 = vadd.f32 %v6688, %v6715
      %v6728 = vadd.f32 %v6689, %v6715
      %v6729 = vadd.f32 %v6690, %v6715
      %v6730 = vadd.f32 %v6691, %v6715
      %v6731 = vadd.f32 %v6692, %v6715
      %v6732 = vadd.f32 %v6693, %v6715
      %v6733 = vadd.f32 %v6694, %v6715
      %v6734 = vadd.f32 %v6695, %v6715
      %v6735 = vadd.f32 %v6696, %v6715
      %v6736 = vadd.f32 %v6697, %v6715
      %v6737 = vadd.f32 %v6698, %v6715
      %v6738 = vadd.f32 %v6699, %v6715
      %v6739 = vadd.f32 %v6700, %v6715
      %v6740 = vadd.f32 %v6701, %v6715
      %v6741 = vadd.f32 %v6702, %v6715
      %v6742 = vadd.f32 %v6703, %v6715
      %v6743 = vadd.f32 %v6704, %v6715
      %v6744 = vadd.f32 %v6705, %v6715
      %v6745 = vadd.f32 %v6706, %v6715
      %v6746 = vadd.f32 %v6707, %v6715
      %v6747 = vadd.f32 %v6708, %v6715
      %v6748 = vadd.f32 %v6709, %v6715
      %vm6749 = vcmp.ge.f32.partialorder %v6717, 0.0
      %vm6750 = vcmp.ge.f32.partialorder %v6718, 0.0
      %vm6751 = vcmp.ge.f32.partialorder %v6719, 0.0
      %vm6752 = vcmp.ge.f32.partialorder %v6720, 0.0
      %vm6753 = vcmp.ge.f32.partialorder %v6721, 0.0
      %vm6754 = vcmp.ge.f32.partialorder %v6722, 0.0
      %vm6755 = vcmp.ge.f32.partialorder %v6723, 0.0
      %vm6756 = vcmp.ge.f32.partialorder %v6724, 0.0
      %vm6757 = vcmp.ge.f32.partialorder %v6725, 0.0
      %vm6758 = vcmp.ge.f32.partialorder %v6726, 0.0
      %vm6759 = vcmp.ge.f32.partialorder %v6727, 0.0
      %vm6760 = vcmp.ge.f32.partialorder %v6728, 0.0
      %vm6761 = vcmp.ge.f32.partialorder %v6729, 0.0
      %vm6762 = vcmp.ge.f32.partialorder %v6730, 0.0
      %vm6763 = vcmp.ge.f32.partialorder %v6731, 0.0
      %vm6764 = vcmp.ge.f32.partialorder %v6732, 0.0
      %vm6765 = vcmp.ge.f32.partialorder %v6733, 0.0
      %vm6766 = vcmp.ge.f32.partialorder %v6734, 0.0
      %vm6767 = vcmp.ge.f32.partialorder %v6735, 0.0
      %vm6768 = vcmp.ge.f32.partialorder %v6736, 0.0
      %vm6769 = vcmp.ge.f32.partialorder %v6737, 0.0
      %vm6770 = vcmp.ge.f32.partialorder %v6738, 0.0
      %vm6771 = vcmp.ge.f32.partialorder %v6739, 0.0
      %vm6772 = vcmp.ge.f32.partialorder %v6740, 0.0
      %vm6773 = vcmp.ge.f32.partialorder %v6741, 0.0
      %vm6774 = vcmp.ge.f32.partialorder %v6742, 0.0
      %vm6775 = vcmp.ge.f32.partialorder %v6743, 0.0
      %vm6776 = vcmp.ge.f32.partialorder %v6744, 0.0
      %vm6777 = vcmp.ge.f32.partialorder %v6745, 0.0
      %vm6778 = vcmp.ge.f32.partialorder %v6746, 0.0
      %vm6779 = vcmp.ge.f32.partialorder %v6747, 0.0
      %vm6780 = vcmp.ge.f32.partialorder %v6748, 0.0
      %v6781 = vmul.f32 %v6717, 0.1
      %v6782 = vmul.f32 %v6718, 0.1
      %v6783 = vmul.f32 %v6719, 0.1
      %v6784 = vmul.f32 %v6720, 0.1
      %v6785 = vmul.f32 %v6721, 0.1
      %v6786 = vmul.f32 %v6722, 0.1
      %v6787 = vmul.f32 %v6723, 0.1
      %v6788 = vmul.f32 %v6724, 0.1
      %v6789 = vmul.f32 %v6725, 0.1
      %v6790 = vmul.f32 %v6726, 0.1
      %v6791 = vmul.f32 %v6727, 0.1
      %v6792 = vmul.f32 %v6728, 0.1
      %v6793 = vmul.f32 %v6729, 0.1
      %v6794 = vmul.f32 %v6730, 0.1
      %v6795 = vmul.f32 %v6731, 0.1
      %v6796 = vmul.f32 %v6732, 0.1
      %v6797 = vmul.f32 %v6733, 0.1
      %v6798 = vmul.f32 %v6734, 0.1
      %v6799 = vmul.f32 %v6735, 0.1
      %v6800 = vmul.f32 %v6736, 0.1
      %v6801 = vmul.f32 %v6737, 0.1
      %v6802 = vmul.f32 %v6738, 0.1
      %v6803 = vmul.f32 %v6739, 0.1
      %v6804 = vmul.f32 %v6740, 0.1
      %v6805 = vmul.f32 %v6741, 0.1
      %v6806 = vmul.f32 %v6742, 0.1
      %v6807 = vmul.f32 %v6743, 0.1
      %v6808 = vmul.f32 %v6744, 0.1
      %v6809 = vmul.f32 %v6745, 0.1
      %v6810 = vmul.f32 %v6746, 0.1
      %v6811 = vmul.f32 %v6747, 0.1
      %v6812 = vmul.f32 %v6748, 0.1
      %v6813 = vsel %vm6749, %v6717, %v6781
      %v6814 = vsel %vm6750, %v6718, %v6782
      %v6815 = vsel %vm6751, %v6719, %v6783
      %v6816 = vsel %vm6752, %v6720, %v6784
      %v6817 = vsel %vm6753, %v6721, %v6785
      %v6818 = vsel %vm6754, %v6722, %v6786
      %v6819 = vsel %vm6755, %v6723, %v6787
      %v6820 = vsel %vm6756, %v6724, %v6788
      %v6821 = vsel %vm6757, %v6725, %v6789
      %v6822 = vsel %vm6758, %v6726, %v6790
      %v6823 = vsel %vm6759, %v6727, %v6791
      %v6824 = vsel %vm6760, %v6728, %v6792
      %v6825 = vsel %vm6761, %v6729, %v6793
      %v6826 = vsel %vm6762, %v6730, %v6794
      %v6827 = vsel %vm6763, %v6731, %v6795
      %v6828 = vsel %vm6764, %v6732, %v6796
      %v6829 = vsel %vm6765, %v6733, %v6797
      %v6830 = vsel %vm6766, %v6734, %v6798
      %v6831 = vsel %vm6767, %v6735, %v6799
      %v6832 = vsel %vm6768, %v6736, %v6800
      %v6833 = vsel %vm6769, %v6737, %v6801
      %v6834 = vsel %vm6770, %v6738, %v6802
      %v6835 = vsel %vm6771, %v6739, %v6803
      %v6836 = vsel %vm6772, %v6740, %v6804
      %v6837 = vsel %vm6773, %v6741, %v6805
      %v6838 = vsel %vm6774, %v6742, %v6806
      %v6839 = vsel %vm6775, %v6743, %v6807
      %v6840 = vsel %vm6776, %v6744, %v6808
      %v6841 = vsel %vm6777, %v6745, %v6809
      %v6842 = vsel %vm6778, %v6746, %v6810
      %v6843 = vsel %vm6779, %v6747, %v6811
      %v6844 = vsel %vm6780, %v6748, %v6812
      %6845 = vst.msk [vmem:[%s2532 + $0x1] sm:$0xff] %vm334, %v6813
      %6846 = vst.msk [vmem:[%s2532 + $0x9] sm:$0xff] %vm334, %v6814
      %6847 = vst.msk [vmem:[%s2532 + $0x19] sm:$0xff] %vm334, %v6815
      %6848 = vst.msk [vmem:[%s2532 + $0x21] sm:$0xff] %vm334, %v6816
      %6849 = vst.msk [vmem:[%s2532 + $0x31] sm:$0xff] %vm334, %v6817
      %6850 = vst.msk [vmem:[%s2532 + $0x39] sm:$0xff] %vm334, %v6818
      %6851 = vst.msk [vmem:[%s2532 + $0x49] sm:$0xff] %vm334, %v6819
      %6852 = vst.msk [vmem:[%s2532 + $0x51] sm:$0xff] %vm334, %v6820
      %6853 = vst.msk [vmem:[%s2532 + $0x61] sm:$0xff] %vm334, %v6821
      %6854 = vst.msk [vmem:[%s2532 + $0x69] sm:$0xff] %vm334, %v6822
      %6855 = vst.msk [vmem:[%s2532 + $0x79] sm:$0xff] %vm334, %v6823
      %6856 = vst.msk [vmem:[%s2532 + $0x81] sm:$0xff] %vm334, %v6824
      %6857 = vst.msk [vmem:[%s2532 + $0x91] sm:$0xff] %vm334, %v6825
      %6858 = vst.msk [vmem:[%s2532 + $0x99] sm:$0xff] %vm334, %v6826
      %6859 = vst.msk [vmem:[%s2532 + $0xa9] sm:$0xff] %vm334, %v6827
      %6860 = vst.msk [vmem:[%s2532 + $0xb1] sm:$0xff] %vm334, %v6828
      %6861 = vst.msk [vmem:[%s2532 + $0xc1] sm:$0xff] %vm334, %v6829
      %6862 = vst.msk [vmem:[%s2532 + $0xc9] sm:$0xff] %vm334, %v6830
      %6863 = vst.msk [vmem:[%s2532 + $0xd9] sm:$0xff] %vm334, %v6831
      %6864 = vst.msk [vmem:[%s2532 + $0xe1] sm:$0xff] %vm334, %v6832
      %6865 = vst.msk [vmem:[%s2532 + $0xf1] sm:$0xff] %vm334, %v6833
      %6866 = vst.msk [vmem:[%s2532 + $0xf9] sm:$0xff] %vm334, %v6834
      %6867 = vst.msk [vmem:[%s2532 + $0x109] sm:$0xff] %vm334, %v6835
      %6868 = vst.msk [vmem:[%s2532 + $0x111] sm:$0xff] %vm334, %v6836
      %6869 = vst.msk [vmem:[%s2532 + $0x121] sm:$0xff] %vm334, %v6837
      %6870 = vst.msk [vmem:[%s2532 + $0x129] sm:$0xff] %vm334, %v6838
      %6871 = vst.msk [vmem:[%s2532 + $0x139] sm:$0xff] %vm334, %v6839
      %6872 = vst.msk [vmem:[%s2532 + $0x141] sm:$0xff] %vm334, %v6840
      %6873 = vst.msk [vmem:[%s2532 + $0x151] sm:$0xff] %vm334, %v6841
      %6874 = vst.msk [vmem:[%s2532 + $0x159] sm:$0xff] %vm334, %v6842
      %6875 = vst.msk [vmem:[%s2532 + $0x169] sm:$0xff] %vm334, %v6843
      %6876 = vst.msk [vmem:[%s2532 + $0x171] sm:$0xff] %vm334, %v6844
      %v6877 = vld [vmem:[#allocation2] sm:$0xff]
      %v6878 = vld [vmem:[#allocation2 + $0x8] sm:$0xff]
      %v6879 = vld [vmem:[#allocation2 + $0x18] sm:$0xff]
      %v6880 = vld [vmem:[#allocation2 + $0x20] sm:$0xff]
      %v6881 = vld [vmem:[#allocation2 + $0x30] sm:$0xff]
      %v6882 = vld [vmem:[#allocation2 + $0x38] sm:$0xff]
      %v6883 = vld [vmem:[#allocation2 + $0x48] sm:$0xff]
      %v6884 = vld [vmem:[#allocation2 + $0x50] sm:$0xff]
      %v6885 = vld [vmem:[#allocation2 + $0x60] sm:$0xff]
      %v6886 = vld [vmem:[#allocation2 + $0x68] sm:$0xff]
      %v6887 = vld [vmem:[#allocation2 + $0x78] sm:$0xff]
      %v6888 = vld [vmem:[#allocation2 + $0x80] sm:$0xff]
      %v6889 = vld [vmem:[#allocation2 + $0x90] sm:$0xff]
      %v6890 = vld [vmem:[#allocation2 + $0x98] sm:$0xff]
      %v6891 = vld [vmem:[#allocation2 + $0xa8] sm:$0xff]
      %v6892 = vld [vmem:[#allocation2 + $0xb0] sm:$0xff]
      %v6893 = vld [vmem:[#allocation2 + $0xc0] sm:$0xff]
      %v6894 = vld [vmem:[#allocation2 + $0xc8] sm:$0xff]
      %v6895 = vld [vmem:[#allocation2 + $0xd8] sm:$0xff]
      %v6896 = vld [vmem:[#allocation2 + $0xe0] sm:$0xff]
      %v6897 = vld [vmem:[#allocation2 + $0xf0] sm:$0xff]
      %v6898 = vld [vmem:[#allocation2 + $0xf8] sm:$0xff]
      %v6899 = vld [vmem:[#allocation2 + $0x108] sm:$0xff]
      %v6900 = vld [vmem:[#allocation2 + $0x110] sm:$0xff]
      %v6901 = vld [vmem:[#allocation2 + $0x120] sm:$0xff]
      %v6902 = vld [vmem:[#allocation2 + $0x128] sm:$0xff]
      %v6903 = vld [vmem:[#allocation2 + $0x138] sm:$0xff]
      %v6904 = vld [vmem:[#allocation2 + $0x140] sm:$0xff]
      %v6905 = vld [vmem:[#allocation2 + $0x150] sm:$0xff]
      %v6906 = vld [vmem:[#allocation2 + $0x158] sm:$0xff]
      %v6907 = vld [vmem:[#allocation2 + $0x168] sm:$0xff]
      %v6908 = vld [vmem:[#allocation2 + $0x170] sm:$0xff]
      %v6909 = vld [vmem:[#allocation2 + $0x1] sm:$0xff]
      %v6910 = vld [vmem:[#allocation2 + $0x9] sm:$0xff]
      %v6911 = vld [vmem:[#allocation2 + $0x19] sm:$0xff]
      %v6912 = vld [vmem:[#allocation2 + $0x21] sm:$0xff]
      %v6913 = vld [vmem:[#allocation2 + $0x31] sm:$0xff]
      %v6914 = vld [vmem:[#allocation2 + $0x39] sm:$0xff]
      %v6915 = vld [vmem:[#allocation2 + $0x49] sm:$0xff]
      %v6916 = vld [vmem:[#allocation2 + $0x51] sm:$0xff]
      %v6917 = vld [vmem:[#allocation2 + $0x61] sm:$0xff]
      %v6918 = vld [vmem:[#allocation2 + $0x69] sm:$0xff]
      %v6919 = vld [vmem:[#allocation2 + $0x79] sm:$0xff]
      %v6920 = vld [vmem:[#allocation2 + $0x81] sm:$0xff]
      %v6921 = vld [vmem:[#allocation2 + $0x91] sm:$0xff]
      %v6922 = vld [vmem:[#allocation2 + $0x99] sm:$0xff]
      %v6923 = vld [vmem:[#allocation2 + $0xa9] sm:$0xff]
      %v6924 = vld [vmem:[#allocation2 + $0xb1] sm:$0xff]
      %v6925 = vld [vmem:[#allocation2 + $0xc1] sm:$0xff]
      %v6926 = vld [vmem:[#allocation2 + $0xc9] sm:$0xff]
      %v6927 = vld [vmem:[#allocation2 + $0xd9] sm:$0xff]
      %v6928 = vld [vmem:[#allocation2 + $0xe1] sm:$0xff]
      %v6929 = vld [vmem:[#allocation2 + $0xf1] sm:$0xff]
      %v6930 = vld [vmem:[#allocation2 + $0xf9] sm:$0xff]
      %v6931 = vld [vmem:[#allocation2 + $0x109] sm:$0xff]
      %v6932 = vld [vmem:[#allocation2 + $0x111] sm:$0xff]
      %v6933 = vld [vmem:[#allocation2 + $0x121] sm:$0xff]
      %v6934 = vld [vmem:[#allocation2 + $0x129] sm:$0xff]
      %v6935 = vld [vmem:[#allocation2 + $0x139] sm:$0xff]
      %v6936 = vld [vmem:[#allocation2 + $0x141] sm:$0xff]
      %v6937 = vld [vmem:[#allocation2 + $0x151] sm:$0xff]
      %v6938 = vld [vmem:[#allocation2 + $0x159] sm:$0xff]
      %v6939 = vld [vmem:[#allocation2 + $0x169] sm:$0xff]
      %v6940 = vld [vmem:[#allocation2 + $0x171] sm:$0xff]
      %v6941 = vld [vmem:[#allocation2 + $0x2] sm:$0xff]
      %v6942 = vld [vmem:[#allocation2 + $0xa] sm:$0xff]
      %v6943 = vld [vmem:[#allocation2 + $0x1a] sm:$0xff]
      %v6944 = vld [vmem:[#allocation2 + $0x22] sm:$0xff]
      %v6945 = vld [vmem:[#allocation2 + $0x32] sm:$0xff]
      %v6946 = vld [vmem:[#allocation2 + $0x3a] sm:$0xff]
      %v6947 = vld [vmem:[#allocation2 + $0x4a] sm:$0xff]
      %v6948 = vld [vmem:[#allocation2 + $0x52] sm:$0xff]
      %v6949 = vld [vmem:[#allocation2 + $0x62] sm:$0xff]
      %v6950 = vld [vmem:[#allocation2 + $0x6a] sm:$0xff]
      %v6951 = vld [vmem:[#allocation2 + $0x7a] sm:$0xff]
      %v6952 = vld [vmem:[#allocation2 + $0x82] sm:$0xff]
      %v6953 = vld [vmem:[#allocation2 + $0x92] sm:$0xff]
      %v6954 = vld [vmem:[#allocation2 + $0x9a] sm:$0xff]
      %v6955 = vld [vmem:[#allocation2 + $0xaa] sm:$0xff]
      %v6956 = vld [vmem:[#allocation2 + $0xb2] sm:$0xff]
      %v6957 = vld [vmem:[#allocation2 + $0xc2] sm:$0xff]
      %v6958 = vld [vmem:[#allocation2 + $0xca] sm:$0xff]
      %v6959 = vld [vmem:[#allocation2 + $0xda] sm:$0xff]
      %v6960 = vld [vmem:[#allocation2 + $0xe2] sm:$0xff]
      %v6961 = vld [vmem:[#allocation2 + $0xf2] sm:$0xff]
      %v6962 = vld [vmem:[#allocation2 + $0xfa] sm:$0xff]
      %v6963 = vld [vmem:[#allocation2 + $0x10a] sm:$0xff]
      %v6964 = vld [vmem:[#allocation2 + $0x112] sm:$0xff]
      %v6965 = vld [vmem:[#allocation2 + $0x122] sm:$0xff]
      %v6966 = vld [vmem:[#allocation2 + $0x12a] sm:$0xff]
      %v6967 = vld [vmem:[#allocation2 + $0x13a] sm:$0xff]
      %v6968 = vld [vmem:[#allocation2 + $0x142] sm:$0xff]
      %v6969 = vld [vmem:[#allocation2 + $0x152] sm:$0xff]
      %v6970 = vld [vmem:[#allocation2 + $0x15a] sm:$0xff]
      %v6971 = vld [vmem:[#allocation2 + $0x16a] sm:$0xff]
      %v6972 = vld [vmem:[#allocation2 + $0x172] sm:$0xff]
      %7005 = vrot.lane.b32.xlu0 %v6909, 4
      %v7006 = vpop.permute.xlu0 %7005
      %7007 = vrot.lane.b32.xlu0 %v6910, 4
      %v7008 = vpop.permute.xlu0 %7007
      %7009 = vrot.lane.b32.xlu0 %v6911, 4
      %v7010 = vpop.permute.xlu0 %7009
      %7011 = vrot.lane.b32.xlu0 %v6912, 4
      %v7012 = vpop.permute.xlu0 %7011
      %7013 = vrot.lane.b32.xlu0 %v6913, 4
      %v7014 = vpop.permute.xlu0 %7013
      %7015 = vrot.lane.b32.xlu0 %v6914, 4
      %v7016 = vpop.permute.xlu0 %7015
      %7017 = vrot.lane.b32.xlu0 %v6915, 4
      %v7018 = vpop.permute.xlu0 %7017
      %7019 = vrot.lane.b32.xlu0 %v6916, 4
      %v7020 = vpop.permute.xlu0 %7019
      %7021 = vrot.lane.b32.xlu0 %v6917, 4
      %v7022 = vpop.permute.xlu0 %7021
      %7023 = vrot.lane.b32.xlu0 %v6918, 4
      %v7024 = vpop.permute.xlu0 %7023
      %7025 = vrot.lane.b32.xlu0 %v6919, 4
      %v7026 = vpop.permute.xlu0 %7025
      %7027 = vrot.lane.b32.xlu0 %v6920, 4
      %v7028 = vpop.permute.xlu0 %7027
      %7029 = vrot.lane.b32.xlu0 %v6921, 4
      %v7030 = vpop.permute.xlu0 %7029
      %7031 = vrot.lane.b32.xlu0 %v6922, 4
      %v7032 = vpop.permute.xlu0 %7031
      %7033 = vrot.lane.b32.xlu0 %v6923, 4
      %v7034 = vpop.permute.xlu0 %7033
      %7035 = vrot.lane.b32.xlu0 %v6924, 4
      %v7036 = vpop.permute.xlu0 %7035
      %7037 = vrot.lane.b32.xlu0 %v6925, 4
      %v7038 = vpop.permute.xlu0 %7037
      %7039 = vrot.lane.b32.xlu0 %v6926, 4
      %v7040 = vpop.permute.xlu0 %7039
      %7041 = vrot.lane.b32.xlu0 %v6927, 4
      %v7042 = vpop.permute.xlu0 %7041
      %7043 = vrot.lane.b32.xlu0 %v6928, 4
      %v7044 = vpop.permute.xlu0 %7043
      %7045 = vrot.lane.b32.xlu0 %v6929, 4
      %v7046 = vpop.permute.xlu0 %7045
      %7047 = vrot.lane.b32.xlu0 %v6930, 4
      %v7048 = vpop.permute.xlu0 %7047
      %7049 = vrot.lane.b32.xlu0 %v6931, 4
      %v7050 = vpop.permute.xlu0 %7049
      %7051 = vrot.lane.b32.xlu0 %v6932, 4
      %v7052 = vpop.permute.xlu0 %7051
      %7053 = vrot.lane.b32.xlu0 %v6933, 4
      %v7054 = vpop.permute.xlu0 %7053
      %7055 = vrot.lane.b32.xlu0 %v6934, 4
      %v7056 = vpop.permute.xlu0 %7055
      %7057 = vrot.lane.b32.xlu0 %v6935, 4
      %v7058 = vpop.permute.xlu0 %7057
      %7059 = vrot.lane.b32.xlu0 %v6936, 4
      %v7060 = vpop.permute.xlu0 %7059
      %7061 = vrot.lane.b32.xlu0 %v6937, 4
      %v7062 = vpop.permute.xlu0 %7061
      %7063 = vrot.lane.b32.xlu0 %v6938, 4
      %v7064 = vpop.permute.xlu0 %7063
      %7065 = vrot.lane.b32.xlu0 %v6939, 4
      %v7066 = vpop.permute.xlu0 %7065
      %7067 = vrot.lane.b32.xlu0 %v6940, 4
      %v7068 = vpop.permute.xlu0 %7067
      %7133 = vrot.lane.b32.xlu0 %v6941, 8
      %v7134 = vpop.permute.xlu0 %7133
      %7135 = vrot.lane.b32.xlu0 %v6942, 8
      %v7136 = vpop.permute.xlu0 %7135
      %7137 = vrot.lane.b32.xlu0 %v6943, 8
      %v7138 = vpop.permute.xlu0 %7137
      %7139 = vrot.lane.b32.xlu0 %v6944, 8
      %v7140 = vpop.permute.xlu0 %7139
      %7141 = vrot.lane.b32.xlu0 %v6945, 8
      %v7142 = vpop.permute.xlu0 %7141
      %7143 = vrot.lane.b32.xlu0 %v6946, 8
      %v7144 = vpop.permute.xlu0 %7143
      %7145 = vrot.lane.b32.xlu0 %v6947, 8
      %v7146 = vpop.permute.xlu0 %7145
      %7147 = vrot.lane.b32.xlu0 %v6948, 8
      %v7148 = vpop.permute.xlu0 %7147
      %7149 = vrot.lane.b32.xlu0 %v6949, 8
      %v7150 = vpop.permute.xlu0 %7149
      %7151 = vrot.lane.b32.xlu0 %v6950, 8
      %v7152 = vpop.permute.xlu0 %7151
      %7153 = vrot.lane.b32.xlu0 %v6951, 8
      %v7154 = vpop.permute.xlu0 %7153
      %7155 = vrot.lane.b32.xlu0 %v6952, 8
      %v7156 = vpop.permute.xlu0 %7155
      %7157 = vrot.lane.b32.xlu0 %v6953, 8
      %v7158 = vpop.permute.xlu0 %7157
      %7159 = vrot.lane.b32.xlu0 %v6954, 8
      %v7160 = vpop.permute.xlu0 %7159
      %7161 = vrot.lane.b32.xlu0 %v6955, 8
      %v7162 = vpop.permute.xlu0 %7161
      %7163 = vrot.lane.b32.xlu0 %v6956, 8
      %v7164 = vpop.permute.xlu0 %7163
      %7165 = vrot.lane.b32.xlu0 %v6957, 8
      %v7166 = vpop.permute.xlu0 %7165
      %7167 = vrot.lane.b32.xlu0 %v6958, 8
      %v7168 = vpop.permute.xlu0 %7167
      %7169 = vrot.lane.b32.xlu0 %v6959, 8
      %v7170 = vpop.permute.xlu0 %7169
      %7171 = vrot.lane.b32.xlu0 %v6960, 8
      %v7172 = vpop.permute.xlu0 %7171
      %7173 = vrot.lane.b32.xlu0 %v6961, 8
      %v7174 = vpop.permute.xlu0 %7173
      %7175 = vrot.lane.b32.xlu0 %v6962, 8
      %v7176 = vpop.permute.xlu0 %7175
      %7177 = vrot.lane.b32.xlu0 %v6963, 8
      %v7178 = vpop.permute.xlu0 %7177
      %7179 = vrot.lane.b32.xlu0 %v6964, 8
      %v7180 = vpop.permute.xlu0 %7179
      %7181 = vrot.lane.b32.xlu0 %v6965, 8
      %v7182 = vpop.permute.xlu0 %7181
      %7183 = vrot.lane.b32.xlu0 %v6966, 8
      %v7184 = vpop.permute.xlu0 %7183
      %7185 = vrot.lane.b32.xlu0 %v6967, 8
      %v7186 = vpop.permute.xlu0 %7185
      %7187 = vrot.lane.b32.xlu0 %v6968, 8
      %v7188 = vpop.permute.xlu0 %7187
      %7189 = vrot.lane.b32.xlu0 %v6969, 8
      %v7190 = vpop.permute.xlu0 %7189
      %7191 = vrot.lane.b32.xlu0 %v6970, 8
      %v7192 = vpop.permute.xlu0 %7191
      %7193 = vrot.lane.b32.xlu0 %v6971, 8
      %v7194 = vpop.permute.xlu0 %7193
      %7195 = vrot.lane.b32.xlu0 %v6972, 8
      %v7196 = vpop.permute.xlu0 %7195
      %v7229 = vsel %vm334, %v6877, %v7006
      %v7230 = vsel %vm334, %v6878, %v7008
      %v7231 = vsel %vm334, %v6879, %v7010
      %v7232 = vsel %vm334, %v6880, %v7012
      %v7233 = vsel %vm334, %v6881, %v7014
      %v7234 = vsel %vm334, %v6882, %v7016
      %v7235 = vsel %vm334, %v6883, %v7018
      %v7236 = vsel %vm334, %v6884, %v7020
      %v7237 = vsel %vm334, %v6885, %v7022
      %v7238 = vsel %vm334, %v6886, %v7024
      %v7239 = vsel %vm334, %v6887, %v7026
      %v7240 = vsel %vm334, %v6888, %v7028
      %v7241 = vsel %vm334, %v6889, %v7030
      %v7242 = vsel %vm334, %v6890, %v7032
      %v7243 = vsel %vm334, %v6891, %v7034
      %v7244 = vsel %vm334, %v6892, %v7036
      %v7245 = vsel %vm334, %v6893, %v7038
      %v7246 = vsel %vm334, %v6894, %v7040
      %v7247 = vsel %vm334, %v6895, %v7042
      %v7248 = vsel %vm334, %v6896, %v7044
      %v7249 = vsel %vm334, %v6897, %v7046
      %v7250 = vsel %vm334, %v6898, %v7048
      %v7251 = vsel %vm334, %v6899, %v7050
      %v7252 = vsel %vm334, %v6900, %v7052
      %v7253 = vsel %vm334, %v6901, %v7054
      %v7254 = vsel %vm334, %v6902, %v7056
      %v7255 = vsel %vm334, %v6903, %v7058
      %v7256 = vsel %vm334, %v6904, %v7060
      %v7257 = vsel %vm334, %v6905, %v7062
      %v7258 = vsel %vm334, %v6906, %v7064
      %v7259 = vsel %vm334, %v6907, %v7066
      %v7260 = vsel %vm334, %v6908, %v7068
      %v7261 = vsel %vm2949, %v7229, %v7134
      %v7262 = vsel %vm2949, %v7230, %v7136
      %v7263 = vsel %vm2949, %v7231, %v7138
      %v7264 = vsel %vm2949, %v7232, %v7140
      %v7265 = vsel %vm2949, %v7233, %v7142
      %v7266 = vsel %vm2949, %v7234, %v7144
      %v7267 = vsel %vm2949, %v7235, %v7146
      %v7268 = vsel %vm2949, %v7236, %v7148
      %v7269 = vsel %vm2949, %v7237, %v7150
      %v7270 = vsel %vm2949, %v7238, %v7152
      %v7271 = vsel %vm2949, %v7239, %v7154
      %v7272 = vsel %vm2949, %v7240, %v7156
      %v7273 = vsel %vm2949, %v7241, %v7158
      %v7274 = vsel %vm2949, %v7242, %v7160
      %v7275 = vsel %vm2949, %v7243, %v7162
      %v7276 = vsel %vm2949, %v7244, %v7164
      %v7277 = vsel %vm2949, %v7245, %v7166
      %v7278 = vsel %vm2949, %v7246, %v7168
      %v7279 = vsel %vm2949, %v7247, %v7170
      %v7280 = vsel %vm2949, %v7248, %v7172
      %v7281 = vsel %vm2949, %v7249, %v7174
      %v7282 = vsel %vm2949, %v7250, %v7176
      %v7283 = vsel %vm2949, %v7251, %v7178
      %v7284 = vsel %vm2949, %v7252, %v7180
      %v7285 = vsel %vm2949, %v7253, %v7182
      %v7286 = vsel %vm2949, %v7254, %v7184
      %v7287 = vsel %vm2949, %v7255, %v7186
      %v7288 = vsel %vm2949, %v7256, %v7188
      %v7289 = vsel %vm2949, %v7257, %v7190
      %v7290 = vsel %vm2949, %v7258, %v7192
      %v7291 = vsel %vm2949, %v7259, %v7194
      %v7292 = vsel %vm2949, %v7260, %v7196
      %v7293 = vpack.c.bf16 %v7262, %v7261
      %v7294 = vpack.c.bf16 %v7264, %v7263
      %v7295 = vpack.c.bf16 %v7266, %v7265
      %v7296 = vpack.c.bf16 %v7268, %v7267
      %v7297 = vpack.c.bf16 %v7270, %v7269
      %v7298 = vpack.c.bf16 %v7272, %v7271
      %v7299 = vpack.c.bf16 %v7274, %v7273
      %v7300 = vpack.c.bf16 %v7276, %v7275
      %v7301 = vpack.c.bf16 %v7278, %v7277
      %v7302 = vpack.c.bf16 %v7280, %v7279
      %v7303 = vpack.c.bf16 %v7282, %v7281
      %v7304 = vpack.c.bf16 %v7284, %v7283
      %v7305 = vpack.c.bf16 %v7286, %v7285
      %v7306 = vpack.c.bf16 %v7288, %v7287
      %v7307 = vpack.c.bf16 %v7290, %v7289
      %v7308 = vpack.c.bf16 %v7292, %v7291
      %v7309 = vld [vmem:[%s7] sm:$0xf]
      %v7310 = vld [vmem:[%s7 + $0x4] sm:$0xf]
      %v7311 = vld [vmem:[%s7 + $0x8] sm:$0xf]
      %v7312 = vld [vmem:[%s7 + $0xc] sm:$0x3]
      %v7313 = vld [vmem:[%s2532] sm:$0xff]
      %v7314 = vld [vmem:[%s2532 + $0x8] sm:$0xff]
      %v7315 = vld [vmem:[%s2532 + $0x18] sm:$0xff]
      %v7316 = vld [vmem:[%s2532 + $0x20] sm:$0xff]
      %v7317 = vld [vmem:[%s2532 + $0x30] sm:$0xff]
      %v7318 = vld [vmem:[%s2532 + $0x38] sm:$0xff]
      %v7319 = vld [vmem:[%s2532 + $0x48] sm:$0xff]
      %v7320 = vld [vmem:[%s2532 + $0x50] sm:$0xff]
      %v7321 = vld [vmem:[%s2532 + $0x60] sm:$0xff]
      %v7322 = vld [vmem:[%s2532 + $0x68] sm:$0xff]
      %v7323 = vld [vmem:[%s2532 + $0x78] sm:$0xff]
      %v7324 = vld [vmem:[%s2532 + $0x80] sm:$0xff]
      %v7325 = vld [vmem:[%s2532 + $0x90] sm:$0xff]
      %v7326 = vld [vmem:[%s2532 + $0x98] sm:$0xff]
      %v7327 = vld [vmem:[%s2532 + $0xa8] sm:$0xff]
      %v7328 = vld [vmem:[%s2532 + $0xb0] sm:$0xff]
      %v7329 = vld [vmem:[%s2532 + $0xc0] sm:$0xff]
      %v7330 = vld [vmem:[%s2532 + $0xc8] sm:$0xff]
      %v7331 = vld [vmem:[%s2532 + $0xd8] sm:$0xff]
      %v7332 = vld [vmem:[%s2532 + $0xe0] sm:$0xff]
      %v7333 = vld [vmem:[%s2532 + $0xf0] sm:$0xff]
      %v7334 = vld [vmem:[%s2532 + $0xf8] sm:$0xff]
      %v7335 = vld [vmem:[%s2532 + $0x108] sm:$0xff]
      %v7336 = vld [vmem:[%s2532 + $0x110] sm:$0xff]
      %v7337 = vld [vmem:[%s2532 + $0x120] sm:$0xff]
      %v7338 = vld [vmem:[%s2532 + $0x128] sm:$0xff]
      %v7339 = vld [vmem:[%s2532 + $0x138] sm:$0xff]
      %v7340 = vld [vmem:[%s2532 + $0x140] sm:$0xff]
      %v7341 = vld [vmem:[%s2532 + $0x150] sm:$0xff]
      %v7342 = vld [vmem:[%s2532 + $0x158] sm:$0xff]
      %v7343 = vld [vmem:[%s2532 + $0x168] sm:$0xff]
      %v7344 = vld [vmem:[%s2532 + $0x170] sm:$0xff]
      %v7345 = vld [vmem:[%s2532 + $0x1] sm:$0xff]
      %v7346 = vld [vmem:[%s2532 + $0x9] sm:$0xff]
      %v7347 = vld [vmem:[%s2532 + $0x19] sm:$0xff]
      %v7348 = vld [vmem:[%s2532 + $0x21] sm:$0xff]
      %v7349 = vld [vmem:[%s2532 + $0x31] sm:$0xff]
      %v7350 = vld [vmem:[%s2532 + $0x39] sm:$0xff]
      %v7351 = vld [vmem:[%s2532 + $0x49] sm:$0xff]
      %v7352 = vld [vmem:[%s2532 + $0x51] sm:$0xff]
      %v7353 = vld [vmem:[%s2532 + $0x61] sm:$0xff]
      %v7354 = vld [vmem:[%s2532 + $0x69] sm:$0xff]
      %v7355 = vld [vmem:[%s2532 + $0x79] sm:$0xff]
      %v7356 = vld [vmem:[%s2532 + $0x81] sm:$0xff]
      %v7357 = vld [vmem:[%s2532 + $0x91] sm:$0xff]
      %v7358 = vld [vmem:[%s2532 + $0x99] sm:$0xff]
      %v7359 = vld [vmem:[%s2532 + $0xa9] sm:$0xff]
      %v7360 = vld [vmem:[%s2532 + $0xb1] sm:$0xff]
      %v7361 = vld [vmem:[%s2532 + $0xc1] sm:$0xff]
      %v7362 = vld [vmem:[%s2532 + $0xc9] sm:$0xff]
      %v7363 = vld [vmem:[%s2532 + $0xd9] sm:$0xff]
      %v7364 = vld [vmem:[%s2532 + $0xe1] sm:$0xff]
      %v7365 = vld [vmem:[%s2532 + $0xf1] sm:$0xff]
      %v7366 = vld [vmem:[%s2532 + $0xf9] sm:$0xff]
      %v7367 = vld [vmem:[%s2532 + $0x109] sm:$0xff]
      %v7368 = vld [vmem:[%s2532 + $0x111] sm:$0xff]
      %v7369 = vld [vmem:[%s2532 + $0x121] sm:$0xff]
      %v7370 = vld [vmem:[%s2532 + $0x129] sm:$0xff]
      %v7371 = vld [vmem:[%s2532 + $0x139] sm:$0xff]
      %v7372 = vld [vmem:[%s2532 + $0x141] sm:$0xff]
      %v7373 = vld [vmem:[%s2532 + $0x151] sm:$0xff]
      %v7374 = vld [vmem:[%s2532 + $0x159] sm:$0xff]
      %v7375 = vld [vmem:[%s2532 + $0x169] sm:$0xff]
      %v7376 = vld [vmem:[%s2532 + $0x171] sm:$0xff]
      %v7377 = vld [vmem:[%s2532 + $0x2] sm:$0xff]
      %v7378 = vld [vmem:[%s2532 + $0xa] sm:$0xff]
      %v7379 = vld [vmem:[%s2532 + $0x1a] sm:$0xff]
      %v7380 = vld [vmem:[%s2532 + $0x22] sm:$0xff]
      %v7381 = vld [vmem:[%s2532 + $0x32] sm:$0xff]
      %v7382 = vld [vmem:[%s2532 + $0x3a] sm:$0xff]
      %v7383 = vld [vmem:[%s2532 + $0x4a] sm:$0xff]
      %v7384 = vld [vmem:[%s2532 + $0x52] sm:$0xff]
      %v7385 = vld [vmem:[%s2532 + $0x62] sm:$0xff]
      %v7386 = vld [vmem:[%s2532 + $0x6a] sm:$0xff]
      %v7387 = vld [vmem:[%s2532 + $0x7a] sm:$0xff]
      %v7388 = vld [vmem:[%s2532 + $0x82] sm:$0xff]
      %v7389 = vld [vmem:[%s2532 + $0x92] sm:$0xff]
      %v7390 = vld [vmem:[%s2532 + $0x9a] sm:$0xff]
      %v7391 = vld [vmem:[%s2532 + $0xaa] sm:$0xff]
      %v7392 = vld [vmem:[%s2532 + $0xb2] sm:$0xff]
      %v7393 = vld [vmem:[%s2532 + $0xc2] sm:$0xff]
      %v7394 = vld [vmem:[%s2532 + $0xca] sm:$0xff]
      %v7395 = vld [vmem:[%s2532 + $0xda] sm:$0xff]
      %v7396 = vld [vmem:[%s2532 + $0xe2] sm:$0xff]
      %v7397 = vld [vmem:[%s2532 + $0xf2] sm:$0xff]
      %v7398 = vld [vmem:[%s2532 + $0xfa] sm:$0xff]
      %v7399 = vld [vmem:[%s2532 + $0x10a] sm:$0xff]
      %v7400 = vld [vmem:[%s2532 + $0x112] sm:$0xff]
      %v7401 = vld [vmem:[%s2532 + $0x122] sm:$0xff]
      %v7402 = vld [vmem:[%s2532 + $0x12a] sm:$0xff]
      %v7403 = vld [vmem:[%s2532 + $0x13a] sm:$0xff]
      %v7404 = vld [vmem:[%s2532 + $0x142] sm:$0xff]
      %v7405 = vld [vmem:[%s2532 + $0x152] sm:$0xff]
      %v7406 = vld [vmem:[%s2532 + $0x15a] sm:$0xff]
      %v7407 = vld [vmem:[%s2532 + $0x16a] sm:$0xff]
      %v7408 = vld [vmem:[%s2532 + $0x172] sm:$0xff]
      %7441 = vrot.lane.b32.xlu0 %v7345, 4
      %v7442 = vpop.permute.xlu0 %7441
      %7443 = vrot.lane.b32.xlu0 %v7346, 4
      %v7444 = vpop.permute.xlu0 %7443
      %7445 = vrot.lane.b32.xlu0 %v7347, 4
      %v7446 = vpop.permute.xlu0 %7445
      %7447 = vrot.lane.b32.xlu0 %v7348, 4
      %v7448 = vpop.permute.xlu0 %7447
      %7449 = vrot.lane.b32.xlu0 %v7349, 4
      %v7450 = vpop.permute.xlu0 %7449
      %7451 = vrot.lane.b32.xlu0 %v7350, 4
      %v7452 = vpop.permute.xlu0 %7451
      %7453 = vrot.lane.b32.xlu0 %v7351, 4
      %v7454 = vpop.permute.xlu0 %7453
      %7455 = vrot.lane.b32.xlu0 %v7352, 4
      %v7456 = vpop.permute.xlu0 %7455
      %7457 = vrot.lane.b32.xlu0 %v7353, 4
      %v7458 = vpop.permute.xlu0 %7457
      %7459 = vrot.lane.b32.xlu0 %v7354, 4
      %v7460 = vpop.permute.xlu0 %7459
      %7461 = vrot.lane.b32.xlu0 %v7355, 4
      %v7462 = vpop.permute.xlu0 %7461
      %7463 = vrot.lane.b32.xlu0 %v7356, 4
      %v7464 = vpop.permute.xlu0 %7463
      %7465 = vrot.lane.b32.xlu0 %v7357, 4
      %v7466 = vpop.permute.xlu0 %7465
      %7467 = vrot.lane.b32.xlu0 %v7358, 4
      %v7468 = vpop.permute.xlu0 %7467
      %7469 = vrot.lane.b32.xlu0 %v7359, 4
      %v7470 = vpop.permute.xlu0 %7469
      %7471 = vrot.lane.b32.xlu0 %v7360, 4
      %v7472 = vpop.permute.xlu0 %7471
      %7473 = vrot.lane.b32.xlu0 %v7361, 4
      %v7474 = vpop.permute.xlu0 %7473
      %7475 = vrot.lane.b32.xlu0 %v7362, 4
      %v7476 = vpop.permute.xlu0 %7475
      %7477 = vrot.lane.b32.xlu0 %v7363, 4
      %v7478 = vpop.permute.xlu0 %7477
      %7479 = vrot.lane.b32.xlu0 %v7364, 4
      %v7480 = vpop.permute.xlu0 %7479
      %7481 = vrot.lane.b32.xlu0 %v7365, 4
      %v7482 = vpop.permute.xlu0 %7481
      %7483 = vrot.lane.b32.xlu0 %v7366, 4
      %v7484 = vpop.permute.xlu0 %7483
      %7485 = vrot.lane.b32.xlu0 %v7367, 4
      %v7486 = vpop.permute.xlu0 %7485
      %7487 = vrot.lane.b32.xlu0 %v7368, 4
      %v7488 = vpop.permute.xlu0 %7487
      %7489 = vrot.lane.b32.xlu0 %v7369, 4
      %v7490 = vpop.permute.xlu0 %7489
      %7491 = vrot.lane.b32.xlu0 %v7370, 4
      %v7492 = vpop.permute.xlu0 %7491
      %7493 = vrot.lane.b32.xlu0 %v7371, 4
      %v7494 = vpop.permute.xlu0 %7493
      %7495 = vrot.lane.b32.xlu0 %v7372, 4
      %v7496 = vpop.permute.xlu0 %7495
      %7497 = vrot.lane.b32.xlu0 %v7373, 4
      %v7498 = vpop.permute.xlu0 %7497
      %7499 = vrot.lane.b32.xlu0 %v7374, 4
      %v7500 = vpop.permute.xlu0 %7499
      %7501 = vrot.lane.b32.xlu0 %v7375, 4
      %v7502 = vpop.permute.xlu0 %7501
      %7503 = vrot.lane.b32.xlu0 %v7376, 4
      %v7504 = vpop.permute.xlu0 %7503
      %7569 = vrot.lane.b32.xlu0 %v7377, 8
      %v7570 = vpop.permute.xlu0 %7569
      %7571 = vrot.lane.b32.xlu0 %v7378, 8
      %v7572 = vpop.permute.xlu0 %7571
      %7573 = vrot.lane.b32.xlu0 %v7379, 8
      %v7574 = vpop.permute.xlu0 %7573
      %7575 = vrot.lane.b32.xlu0 %v7380, 8
      %v7576 = vpop.permute.xlu0 %7575
      %7577 = vrot.lane.b32.xlu0 %v7381, 8
      %v7578 = vpop.permute.xlu0 %7577
      %7579 = vrot.lane.b32.xlu0 %v7382, 8
      %v7580 = vpop.permute.xlu0 %7579
      %7581 = vrot.lane.b32.xlu0 %v7383, 8
      %v7582 = vpop.permute.xlu0 %7581
      %7583 = vrot.lane.b32.xlu0 %v7384, 8
      %v7584 = vpop.permute.xlu0 %7583
      %7585 = vrot.lane.b32.xlu0 %v7385, 8
      %v7586 = vpop.permute.xlu0 %7585
      %7587 = vrot.lane.b32.xlu0 %v7386, 8
      %v7588 = vpop.permute.xlu0 %7587
      %7589 = vrot.lane.b32.xlu0 %v7387, 8
      %v7590 = vpop.permute.xlu0 %7589
      %7591 = vrot.lane.b32.xlu0 %v7388, 8
      %v7592 = vpop.permute.xlu0 %7591
      %7593 = vrot.lane.b32.xlu0 %v7389, 8
      %v7594 = vpop.permute.xlu0 %7593
      %7595 = vrot.lane.b32.xlu0 %v7390, 8
      %v7596 = vpop.permute.xlu0 %7595
      %7597 = vrot.lane.b32.xlu0 %v7391, 8
      %v7598 = vpop.permute.xlu0 %7597
      %7599 = vrot.lane.b32.xlu0 %v7392, 8
      %v7600 = vpop.permute.xlu0 %7599
      %7601 = vrot.lane.b32.xlu0 %v7393, 8
      %v7602 = vpop.permute.xlu0 %7601
      %7603 = vrot.lane.b32.xlu0 %v7394, 8
      %v7604 = vpop.permute.xlu0 %7603
      %7605 = vrot.lane.b32.xlu0 %v7395, 8
      %v7606 = vpop.permute.xlu0 %7605
      %7607 = vrot.lane.b32.xlu0 %v7396, 8
      %v7608 = vpop.permute.xlu0 %7607
      %7609 = vrot.lane.b32.xlu0 %v7397, 8
      %v7610 = vpop.permute.xlu0 %7609
      %7611 = vrot.lane.b32.xlu0 %v7398, 8
      %v7612 = vpop.permute.xlu0 %7611
      %7613 = vrot.lane.b32.xlu0 %v7399, 8
      %v7614 = vpop.permute.xlu0 %7613
      %7615 = vrot.lane.b32.xlu0 %v7400, 8
      %v7616 = vpop.permute.xlu0 %7615
      %7617 = vrot.lane.b32.xlu0 %v7401, 8
      %v7618 = vpop.permute.xlu0 %7617
      %7619 = vrot.lane.b32.xlu0 %v7402, 8
      %v7620 = vpop.permute.xlu0 %7619
      %7621 = vrot.lane.b32.xlu0 %v7403, 8
      %v7622 = vpop.permute.xlu0 %7621
      %7623 = vrot.lane.b32.xlu0 %v7404, 8
      %v7624 = vpop.permute.xlu0 %7623
      %7625 = vrot.lane.b32.xlu0 %v7405, 8
      %v7626 = vpop.permute.xlu0 %7625
      %7627 = vrot.lane.b32.xlu0 %v7406, 8
      %v7628 = vpop.permute.xlu0 %7627
      %7629 = vrot.lane.b32.xlu0 %v7407, 8
      %v7630 = vpop.permute.xlu0 %7629
      %7631 = vrot.lane.b32.xlu0 %v7408, 8
      %v7632 = vpop.permute.xlu0 %7631
      %v7665 = vsel %vm334, %v7313, %v7442
      %v7666 = vsel %vm334, %v7314, %v7444
      %v7667 = vsel %vm334, %v7315, %v7446
      %v7668 = vsel %vm334, %v7316, %v7448
      %v7669 = vsel %vm334, %v7317, %v7450
      %v7670 = vsel %vm334, %v7318, %v7452
      %v7671 = vsel %vm334, %v7319, %v7454
      %v7672 = vsel %vm334, %v7320, %v7456
      %v7673 = vsel %vm334, %v7321, %v7458
      %v7674 = vsel %vm334, %v7322, %v7460
      %v7675 = vsel %vm334, %v7323, %v7462
      %v7676 = vsel %vm334, %v7324, %v7464
      %v7677 = vsel %vm334, %v7325, %v7466
      %v7678 = vsel %vm334, %v7326, %v7468
      %v7679 = vsel %vm334, %v7327, %v7470
      %v7680 = vsel %vm334, %v7328, %v7472
      %v7681 = vsel %vm334, %v7329, %v7474
      %v7682 = vsel %vm334, %v7330, %v7476
      %v7683 = vsel %vm334, %v7331, %v7478
      %v7684 = vsel %vm334, %v7332, %v7480
      %v7685 = vsel %vm334, %v7333, %v7482
      %v7686 = vsel %vm334, %v7334, %v7484
      %v7687 = vsel %vm334, %v7335, %v7486
      %v7688 = vsel %vm334, %v7336, %v7488
      %v7689 = vsel %vm334, %v7337, %v7490
      %v7690 = vsel %vm334, %v7338, %v7492
      %v7691 = vsel %vm334, %v7339, %v7494
      %v7692 = vsel %vm334, %v7340, %v7496
      %v7693 = vsel %vm334, %v7341, %v7498
      %v7694 = vsel %vm334, %v7342, %v7500
      %v7695 = vsel %vm334, %v7343, %v7502
      %v7696 = vsel %vm334, %v7344, %v7504
      %v7697 = vsel %vm2949, %v7665, %v7570
      %v7698 = vsel %vm2949, %v7666, %v7572
      %v7699 = vsel %vm2949, %v7667, %v7574
      %v7700 = vsel %vm2949, %v7668, %v7576
      %v7701 = vsel %vm2949, %v7669, %v7578
      %v7702 = vsel %vm2949, %v7670, %v7580
      %v7703 = vsel %vm2949, %v7671, %v7582
      %v7704 = vsel %vm2949, %v7672, %v7584
      %v7705 = vsel %vm2949, %v7673, %v7586
      %v7706 = vsel %vm2949, %v7674, %v7588
      %v7707 = vsel %vm2949, %v7675, %v7590
      %v7708 = vsel %vm2949, %v7676, %v7592
      %v7709 = vsel %vm2949, %v7677, %v7594
      %v7710 = vsel %vm2949, %v7678, %v7596
      %v7711 = vsel %vm2949, %v7679, %v7598
      %v7712 = vsel %vm2949, %v7680, %v7600
      %v7713 = vsel %vm2949, %v7681, %v7602
      %v7714 = vsel %vm2949, %v7682, %v7604
      %v7715 = vsel %vm2949, %v7683, %v7606
      %v7716 = vsel %vm2949, %v7684, %v7608
      %v7717 = vsel %vm2949, %v7685, %v7610
      %v7718 = vsel %vm2949, %v7686, %v7612
      %v7719 = vsel %vm2949, %v7687, %v7614
      %v7720 = vsel %vm2949, %v7688, %v7616
      %v7721 = vsel %vm2949, %v7689, %v7618
      %v7722 = vsel %vm2949, %v7690, %v7620
      %v7723 = vsel %vm2949, %v7691, %v7622
      %v7724 = vsel %vm2949, %v7692, %v7624
      %v7725 = vsel %vm2949, %v7693, %v7626
      %v7726 = vsel %vm2949, %v7694, %v7628
      %v7727 = vsel %vm2949, %v7695, %v7630
      %v7728 = vsel %vm2949, %v7696, %v7632
      %v7729 = vpack.c.bf16 %v7698, %v7697
      %v7730 = vpack.c.bf16 %v7700, %v7699
      %v7731 = vpack.c.bf16 %v7702, %v7701
      %v7732 = vpack.c.bf16 %v7704, %v7703
      %v7733 = vpack.c.bf16 %v7706, %v7705
      %v7734 = vpack.c.bf16 %v7708, %v7707
      %v7735 = vpack.c.bf16 %v7710, %v7709
      %v7736 = vpack.c.bf16 %v7712, %v7711
      %v7737 = vpack.c.bf16 %v7714, %v7713
      %v7738 = vpack.c.bf16 %v7716, %v7715
      %v7739 = vpack.c.bf16 %v7718, %v7717
      %v7740 = vpack.c.bf16 %v7720, %v7719
      %v7741 = vpack.c.bf16 %v7722, %v7721
      %v7742 = vpack.c.bf16 %v7724, %v7723
      %v7743 = vpack.c.bf16 %v7726, %v7725
      %v7744 = vpack.c.bf16 %v7728, %v7727
      %s7745 = scalar_lea.vmem %s7, 16
      %v7746 = vld [vmem:[%s7745] sm:$0xf]
      %v7747 = vld [vmem:[%s7745 + $0x4] sm:$0xf]
      %v7748 = vld [vmem:[%s7745 + $0x8] sm:$0xf]
      %v7749 = vld [vmem:[%s7745 + $0xc] sm:$0x3]
      %v7754 = vunpack.c.l.b16 %v7746
      %v7755 = vunpack.c.l.b16 %v7747
      %v7756 = vunpack.c.l.b16 %v7748
      %v7757 = vunpack.c.l.b16 %v7749
      %v7758 = vpack.c.b16 %v7755, %v7754
      %v7759 = vpack.c.b16 %v7757, %v7756
      %v7761 = vsel %vm3440, %v7758, 0
      %v7764 = vsel %vm3440, %v7759, 0
      %v7767 = vsel %vm3440, %v7729, 0
      %v7770 = vsel %vm3440, %v7730, 0
      %v7773 = vsel %vm3440, %v7731, 0
      %v7776 = vsel %vm3440, %v7732, 0
      %v7779 = vsel %vm3440, %v7733, 0
      %v7782 = vsel %vm3440, %v7734, 0
      %v7785 = vsel %vm3440, %v7735, 0
      %v7788 = vsel %vm3440, %v7736, 0
      %v7791 = vsel %vm3440, %v7737, 0
      %v7794 = vsel %vm3440, %v7738, 0
      %v7797 = vsel %vm3440, %v7739, 0
      %v7800 = vsel %vm3440, %v7740, 0
      %v7803 = vsel %vm3440, %v7741, 0
      %v7806 = vsel %vm3440, %v7742, 0
      %v7809 = vsel %vm3440, %v7743, 0
      %v7812 = vsel %vm3440, %v7744, 0
      %7814 = vmatprep.subr.bf16.mxu0 0
      %7815 = vmatpush1.bf16.xpose.msra.mxu0 %v7788
      %7816 = vmatprep.subr.bf16.mxu0 0
      %7817 = vmatpush1.bf16.xpose.msra.mxu0 %v7785
      %7818 = vmatprep.subr.bf16.mxu0 0
      %7819 = vmatpush1.bf16.xpose.msra.mxu0 %v7782
      %7820 = vmatprep.subr.bf16.mxu0 0
      %7821 = vmatpush1.bf16.xpose.msra.mxu0 %v7779
      %7822 = vmatprep.subr.bf16.mxu0 0
      %7823 = vmatpush1.bf16.xpose.msra.mxu0 %v7776
      %7824 = vmatprep.subr.bf16.mxu0 0
      %7825 = vmatpush1.bf16.xpose.msra.mxu0 %v7773
      %7826 = vmatprep.subr.bf16.mxu0 0
      %7827 = vmatpush1.bf16.xpose.msra.mxu0 %v7770
      %7828 = vmatprep.subr.bf16.mxu0 0
      %7829 = vmatpush1.bf16.xpose.msra.mxu0 %v7767
      %7830 = vmatprep.subr.bf16.mxu0 0
      %7831 = vmatpush2.bf16.xpose.msra.mxu0 %v7812
      %7832 = vmatprep.subr.bf16.mxu0 0
      %7833 = vmatpush2.bf16.xpose.msra.mxu0 %v7809
      %7834 = vmatprep.subr.bf16.mxu0 0
      %7835 = vmatpush2.bf16.xpose.msra.mxu0 %v7806
      %7836 = vmatprep.subr.bf16.mxu0 0
      %7837 = vmatpush2.bf16.xpose.msra.mxu0 %v7803
      %7838 = vmatprep.subr.bf16.mxu0 0
      %7839 = vmatpush2.bf16.xpose.msra.mxu0 %v7800
      %7840 = vmatprep.subr.bf16.mxu0 0
      %7841 = vmatpush2.bf16.xpose.msra.mxu0 %v7797
      %7842 = vmatprep.subr.bf16.mxu0 0
      %7843 = vmatpush2.bf16.xpose.msra.mxu0 %v7794
      %7844 = vmatprep.subr.bf16.mxu0 0
      %7845 = vmatpush2.bf16.xpose.msra.mxu0 %v7791
      %7846 = vmatprep.mubr.bf16.mxu0 0
      %7847 = vmatmul.mubr.bf16.gmra.mxu0 %v7761
      %v7848 = vpop.f32.mrf.mxu0
      %v7849 = vadd.f32 0.0, %v7848
      %v7850 = vpop.f32.mrf.mxu0
      %v7851 = vadd.f32 0.0, %v7850
      %v7852 = vpop.f32.mrf.mxu0
      %v7853 = vadd.f32 0.0, %v7852
      %v7854 = vpop.f32.mrf.mxu0
      %v7855 = vadd.f32 0.0, %v7854
      %7856 = vmatprep.mubr.bf16.mxu0 0
      %7857 = vmatmul.mubr.bf16.gmra.mxu0 %v7764
      %v7858 = vpop.f32.mrf.mxu0
      %v7859 = vadd.f32 0.0, %v7858
      %v7860 = vpop.f32.mrf.mxu0
      %v7861 = vadd.f32 0.0, %v7860
      %v7862 = vpop.f32.mrf.mxu0
      %v7863 = vadd.f32 0.0, %v7862
      %v7864 = vpop.f32.mrf.mxu0
      %v7865 = vadd.f32 0.0, %v7864
      %7866 = vdwg.mxu0
      %v7871 = vunpack.c.l.b16 %v7309
      %v7872 = vunpack.c.l.b16 %v7310
      %v7873 = vunpack.c.l.b16 %v7311
      %v7874 = vunpack.c.l.b16 %v7312
      %v7875 = vpack.c.b16 %v7872, %v7871
      %v7876 = vpack.c.b16 %v7874, %v7873
      %v7878 = vsel %vm3440, %v7875, 0
      %v7881 = vsel %vm3440, %v7876, 0
      %v7884 = vsel %vm3440, %v7293, 0
      %v7887 = vsel %vm3440, %v7294, 0
      %v7890 = vsel %vm3440, %v7295, 0
      %v7893 = vsel %vm3440, %v7296, 0
      %v7896 = vsel %vm3440, %v7297, 0
      %v7899 = vsel %vm3440, %v7298, 0
      %v7902 = vsel %vm3440, %v7299, 0
      %v7905 = vsel %vm3440, %v7300, 0
      %v7908 = vsel %vm3440, %v7301, 0
      %v7911 = vsel %vm3440, %v7302, 0
      %v7914 = vsel %vm3440, %v7303, 0
      %v7917 = vsel %vm3440, %v7304, 0
      %v7920 = vsel %vm3440, %v7305, 0
      %v7923 = vsel %vm3440, %v7306, 0
      %v7926 = vsel %vm3440, %v7307, 0
      %v7929 = vsel %vm3440, %v7308, 0
      %7931 = vmatprep.subr.bf16.mxu0 0
      %7932 = vmatpush1.bf16.xpose.msra.mxu0 %v7905
      %7933 = vmatprep.subr.bf16.mxu0 0
      %7934 = vmatpush1.bf16.xpose.msra.mxu0 %v7902
      %7935 = vmatprep.subr.bf16.mxu0 0
      %7936 = vmatpush1.bf16.xpose.msra.mxu0 %v7899
      %7937 = vmatprep.subr.bf16.mxu0 0
      %7938 = vmatpush1.bf16.xpose.msra.mxu0 %v7896
      %7939 = vmatprep.subr.bf16.mxu0 0
      %7940 = vmatpush1.bf16.xpose.msra.mxu0 %v7893
      %7941 = vmatprep.subr.bf16.mxu0 0
      %7942 = vmatpush1.bf16.xpose.msra.mxu0 %v7890
      %7943 = vmatprep.subr.bf16.mxu0 0
      %7944 = vmatpush1.bf16.xpose.msra.mxu0 %v7887
      %7945 = vmatprep.subr.bf16.mxu0 0
      %7946 = vmatpush1.bf16.xpose.msra.mxu0 %v7884
      %7947 = vmatprep.subr.bf16.mxu0 0
      %7948 = vmatpush2.bf16.xpose.msra.mxu0 %v7929
      %7949 = vmatprep.subr.bf16.mxu0 0
      %7950 = vmatpush2.bf16.xpose.msra.mxu0 %v7926
      %7951 = vmatprep.subr.bf16.mxu0 0
      %7952 = vmatpush2.bf16.xpose.msra.mxu0 %v7923
      %7953 = vmatprep.subr.bf16.mxu0 0
      %7954 = vmatpush2.bf16.xpose.msra.mxu0 %v7920
      %7955 = vmatprep.subr.bf16.mxu0 0
      %7956 = vmatpush2.bf16.xpose.msra.mxu0 %v7917
      %7957 = vmatprep.subr.bf16.mxu0 0
      %7958 = vmatpush2.bf16.xpose.msra.mxu0 %v7914
      %7959 = vmatprep.subr.bf16.mxu0 0
      %7960 = vmatpush2.bf16.xpose.msra.mxu0 %v7911
      %7961 = vmatprep.subr.bf16.mxu0 0
      %7962 = vmatpush2.bf16.xpose.msra.mxu0 %v7908
      %7963 = vmatprep.mubr.bf16.mxu0 0
      %7964 = vmatmul.mubr.bf16.gmra.mxu0 %v7878
      %v7965 = vpop.f32.mrf.mxu0
      %v7966 = vadd.f32 %v7849, %v7965
      %v7967 = vpop.f32.mrf.mxu0
      %v7968 = vadd.f32 %v7851, %v7967
      %v7969 = vpop.f32.mrf.mxu0
      %v7970 = vadd.f32 %v7853, %v7969
      %v7971 = vpop.f32.mrf.mxu0
      %v7972 = vadd.f32 %v7855, %v7971
      %7973 = vmatprep.mubr.bf16.mxu0 0
      %7974 = vmatmul.mubr.bf16.gmra.mxu0 %v7881
      %v7975 = vpop.f32.mrf.mxu0
      %v7976 = vadd.f32 %v7859, %v7975
      %v7977 = vpop.f32.mrf.mxu0
      %v7978 = vadd.f32 %v7861, %v7977
      %v7979 = vpop.f32.mrf.mxu0
      %v7980 = vadd.f32 %v7863, %v7979
      %v7981 = vpop.f32.mrf.mxu0
      %v7982 = vadd.f32 %v7865, %v7981
      %7983 = vdwg.mxu0
      %v7984 = vld [vmem:[%s3871] sm:$0xff]
      %v7985 = vld [vmem:[%s3871 + $0x8] sm:$0xff]
      %v7986 = vld [vmem:[%s3871 + $0x18] sm:$0xff]
      %v7987 = vld [vmem:[%s3871 + $0x20] sm:$0xff]
      %v7988 = vld [vmem:[%s3871 + $0x30] sm:$0xff]
      %v7989 = vld [vmem:[%s3871 + $0x38] sm:$0xff]
      %v7990 = vld [vmem:[%s3871 + $0x48] sm:$0xff]
      %v7991 = vld [vmem:[%s3871 + $0x50] sm:$0xff]
      %v7992 = vld [vmem:[%s3871 + $0x60] sm:$0xff]
      %v7993 = vld [vmem:[%s3871 + $0x68] sm:$0xff]
      %v7994 = vld [vmem:[%s3871 + $0x78] sm:$0xff]
      %v7995 = vld [vmem:[%s3871 + $0x80] sm:$0xff]
      %v7996 = vld [vmem:[%s3871 + $0x90] sm:$0xff]
      %v7997 = vld [vmem:[%s3871 + $0x98] sm:$0xff]
      %v7998 = vld [vmem:[%s3871 + $0xa8] sm:$0xff]
      %v7999 = vld [vmem:[%s3871 + $0xb0] sm:$0xff]
      %v8000 = vld [vmem:[%s3871 + $0xc0] sm:$0xff]
      %v8001 = vld [vmem:[%s3871 + $0xc8] sm:$0xff]
      %v8002 = vld [vmem:[%s3871 + $0xd8] sm:$0xff]
      %v8003 = vld [vmem:[%s3871 + $0xe0] sm:$0xff]
      %v8004 = vld [vmem:[%s3871 + $0xf0] sm:$0xff]
      %v8005 = vld [vmem:[%s3871 + $0xf8] sm:$0xff]
      %v8006 = vld [vmem:[%s3871 + $0x108] sm:$0xff]
      %v8007 = vld [vmem:[%s3871 + $0x110] sm:$0xff]
      %v8008 = vld [vmem:[%s3871 + $0x120] sm:$0xff]
      %v8009 = vld [vmem:[%s3871 + $0x128] sm:$0xff]
      %v8010 = vld [vmem:[%s3871 + $0x138] sm:$0xff]
      %v8011 = vld [vmem:[%s3871 + $0x140] sm:$0xff]
      %v8012 = vld [vmem:[%s3871 + $0x150] sm:$0xff]
      %v8013 = vld [vmem:[%s3871 + $0x158] sm:$0xff]
      %v8014 = vld [vmem:[%s3871 + $0x168] sm:$0xff]
      %v8015 = vld [vmem:[%s3871 + $0x170] sm:$0xff]
      %v8016 = vld [vmem:[%s3871 + $0x1] sm:$0xff]
      %v8017 = vld [vmem:[%s3871 + $0x9] sm:$0xff]
      %v8018 = vld [vmem:[%s3871 + $0x19] sm:$0xff]
      %v8019 = vld [vmem:[%s3871 + $0x21] sm:$0xff]
      %v8020 = vld [vmem:[%s3871 + $0x31] sm:$0xff]
      %v8021 = vld [vmem:[%s3871 + $0x39] sm:$0xff]
      %v8022 = vld [vmem:[%s3871 + $0x49] sm:$0xff]
      %v8023 = vld [vmem:[%s3871 + $0x51] sm:$0xff]
      %v8024 = vld [vmem:[%s3871 + $0x61] sm:$0xff]
      %v8025 = vld [vmem:[%s3871 + $0x69] sm:$0xff]
      %v8026 = vld [vmem:[%s3871 + $0x79] sm:$0xff]
      %v8027 = vld [vmem:[%s3871 + $0x81] sm:$0xff]
      %v8028 = vld [vmem:[%s3871 + $0x91] sm:$0xff]
      %v8029 = vld [vmem:[%s3871 + $0x99] sm:$0xff]
      %v8030 = vld [vmem:[%s3871 + $0xa9] sm:$0xff]
      %v8031 = vld [vmem:[%s3871 + $0xb1] sm:$0xff]
      %v8032 = vld [vmem:[%s3871 + $0xc1] sm:$0xff]
      %v8033 = vld [vmem:[%s3871 + $0xc9] sm:$0xff]
      %v8034 = vld [vmem:[%s3871 + $0xd9] sm:$0xff]
      %v8035 = vld [vmem:[%s3871 + $0xe1] sm:$0xff]
      %v8036 = vld [vmem:[%s3871 + $0xf1] sm:$0xff]
      %v8037 = vld [vmem:[%s3871 + $0xf9] sm:$0xff]
      %v8038 = vld [vmem:[%s3871 + $0x109] sm:$0xff]
      %v8039 = vld [vmem:[%s3871 + $0x111] sm:$0xff]
      %v8040 = vld [vmem:[%s3871 + $0x121] sm:$0xff]
      %v8041 = vld [vmem:[%s3871 + $0x129] sm:$0xff]
      %v8042 = vld [vmem:[%s3871 + $0x139] sm:$0xff]
      %v8043 = vld [vmem:[%s3871 + $0x141] sm:$0xff]
      %v8044 = vld [vmem:[%s3871 + $0x151] sm:$0xff]
      %v8045 = vld [vmem:[%s3871 + $0x159] sm:$0xff]
      %v8046 = vld [vmem:[%s3871 + $0x169] sm:$0xff]
      %v8047 = vld [vmem:[%s3871 + $0x171] sm:$0xff]
      %v8048 = vld [vmem:[%s3871 + $0x2] sm:$0xff]
      %v8049 = vld [vmem:[%s3871 + $0xa] sm:$0xff]
      %v8050 = vld [vmem:[%s3871 + $0x1a] sm:$0xff]
      %v8051 = vld [vmem:[%s3871 + $0x22] sm:$0xff]
      %v8052 = vld [vmem:[%s3871 + $0x32] sm:$0xff]
      %v8053 = vld [vmem:[%s3871 + $0x3a] sm:$0xff]
      %v8054 = vld [vmem:[%s3871 + $0x4a] sm:$0xff]
      %v8055 = vld [vmem:[%s3871 + $0x52] sm:$0xff]
      %v8056 = vld [vmem:[%s3871 + $0x62] sm:$0xff]
      %v8057 = vld [vmem:[%s3871 + $0x6a] sm:$0xff]
      %v8058 = vld [vmem:[%s3871 + $0x7a] sm:$0xff]
      %v8059 = vld [vmem:[%s3871 + $0x82] sm:$0xff]
      %v8060 = vld [vmem:[%s3871 + $0x92] sm:$0xff]
      %v8061 = vld [vmem:[%s3871 + $0x9a] sm:$0xff]
      %v8062 = vld [vmem:[%s3871 + $0xaa] sm:$0xff]
      %v8063 = vld [vmem:[%s3871 + $0xb2] sm:$0xff]
      %v8064 = vld [vmem:[%s3871 + $0xc2] sm:$0xff]
      %v8065 = vld [vmem:[%s3871 + $0xca] sm:$0xff]
      %v8066 = vld [vmem:[%s3871 + $0xda] sm:$0xff]
      %v8067 = vld [vmem:[%s3871 + $0xe2] sm:$0xff]
      %v8068 = vld [vmem:[%s3871 + $0xf2] sm:$0xff]
      %v8069 = vld [vmem:[%s3871 + $0xfa] sm:$0xff]
      %v8070 = vld [vmem:[%s3871 + $0x10a] sm:$0xff]
      %v8071 = vld [vmem:[%s3871 + $0x112] sm:$0xff]
      %v8072 = vld [vmem:[%s3871 + $0x122] sm:$0xff]
      %v8073 = vld [vmem:[%s3871 + $0x12a] sm:$0xff]
      %v8074 = vld [vmem:[%s3871 + $0x13a] sm:$0xff]
      %v8075 = vld [vmem:[%s3871 + $0x142] sm:$0xff]
      %v8076 = vld [vmem:[%s3871 + $0x152] sm:$0xff]
      %v8077 = vld [vmem:[%s3871 + $0x15a] sm:$0xff]
      %v8078 = vld [vmem:[%s3871 + $0x16a] sm:$0xff]
      %v8079 = vld [vmem:[%s3871 + $0x172] sm:$0xff]
      %8112 = vrot.lane.b32.xlu0 %v8016, 4
      %v8113 = vpop.permute.xlu0 %8112
      %8114 = vrot.lane.b32.xlu0 %v8017, 4
      %v8115 = vpop.permute.xlu0 %8114
      %8116 = vrot.lane.b32.xlu0 %v8018, 4
      %v8117 = vpop.permute.xlu0 %8116
      %8118 = vrot.lane.b32.xlu0 %v8019, 4
      %v8119 = vpop.permute.xlu0 %8118
      %8120 = vrot.lane.b32.xlu0 %v8020, 4
      %v8121 = vpop.permute.xlu0 %8120
      %8122 = vrot.lane.b32.xlu0 %v8021, 4
      %v8123 = vpop.permute.xlu0 %8122
      %8124 = vrot.lane.b32.xlu0 %v8022, 4
      %v8125 = vpop.permute.xlu0 %8124
      %8126 = vrot.lane.b32.xlu0 %v8023, 4
      %v8127 = vpop.permute.xlu0 %8126
      %8128 = vrot.lane.b32.xlu0 %v8024, 4
      %v8129 = vpop.permute.xlu0 %8128
      %8130 = vrot.lane.b32.xlu0 %v8025, 4
      %v8131 = vpop.permute.xlu0 %8130
      %8132 = vrot.lane.b32.xlu0 %v8026, 4
      %v8133 = vpop.permute.xlu0 %8132
      %8134 = vrot.lane.b32.xlu0 %v8027, 4
      %v8135 = vpop.permute.xlu0 %8134
      %8136 = vrot.lane.b32.xlu0 %v8028, 4
      %v8137 = vpop.permute.xlu0 %8136
      %8138 = vrot.lane.b32.xlu0 %v8029, 4
      %v8139 = vpop.permute.xlu0 %8138
      %8140 = vrot.lane.b32.xlu0 %v8030, 4
      %v8141 = vpop.permute.xlu0 %8140
      %8142 = vrot.lane.b32.xlu0 %v8031, 4
      %v8143 = vpop.permute.xlu0 %8142
      %8144 = vrot.lane.b32.xlu0 %v8032, 4
      %v8145 = vpop.permute.xlu0 %8144
      %8146 = vrot.lane.b32.xlu0 %v8033, 4
      %v8147 = vpop.permute.xlu0 %8146
      %8148 = vrot.lane.b32.xlu0 %v8034, 4
      %v8149 = vpop.permute.xlu0 %8148
      %8150 = vrot.lane.b32.xlu0 %v8035, 4
      %v8151 = vpop.permute.xlu0 %8150
      %8152 = vrot.lane.b32.xlu0 %v8036, 4
      %v8153 = vpop.permute.xlu0 %8152
      %8154 = vrot.lane.b32.xlu0 %v8037, 4
      %v8155 = vpop.permute.xlu0 %8154
      %8156 = vrot.lane.b32.xlu0 %v8038, 4
      %v8157 = vpop.permute.xlu0 %8156
      %8158 = vrot.lane.b32.xlu0 %v8039, 4
      %v8159 = vpop.permute.xlu0 %8158
      %8160 = vrot.lane.b32.xlu0 %v8040, 4
      %v8161 = vpop.permute.xlu0 %8160
      %8162 = vrot.lane.b32.xlu0 %v8041, 4
      %v8163 = vpop.permute.xlu0 %8162
      %8164 = vrot.lane.b32.xlu0 %v8042, 4
      %v8165 = vpop.permute.xlu0 %8164
      %8166 = vrot.lane.b32.xlu0 %v8043, 4
      %v8167 = vpop.permute.xlu0 %8166
      %8168 = vrot.lane.b32.xlu0 %v8044, 4
      %v8169 = vpop.permute.xlu0 %8168
      %8170 = vrot.lane.b32.xlu0 %v8045, 4
      %v8171 = vpop.permute.xlu0 %8170
      %8172 = vrot.lane.b32.xlu0 %v8046, 4
      %v8173 = vpop.permute.xlu0 %8172
      %8174 = vrot.lane.b32.xlu0 %v8047, 4
      %v8175 = vpop.permute.xlu0 %8174
      %8240 = vrot.lane.b32.xlu0 %v8048, 8
      %v8241 = vpop.permute.xlu0 %8240
      %8242 = vrot.lane.b32.xlu0 %v8049, 8
      %v8243 = vpop.permute.xlu0 %8242
      %8244 = vrot.lane.b32.xlu0 %v8050, 8
      %v8245 = vpop.permute.xlu0 %8244
      %8246 = vrot.lane.b32.xlu0 %v8051, 8
      %v8247 = vpop.permute.xlu0 %8246
      %8248 = vrot.lane.b32.xlu0 %v8052, 8
      %v8249 = vpop.permute.xlu0 %8248
      %8250 = vrot.lane.b32.xlu0 %v8053, 8
      %v8251 = vpop.permute.xlu0 %8250
      %8252 = vrot.lane.b32.xlu0 %v8054, 8
      %v8253 = vpop.permute.xlu0 %8252
      %8254 = vrot.lane.b32.xlu0 %v8055, 8
      %v8255 = vpop.permute.xlu0 %8254
      %8256 = vrot.lane.b32.xlu0 %v8056, 8
      %v8257 = vpop.permute.xlu0 %8256
      %8258 = vrot.lane.b32.xlu0 %v8057, 8
      %v8259 = vpop.permute.xlu0 %8258
      %8260 = vrot.lane.b32.xlu0 %v8058, 8
      %v8261 = vpop.permute.xlu0 %8260
      %8262 = vrot.lane.b32.xlu0 %v8059, 8
      %v8263 = vpop.permute.xlu0 %8262
      %8264 = vrot.lane.b32.xlu0 %v8060, 8
      %v8265 = vpop.permute.xlu0 %8264
      %8266 = vrot.lane.b32.xlu0 %v8061, 8
      %v8267 = vpop.permute.xlu0 %8266
      %8268 = vrot.lane.b32.xlu0 %v8062, 8
      %v8269 = vpop.permute.xlu0 %8268
      %8270 = vrot.lane.b32.xlu0 %v8063, 8
      %v8271 = vpop.permute.xlu0 %8270
      %8272 = vrot.lane.b32.xlu0 %v8064, 8
      %v8273 = vpop.permute.xlu0 %8272
      %8274 = vrot.lane.b32.xlu0 %v8065, 8
      %v8275 = vpop.permute.xlu0 %8274
      %8276 = vrot.lane.b32.xlu0 %v8066, 8
      %v8277 = vpop.permute.xlu0 %8276
      %8278 = vrot.lane.b32.xlu0 %v8067, 8
      %v8279 = vpop.permute.xlu0 %8278
      %8280 = vrot.lane.b32.xlu0 %v8068, 8
      %v8281 = vpop.permute.xlu0 %8280
      %8282 = vrot.lane.b32.xlu0 %v8069, 8
      %v8283 = vpop.permute.xlu0 %8282
      %8284 = vrot.lane.b32.xlu0 %v8070, 8
      %v8285 = vpop.permute.xlu0 %8284
      %8286 = vrot.lane.b32.xlu0 %v8071, 8
      %v8287 = vpop.permute.xlu0 %8286
      %8288 = vrot.lane.b32.xlu0 %v8072, 8
      %v8289 = vpop.permute.xlu0 %8288
      %8290 = vrot.lane.b32.xlu0 %v8073, 8
      %v8291 = vpop.permute.xlu0 %8290
      %8292 = vrot.lane.b32.xlu0 %v8074, 8
      %v8293 = vpop.permute.xlu0 %8292
      %8294 = vrot.lane.b32.xlu0 %v8075, 8
      %v8295 = vpop.permute.xlu0 %8294
      %8296 = vrot.lane.b32.xlu0 %v8076, 8
      %v8297 = vpop.permute.xlu0 %8296
      %8298 = vrot.lane.b32.xlu0 %v8077, 8
      %v8299 = vpop.permute.xlu0 %8298
      %8300 = vrot.lane.b32.xlu0 %v8078, 8
      %v8301 = vpop.permute.xlu0 %8300
      %8302 = vrot.lane.b32.xlu0 %v8079, 8
      %v8303 = vpop.permute.xlu0 %8302
      %v8336 = vsel %vm334, %v7984, %v8113
      %v8337 = vsel %vm334, %v7985, %v8115
      %v8338 = vsel %vm334, %v7986, %v8117
      %v8339 = vsel %vm334, %v7987, %v8119
      %v8340 = vsel %vm334, %v7988, %v8121
      %v8341 = vsel %vm334, %v7989, %v8123
      %v8342 = vsel %vm334, %v7990, %v8125
      %v8343 = vsel %vm334, %v7991, %v8127
      %v8344 = vsel %vm334, %v7992, %v8129
      %v8345 = vsel %vm334, %v7993, %v8131
      %v8346 = vsel %vm334, %v7994, %v8133
      %v8347 = vsel %vm334, %v7995, %v8135
      %v8348 = vsel %vm334, %v7996, %v8137
      %v8349 = vsel %vm334, %v7997, %v8139
      %v8350 = vsel %vm334, %v7998, %v8141
      %v8351 = vsel %vm334, %v7999, %v8143
      %v8352 = vsel %vm334, %v8000, %v8145
      %v8353 = vsel %vm334, %v8001, %v8147
      %v8354 = vsel %vm334, %v8002, %v8149
      %v8355 = vsel %vm334, %v8003, %v8151
      %v8356 = vsel %vm334, %v8004, %v8153
      %v8357 = vsel %vm334, %v8005, %v8155
      %v8358 = vsel %vm334, %v8006, %v8157
      %v8359 = vsel %vm334, %v8007, %v8159
      %v8360 = vsel %vm334, %v8008, %v8161
      %v8361 = vsel %vm334, %v8009, %v8163
      %v8362 = vsel %vm334, %v8010, %v8165
      %v8363 = vsel %vm334, %v8011, %v8167
      %v8364 = vsel %vm334, %v8012, %v8169
      %v8365 = vsel %vm334, %v8013, %v8171
      %v8366 = vsel %vm334, %v8014, %v8173
      %v8367 = vsel %vm334, %v8015, %v8175
      %v8368 = vsel %vm2949, %v8336, %v8241
      %v8369 = vsel %vm2949, %v8337, %v8243
      %v8370 = vsel %vm2949, %v8338, %v8245
      %v8371 = vsel %vm2949, %v8339, %v8247
      %v8372 = vsel %vm2949, %v8340, %v8249
      %v8373 = vsel %vm2949, %v8341, %v8251
      %v8374 = vsel %vm2949, %v8342, %v8253
      %v8375 = vsel %vm2949, %v8343, %v8255
      %v8376 = vsel %vm2949, %v8344, %v8257
      %v8377 = vsel %vm2949, %v8345, %v8259
      %v8378 = vsel %vm2949, %v8346, %v8261
      %v8379 = vsel %vm2949, %v8347, %v8263
      %v8380 = vsel %vm2949, %v8348, %v8265
      %v8381 = vsel %vm2949, %v8349, %v8267
      %v8382 = vsel %vm2949, %v8350, %v8269
      %v8383 = vsel %vm2949, %v8351, %v8271
      %v8384 = vsel %vm2949, %v8352, %v8273
      %v8385 = vsel %vm2949, %v8353, %v8275
      %v8386 = vsel %vm2949, %v8354, %v8277
      %v8387 = vsel %vm2949, %v8355, %v8279
      %v8388 = vsel %vm2949, %v8356, %v8281
      %v8389 = vsel %vm2949, %v8357, %v8283
      %v8390 = vsel %vm2949, %v8358, %v8285
      %v8391 = vsel %vm2949, %v8359, %v8287
      %v8392 = vsel %vm2949, %v8360, %v8289
      %v8393 = vsel %vm2949, %v8361, %v8291
      %v8394 = vsel %vm2949, %v8362, %v8293
      %v8395 = vsel %vm2949, %v8363, %v8295
      %v8396 = vsel %vm2949, %v8364, %v8297
      %v8397 = vsel %vm2949, %v8365, %v8299
      %v8398 = vsel %vm2949, %v8366, %v8301
      %v8399 = vsel %vm2949, %v8367, %v8303
      %v8400 = vpack.c.bf16 %v8369, %v8368
      %v8401 = vpack.c.bf16 %v8371, %v8370
      %v8402 = vpack.c.bf16 %v8373, %v8372
      %v8403 = vpack.c.bf16 %v8375, %v8374
      %v8404 = vpack.c.bf16 %v8377, %v8376
      %v8405 = vpack.c.bf16 %v8379, %v8378
      %v8406 = vpack.c.bf16 %v8381, %v8380
      %v8407 = vpack.c.bf16 %v8383, %v8382
      %v8408 = vpack.c.bf16 %v8385, %v8384
      %v8409 = vpack.c.bf16 %v8387, %v8386
      %v8410 = vpack.c.bf16 %v8389, %v8388
      %v8411 = vpack.c.bf16 %v8391, %v8390
      %v8412 = vpack.c.bf16 %v8393, %v8392
      %v8413 = vpack.c.bf16 %v8395, %v8394
      %v8414 = vpack.c.bf16 %v8397, %v8396
      %v8415 = vpack.c.bf16 %v8399, %v8398
      %s8416 = scalar_lea.vmem %s7, 32
      %v8417 = vld [vmem:[%s8416] sm:$0xf]
      %v8418 = vld [vmem:[%s8416 + $0x4] sm:$0xf]
      %v8419 = vld [vmem:[%s8416 + $0x8] sm:$0xf]
      %v8420 = vld [vmem:[%s8416 + $0xc] sm:$0x3]
      %v8425 = vunpack.c.l.b16 %v8417
      %v8426 = vunpack.c.l.b16 %v8418
      %v8427 = vunpack.c.l.b16 %v8419
      %v8428 = vunpack.c.l.b16 %v8420
      %v8429 = vpack.c.b16 %v8426, %v8425
      %v8430 = vpack.c.b16 %v8428, %v8427
      %v8432 = vsel %vm3440, %v8429, 0
      %v8435 = vsel %vm3440, %v8430, 0
      %v8438 = vsel %vm3440, %v8400, 0
      %v8441 = vsel %vm3440, %v8401, 0
      %v8444 = vsel %vm3440, %v8402, 0
      %v8447 = vsel %vm3440, %v8403, 0
      %v8450 = vsel %vm3440, %v8404, 0
      %v8453 = vsel %vm3440, %v8405, 0
      %v8456 = vsel %vm3440, %v8406, 0
      %v8459 = vsel %vm3440, %v8407, 0
      %v8462 = vsel %vm3440, %v8408, 0
      %v8465 = vsel %vm3440, %v8409, 0
      %v8468 = vsel %vm3440, %v8410, 0
      %v8471 = vsel %vm3440, %v8411, 0
      %v8474 = vsel %vm3440, %v8412, 0
      %v8477 = vsel %vm3440, %v8413, 0
      %v8480 = vsel %vm3440, %v8414, 0
      %v8483 = vsel %vm3440, %v8415, 0
      %8485 = vmatprep.subr.bf16.mxu0 0
      %8486 = vmatpush1.bf16.xpose.msra.mxu0 %v8459
      %8487 = vmatprep.subr.bf16.mxu0 0
      %8488 = vmatpush1.bf16.xpose.msra.mxu0 %v8456
      %8489 = vmatprep.subr.bf16.mxu0 0
      %8490 = vmatpush1.bf16.xpose.msra.mxu0 %v8453
      %8491 = vmatprep.subr.bf16.mxu0 0
      %8492 = vmatpush1.bf16.xpose.msra.mxu0 %v8450
      %8493 = vmatprep.subr.bf16.mxu0 0
      %8494 = vmatpush1.bf16.xpose.msra.mxu0 %v8447
      %8495 = vmatprep.subr.bf16.mxu0 0
      %8496 = vmatpush1.bf16.xpose.msra.mxu0 %v8444
      %8497 = vmatprep.subr.bf16.mxu0 0
      %8498 = vmatpush1.bf16.xpose.msra.mxu0 %v8441
      %8499 = vmatprep.subr.bf16.mxu0 0
      %8500 = vmatpush1.bf16.xpose.msra.mxu0 %v8438
      %8501 = vmatprep.subr.bf16.mxu0 0
      %8502 = vmatpush2.bf16.xpose.msra.mxu0 %v8483
      %8503 = vmatprep.subr.bf16.mxu0 0
      %8504 = vmatpush2.bf16.xpose.msra.mxu0 %v8480
      %8505 = vmatprep.subr.bf16.mxu0 0
      %8506 = vmatpush2.bf16.xpose.msra.mxu0 %v8477
      %8507 = vmatprep.subr.bf16.mxu0 0
      %8508 = vmatpush2.bf16.xpose.msra.mxu0 %v8474
      %8509 = vmatprep.subr.bf16.mxu0 0
      %8510 = vmatpush2.bf16.xpose.msra.mxu0 %v8471
      %8511 = vmatprep.subr.bf16.mxu0 0
      %8512 = vmatpush2.bf16.xpose.msra.mxu0 %v8468
      %8513 = vmatprep.subr.bf16.mxu0 0
      %8514 = vmatpush2.bf16.xpose.msra.mxu0 %v8465
      %8515 = vmatprep.subr.bf16.mxu0 0
      %8516 = vmatpush2.bf16.xpose.msra.mxu0 %v8462
      %8517 = vmatprep.mubr.bf16.mxu0 0
      %8518 = vmatmul.mubr.bf16.gmra.mxu0 %v8432
      %v8519 = vpop.f32.mrf.mxu0
      %v8520 = vadd.f32 0.0, %v8519
      %v8521 = vpop.f32.mrf.mxu0
      %v8522 = vadd.f32 0.0, %v8521
      %v8523 = vpop.f32.mrf.mxu0
      %v8524 = vadd.f32 0.0, %v8523
      %v8525 = vpop.f32.mrf.mxu0
      %v8526 = vadd.f32 0.0, %v8525
      %8527 = vmatprep.mubr.bf16.mxu0 0
      %8528 = vmatmul.mubr.bf16.gmra.mxu0 %v8435
      %v8529 = vpop.f32.mrf.mxu0
      %v8530 = vadd.f32 0.0, %v8529
      %v8531 = vpop.f32.mrf.mxu0
      %v8532 = vadd.f32 0.0, %v8531
      %v8533 = vpop.f32.mrf.mxu0
      %v8534 = vadd.f32 0.0, %v8533
      %v8535 = vpop.f32.mrf.mxu0
      %v8536 = vadd.f32 0.0, %v8535
      %8537 = vdwg.mxu0
      %v8538 = vadd.f32 %v7966, %v8520
      %v8539 = vadd.f32 %v7968, %v8522
      %v8540 = vadd.f32 %v7970, %v8524
      %v8541 = vadd.f32 %v7972, %v8526
      %v8542 = vadd.f32 %v7976, %v8530
      %v8543 = vadd.f32 %v7978, %v8532
      %v8544 = vadd.f32 %v7980, %v8534
      %v8545 = vadd.f32 %v7982, %v8536
      %v8546 = vld [vmem:[%s8] sm:$0xff]
      %v8547 = vld [vmem:[%s8 + $0x8] sm:$0xff]
      %v8548 = vld [vmem:[%s8 + $0x10] sm:$0xff]
      %v8549 = vld [vmem:[%s8 + $0x18] sm:$0x7]
      %8551 = vset.pattern.permute.xlu0 0
      %8552 = vperm.xlu0 %8551, %v8546
      %v8553 = vpop.permute.xlu0 %8552
      %8556 = vset.pattern.permute.xlu0 0
      %8557 = vperm.xlu0 %8556, %v8547
      %v8558 = vpop.permute.xlu0 %8557
      %8561 = vset.pattern.permute.xlu0 0
      %8562 = vperm.xlu0 %8561, %v8548
      %v8563 = vpop.permute.xlu0 %8562
      %8566 = vset.pattern.permute.xlu0 0
      %8567 = vperm.xlu0 %8566, %v8549
      %v8568 = vpop.permute.xlu0 %8567
      %v8570 = vadd.f32 %v8538, %v8553
      %v8571 = vadd.f32 %v8539, %v8553
      %v8572 = vadd.f32 %v8540, %v8558
      %v8573 = vadd.f32 %v8541, %v8558
      %v8574 = vadd.f32 %v8542, %v8563
      %v8575 = vadd.f32 %v8543, %v8563
      %v8576 = vadd.f32 %v8544, %v8568
      %v8577 = vadd.f32 %v8545, %v8568
      %8578 = vst [vmem:[%s332] sm:$0xff] %v8570
      %8579 = vst [vmem:[%s332 + $0x8] sm:$0xff] %v8571
      %8580 = vst [vmem:[%s332 + $0x10] sm:$0xff] %v8572
      %8581 = vst [vmem:[%s332 + $0x18] sm:$0xff] %v8573
      %8582 = vst [vmem:[%s332 + $0x20] sm:$0xff] %v8574
      %8583 = vst [vmem:[%s332 + $0x28] sm:$0xff] %v8575
      %8584 = vst [vmem:[%s332 + $0x30] sm:$0x7] %v8576
      %8585 = vst [vmem:[%s332 + $0x38] sm:$0x7] %v8577
      %p8586 = scmp.lt.s32.totalorder %s20, 1
      %s8587 = scalar_select %p8586, %s20, 1
      %s8588 = smul.addr %s8587, 8
      %s8589 = smul.addr %s8588, 8
      %s8590 = scalar_lea.vmem %s9, %s8589
      // Predicated region
      $region57: #{tpu_custom_call.1} parent=55 // pred_check
        %p8591 = pneg %p232
      $region58: #{tpu_custom_call.1} parent=55 // pred_check_branch
        %8593 = sbr.rel (%p8591) target = $region60
      $region59: #{tpu_custom_call.1} parent=55 // pred_region
        _
      $region60: #{tpu_custom_call.1} parent=55 // pred_fallthru
        _
    $region56: #{tpu_custom_call.1} parent=5 // pred_fallthru
      _
    %p8594 = scmp.le.s32.totalorder 2, %s15
    // Predicated region
    $region61: #{tpu_custom_call.1} parent=5 // pred_check
      %p8595 = pneg %p8594
    $region62: #{tpu_custom_call.1} parent=5 // pred_check_branch
      %8597 = sbr.rel (%p8595) target = $region64
    $region63: #{tpu_custom_call.1} parent=5 // pred_region
      %s8598 = ssub.s32 %s15, 2
      // Predicated region
      $region65: #{tpu_custom_call.1} parent=63 // pred_check
        %p8599 = pneg %p238
      $region66: #{tpu_custom_call.1} parent=63 // pred_check_branch
        %8601 = sbr.rel (%p8599) target = $region68
      $region67: #{tpu_custom_call.1} parent=63 // pred_region
        %p8602 = scmp.lt.s32.totalorder %s21, 1
        %s8603 = scalar_select %p8602, %s21, 1
        %s8604 = smul.addr %s8603, 8
        %s8605 = smul.addr %s8604, 8
        %s8606 = scalar_lea.vmem %s9, %s8605
      $region68: #{tpu_custom_call.1} parent=63 // pred_fallthru
        _
    $region64: #{tpu_custom_call.1} parent=5 // pred_fallthru
      _
  $region6: #{tpu_custom_call.1} parent=0 // loop_footer
    %s19 = sadd.s32 1, %s15
  $region7: #{tpu_custom_call.1} parent=0 // loop_footer_branch
    %14 = sbr.rel target = $region3
  $region8: #{tpu_custom_call.1} parent=0 // loop_exit
    _

</llo_original>
